<compile_context>
chip_gen: v7x
topology: tpu7x:2x2x1
jax: 0.10.0
libtpu: 0.0.40
codegen_flags: <defaults>
</compile_context>

<pallas_src>
import functools

import jax
import jax.numpy as jnp
from jax.experimental import pallas as pl
from jax.experimental.pallas import tpu as pltpu


# --------------------------------------------------------------------------
# Fused kernel: the ENTIRE SpatialTransformer for one block of (b*t) slices.
# All refs are 2D / stacked-2D; rows are ordered (slice-major, node-minor).
# --------------------------------------------------------------------------
def _st_kernel(x_ref, pos_ref, mask_ref, adjblk_ref,
               wqkv_ref, wproj_ref, bproj_ref,
               gln_ref, bln_ref, w1_ref, b1_ref, w2_ref, b2_ref,
               wg_ref, bg_ref,
               out_ref, *, heads, depth, n_supports):
    F, C = x_ref.shape
    hd = C // heads
    scale = hd ** -0.5
    bf16 = jnp.bfloat16

    # positional embedding (pre-tiled to (F, C) in the wrapper) and the
    # block-diagonal attention mask are loaded ONCE, outside the depth loop.
    x = x_ref[...] + pos_ref[...]                    # (F, C)  f32
    mask = mask_ref[...]                             # (F, F)  f32, 0 / -1e30

    for d in range(depth):
        residual = x                                 # layer input, feeds the GCN
        xb = x.astype(bf16)

        # ---------------- SpatialAttention (+ residual) ----------------
        # One lane-dense QKV matmul over all F rows; per-head block-diag
        # masked attention; output projection distributed over heads:
        #   concat_h(P_h @ V_h) @ Wproj == sum_h P_h @ (V_h @ Wproj_h)
        qkv = jnp.dot(xb, wqkv_ref[d],
                      preferred_element_type=jnp.float32)            # (F, 3C)
        qkvb = qkv.astype(bf16)
        attn = None
        for h in range(heads):
            qh = qkvb[:, h * hd:(h + 1) * hd]                        # (F, hd)
            kh = qkvb[:, C + h * hd:C + (h + 1) * hd]                # (F, hd)
            vh = qkvb[:, 2 * C + h * hd:2 * C + (h + 1) * hd]        # (F, hd)
            vW = jnp.dot(vh, wproj_ref[d, h],
                         preferred_element_type=jnp.float32)         # (F, C)
            s = jax.lax.dot_general(
                qh, kh, (((1,), (1,)), ((), ())),
                preferred_element_type=jnp.float32) * scale + mask   # (F, F)
            s = s - jnp.max(s, axis=-1, keepdims=True)
            p = jnp.exp(s)
            p = p * pl.reciprocal(jnp.sum(p, axis=-1, keepdims=True),
                                  approx=True)
            o = jnp.dot(p.astype(bf16), vW.astype(bf16),
                        preferred_element_type=jnp.float32)          # (F, C)
            attn = o if attn is None else attn + o
        x = attn + bproj_ref[d] + x

        # ---------------- PreNorm(FeedForward) (+ residual) ----------------
        mu = jnp.mean(x, axis=-1, keepdims=True)
        var = jnp.mean((x - mu) ** 2, axis=-1, keepdims=True)
        xn = (x - mu) * jax.lax.rsqrt(var + 1e-5)
        xn = xn * gln_ref[d] + bln_ref[d]
        h1 = jnp.dot(xn.astype(bf16), w1_ref[d],
                     preferred_element_type=jnp.float32) + b1_ref[d]
        h1 = jax.nn.gelu(h1, approximate=True)       # tanh GELU -> EUP slot
        ff = jnp.dot(h1.astype(bf16), w2_ref[d],
                     preferred_element_type=jnp.float32) + b2_ref[d]
        x = ff + x

        # ---------------- GCN on the layer input (+ residual) ----------------
        # blockdiag(A^T) @ residual replaces the per-slice node-mixing loops.
        rb = residual.astype(bf16)
        g = jnp.dot(rb, wg_ref[d, 0], preferred_element_type=jnp.float32)
        j = 1
        for si in range(n_supports):                 # support_len = 2, order = 2
            Ab = adjblk_ref[si]                      # (F, F) bf16 blockdiag(A^T)
            x1b = jnp.dot(Ab, rb,
                          preferred_element_type=jnp.float32).astype(bf16)
            g = g + jnp.dot(x1b, wg_ref[d, j],
                            preferred_element_type=jnp.float32)
            x2b = jnp.dot(Ab, x1b,
                          preferred_element_type=jnp.float32).astype(bf16)
            g = g + jnp.dot(x2b, wg_ref[d, j + 1],
                            preferred_element_type=jnp.float32)
            j += 2
        x = g + bg_ref[d] + x

    out_ref[...] = x.astype(out_ref.dtype)


# --------------------------------------------------------------------------
# Generation-aware grid split: only a 2-TensorCore chip (v7x) benefits from
# G=2; on v5e/v6e the grid is a serial loop, so keep G=1 (full-F matmuls).
# --------------------------------------------------------------------------
def _num_grid_blocks(BT):
    try:
        kind = jax.devices()[0].device_kind.lower()
    except Exception:
        kind = ""
    if "v7" in kind and BT % 2 == 0:
        return 2
    return 1


# --------------------------------------------------------------------------
# Wrapper reproducing SpatialTransformer.forward (NCHW glue + one pallas_call)
# --------------------------------------------------------------------------
def spatial_transformer_forward(x_ncht, adj, params, heads):
    b, c, n, t = x_ncht.shape
    BT = b * t
    depth = len(params['layers'])
    bf, f32 = jnp.bfloat16, jnp.float32

    G = _num_grid_blocks(BT)
    BTb = BT // G
    Fb = BTb * n                       # rows per grid block

    # (b, c, n, t) -> (b*t*n, c), slice-major row order
    x2d = jnp.transpose(x_ncht, (0, 3, 2, 1)).reshape(BT * n, c)

    # positional embedding tiled over the BTb slices of one block
    pos = jnp.tile(params['pos_embedding'][0], (BTb, 1)).astype(f32)   # (Fb, c)

    # block-diagonal attention mask (0 within a slice, -1e30 across slices)
    ids = jnp.arange(Fb) // n
    mask = jnp.where(ids[:, None] == ids[None, :], 0.0, -1e30).astype(f32)

    # blockdiag(A^T) per support: node mixing for all BTb slices in one matmul
    eye = jnp.eye(BTb, dtype=f32)
    adjblk = jnp.stack([jnp.kron(eye, jnp.transpose(a)) for a in adj],
                       axis=0).astype(bf)                              # (S, Fb, Fb)
    n_supports = adjblk.shape[0]

    stk = lambda k, dt: jnp.stack([lp[k] for lp in params['layers']],
                                  axis=0).astype(dt)
    wqkv = stk('wqkv', bf)                                             # (D, c, 3c)
    wproj = stk('wproj', bf).reshape(depth, heads, c // heads, c)      # per-head blocks
    wg = stk('wg', bf).reshape(depth, 2 * n_supports + 1, c, c)        # per-feature blocks
    weights = [pos, mask, adjblk, wqkv, wproj, stk('bproj', f32),
               stk('gln', f32), stk('bln', f32),
               stk('w1', bf), stk('b1', f32), stk('w2', bf), stk('b2', f32),
               wg, stk('bg', f32)]

    kernel = functools.partial(_st_kernel, heads=heads, depth=depth,
                               n_supports=n_supports)

    def resident(a):                   # full-array operand, VMEM-resident all steps
        nd = a.ndim
        return pl.BlockSpec(a.shape, lambda i, _nd=nd: (0,) * _nd)

    out = pl.pallas_call(
        kernel,
        out_shape=jax.ShapeDtypeStruct((BT * n, c), jnp.float32),
        grid=(G,),
        in_specs=[pl.BlockSpec((Fb, c), lambda i: (i, 0))]
                 + [resident(a) for a in weights],
        out_specs=pl.BlockSpec((Fb, c), lambda i: (i, 0)),
        compiler_params=pltpu.CompilerParams(dimension_semantics=("parallel",)),
    )(x2d, *weights)

    return out.reshape(b, t, n, c).transpose(0, 3, 2, 1)   # back to (b, c, n, t)


# --------------------------------------------------------------------------
# Deterministic synthetic parameter init (shapes from the module __init__).
# Linear weights stored pre-transposed as (in, out) so kernels do x @ W.
# GCN conv 1x1 weight stored as (5*dim, dim) (== conv_weight[:, :, 0, 0].T).
# --------------------------------------------------------------------------
def init_params(key, dim, depth, mlp_dim, node_num):
    keys = jax.random.split(key, 1 + depth)
    params = {'pos_embedding':
              jax.random.normal(keys[0], (1, node_num, dim), jnp.float32)}
    layers = []
    for d in range(depth):
        ks = jax.random.split(keys[1 + d], 9)
        s = dim ** -0.5
        layers.append(dict(
            wqkv=jax.random.normal(ks[0], (dim, 3 * dim), jnp.float32) * s,
            wproj=jax.random.normal(ks[1], (dim, dim), jnp.float32) * s,
            bproj=jax.random.normal(ks[2], (1, dim), jnp.float32) * 0.01,
            gln=jnp.ones((1, dim), jnp.float32),
            bln=jnp.zeros((1, dim), jnp.float32),
            w1=jax.random.normal(ks[3], (dim, mlp_dim), jnp.float32) * s,
            b1=jax.random.normal(ks[4], (1, mlp_dim), jnp.float32) * 0.01,
            w2=jax.random.normal(ks[5], (mlp_dim, dim), jnp.float32) * (mlp_dim ** -0.5),
            b2=jax.random.normal(ks[6], (1, dim), jnp.float32) * 0.01,
            wg=jax.random.normal(ks[7], (5 * dim, dim), jnp.float32) * ((5 * dim) ** -0.5),
            bg=jax.random.normal(ks[8], (1, dim), jnp.float32) * 0.01,
        ))
    params['layers'] = layers
    return params


# --------------------------------------------------------------------------
# Pure-JAX reference (mirrors the PyTorch forward, exact f32) for correctness.
# --------------------------------------------------------------------------
def reference_forward(x_ncht, adj, params, heads):
    b, c, n, t = x_ncht.shape
    hd = c // heads
    scale = hd ** -0.5
    x = jnp.transpose(x_ncht, (0, 3, 2, 1)).reshape(b * t, n, c)
    x = x + params['pos_embedding'][0]
    for lp in params['layers']:
        residual = x
        qkv = x @ lp['wqkv']
        q = qkv[..., :c].reshape(b * t, n, heads, hd).transpose(0, 2, 1, 3)
        k = qkv[..., c:2 * c].reshape(b * t, n, heads, hd).transpose(0, 2, 1, 3)
        v = qkv[..., 2 * c:].reshape(b * t, n, heads, hd).transpose(0, 2, 1, 3)
        attn = jax.nn.softmax(jnp.einsum('bhqd,bhkd->bhqk', q, k) * scale, axis=-1)
        ao = jnp.einsum('bhqk,bhkd->bhqd', attn, v).transpose(0, 2, 1, 3).reshape(b * t, n, c)
        x = ao @ lp['wproj'] + lp['bproj'][0] + x
        mu = x.mean(-1, keepdims=True)
        var = ((x - mu) ** 2).mean(-1, keepdims=True)
        xn = (x - mu) / jnp.sqrt(var + 1e-5) * lp['gln'][0] + lp['bln'][0]
        h1 = jax.nn.gelu(xn @ lp['w1'] + lp['b1'][0], approximate=False)
        x = h1 @ lp['w2'] + lp['b2'][0] + x
        feats = [residual]
        for s in range(2):
            A = adj[s]
            x1 = jnp.einsum('vw,bvc->bwc', A, residual)
            feats.append(x1)
            x2 = jnp.einsum('vw,bvc->bwc', A, x1)
            feats.append(x2)
        cat = jnp.concatenate(feats, axis=-1)
        x = cat @ lp['wg'] + lp['bg'][0] + x
    return x.reshape(b, t, n, c).transpose(0, 3, 2, 1)


if __name__ == "__main__":
    key = jax.random.PRNGKey(0)
    b, dim, n, t = 2, 32, 16, 4          # (batch, channels/dim, node_num, time)
    heads, mlp_dim, depth = 4, 64, 2

    kx, ka0, ka1, kp = jax.random.split(key, 4)
    x = jax.random.normal(kx, (b, dim, n, t), jnp.float32)
    adj = [jax.nn.softmax(jax.random.normal(ka0, (n, n), jnp.float32), axis=-1),
           jax.nn.softmax(jax.random.normal(ka1, (n, n), jnp.float32), axis=-1)]
    params = init_params(kp, dim, depth, mlp_dim, n)

    out = spatial_transformer_forward(x, adj, params, heads)
    out = jax.block_until_ready(out)

    ref = reference_forward(x, adj, params, heads)
    rel_err = float(jnp.max(jnp.abs(out - ref)) / (jnp.max(jnp.abs(ref)) + 1e-6))
    assert out.shape == (b, dim, n, t), out.shape
    assert rel_err < 5e-2, f"mismatch vs reference, rel err={rel_err}"
    print("KERNEL_OK")
</pallas_src>

<mosaic_0001>
module attributes {stable_mosaic.version = 11 : i64} {
  func.func @_st_kernel(%arg0: i32, %arg1: memref<128x32xf32, #tpu.memory_space<vmem>>, %arg2: memref<128x32xf32, #tpu.memory_space<vmem>>, %arg3: memref<128x128xf32, #tpu.memory_space<vmem>>, %arg4: memref<2x128x128xbf16, #tpu.memory_space<vmem>>, %arg5: memref<2x32x96xbf16, #tpu.memory_space<vmem>>, %arg6: memref<2x4x8x32xbf16, #tpu.memory_space<vmem>>, %arg7: memref<2x1x32xf32, #tpu.memory_space<vmem>>, %arg8: memref<2x1x32xf32, #tpu.memory_space<vmem>>, %arg9: memref<2x1x32xf32, #tpu.memory_space<vmem>>, %arg10: memref<2x32x64xbf16, #tpu.memory_space<vmem>>, %arg11: memref<2x1x64xf32, #tpu.memory_space<vmem>>, %arg12: memref<2x64x32xbf16, #tpu.memory_space<vmem>>, %arg13: memref<2x1x32xf32, #tpu.memory_space<vmem>>, %arg14: memref<2x5x32x32xbf16, #tpu.memory_space<vmem>>, %arg15: memref<2x1x32xf32, #tpu.memory_space<vmem>>, %arg16: memref<128x32xf32, #tpu.memory_space<vmem>>) attributes {dimension_semantics = [#tpu.dimension_semantics<parallel>], iteration_bounds = array<i64: 1>, scalar_prefetch = 0 : i64, scratch_operands = 0 : i64, tpu.core_type = #tpu.core_type<tc>, window_params = [{transform_indices = @transform_0, window_bounds = array<i64: 128, 32>}, {pipeline_mode = #tpu.pipeline_mode<synchronous>, transform_indices = @transform_1, window_bounds = array<i64: 128, 32>}, {pipeline_mode = #tpu.pipeline_mode<synchronous>, transform_indices = @transform_2, window_bounds = array<i64: 128, 128>}, {pipeline_mode = #tpu.pipeline_mode<synchronous>, transform_indices = @transform_3, window_bounds = array<i64: 2, 128, 128>}, {pipeline_mode = #tpu.pipeline_mode<synchronous>, transform_indices = @transform_4, window_bounds = array<i64: 2, 32, 96>}, {pipeline_mode = #tpu.pipeline_mode<synchronous>, transform_indices = @transform_5, window_bounds = array<i64: 2, 4, 8, 32>}, {pipeline_mode = #tpu.pipeline_mode<synchronous>, transform_indices = @transform_6, window_bounds = array<i64: 2, 1, 32>}, {pipeline_mode = #tpu.pipeline_mode<synchronous>, transform_indices = @transform_7, window_bounds = array<i64: 2, 1, 32>}, {pipeline_mode = #tpu.pipeline_mode<synchronous>, transform_indices = @transform_8, window_bounds = array<i64: 2, 1, 32>}, {pipeline_mode = #tpu.pipeline_mode<synchronous>, transform_indices = @transform_9, window_bounds = array<i64: 2, 32, 64>}, {pipeline_mode = #tpu.pipeline_mode<synchronous>, transform_indices = @transform_10, window_bounds = array<i64: 2, 1, 64>}, {pipeline_mode = #tpu.pipeline_mode<synchronous>, transform_indices = @transform_11, window_bounds = array<i64: 2, 64, 32>}, {pipeline_mode = #tpu.pipeline_mode<synchronous>, transform_indices = @transform_12, window_bounds = array<i64: 2, 1, 32>}, {pipeline_mode = #tpu.pipeline_mode<synchronous>, transform_indices = @transform_13, window_bounds = array<i64: 2, 5, 32, 32>}, {pipeline_mode = #tpu.pipeline_mode<synchronous>, transform_indices = @transform_14, window_bounds = array<i64: 2, 1, 32>}, {transform_indices = @transform_15, window_bounds = array<i64: 128, 32>}]} {
    %c0 = arith.constant 0 : index
    %c0_0 = arith.constant 0 : index
    %0 = vector.load %arg1[%c0, %c0_0] : memref<128x32xf32, #tpu.memory_space<vmem>>, vector<128x32xf32>
    %c0_1 = arith.constant 0 : index
    %c0_2 = arith.constant 0 : index
    %1 = vector.load %arg2[%c0_1, %c0_2] : memref<128x32xf32, #tpu.memory_space<vmem>>, vector<128x32xf32>
    %2 = arith.addf %0, %1 : vector<128x32xf32>
    %c0_3 = arith.constant 0 : index
    %c0_4 = arith.constant 0 : index
    %3 = vector.load %arg3[%c0_3, %c0_4] : memref<128x128xf32, #tpu.memory_space<vmem>>, vector<128x128xf32>
    %4 = arith.truncf %2 : vector<128x32xf32> to vector<128x32xbf16>
    %c0_5 = arith.constant 0 : index
    %c0_6 = arith.constant 0 : index
    %c0_7 = arith.constant 0 : index
    %5 = vector.load %arg5[%c0_5, %c0_6, %c0_7] : memref<2x32x96xbf16, #tpu.memory_space<vmem>>, vector<1x32x96xbf16>
    %6 = vector.shape_cast %5 : vector<1x32x96xbf16> to vector<32x96xbf16>
    %cst = arith.constant dense<0.000000e+00> : vector<128x96xf32>
    %7 = tpu.matmul %4, %6, %cst {dimension_numbers = #tpu.dot_dimension_numbers<[1], [0], [0], [1], [0, 0, 1, 1], [], []>} : vector<128x32xbf16>, vector<32x96xbf16>, vector<128x96xf32> -> vector<128x96xf32>
    %8 = arith.truncf %7 : vector<128x96xf32> to vector<128x96xbf16>
    %9 = vector.extract_strided_slice %8 {offsets = [0, 0], sizes = [128, 8], strides = [1, 1]} : vector<128x96xbf16> to vector<128x8xbf16>
    %10 = vector.extract_strided_slice %8 {offsets = [0, 32], sizes = [128, 8], strides = [1, 1]} : vector<128x96xbf16> to vector<128x8xbf16>
    %11 = vector.extract_strided_slice %8 {offsets = [0, 64], sizes = [128, 8], strides = [1, 1]} : vector<128x96xbf16> to vector<128x8xbf16>
    %c0_8 = arith.constant 0 : index
    %c0_9 = arith.constant 0 : index
    %c0_10 = arith.constant 0 : index
    %c0_11 = arith.constant 0 : index
    %12 = vector.load %arg6[%c0_8, %c0_9, %c0_10, %c0_11] : memref<2x4x8x32xbf16, #tpu.memory_space<vmem>>, vector<1x1x8x32xbf16>
    %13 = vector.shape_cast %12 : vector<1x1x8x32xbf16> to vector<8x32xbf16>
    %cst_12 = arith.constant dense<0.000000e+00> : vector<128x32xf32>
    %14 = tpu.matmul %11, %13, %cst_12 {dimension_numbers = #tpu.dot_dimension_numbers<[1], [0], [0], [1], [0, 0, 1, 1], [], []>} : vector<128x8xbf16>, vector<8x32xbf16>, vector<128x32xf32> -> vector<128x32xf32>
    %cst_13 = arith.constant dense<0.000000e+00> : vector<128x128xf32>
    %15 = tpu.matmul %9, %10, %cst_13 {dimension_numbers = #tpu.dot_dimension_numbers<[1], [1], [0], [0], [0, 0, 1, 0], [], []>} : vector<128x8xbf16>, vector<128x8xbf16>, vector<128x128xf32> -> vector<128x128xf32>
    %cst_14 = arith.constant 0.353553385 : f32
    %16 = vector.broadcast %cst_14 : f32 to vector<128x128xf32>
    %17 = arith.mulf %15, %16 : vector<128x128xf32>
    %18 = arith.addf %17, %3 : vector<128x128xf32>
    %cst_15 = arith.constant dense<0xFF800000> : vector<128xf32>
    %19 = vector.multi_reduction <maximumf>, %18, %cst_15 [1] : vector<128x128xf32> to vector<128xf32>
    %20 = vector.shape_cast %19 : vector<128xf32> to vector<128x1xf32>
    %21 = vector.broadcast %20 : vector<128x1xf32> to vector<128x128xf32>
    %22 = arith.subf %18, %21 : vector<128x128xf32>
    %23 = math.exp %22 : vector<128x128xf32>
    %cst_16 = arith.constant dense<0.000000e+00> : vector<128xf32>
    %24 = vector.multi_reduction <add>, %23, %cst_16 [1] : vector<128x128xf32> to vector<128xf32>
    %25 = vector.shape_cast %24 : vector<128xf32> to vector<128x1xf32>
    %26 = tpu.reciprocal %25 {approx = true} : vector<128x1xf32> -> vector<128x1xf32>
    %27 = vector.broadcast %26 : vector<128x1xf32> to vector<128x128xf32>
    %28 = arith.mulf %23, %27 : vector<128x128xf32>
    %29 = arith.truncf %28 : vector<128x128xf32> to vector<128x128xbf16>
    %30 = arith.truncf %14 : vector<128x32xf32> to vector<128x32xbf16>
    %cst_17 = arith.constant dense<0.000000e+00> : vector<128x32xf32>
    %31 = tpu.matmul %29, %30, %cst_17 {dimension_numbers = #tpu.dot_dimension_numbers<[1], [0], [0], [1], [0, 0, 1, 1], [], []>} : vector<128x128xbf16>, vector<128x32xbf16>, vector<128x32xf32> -> vector<128x32xf32>
    %32 = vector.extract_strided_slice %8 {offsets = [0, 8], sizes = [128, 8], strides = [1, 1]} : vector<128x96xbf16> to vector<128x8xbf16>
    %33 = vector.extract_strided_slice %8 {offsets = [0, 40], sizes = [128, 8], strides = [1, 1]} : vector<128x96xbf16> to vector<128x8xbf16>
    %34 = vector.extract_strided_slice %8 {offsets = [0, 72], sizes = [128, 8], strides = [1, 1]} : vector<128x96xbf16> to vector<128x8xbf16>
    %c0_18 = arith.constant 0 : index
    %c1 = arith.constant 1 : index
    %c0_19 = arith.constant 0 : index
    %c0_20 = arith.constant 0 : index
    %35 = vector.load %arg6[%c0_18, %c1, %c0_19, %c0_20] : memref<2x4x8x32xbf16, #tpu.memory_space<vmem>>, vector<1x1x8x32xbf16>
    %36 = vector.shape_cast %35 : vector<1x1x8x32xbf16> to vector<8x32xbf16>
    %cst_21 = arith.constant dense<0.000000e+00> : vector<128x32xf32>
    %37 = tpu.matmul %34, %36, %cst_21 {dimension_numbers = #tpu.dot_dimension_numbers<[1], [0], [0], [1], [0, 0, 1, 1], [], []>} : vector<128x8xbf16>, vector<8x32xbf16>, vector<128x32xf32> -> vector<128x32xf32>
    %cst_22 = arith.constant dense<0.000000e+00> : vector<128x128xf32>
    %38 = tpu.matmul %32, %33, %cst_22 {dimension_numbers = #tpu.dot_dimension_numbers<[1], [1], [0], [0], [0, 0, 1, 0], [], []>} : vector<128x8xbf16>, vector<128x8xbf16>, vector<128x128xf32> -> vector<128x128xf32>
    %cst_23 = arith.constant 0.353553385 : f32
    %39 = vector.broadcast %cst_23 : f32 to vector<128x128xf32>
    %40 = arith.mulf %38, %39 : vector<128x128xf32>
    %41 = arith.addf %40, %3 : vector<128x128xf32>
    %cst_24 = arith.constant dense<0xFF800000> : vector<128xf32>
    %42 = vector.multi_reduction <maximumf>, %41, %cst_24 [1] : vector<128x128xf32> to vector<128xf32>
    %43 = vector.shape_cast %42 : vector<128xf32> to vector<128x1xf32>
    %44 = vector.broadcast %43 : vector<128x1xf32> to vector<128x128xf32>
    %45 = arith.subf %41, %44 : vector<128x128xf32>
    %46 = math.exp %45 : vector<128x128xf32>
    %cst_25 = arith.constant dense<0.000000e+00> : vector<128xf32>
    %47 = vector.multi_reduction <add>, %46, %cst_25 [1] : vector<128x128xf32> to vector<128xf32>
    %48 = vector.shape_cast %47 : vector<128xf32> to vector<128x1xf32>
    %49 = tpu.reciprocal %48 {approx = true} : vector<128x1xf32> -> vector<128x1xf32>
    %50 = vector.broadcast %49 : vector<128x1xf32> to vector<128x128xf32>
    %51 = arith.mulf %46, %50 : vector<128x128xf32>
    %52 = arith.truncf %51 : vector<128x128xf32> to vector<128x128xbf16>
    %53 = arith.truncf %37 : vector<128x32xf32> to vector<128x32xbf16>
    %cst_26 = arith.constant dense<0.000000e+00> : vector<128x32xf32>
    %54 = tpu.matmul %52, %53, %cst_26 {dimension_numbers = #tpu.dot_dimension_numbers<[1], [0], [0], [1], [0, 0, 1, 1], [], []>} : vector<128x128xbf16>, vector<128x32xbf16>, vector<128x32xf32> -> vector<128x32xf32>
    %55 = arith.addf %31, %54 : vector<128x32xf32>
    %56 = vector.extract_strided_slice %8 {offsets = [0, 16], sizes = [128, 8], strides = [1, 1]} : vector<128x96xbf16> to vector<128x8xbf16>
    %57 = vector.extract_strided_slice %8 {offsets = [0, 48], sizes = [128, 8], strides = [1, 1]} : vector<128x96xbf16> to vector<128x8xbf16>
    %58 = vector.extract_strided_slice %8 {offsets = [0, 80], sizes = [128, 8], strides = [1, 1]} : vector<128x96xbf16> to vector<128x8xbf16>
    %c0_27 = arith.constant 0 : index
    %c2 = arith.constant 2 : index
    %c0_28 = arith.constant 0 : index
    %c0_29 = arith.constant 0 : index
    %59 = vector.load %arg6[%c0_27, %c2, %c0_28, %c0_29] : memref<2x4x8x32xbf16, #tpu.memory_space<vmem>>, vector<1x1x8x32xbf16>
    %60 = vector.shape_cast %59 : vector<1x1x8x32xbf16> to vector<8x32xbf16>
    %cst_30 = arith.constant dense<0.000000e+00> : vector<128x32xf32>
    %61 = tpu.matmul %58, %60, %cst_30 {dimension_numbers = #tpu.dot_dimension_numbers<[1], [0], [0], [1], [0, 0, 1, 1], [], []>} : vector<128x8xbf16>, vector<8x32xbf16>, vector<128x32xf32> -> vector<128x32xf32>
    %cst_31 = arith.constant dense<0.000000e+00> : vector<128x128xf32>
    %62 = tpu.matmul %56, %57, %cst_31 {dimension_numbers = #tpu.dot_dimension_numbers<[1], [1], [0], [0], [0, 0, 1, 0], [], []>} : vector<128x8xbf16>, vector<128x8xbf16>, vector<128x128xf32> -> vector<128x128xf32>
    %cst_32 = arith.constant 0.353553385 : f32
    %63 = vector.broadcast %cst_32 : f32 to vector<128x128xf32>
    %64 = arith.mulf %62, %63 : vector<128x128xf32>
    %65 = arith.addf %64, %3 : vector<128x128xf32>
    %cst_33 = arith.constant dense<0xFF800000> : vector<128xf32>
    %66 = vector.multi_reduction <maximumf>, %65, %cst_33 [1] : vector<128x128xf32> to vector<128xf32>
    %67 = vector.shape_cast %66 : vector<128xf32> to vector<128x1xf32>
    %68 = vector.broadcast %67 : vector<128x1xf32> to vector<128x128xf32>
    %69 = arith.subf %65, %68 : vector<128x128xf32>
    %70 = math.exp %69 : vector<128x128xf32>
    %cst_34 = arith.constant dense<0.000000e+00> : vector<128xf32>
    %71 = vector.multi_reduction <add>, %70, %cst_34 [1] : vector<128x128xf32> to vector<128xf32>
    %72 = vector.shape_cast %71 : vector<128xf32> to vector<128x1xf32>
    %73 = tpu.reciprocal %72 {approx = true} : vector<128x1xf32> -> vector<128x1xf32>
    %74 = vector.broadcast %73 : vector<128x1xf32> to vector<128x128xf32>
    %75 = arith.mulf %70, %74 : vector<128x128xf32>
    %76 = arith.truncf %75 : vector<128x128xf32> to vector<128x128xbf16>
    %77 = arith.truncf %61 : vector<128x32xf32> to vector<128x32xbf16>
    %cst_35 = arith.constant dense<0.000000e+00> : vector<128x32xf32>
    %78 = tpu.matmul %76, %77, %cst_35 {dimension_numbers = #tpu.dot_dimension_numbers<[1], [0], [0], [1], [0, 0, 1, 1], [], []>} : vector<128x128xbf16>, vector<128x32xbf16>, vector<128x32xf32> -> vector<128x32xf32>
    %79 = arith.addf %55, %78 : vector<128x32xf32>
    %80 = vector.extract_strided_slice %8 {offsets = [0, 24], sizes = [128, 8], strides = [1, 1]} : vector<128x96xbf16> to vector<128x8xbf16>
    %81 = vector.extract_strided_slice %8 {offsets = [0, 56], sizes = [128, 8], strides = [1, 1]} : vector<128x96xbf16> to vector<128x8xbf16>
    %82 = vector.extract_strided_slice %8 {offsets = [0, 88], sizes = [128, 8], strides = [1, 1]} : vector<128x96xbf16> to vector<128x8xbf16>
    %c0_36 = arith.constant 0 : index
    %c3 = arith.constant 3 : index
    %c0_37 = arith.constant 0 : index
    %c0_38 = arith.constant 0 : index
    %83 = vector.load %arg6[%c0_36, %c3, %c0_37, %c0_38] : memref<2x4x8x32xbf16, #tpu.memory_space<vmem>>, vector<1x1x8x32xbf16>
    %84 = vector.shape_cast %83 : vector<1x1x8x32xbf16> to vector<8x32xbf16>
    %cst_39 = arith.constant dense<0.000000e+00> : vector<128x32xf32>
    %85 = tpu.matmul %82, %84, %cst_39 {dimension_numbers = #tpu.dot_dimension_numbers<[1], [0], [0], [1], [0, 0, 1, 1], [], []>} : vector<128x8xbf16>, vector<8x32xbf16>, vector<128x32xf32> -> vector<128x32xf32>
    %cst_40 = arith.constant dense<0.000000e+00> : vector<128x128xf32>
    %86 = tpu.matmul %80, %81, %cst_40 {dimension_numbers = #tpu.dot_dimension_numbers<[1], [1], [0], [0], [0, 0, 1, 0], [], []>} : vector<128x8xbf16>, vector<128x8xbf16>, vector<128x128xf32> -> vector<128x128xf32>
    %cst_41 = arith.constant 0.353553385 : f32
    %87 = vector.broadcast %cst_41 : f32 to vector<128x128xf32>
    %88 = arith.mulf %86, %87 : vector<128x128xf32>
    %89 = arith.addf %88, %3 : vector<128x128xf32>
    %cst_42 = arith.constant dense<0xFF800000> : vector<128xf32>
    %90 = vector.multi_reduction <maximumf>, %89, %cst_42 [1] : vector<128x128xf32> to vector<128xf32>
    %91 = vector.shape_cast %90 : vector<128xf32> to vector<128x1xf32>
    %92 = vector.broadcast %91 : vector<128x1xf32> to vector<128x128xf32>
    %93 = arith.subf %89, %92 : vector<128x128xf32>
    %94 = math.exp %93 : vector<128x128xf32>
    %cst_43 = arith.constant dense<0.000000e+00> : vector<128xf32>
    %95 = vector.multi_reduction <add>, %94, %cst_43 [1] : vector<128x128xf32> to vector<128xf32>
    %96 = vector.shape_cast %95 : vector<128xf32> to vector<128x1xf32>
    %97 = tpu.reciprocal %96 {approx = true} : vector<128x1xf32> -> vector<128x1xf32>
    %98 = vector.broadcast %97 : vector<128x1xf32> to vector<128x128xf32>
    %99 = arith.mulf %94, %98 : vector<128x128xf32>
    %100 = arith.truncf %99 : vector<128x128xf32> to vector<128x128xbf16>
    %101 = arith.truncf %85 : vector<128x32xf32> to vector<128x32xbf16>
    %cst_44 = arith.constant dense<0.000000e+00> : vector<128x32xf32>
    %102 = tpu.matmul %100, %101, %cst_44 {dimension_numbers = #tpu.dot_dimension_numbers<[1], [0], [0], [1], [0, 0, 1, 1], [], []>} : vector<128x128xbf16>, vector<128x32xbf16>, vector<128x32xf32> -> vector<128x32xf32>
    %103 = arith.addf %79, %102 : vector<128x32xf32>
    %c0_45 = arith.constant 0 : index
    %c0_46 = arith.constant 0 : index
    %c0_47 = arith.constant 0 : index
    %104 = vector.load %arg7[%c0_45, %c0_46, %c0_47] : memref<2x1x32xf32, #tpu.memory_space<vmem>>, vector<1x1x32xf32>
    %105 = vector.shape_cast %104 : vector<1x1x32xf32> to vector<1x32xf32>
    %106 = vector.broadcast %105 : vector<1x32xf32> to vector<128x32xf32>
    %107 = arith.addf %103, %106 : vector<128x32xf32>
    %108 = arith.addf %107, %2 : vector<128x32xf32>
    %cst_48 = arith.constant dense<0.000000e+00> : vector<128xf32>
    %109 = vector.multi_reduction <add>, %108, %cst_48 [1] : vector<128x32xf32> to vector<128xf32>
    %110 = vector.shape_cast %109 : vector<128xf32> to vector<128x1xf32>
    %cst_49 = arith.constant 3.200000e+01 : f32
    %111 = vector.broadcast %cst_49 : f32 to vector<128x1xf32>
    %112 = arith.divf %110, %111 : vector<128x1xf32>
    %113 = vector.broadcast %112 : vector<128x1xf32> to vector<128x32xf32>
    %114 = arith.subf %108, %113 : vector<128x32xf32>
    %115 = arith.mulf %114, %114 : vector<128x32xf32>
    %cst_50 = arith.constant dense<0.000000e+00> : vector<128xf32>
    %116 = vector.multi_reduction <add>, %115, %cst_50 [1] : vector<128x32xf32> to vector<128xf32>
    %117 = vector.shape_cast %116 : vector<128xf32> to vector<128x1xf32>
    %cst_51 = arith.constant 3.200000e+01 : f32
    %118 = vector.broadcast %cst_51 : f32 to vector<128x1xf32>
    %119 = arith.divf %117, %118 : vector<128x1xf32>
    %120 = vector.broadcast %112 : vector<128x1xf32> to vector<128x32xf32>
    %121 = arith.subf %108, %120 : vector<128x32xf32>
    %cst_52 = arith.constant 9.99999974E-6 : f32
    %122 = vector.broadcast %cst_52 : f32 to vector<128x1xf32>
    %123 = arith.addf %119, %122 : vector<128x1xf32>
    %124 = math.rsqrt %123 : vector<128x1xf32>
    %125 = vector.broadcast %124 : vector<128x1xf32> to vector<128x32xf32>
    %126 = arith.mulf %121, %125 : vector<128x32xf32>
    %c0_53 = arith.constant 0 : index
    %c0_54 = arith.constant 0 : index
    %c0_55 = arith.constant 0 : index
    %127 = vector.load %arg8[%c0_53, %c0_54, %c0_55] : memref<2x1x32xf32, #tpu.memory_space<vmem>>, vector<1x1x32xf32>
    %128 = vector.shape_cast %127 : vector<1x1x32xf32> to vector<1x32xf32>
    %129 = vector.broadcast %128 : vector<1x32xf32> to vector<128x32xf32>
    %130 = arith.mulf %126, %129 : vector<128x32xf32>
    %c0_56 = arith.constant 0 : index
    %c0_57 = arith.constant 0 : index
    %c0_58 = arith.constant 0 : index
    %131 = vector.load %arg9[%c0_56, %c0_57, %c0_58] : memref<2x1x32xf32, #tpu.memory_space<vmem>>, vector<1x1x32xf32>
    %132 = vector.shape_cast %131 : vector<1x1x32xf32> to vector<1x32xf32>
    %133 = vector.broadcast %132 : vector<1x32xf32> to vector<128x32xf32>
    %134 = arith.addf %130, %133 : vector<128x32xf32>
    %135 = arith.truncf %134 : vector<128x32xf32> to vector<128x32xbf16>
    %c0_59 = arith.constant 0 : index
    %c0_60 = arith.constant 0 : index
    %c0_61 = arith.constant 0 : index
    %136 = vector.load %arg10[%c0_59, %c0_60, %c0_61] : memref<2x32x64xbf16, #tpu.memory_space<vmem>>, vector<1x32x64xbf16>
    %137 = vector.shape_cast %136 : vector<1x32x64xbf16> to vector<32x64xbf16>
    %cst_62 = arith.constant dense<0.000000e+00> : vector<128x64xf32>
    %138 = tpu.matmul %135, %137, %cst_62 {dimension_numbers = #tpu.dot_dimension_numbers<[1], [0], [0], [1], [0, 0, 1, 1], [], []>} : vector<128x32xbf16>, vector<32x64xbf16>, vector<128x64xf32> -> vector<128x64xf32>
    %c0_63 = arith.constant 0 : index
    %c0_64 = arith.constant 0 : index
    %c0_65 = arith.constant 0 : index
    %139 = vector.load %arg11[%c0_63, %c0_64, %c0_65] : memref<2x1x64xf32, #tpu.memory_space<vmem>>, vector<1x1x64xf32>
    %140 = vector.shape_cast %139 : vector<1x1x64xf32> to vector<1x64xf32>
    %141 = vector.broadcast %140 : vector<1x64xf32> to vector<128x64xf32>
    %142 = arith.addf %138, %141 : vector<128x64xf32>
    %143 = arith.mulf %142, %142 : vector<128x64xf32>
    %144 = arith.mulf %142, %143 : vector<128x64xf32>
    %cst_66 = arith.constant 4.471500e-02 : f32
    %145 = vector.broadcast %cst_66 : f32 to vector<128x64xf32>
    %146 = arith.mulf %145, %144 : vector<128x64xf32>
    %147 = arith.addf %142, %146 : vector<128x64xf32>
    %cst_67 = arith.constant 0.797884583 : f32
    %148 = vector.broadcast %cst_67 : f32 to vector<128x64xf32>
    %149 = arith.mulf %148, %147 : vector<128x64xf32>
    %150 = math.tanh %149 : vector<128x64xf32>
    %cst_68 = arith.constant 1.000000e+00 : f32
    %151 = vector.broadcast %cst_68 : f32 to vector<128x64xf32>
    %152 = arith.addf %151, %150 : vector<128x64xf32>
    %cst_69 = arith.constant 5.000000e-01 : f32
    %153 = vector.broadcast %cst_69 : f32 to vector<128x64xf32>
    %154 = arith.mulf %153, %152 : vector<128x64xf32>
    %155 = arith.mulf %142, %154 : vector<128x64xf32>
    %156 = arith.truncf %155 : vector<128x64xf32> to vector<128x64xbf16>
    %c0_70 = arith.constant 0 : index
    %c0_71 = arith.constant 0 : index
    %c0_72 = arith.constant 0 : index
    %157 = vector.load %arg12[%c0_70, %c0_71, %c0_72] : memref<2x64x32xbf16, #tpu.memory_space<vmem>>, vector<1x64x32xbf16>
    %158 = vector.shape_cast %157 : vector<1x64x32xbf16> to vector<64x32xbf16>
    %cst_73 = arith.constant dense<0.000000e+00> : vector<128x32xf32>
    %159 = tpu.matmul %156, %158, %cst_73 {dimension_numbers = #tpu.dot_dimension_numbers<[1], [0], [0], [1], [0, 0, 1, 1], [], []>} : vector<128x64xbf16>, vector<64x32xbf16>, vector<128x32xf32> -> vector<128x32xf32>
    %c0_74 = arith.constant 0 : index
    %c0_75 = arith.constant 0 : index
    %c0_76 = arith.constant 0 : index
    %160 = vector.load %arg13[%c0_74, %c0_75, %c0_76] : memref<2x1x32xf32, #tpu.memory_space<vmem>>, vector<1x1x32xf32>
    %161 = vector.shape_cast %160 : vector<1x1x32xf32> to vector<1x32xf32>
    %162 = vector.broadcast %161 : vector<1x32xf32> to vector<128x32xf32>
    %163 = arith.addf %159, %162 : vector<128x32xf32>
    %164 = arith.addf %163, %108 : vector<128x32xf32>
    %165 = arith.truncf %2 : vector<128x32xf32> to vector<128x32xbf16>
    %c0_77 = arith.constant 0 : index
    %c0_78 = arith.constant 0 : index
    %c0_79 = arith.constant 0 : index
    %c0_80 = arith.constant 0 : index
    %166 = vector.load %arg14[%c0_77, %c0_78, %c0_79, %c0_80] : memref<2x5x32x32xbf16, #tpu.memory_space<vmem>>, vector<1x1x32x32xbf16>
    %167 = vector.shape_cast %166 : vector<1x1x32x32xbf16> to vector<32x32xbf16>
    %cst_81 = arith.constant dense<0.000000e+00> : vector<128x32xf32>
    %168 = tpu.matmul %165, %167, %cst_81 {dimension_numbers = #tpu.dot_dimension_numbers<[1], [0], [0], [1], [0, 0, 1, 1], [], []>} : vector<128x32xbf16>, vector<32x32xbf16>, vector<128x32xf32> -> vector<128x32xf32>
    %c0_82 = arith.constant 0 : index
    %c0_83 = arith.constant 0 : index
    %c0_84 = arith.constant 0 : index
    %169 = vector.load %arg4[%c0_82, %c0_83, %c0_84] : memref<2x128x128xbf16, #tpu.memory_space<vmem>>, vector<1x128x128xbf16>
    %170 = vector.shape_cast %169 : vector<1x128x128xbf16> to vector<128x128xbf16>
    %cst_85 = arith.constant dense<0.000000e+00> : vector<128x32xf32>
    %171 = tpu.matmul %170, %165, %cst_85 {dimension_numbers = #tpu.dot_dimension_numbers<[1], [0], [0], [1], [0, 0, 1, 1], [], []>} : vector<128x128xbf16>, vector<128x32xbf16>, vector<128x32xf32> -> vector<128x32xf32>
    %172 = arith.truncf %171 : vector<128x32xf32> to vector<128x32xbf16>
    %c0_86 = arith.constant 0 : index
    %c1_87 = arith.constant 1 : index
    %c0_88 = arith.constant 0 : index
    %c0_89 = arith.constant 0 : index
    %173 = vector.load %arg14[%c0_86, %c1_87, %c0_88, %c0_89] : memref<2x5x32x32xbf16, #tpu.memory_space<vmem>>, vector<1x1x32x32xbf16>
    %174 = vector.shape_cast %173 : vector<1x1x32x32xbf16> to vector<32x32xbf16>
    %cst_90 = arith.constant dense<0.000000e+00> : vector<128x32xf32>
    %175 = tpu.matmul %172, %174, %cst_90 {dimension_numbers = #tpu.dot_dimension_numbers<[1], [0], [0], [1], [0, 0, 1, 1], [], []>} : vector<128x32xbf16>, vector<32x32xbf16>, vector<128x32xf32> -> vector<128x32xf32>
    %176 = arith.addf %168, %175 : vector<128x32xf32>
    %cst_91 = arith.constant dense<0.000000e+00> : vector<128x32xf32>
    %177 = tpu.matmul %170, %172, %cst_91 {dimension_numbers = #tpu.dot_dimension_numbers<[1], [0], [0], [1], [0, 0, 1, 1], [], []>} : vector<128x128xbf16>, vector<128x32xbf16>, vector<128x32xf32> -> vector<128x32xf32>
    %178 = arith.truncf %177 : vector<128x32xf32> to vector<128x32xbf16>
    %c0_92 = arith.constant 0 : index
    %c2_93 = arith.constant 2 : index
    %c0_94 = arith.constant 0 : index
    %c0_95 = arith.constant 0 : index
    %179 = vector.load %arg14[%c0_92, %c2_93, %c0_94, %c0_95] : memref<2x5x32x32xbf16, #tpu.memory_space<vmem>>, vector<1x1x32x32xbf16>
    %180 = vector.shape_cast %179 : vector<1x1x32x32xbf16> to vector<32x32xbf16>
    %cst_96 = arith.constant dense<0.000000e+00> : vector<128x32xf32>
    %181 = tpu.matmul %178, %180, %cst_96 {dimension_numbers = #tpu.dot_dimension_numbers<[1], [0], [0], [1], [0, 0, 1, 1], [], []>} : vector<128x32xbf16>, vector<32x32xbf16>, vector<128x32xf32> -> vector<128x32xf32>
    %182 = arith.addf %176, %181 : vector<128x32xf32>
    %c1_97 = arith.constant 1 : index
    %c0_98 = arith.constant 0 : index
    %c0_99 = arith.constant 0 : index
    %183 = vector.load %arg4[%c1_97, %c0_98, %c0_99] : memref<2x128x128xbf16, #tpu.memory_space<vmem>>, vector<1x128x128xbf16>
    %184 = vector.shape_cast %183 : vector<1x128x128xbf16> to vector<128x128xbf16>
    %cst_100 = arith.constant dense<0.000000e+00> : vector<128x32xf32>
    %185 = tpu.matmul %184, %165, %cst_100 {dimension_numbers = #tpu.dot_dimension_numbers<[1], [0], [0], [1], [0, 0, 1, 1], [], []>} : vector<128x128xbf16>, vector<128x32xbf16>, vector<128x32xf32> -> vector<128x32xf32>
    %186 = arith.truncf %185 : vector<128x32xf32> to vector<128x32xbf16>
    %c0_101 = arith.constant 0 : index
    %c3_102 = arith.constant 3 : index
    %c0_103 = arith.constant 0 : index
    %c0_104 = arith.constant 0 : index
    %187 = vector.load %arg14[%c0_101, %c3_102, %c0_103, %c0_104] : memref<2x5x32x32xbf16, #tpu.memory_space<vmem>>, vector<1x1x32x32xbf16>
    %188 = vector.shape_cast %187 : vector<1x1x32x32xbf16> to vector<32x32xbf16>
    %cst_105 = arith.constant dense<0.000000e+00> : vector<128x32xf32>
    %189 = tpu.matmul %186, %188, %cst_105 {dimension_numbers = #tpu.dot_dimension_numbers<[1], [0], [0], [1], [0, 0, 1, 1], [], []>} : vector<128x32xbf16>, vector<32x32xbf16>, vector<128x32xf32> -> vector<128x32xf32>
    %190 = arith.addf %182, %189 : vector<128x32xf32>
    %cst_106 = arith.constant dense<0.000000e+00> : vector<128x32xf32>
    %191 = tpu.matmul %184, %186, %cst_106 {dimension_numbers = #tpu.dot_dimension_numbers<[1], [0], [0], [1], [0, 0, 1, 1], [], []>} : vector<128x128xbf16>, vector<128x32xbf16>, vector<128x32xf32> -> vector<128x32xf32>
    %192 = arith.truncf %191 : vector<128x32xf32> to vector<128x32xbf16>
    %c0_107 = arith.constant 0 : index
    %c4 = arith.constant 4 : index
    %c0_108 = arith.constant 0 : index
    %c0_109 = arith.constant 0 : index
    %193 = vector.load %arg14[%c0_107, %c4, %c0_108, %c0_109] : memref<2x5x32x32xbf16, #tpu.memory_space<vmem>>, vector<1x1x32x32xbf16>
    %194 = vector.shape_cast %193 : vector<1x1x32x32xbf16> to vector<32x32xbf16>
    %cst_110 = arith.constant dense<0.000000e+00> : vector<128x32xf32>
    %195 = tpu.matmul %192, %194, %cst_110 {dimension_numbers = #tpu.dot_dimension_numbers<[1], [0], [0], [1], [0, 0, 1, 1], [], []>} : vector<128x32xbf16>, vector<32x32xbf16>, vector<128x32xf32> -> vector<128x32xf32>
    %196 = arith.addf %190, %195 : vector<128x32xf32>
    %c0_111 = arith.constant 0 : index
    %c0_112 = arith.constant 0 : index
    %c0_113 = arith.constant 0 : index
    %197 = vector.load %arg15[%c0_111, %c0_112, %c0_113] : memref<2x1x32xf32, #tpu.memory_space<vmem>>, vector<1x1x32xf32>
    %198 = vector.shape_cast %197 : vector<1x1x32xf32> to vector<1x32xf32>
    %199 = vector.broadcast %198 : vector<1x32xf32> to vector<128x32xf32>
    %200 = arith.addf %196, %199 : vector<128x32xf32>
    %201 = arith.addf %200, %164 : vector<128x32xf32>
    %202 = arith.truncf %201 : vector<128x32xf32> to vector<128x32xbf16>
    %c1_114 = arith.constant 1 : index
    %c0_115 = arith.constant 0 : index
    %c0_116 = arith.constant 0 : index
    %203 = vector.load %arg5[%c1_114, %c0_115, %c0_116] : memref<2x32x96xbf16, #tpu.memory_space<vmem>>, vector<1x32x96xbf16>
    %204 = vector.shape_cast %203 : vector<1x32x96xbf16> to vector<32x96xbf16>
    %cst_117 = arith.constant dense<0.000000e+00> : vector<128x96xf32>
    %205 = tpu.matmul %202, %204, %cst_117 {dimension_numbers = #tpu.dot_dimension_numbers<[1], [0], [0], [1], [0, 0, 1, 1], [], []>} : vector<128x32xbf16>, vector<32x96xbf16>, vector<128x96xf32> -> vector<128x96xf32>
    %206 = arith.truncf %205 : vector<128x96xf32> to vector<128x96xbf16>
    %207 = vector.extract_strided_slice %206 {offsets = [0, 0], sizes = [128, 8], strides = [1, 1]} : vector<128x96xbf16> to vector<128x8xbf16>
    %208 = vector.extract_strided_slice %206 {offsets = [0, 32], sizes = [128, 8], strides = [1, 1]} : vector<128x96xbf16> to vector<128x8xbf16>
    %209 = vector.extract_strided_slice %206 {offsets = [0, 64], sizes = [128, 8], strides = [1, 1]} : vector<128x96xbf16> to vector<128x8xbf16>
    %c1_118 = arith.constant 1 : index
    %c0_119 = arith.constant 0 : index
    %c0_120 = arith.constant 0 : index
    %c0_121 = arith.constant 0 : index
    %210 = vector.load %arg6[%c1_118, %c0_119, %c0_120, %c0_121] : memref<2x4x8x32xbf16, #tpu.memory_space<vmem>>, vector<1x1x8x32xbf16>
    %211 = vector.shape_cast %210 : vector<1x1x8x32xbf16> to vector<8x32xbf16>
    %cst_122 = arith.constant dense<0.000000e+00> : vector<128x32xf32>
    %212 = tpu.matmul %209, %211, %cst_122 {dimension_numbers = #tpu.dot_dimension_numbers<[1], [0], [0], [1], [0, 0, 1, 1], [], []>} : vector<128x8xbf16>, vector<8x32xbf16>, vector<128x32xf32> -> vector<128x32xf32>
    %cst_123 = arith.constant dense<0.000000e+00> : vector<128x128xf32>
    %213 = tpu.matmul %207, %208, %cst_123 {dimension_numbers = #tpu.dot_dimension_numbers<[1], [1], [0], [0], [0, 0, 1, 0], [], []>} : vector<128x8xbf16>, vector<128x8xbf16>, vector<128x128xf32> -> vector<128x128xf32>
    %cst_124 = arith.constant 0.353553385 : f32
    %214 = vector.broadcast %cst_124 : f32 to vector<128x128xf32>
    %215 = arith.mulf %213, %214 : vector<128x128xf32>
    %216 = arith.addf %215, %3 : vector<128x128xf32>
    %cst_125 = arith.constant dense<0xFF800000> : vector<128xf32>
    %217 = vector.multi_reduction <maximumf>, %216, %cst_125 [1] : vector<128x128xf32> to vector<128xf32>
    %218 = vector.shape_cast %217 : vector<128xf32> to vector<128x1xf32>
    %219 = vector.broadcast %218 : vector<128x1xf32> to vector<128x128xf32>
    %220 = arith.subf %216, %219 : vector<128x128xf32>
    %221 = math.exp %220 : vector<128x128xf32>
    %cst_126 = arith.constant dense<0.000000e+00> : vector<128xf32>
    %222 = vector.multi_reduction <add>, %221, %cst_126 [1] : vector<128x128xf32> to vector<128xf32>
    %223 = vector.shape_cast %222 : vector<128xf32> to vector<128x1xf32>
    %224 = tpu.reciprocal %223 {approx = true} : vector<128x1xf32> -> vector<128x1xf32>
    %225 = vector.broadcast %224 : vector<128x1xf32> to vector<128x128xf32>
    %226 = arith.mulf %221, %225 : vector<128x128xf32>
    %227 = arith.truncf %226 : vector<128x128xf32> to vector<128x128xbf16>
    %228 = arith.truncf %212 : vector<128x32xf32> to vector<128x32xbf16>
    %cst_127 = arith.constant dense<0.000000e+00> : vector<128x32xf32>
    %229 = tpu.matmul %227, %228, %cst_127 {dimension_numbers = #tpu.dot_dimension_numbers<[1], [0], [0], [1], [0, 0, 1, 1], [], []>} : vector<128x128xbf16>, vector<128x32xbf16>, vector<128x32xf32> -> vector<128x32xf32>
    %230 = vector.extract_strided_slice %206 {offsets = [0, 8], sizes = [128, 8], strides = [1, 1]} : vector<128x96xbf16> to vector<128x8xbf16>
    %231 = vector.extract_strided_slice %206 {offsets = [0, 40], sizes = [128, 8], strides = [1, 1]} : vector<128x96xbf16> to vector<128x8xbf16>
    %232 = vector.extract_strided_slice %206 {offsets = [0, 72], sizes = [128, 8], strides = [1, 1]} : vector<128x96xbf16> to vector<128x8xbf16>
    %c1_128 = arith.constant 1 : index
    %c1_129 = arith.constant 1 : index
    %c0_130 = arith.constant 0 : index
    %c0_131 = arith.constant 0 : index
    %233 = vector.load %arg6[%c1_128, %c1_129, %c0_130, %c0_131] : memref<2x4x8x32xbf16, #tpu.memory_space<vmem>>, vector<1x1x8x32xbf16>
    %234 = vector.shape_cast %233 : vector<1x1x8x32xbf16> to vector<8x32xbf16>
    %cst_132 = arith.constant dense<0.000000e+00> : vector<128x32xf32>
    %235 = tpu.matmul %232, %234, %cst_132 {dimension_numbers = #tpu.dot_dimension_numbers<[1], [0], [0], [1], [0, 0, 1, 1], [], []>} : vector<128x8xbf16>, vector<8x32xbf16>, vector<128x32xf32> -> vector<128x32xf32>
    %cst_133 = arith.constant dense<0.000000e+00> : vector<128x128xf32>
    %236 = tpu.matmul %230, %231, %cst_133 {dimension_numbers = #tpu.dot_dimension_numbers<[1], [1], [0], [0], [0, 0, 1, 0], [], []>} : vector<128x8xbf16>, vector<128x8xbf16>, vector<128x128xf32> -> vector<128x128xf32>
    %cst_134 = arith.constant 0.353553385 : f32
    %237 = vector.broadcast %cst_134 : f32 to vector<128x128xf32>
    %238 = arith.mulf %236, %237 : vector<128x128xf32>
    %239 = arith.addf %238, %3 : vector<128x128xf32>
    %cst_135 = arith.constant dense<0xFF800000> : vector<128xf32>
    %240 = vector.multi_reduction <maximumf>, %239, %cst_135 [1] : vector<128x128xf32> to vector<128xf32>
    %241 = vector.shape_cast %240 : vector<128xf32> to vector<128x1xf32>
    %242 = vector.broadcast %241 : vector<128x1xf32> to vector<128x128xf32>
    %243 = arith.subf %239, %242 : vector<128x128xf32>
    %244 = math.exp %243 : vector<128x128xf32>
    %cst_136 = arith.constant dense<0.000000e+00> : vector<128xf32>
    %245 = vector.multi_reduction <add>, %244, %cst_136 [1] : vector<128x128xf32> to vector<128xf32>
    %246 = vector.shape_cast %245 : vector<128xf32> to vector<128x1xf32>
    %247 = tpu.reciprocal %246 {approx = true} : vector<128x1xf32> -> vector<128x1xf32>
    %248 = vector.broadcast %247 : vector<128x1xf32> to vector<128x128xf32>
    %249 = arith.mulf %244, %248 : vector<128x128xf32>
    %250 = arith.truncf %249 : vector<128x128xf32> to vector<128x128xbf16>
    %251 = arith.truncf %235 : vector<128x32xf32> to vector<128x32xbf16>
    %cst_137 = arith.constant dense<0.000000e+00> : vector<128x32xf32>
    %252 = tpu.matmul %250, %251, %cst_137 {dimension_numbers = #tpu.dot_dimension_numbers<[1], [0], [0], [1], [0, 0, 1, 1], [], []>} : vector<128x128xbf16>, vector<128x32xbf16>, vector<128x32xf32> -> vector<128x32xf32>
    %253 = arith.addf %229, %252 : vector<128x32xf32>
    %254 = vector.extract_strided_slice %206 {offsets = [0, 16], sizes = [128, 8], strides = [1, 1]} : vector<128x96xbf16> to vector<128x8xbf16>
    %255 = vector.extract_strided_slice %206 {offsets = [0, 48], sizes = [128, 8], strides = [1, 1]} : vector<128x96xbf16> to vector<128x8xbf16>
    %256 = vector.extract_strided_slice %206 {offsets = [0, 80], sizes = [128, 8], strides = [1, 1]} : vector<128x96xbf16> to vector<128x8xbf16>
    %c1_138 = arith.constant 1 : index
    %c2_139 = arith.constant 2 : index
    %c0_140 = arith.constant 0 : index
    %c0_141 = arith.constant 0 : index
    %257 = vector.load %arg6[%c1_138, %c2_139, %c0_140, %c0_141] : memref<2x4x8x32xbf16, #tpu.memory_space<vmem>>, vector<1x1x8x32xbf16>
    %258 = vector.shape_cast %257 : vector<1x1x8x32xbf16> to vector<8x32xbf16>
    %cst_142 = arith.constant dense<0.000000e+00> : vector<128x32xf32>
    %259 = tpu.matmul %256, %258, %cst_142 {dimension_numbers = #tpu.dot_dimension_numbers<[1], [0], [0], [1], [0, 0, 1, 1], [], []>} : vector<128x8xbf16>, vector<8x32xbf16>, vector<128x32xf32> -> vector<128x32xf32>
    %cst_143 = arith.constant dense<0.000000e+00> : vector<128x128xf32>
    %260 = tpu.matmul %254, %255, %cst_143 {dimension_numbers = #tpu.dot_dimension_numbers<[1], [1], [0], [0], [0, 0, 1, 0], [], []>} : vector<128x8xbf16>, vector<128x8xbf16>, vector<128x128xf32> -> vector<128x128xf32>
    %cst_144 = arith.constant 0.353553385 : f32
    %261 = vector.broadcast %cst_144 : f32 to vector<128x128xf32>
    %262 = arith.mulf %260, %261 : vector<128x128xf32>
    %263 = arith.addf %262, %3 : vector<128x128xf32>
    %cst_145 = arith.constant dense<0xFF800000> : vector<128xf32>
    %264 = vector.multi_reduction <maximumf>, %263, %cst_145 [1] : vector<128x128xf32> to vector<128xf32>
    %265 = vector.shape_cast %264 : vector<128xf32> to vector<128x1xf32>
    %266 = vector.broadcast %265 : vector<128x1xf32> to vector<128x128xf32>
    %267 = arith.subf %263, %266 : vector<128x128xf32>
    %268 = math.exp %267 : vector<128x128xf32>
    %cst_146 = arith.constant dense<0.000000e+00> : vector<128xf32>
    %269 = vector.multi_reduction <add>, %268, %cst_146 [1] : vector<128x128xf32> to vector<128xf32>
    %270 = vector.shape_cast %269 : vector<128xf32> to vector<128x1xf32>
    %271 = tpu.reciprocal %270 {approx = true} : vector<128x1xf32> -> vector<128x1xf32>
    %272 = vector.broadcast %271 : vector<128x1xf32> to vector<128x128xf32>
    %273 = arith.mulf %268, %272 : vector<128x128xf32>
    %274 = arith.truncf %273 : vector<128x128xf32> to vector<128x128xbf16>
    %275 = arith.truncf %259 : vector<128x32xf32> to vector<128x32xbf16>
    %cst_147 = arith.constant dense<0.000000e+00> : vector<128x32xf32>
    %276 = tpu.matmul %274, %275, %cst_147 {dimension_numbers = #tpu.dot_dimension_numbers<[1], [0], [0], [1], [0, 0, 1, 1], [], []>} : vector<128x128xbf16>, vector<128x32xbf16>, vector<128x32xf32> -> vector<128x32xf32>
    %277 = arith.addf %253, %276 : vector<128x32xf32>
    %278 = vector.extract_strided_slice %206 {offsets = [0, 24], sizes = [128, 8], strides = [1, 1]} : vector<128x96xbf16> to vector<128x8xbf16>
    %279 = vector.extract_strided_slice %206 {offsets = [0, 56], sizes = [128, 8], strides = [1, 1]} : vector<128x96xbf16> to vector<128x8xbf16>
    %280 = vector.extract_strided_slice %206 {offsets = [0, 88], sizes = [128, 8], strides = [1, 1]} : vector<128x96xbf16> to vector<128x8xbf16>
    %c1_148 = arith.constant 1 : index
    %c3_149 = arith.constant 3 : index
    %c0_150 = arith.constant 0 : index
    %c0_151 = arith.constant 0 : index
    %281 = vector.load %arg6[%c1_148, %c3_149, %c0_150, %c0_151] : memref<2x4x8x32xbf16, #tpu.memory_space<vmem>>, vector<1x1x8x32xbf16>
    %282 = vector.shape_cast %281 : vector<1x1x8x32xbf16> to vector<8x32xbf16>
    %cst_152 = arith.constant dense<0.000000e+00> : vector<128x32xf32>
    %283 = tpu.matmul %280, %282, %cst_152 {dimension_numbers = #tpu.dot_dimension_numbers<[1], [0], [0], [1], [0, 0, 1, 1], [], []>} : vector<128x8xbf16>, vector<8x32xbf16>, vector<128x32xf32> -> vector<128x32xf32>
    %cst_153 = arith.constant dense<0.000000e+00> : vector<128x128xf32>
    %284 = tpu.matmul %278, %279, %cst_153 {dimension_numbers = #tpu.dot_dimension_numbers<[1], [1], [0], [0], [0, 0, 1, 0], [], []>} : vector<128x8xbf16>, vector<128x8xbf16>, vector<128x128xf32> -> vector<128x128xf32>
    %cst_154 = arith.constant 0.353553385 : f32
    %285 = vector.broadcast %cst_154 : f32 to vector<128x128xf32>
    %286 = arith.mulf %284, %285 : vector<128x128xf32>
    %287 = arith.addf %286, %3 : vector<128x128xf32>
    %cst_155 = arith.constant dense<0xFF800000> : vector<128xf32>
    %288 = vector.multi_reduction <maximumf>, %287, %cst_155 [1] : vector<128x128xf32> to vector<128xf32>
    %289 = vector.shape_cast %288 : vector<128xf32> to vector<128x1xf32>
    %290 = vector.broadcast %289 : vector<128x1xf32> to vector<128x128xf32>
    %291 = arith.subf %287, %290 : vector<128x128xf32>
    %292 = math.exp %291 : vector<128x128xf32>
    %cst_156 = arith.constant dense<0.000000e+00> : vector<128xf32>
    %293 = vector.multi_reduction <add>, %292, %cst_156 [1] : vector<128x128xf32> to vector<128xf32>
    %294 = vector.shape_cast %293 : vector<128xf32> to vector<128x1xf32>
    %295 = tpu.reciprocal %294 {approx = true} : vector<128x1xf32> -> vector<128x1xf32>
    %296 = vector.broadcast %295 : vector<128x1xf32> to vector<128x128xf32>
    %297 = arith.mulf %292, %296 : vector<128x128xf32>
    %298 = arith.truncf %297 : vector<128x128xf32> to vector<128x128xbf16>
    %299 = arith.truncf %283 : vector<128x32xf32> to vector<128x32xbf16>
    %cst_157 = arith.constant dense<0.000000e+00> : vector<128x32xf32>
    %300 = tpu.matmul %298, %299, %cst_157 {dimension_numbers = #tpu.dot_dimension_numbers<[1], [0], [0], [1], [0, 0, 1, 1], [], []>} : vector<128x128xbf16>, vector<128x32xbf16>, vector<128x32xf32> -> vector<128x32xf32>
    %301 = arith.addf %277, %300 : vector<128x32xf32>
    %c1_158 = arith.constant 1 : index
    %c0_159 = arith.constant 0 : index
    %c0_160 = arith.constant 0 : index
    %302 = vector.load %arg7[%c1_158, %c0_159, %c0_160] : memref<2x1x32xf32, #tpu.memory_space<vmem>>, vector<1x1x32xf32>
    %303 = vector.shape_cast %302 : vector<1x1x32xf32> to vector<1x32xf32>
    %304 = vector.broadcast %303 : vector<1x32xf32> to vector<128x32xf32>
    %305 = arith.addf %301, %304 : vector<128x32xf32>
    %306 = arith.addf %305, %201 : vector<128x32xf32>
    %cst_161 = arith.constant dense<0.000000e+00> : vector<128xf32>
    %307 = vector.multi_reduction <add>, %306, %cst_161 [1] : vector<128x32xf32> to vector<128xf32>
    %308 = vector.shape_cast %307 : vector<128xf32> to vector<128x1xf32>
    %cst_162 = arith.constant 3.200000e+01 : f32
    %309 = vector.broadcast %cst_162 : f32 to vector<128x1xf32>
    %310 = arith.divf %308, %309 : vector<128x1xf32>
    %311 = vector.broadcast %310 : vector<128x1xf32> to vector<128x32xf32>
    %312 = arith.subf %306, %311 : vector<128x32xf32>
    %313 = arith.mulf %312, %312 : vector<128x32xf32>
    %cst_163 = arith.constant dense<0.000000e+00> : vector<128xf32>
    %314 = vector.multi_reduction <add>, %313, %cst_163 [1] : vector<128x32xf32> to vector<128xf32>
    %315 = vector.shape_cast %314 : vector<128xf32> to vector<128x1xf32>
    %cst_164 = arith.constant 3.200000e+01 : f32
    %316 = vector.broadcast %cst_164 : f32 to vector<128x1xf32>
    %317 = arith.divf %315, %316 : vector<128x1xf32>
    %318 = vector.broadcast %310 : vector<128x1xf32> to vector<128x32xf32>
    %319 = arith.subf %306, %318 : vector<128x32xf32>
    %cst_165 = arith.constant 9.99999974E-6 : f32
    %320 = vector.broadcast %cst_165 : f32 to vector<128x1xf32>
    %321 = arith.addf %317, %320 : vector<128x1xf32>
    %322 = math.rsqrt %321 : vector<128x1xf32>
    %323 = vector.broadcast %322 : vector<128x1xf32> to vector<128x32xf32>
    %324 = arith.mulf %319, %323 : vector<128x32xf32>
    %c1_166 = arith.constant 1 : index
    %c0_167 = arith.constant 0 : index
    %c0_168 = arith.constant 0 : index
    %325 = vector.load %arg8[%c1_166, %c0_167, %c0_168] : memref<2x1x32xf32, #tpu.memory_space<vmem>>, vector<1x1x32xf32>
    %326 = vector.shape_cast %325 : vector<1x1x32xf32> to vector<1x32xf32>
    %327 = vector.broadcast %326 : vector<1x32xf32> to vector<128x32xf32>
    %328 = arith.mulf %324, %327 : vector<128x32xf32>
    %c1_169 = arith.constant 1 : index
    %c0_170 = arith.constant 0 : index
    %c0_171 = arith.constant 0 : index
    %329 = vector.load %arg9[%c1_169, %c0_170, %c0_171] : memref<2x1x32xf32, #tpu.memory_space<vmem>>, vector<1x1x32xf32>
    %330 = vector.shape_cast %329 : vector<1x1x32xf32> to vector<1x32xf32>
    %331 = vector.broadcast %330 : vector<1x32xf32> to vector<128x32xf32>
    %332 = arith.addf %328, %331 : vector<128x32xf32>
    %333 = arith.truncf %332 : vector<128x32xf32> to vector<128x32xbf16>
    %c1_172 = arith.constant 1 : index
    %c0_173 = arith.constant 0 : index
    %c0_174 = arith.constant 0 : index
    %334 = vector.load %arg10[%c1_172, %c0_173, %c0_174] : memref<2x32x64xbf16, #tpu.memory_space<vmem>>, vector<1x32x64xbf16>
    %335 = vector.shape_cast %334 : vector<1x32x64xbf16> to vector<32x64xbf16>
    %cst_175 = arith.constant dense<0.000000e+00> : vector<128x64xf32>
    %336 = tpu.matmul %333, %335, %cst_175 {dimension_numbers = #tpu.dot_dimension_numbers<[1], [0], [0], [1], [0, 0, 1, 1], [], []>} : vector<128x32xbf16>, vector<32x64xbf16>, vector<128x64xf32> -> vector<128x64xf32>
    %c1_176 = arith.constant 1 : index
    %c0_177 = arith.constant 0 : index
    %c0_178 = arith.constant 0 : index
    %337 = vector.load %arg11[%c1_176, %c0_177, %c0_178] : memref<2x1x64xf32, #tpu.memory_space<vmem>>, vector<1x1x64xf32>
    %338 = vector.shape_cast %337 : vector<1x1x64xf32> to vector<1x64xf32>
    %339 = vector.broadcast %338 : vector<1x64xf32> to vector<128x64xf32>
    %340 = arith.addf %336, %339 : vector<128x64xf32>
    %341 = arith.mulf %340, %340 : vector<128x64xf32>
    %342 = arith.mulf %340, %341 : vector<128x64xf32>
    %cst_179 = arith.constant 4.471500e-02 : f32
    %343 = vector.broadcast %cst_179 : f32 to vector<128x64xf32>
    %344 = arith.mulf %343, %342 : vector<128x64xf32>
    %345 = arith.addf %340, %344 : vector<128x64xf32>
    %cst_180 = arith.constant 0.797884583 : f32
    %346 = vector.broadcast %cst_180 : f32 to vector<128x64xf32>
    %347 = arith.mulf %346, %345 : vector<128x64xf32>
    %348 = math.tanh %347 : vector<128x64xf32>
    %cst_181 = arith.constant 1.000000e+00 : f32
    %349 = vector.broadcast %cst_181 : f32 to vector<128x64xf32>
    %350 = arith.addf %349, %348 : vector<128x64xf32>
    %cst_182 = arith.constant 5.000000e-01 : f32
    %351 = vector.broadcast %cst_182 : f32 to vector<128x64xf32>
    %352 = arith.mulf %351, %350 : vector<128x64xf32>
    %353 = arith.mulf %340, %352 : vector<128x64xf32>
    %354 = arith.truncf %353 : vector<128x64xf32> to vector<128x64xbf16>
    %c1_183 = arith.constant 1 : index
    %c0_184 = arith.constant 0 : index
    %c0_185 = arith.constant 0 : index
    %355 = vector.load %arg12[%c1_183, %c0_184, %c0_185] : memref<2x64x32xbf16, #tpu.memory_space<vmem>>, vector<1x64x32xbf16>
    %356 = vector.shape_cast %355 : vector<1x64x32xbf16> to vector<64x32xbf16>
    %cst_186 = arith.constant dense<0.000000e+00> : vector<128x32xf32>
    %357 = tpu.matmul %354, %356, %cst_186 {dimension_numbers = #tpu.dot_dimension_numbers<[1], [0], [0], [1], [0, 0, 1, 1], [], []>} : vector<128x64xbf16>, vector<64x32xbf16>, vector<128x32xf32> -> vector<128x32xf32>
    %c1_187 = arith.constant 1 : index
    %c0_188 = arith.constant 0 : index
    %c0_189 = arith.constant 0 : index
    %358 = vector.load %arg13[%c1_187, %c0_188, %c0_189] : memref<2x1x32xf32, #tpu.memory_space<vmem>>, vector<1x1x32xf32>
    %359 = vector.shape_cast %358 : vector<1x1x32xf32> to vector<1x32xf32>
    %360 = vector.broadcast %359 : vector<1x32xf32> to vector<128x32xf32>
    %361 = arith.addf %357, %360 : vector<128x32xf32>
    %362 = arith.addf %361, %306 : vector<128x32xf32>
    %363 = arith.truncf %201 : vector<128x32xf32> to vector<128x32xbf16>
    %c1_190 = arith.constant 1 : index
    %c0_191 = arith.constant 0 : index
    %c0_192 = arith.constant 0 : index
    %c0_193 = arith.constant 0 : index
    %364 = vector.load %arg14[%c1_190, %c0_191, %c0_192, %c0_193] : memref<2x5x32x32xbf16, #tpu.memory_space<vmem>>, vector<1x1x32x32xbf16>
    %365 = vector.shape_cast %364 : vector<1x1x32x32xbf16> to vector<32x32xbf16>
    %cst_194 = arith.constant dense<0.000000e+00> : vector<128x32xf32>
    %366 = tpu.matmul %363, %365, %cst_194 {dimension_numbers = #tpu.dot_dimension_numbers<[1], [0], [0], [1], [0, 0, 1, 1], [], []>} : vector<128x32xbf16>, vector<32x32xbf16>, vector<128x32xf32> -> vector<128x32xf32>
    %c0_195 = arith.constant 0 : index
    %c0_196 = arith.constant 0 : index
    %c0_197 = arith.constant 0 : index
    %367 = vector.load %arg4[%c0_195, %c0_196, %c0_197] : memref<2x128x128xbf16, #tpu.memory_space<vmem>>, vector<1x128x128xbf16>
    %368 = vector.shape_cast %367 : vector<1x128x128xbf16> to vector<128x128xbf16>
    %cst_198 = arith.constant dense<0.000000e+00> : vector<128x32xf32>
    %369 = tpu.matmul %368, %363, %cst_198 {dimension_numbers = #tpu.dot_dimension_numbers<[1], [0], [0], [1], [0, 0, 1, 1], [], []>} : vector<128x128xbf16>, vector<128x32xbf16>, vector<128x32xf32> -> vector<128x32xf32>
    %370 = arith.truncf %369 : vector<128x32xf32> to vector<128x32xbf16>
    %c1_199 = arith.constant 1 : index
    %c1_200 = arith.constant 1 : index
    %c0_201 = arith.constant 0 : index
    %c0_202 = arith.constant 0 : index
    %371 = vector.load %arg14[%c1_199, %c1_200, %c0_201, %c0_202] : memref<2x5x32x32xbf16, #tpu.memory_space<vmem>>, vector<1x1x32x32xbf16>
    %372 = vector.shape_cast %371 : vector<1x1x32x32xbf16> to vector<32x32xbf16>
    %cst_203 = arith.constant dense<0.000000e+00> : vector<128x32xf32>
    %373 = tpu.matmul %370, %372, %cst_203 {dimension_numbers = #tpu.dot_dimension_numbers<[1], [0], [0], [1], [0, 0, 1, 1], [], []>} : vector<128x32xbf16>, vector<32x32xbf16>, vector<128x32xf32> -> vector<128x32xf32>
    %374 = arith.addf %366, %373 : vector<128x32xf32>
    %cst_204 = arith.constant dense<0.000000e+00> : vector<128x32xf32>
    %375 = tpu.matmul %368, %370, %cst_204 {dimension_numbers = #tpu.dot_dimension_numbers<[1], [0], [0], [1], [0, 0, 1, 1], [], []>} : vector<128x128xbf16>, vector<128x32xbf16>, vector<128x32xf32> -> vector<128x32xf32>
    %376 = arith.truncf %375 : vector<128x32xf32> to vector<128x32xbf16>
    %c1_205 = arith.constant 1 : index
    %c2_206 = arith.constant 2 : index
    %c0_207 = arith.constant 0 : index
    %c0_208 = arith.constant 0 : index
    %377 = vector.load %arg14[%c1_205, %c2_206, %c0_207, %c0_208] : memref<2x5x32x32xbf16, #tpu.memory_space<vmem>>, vector<1x1x32x32xbf16>
    %378 = vector.shape_cast %377 : vector<1x1x32x32xbf16> to vector<32x32xbf16>
    %cst_209 = arith.constant dense<0.000000e+00> : vector<128x32xf32>
    %379 = tpu.matmul %376, %378, %cst_209 {dimension_numbers = #tpu.dot_dimension_numbers<[1], [0], [0], [1], [0, 0, 1, 1], [], []>} : vector<128x32xbf16>, vector<32x32xbf16>, vector<128x32xf32> -> vector<128x32xf32>
    %380 = arith.addf %374, %379 : vector<128x32xf32>
    %c1_210 = arith.constant 1 : index
    %c0_211 = arith.constant 0 : index
    %c0_212 = arith.constant 0 : index
    %381 = vector.load %arg4[%c1_210, %c0_211, %c0_212] : memref<2x128x128xbf16, #tpu.memory_space<vmem>>, vector<1x128x128xbf16>
    %382 = vector.shape_cast %381 : vector<1x128x128xbf16> to vector<128x128xbf16>
    %cst_213 = arith.constant dense<0.000000e+00> : vector<128x32xf32>
    %383 = tpu.matmul %382, %363, %cst_213 {dimension_numbers = #tpu.dot_dimension_numbers<[1], [0], [0], [1], [0, 0, 1, 1], [], []>} : vector<128x128xbf16>, vector<128x32xbf16>, vector<128x32xf32> -> vector<128x32xf32>
    %384 = arith.truncf %383 : vector<128x32xf32> to vector<128x32xbf16>
    %c1_214 = arith.constant 1 : index
    %c3_215 = arith.constant 3 : index
    %c0_216 = arith.constant 0 : index
    %c0_217 = arith.constant 0 : index
    %385 = vector.load %arg14[%c1_214, %c3_215, %c0_216, %c0_217] : memref<2x5x32x32xbf16, #tpu.memory_space<vmem>>, vector<1x1x32x32xbf16>
    %386 = vector.shape_cast %385 : vector<1x1x32x32xbf16> to vector<32x32xbf16>
    %cst_218 = arith.constant dense<0.000000e+00> : vector<128x32xf32>
    %387 = tpu.matmul %384, %386, %cst_218 {dimension_numbers = #tpu.dot_dimension_numbers<[1], [0], [0], [1], [0, 0, 1, 1], [], []>} : vector<128x32xbf16>, vector<32x32xbf16>, vector<128x32xf32> -> vector<128x32xf32>
    %388 = arith.addf %380, %387 : vector<128x32xf32>
    %cst_219 = arith.constant dense<0.000000e+00> : vector<128x32xf32>
    %389 = tpu.matmul %382, %384, %cst_219 {dimension_numbers = #tpu.dot_dimension_numbers<[1], [0], [0], [1], [0, 0, 1, 1], [], []>} : vector<128x128xbf16>, vector<128x32xbf16>, vector<128x32xf32> -> vector<128x32xf32>
    %390 = arith.truncf %389 : vector<128x32xf32> to vector<128x32xbf16>
    %c1_220 = arith.constant 1 : index
    %c4_221 = arith.constant 4 : index
    %c0_222 = arith.constant 0 : index
    %c0_223 = arith.constant 0 : index
    %391 = vector.load %arg14[%c1_220, %c4_221, %c0_222, %c0_223] : memref<2x5x32x32xbf16, #tpu.memory_space<vmem>>, vector<1x1x32x32xbf16>
    %392 = vector.shape_cast %391 : vector<1x1x32x32xbf16> to vector<32x32xbf16>
    %cst_224 = arith.constant dense<0.000000e+00> : vector<128x32xf32>
    %393 = tpu.matmul %390, %392, %cst_224 {dimension_numbers = #tpu.dot_dimension_numbers<[1], [0], [0], [1], [0, 0, 1, 1], [], []>} : vector<128x32xbf16>, vector<32x32xbf16>, vector<128x32xf32> -> vector<128x32xf32>
    %394 = arith.addf %388, %393 : vector<128x32xf32>
    %c1_225 = arith.constant 1 : index
    %c0_226 = arith.constant 0 : index
    %c0_227 = arith.constant 0 : index
    %395 = vector.load %arg15[%c1_225, %c0_226, %c0_227] : memref<2x1x32xf32, #tpu.memory_space<vmem>>, vector<1x1x32xf32>
    %396 = vector.shape_cast %395 : vector<1x1x32xf32> to vector<1x32xf32>
    %397 = vector.broadcast %396 : vector<1x32xf32> to vector<128x32xf32>
    %398 = arith.addf %394, %397 : vector<128x32xf32>
    %399 = arith.addf %398, %362 : vector<128x32xf32>
    %c0_228 = arith.constant 0 : index
    %c0_229 = arith.constant 0 : index
    %400 = vector.load %arg16[%c0_228, %c0_229] : memref<128x32xf32, #tpu.memory_space<vmem>>, vector<128x32xf32>
    tpu.vector_store %arg16[%c0_228, %c0_229], %399 {strides = array<i32>} : memref<128x32xf32, #tpu.memory_space<vmem>>, vector<128x32xf32>,
    return
  }
  func.func @transform_0(%arg0: i32) -> (i32, i32) {
    %c0_i32 = arith.constant 0 : i32
    %c0_i32_0 = arith.constant 0 : i32
    return %arg0, %c0_i32 : i32, i32
  }
  func.func @transform_1(%arg0: i32) -> (i32, i32) {
    %c0_i32 = arith.constant 0 : i32
    %c0_i32_0 = arith.constant 0 : i32
    %c0_i32_1 = arith.constant 0 : i32
    return %c0_i32, %c0_i32_0 : i32, i32
  }
  func.func @transform_2(%arg0: i32) -> (i32, i32) {
    %c0_i32 = arith.constant 0 : i32
    %c0_i32_0 = arith.constant 0 : i32
    %c0_i32_1 = arith.constant 0 : i32
    return %c0_i32, %c0_i32_0 : i32, i32
  }
  func.func @transform_3(%arg0: i32) -> (i32, i32, i32) {
    %c0_i32 = arith.constant 0 : i32
    %c0_i32_0 = arith.constant 0 : i32
    %c0_i32_1 = arith.constant 0 : i32
    %c0_i32_2 = arith.constant 0 : i32
    return %c0_i32, %c0_i32_0, %c0_i32_1 : i32, i32, i32
  }
  func.func @transform_4(%arg0: i32) -> (i32, i32, i32) {
    %c0_i32 = arith.constant 0 : i32
    %c0_i32_0 = arith.constant 0 : i32
    %c0_i32_1 = arith.constant 0 : i32
    %c0_i32_2 = arith.constant 0 : i32
    return %c0_i32, %c0_i32_0, %c0_i32_1 : i32, i32, i32
  }
  func.func @transform_5(%arg0: i32) -> (i32, i32, i32, i32) {
    %c0_i32 = arith.constant 0 : i32
    %c0_i32_0 = arith.constant 0 : i32
    %c0_i32_1 = arith.constant 0 : i32
    %c0_i32_2 = arith.constant 0 : i32
    %c0_i32_3 = arith.constant 0 : i32
    return %c0_i32, %c0_i32_0, %c0_i32_1, %c0_i32_2 : i32, i32, i32, i32
  }
  func.func @transform_6(%arg0: i32) -> (i32, i32, i32) {
    %c0_i32 = arith.constant 0 : i32
    %c0_i32_0 = arith.constant 0 : i32
    %c0_i32_1 = arith.constant 0 : i32
    %c0_i32_2 = arith.constant 0 : i32
    return %c0_i32, %c0_i32_0, %c0_i32_1 : i32, i32, i32
  }
  func.func @transform_7(%arg0: i32) -> (i32, i32, i32) {
    %c0_i32 = arith.constant 0 : i32
    %c0_i32_0 = arith.constant 0 : i32
    %c0_i32_1 = arith.constant 0 : i32
    %c0_i32_2 = arith.constant 0 : i32
    return %c0_i32, %c0_i32_0, %c0_i32_1 : i32, i32, i32
  }
  func.func @transform_8(%arg0: i32) -> (i32, i32, i32) {
    %c0_i32 = arith.constant 0 : i32
    %c0_i32_0 = arith.constant 0 : i32
    %c0_i32_1 = arith.constant 0 : i32
    %c0_i32_2 = arith.constant 0 : i32
    return %c0_i32, %c0_i32_0, %c0_i32_1 : i32, i32, i32
  }
  func.func @transform_9(%arg0: i32) -> (i32, i32, i32) {
    %c0_i32 = arith.constant 0 : i32
    %c0_i32_0 = arith.constant 0 : i32
    %c0_i32_1 = arith.constant 0 : i32
    %c0_i32_2 = arith.constant 0 : i32
    return %c0_i32, %c0_i32_0, %c0_i32_1 : i32, i32, i32
  }
  func.func @transform_10(%arg0: i32) -> (i32, i32, i32) {
    %c0_i32 = arith.constant 0 : i32
    %c0_i32_0 = arith.constant 0 : i32
    %c0_i32_1 = arith.constant 0 : i32
    %c0_i32_2 = arith.constant 0 : i32
    return %c0_i32, %c0_i32_0, %c0_i32_1 : i32, i32, i32
  }
  func.func @transform_11(%arg0: i32) -> (i32, i32, i32) {
    %c0_i32 = arith.constant 0 : i32
    %c0_i32_0 = arith.constant 0 : i32
    %c0_i32_1 = arith.constant 0 : i32
    %c0_i32_2 = arith.constant 0 : i32
    return %c0_i32, %c0_i32_0, %c0_i32_1 : i32, i32, i32
  }
  func.func @transform_12(%arg0: i32) -> (i32, i32, i32) {
    %c0_i32 = arith.constant 0 : i32
    %c0_i32_0 = arith.constant 0 : i32
    %c0_i32_1 = arith.constant 0 : i32
    %c0_i32_2 = arith.constant 0 : i32
    return %c0_i32, %c0_i32_0, %c0_i32_1 : i32, i32, i32
  }
  func.func @transform_13(%arg0: i32) -> (i32, i32, i32, i32) {
    %c0_i32 = arith.constant 0 : i32
    %c0_i32_0 = arith.constant 0 : i32
    %c0_i32_1 = arith.constant 0 : i32
    %c0_i32_2 = arith.constant 0 : i32
    %c0_i32_3 = arith.constant 0 : i32
    return %c0_i32, %c0_i32_0, %c0_i32_1, %c0_i32_2 : i32, i32, i32, i32
  }
  func.func @transform_14(%arg0: i32) -> (i32, i32, i32) {
    %c0_i32 = arith.constant 0 : i32
    %c0_i32_0 = arith.constant 0 : i32
    %c0_i32_1 = arith.constant 0 : i32
    %c0_i32_2 = arith.constant 0 : i32
    return %c0_i32, %c0_i32_0, %c0_i32_1 : i32, i32, i32
  }
  func.func @transform_15(%arg0: i32) -> (i32, i32) {
    %c0_i32 = arith.constant 0 : i32
    %c0_i32_0 = arith.constant 0 : i32
    return %arg0, %c0_i32 : i32, i32
  }
}

</mosaic_0001>

<llo_original>
// kernel: tpu_custom_call.1
$region0: #{tpu_custom_call.1}
  #allocation0 [shape = 'u32[]', space=smem, size = 0x4, offset = 0x4, fixed_abs, tag = 'smem constant byte address 0x4 - core index']
  #allocation1 [shape = 'u32[144,128]{1,0:T(1,128)}', space=vmem, size = 0x12000, scoped, tag = 'internal scratch']
  %s0 = inlined_call_operand.vmem [shape: f32[128,32], index: 0, kind: input, shape index: {}]
  %s1 = inlined_call_operand.vmem [shape: f32[128,32], index: 1, kind: input, shape index: {}]
  %s2 = inlined_call_operand.vmem [shape: f32[128,128], index: 2, kind: input, shape index: {}]
  %s3 = inlined_call_operand.vmem [shape: bf16[2,128,128], index: 3, kind: input, shape index: {}]
  %s4 = inlined_call_operand.hbm [shape: bf16[2,32,96], index: 4, kind: input, shape index: {}]
  %s5 = inlined_call_operand.hbm [shape: bf16[2,4,8,32], index: 5, kind: input, shape index: {}]
  %s6 = inlined_call_operand.vmem [shape: f32[2,1,32], index: 6, kind: input, shape index: {}]
  %s7 = inlined_call_operand.vmem [shape: f32[2,1,32], index: 7, kind: input, shape index: {}]
  %s8 = inlined_call_operand.vmem [shape: f32[2,1,32], index: 8, kind: input, shape index: {}]
  %s9 = inlined_call_operand.hbm [shape: bf16[2,32,64], index: 9, kind: input, shape index: {}]
  %s10 = inlined_call_operand.vmem [shape: f32[2,1,64], index: 10, kind: input, shape index: {}]
  %s11 = inlined_call_operand.vmem [shape: bf16[2,64,32], index: 11, kind: input, shape index: {}]
  %s12 = inlined_call_operand.vmem [shape: f32[2,1,32], index: 12, kind: input, shape index: {}]
  %s13 = inlined_call_operand.vmem [shape: bf16[2,5,32,32], index: 13, kind: input, shape index: {}]
  %s14 = inlined_call_operand.vmem [shape: f32[2,1,32], index: 14, kind: input, shape index: {}]
  %s15 = inlined_call_operand.vmem [shape: f32[128,32], index: 15, kind: output, shape index: {}]
  %s16 = sld [smem:[#allocation0]]
  $region82: #{tpu_custom_call.1} parent=0
    _
  %s18 = ssub.s32 1, %s16
  %s19 = scalar_select 0, %s18, %s16
  $region1: #{tpu_custom_call.1} parent=0
    #allocation2 [shape = 'u8[16384]{0}', space=vmem, size = 0x4000, scoped, tag = 'input window, operand 4, single buffered']
    #allocation3 [shape = 's32[1]{0}', space=sflag, size = 0x4, scoped, tag = 'scoped memory for tpu_custom_call.1']
    #allocation4 [shape = 'u8[16384]{0}', space=vmem, size = 0x4000, scoped, tag = 'input window, operand 5, single buffered']
    #allocation5 [shape = 's32[1]{0}', space=sflag, size = 0x4, scoped, tag = 'scoped memory for tpu_custom_call.1']
    #allocation6 [shape = 'u8[16384]{0}', space=vmem, size = 0x4000, scoped, tag = 'input window, operand 9, single buffered']
    %20 = vsyncpa [#allocation3], 0
    %21 = vsyncpa [#allocation5], 0
    // Predicated region
    $region2: #{tpu_custom_call.1} parent=1 // pred_check
      _
    $region3: #{tpu_custom_call.1} parent=1 // pred_check_branch
      %23 = sbr.rel (0) target = $region5
    $region4: #{tpu_custom_call.1} parent=1 // pred_region
      _
    $region5: #{tpu_custom_call.1} parent=1 // pred_fallthru
      _
    // Predicated region
    $region6: #{tpu_custom_call.1} parent=1 // pred_check
      _
    $region7: #{tpu_custom_call.1} parent=1 // pred_check_branch
      %25 = sbr.rel (0) target = $region9
    $region8: #{tpu_custom_call.1} parent=1 // pred_region
      _
    $region9: #{tpu_custom_call.1} parent=1 // pred_fallthru
      _
    // Predicated region
    $region10: #{tpu_custom_call.1} parent=1 // pred_check
      _
    $region11: #{tpu_custom_call.1} parent=1 // pred_check_branch
      %27 = sbr.rel (0) target = $region13
    $region12: #{tpu_custom_call.1} parent=1 // pred_region
      _
    $region13: #{tpu_custom_call.1} parent=1 // pred_fallthru
      _
    // Predicated region
    $region14: #{tpu_custom_call.1} parent=1 // pred_check
      _
    $region15: #{tpu_custom_call.1} parent=1 // pred_check_branch
      %29 = sbr.rel (0) target = $region17
    $region16: #{tpu_custom_call.1} parent=1 // pred_region
      _
    $region17: #{tpu_custom_call.1} parent=1 // pred_fallthru
      _
    // Predicated region
    $region18: #{tpu_custom_call.1} parent=1 // pred_check
      _
    $region19: #{tpu_custom_call.1} parent=1 // pred_check_branch
      %31 = sbr.rel (0) target = $region21
    $region20: #{tpu_custom_call.1} parent=1 // pred_region
      %s33 = ssub.s32 512, 512
      %34 = vsyncadd [#allocation3], %s33
      %s35 = sshll.u32 [#allocation2], 4
      %s36 = int_to_ptr.vmem [resolvable:$true] %s35
      %41 = dma.hbm_to_vmem [thread:$0]  %s4, 512, %s36, [#allocation3], 64, 64, 4
    $region21: #{tpu_custom_call.1} parent=1 // pred_fallthru
      _
    // Predicated region
    $region22: #{tpu_custom_call.1} parent=1 // pred_check
      _
    $region23: #{tpu_custom_call.1} parent=1 // pred_check_branch
      %43 = sbr.rel (0) target = $region25
    $region24: #{tpu_custom_call.1} parent=1 // pred_region
      %s45 = ssub.s32 512, 512
      %46 = vsyncadd [#allocation5], %s45
      %s47 = sshll.u32 [#allocation4], 4
      %s48 = int_to_ptr.vmem [resolvable:$true] %s47
      %53 = dma.hbm_to_vmem [thread:$0]  %s5, 512, %s48, [#allocation5], 64, 64, 4
    $region25: #{tpu_custom_call.1} parent=1 // pred_fallthru
      _
    // Predicated region
    $region26: #{tpu_custom_call.1} parent=1 // pred_check
      _
    $region27: #{tpu_custom_call.1} parent=1 // pred_check_branch
      %55 = sbr.rel (0) target = $region29
    $region28: #{tpu_custom_call.1} parent=1 // pred_region
      _
    $region29: #{tpu_custom_call.1} parent=1 // pred_fallthru
      _
    // Predicated region
    $region30: #{tpu_custom_call.1} parent=1 // pred_check
      _
    $region31: #{tpu_custom_call.1} parent=1 // pred_check_branch
      %57 = sbr.rel (0) target = $region33
    $region32: #{tpu_custom_call.1} parent=1 // pred_region
      _
    $region33: #{tpu_custom_call.1} parent=1 // pred_fallthru
      _
    // Predicated region
    $region34: #{tpu_custom_call.1} parent=1 // pred_check
      _
    $region35: #{tpu_custom_call.1} parent=1 // pred_check_branch
      %59 = sbr.rel (0) target = $region37
    $region36: #{tpu_custom_call.1} parent=1 // pred_region
      _
    $region37: #{tpu_custom_call.1} parent=1 // pred_fallthru
      _
    // Predicated region
    $region38: #{tpu_custom_call.1} parent=1 // pred_check
      _
    $region39: #{tpu_custom_call.1} parent=1 // pred_check_branch
      %61 = sbr.rel (0) target = $region41
    $region40: #{tpu_custom_call.1} parent=1 // pred_region
      %s63 = ssub.s32 512, 512
      %64 = vsyncadd [#allocation5], %s63
      %s65 = sshll.u32 [#allocation6], 4
      %s66 = int_to_ptr.vmem [resolvable:$true] %s65
      %71 = dma.hbm_to_vmem [thread:$0]  %s9, 512, %s66, [#allocation5], 64, 64, 4
    $region41: #{tpu_custom_call.1} parent=1 // pred_fallthru
      _
    // Predicated region
    $region42: #{tpu_custom_call.1} parent=1 // pred_check
      _
    $region43: #{tpu_custom_call.1} parent=1 // pred_check_branch
      %73 = sbr.rel (0) target = $region45
    $region44: #{tpu_custom_call.1} parent=1 // pred_region
      _
    $region45: #{tpu_custom_call.1} parent=1 // pred_fallthru
      _
    // Predicated region
    $region46: #{tpu_custom_call.1} parent=1 // pred_check
      _
    $region47: #{tpu_custom_call.1} parent=1 // pred_check_branch
      %75 = sbr.rel (0) target = $region49
    $region48: #{tpu_custom_call.1} parent=1 // pred_region
      _
    $region49: #{tpu_custom_call.1} parent=1 // pred_fallthru
      _
    // Predicated region
    $region50: #{tpu_custom_call.1} parent=1 // pred_check
      _
    $region51: #{tpu_custom_call.1} parent=1 // pred_check_branch
      %77 = sbr.rel (0) target = $region53
    $region52: #{tpu_custom_call.1} parent=1 // pred_region
      _
    $region53: #{tpu_custom_call.1} parent=1 // pred_fallthru
      _
    // Predicated region
    $region54: #{tpu_custom_call.1} parent=1 // pred_check
      _
    $region55: #{tpu_custom_call.1} parent=1 // pred_check_branch
      %79 = sbr.rel (0) target = $region57
    $region56: #{tpu_custom_call.1} parent=1 // pred_region
      _
    $region57: #{tpu_custom_call.1} parent=1 // pred_fallthru
      _
    // Predicated region
    $region58: #{tpu_custom_call.1} parent=1 // pred_check
      _
    $region59: #{tpu_custom_call.1} parent=1 // pred_check_branch
      %81 = sbr.rel (0) target = $region61
    $region60: #{tpu_custom_call.1} parent=1 // pred_region
      _
    $region61: #{tpu_custom_call.1} parent=1 // pred_fallthru
      _
    // Predicated region
    $region62: #{tpu_custom_call.1} parent=1 // pred_check
      _
    $region63: #{tpu_custom_call.1} parent=1 // pred_check_branch
      %83 = sbr.rel (0) target = $region65
    $region64: #{tpu_custom_call.1} parent=1 // pred_region
      %84 = dma.done [#allocation3], 512
    $region65: #{tpu_custom_call.1} parent=1 // pred_fallthru
      _
    // Predicated region
    $region66: #{tpu_custom_call.1} parent=1 // pred_check
      _
    $region67: #{tpu_custom_call.1} parent=1 // pred_check_branch
      %86 = sbr.rel (0) target = $region69
    $region68: #{tpu_custom_call.1} parent=1 // pred_region
      %87 = dma.done [#allocation5], 512
    $region69: #{tpu_custom_call.1} parent=1 // pred_fallthru
      _
    // Predicated region
    $region70: #{tpu_custom_call.1} parent=1 // pred_check
      _
    $region71: #{tpu_custom_call.1} parent=1 // pred_check_branch
      %89 = sbr.rel (0) target = $region73
    $region72: #{tpu_custom_call.1} parent=1 // pred_region
      %90 = dma.done [#allocation5], 512
    $region73: #{tpu_custom_call.1} parent=1 // pred_fallthru
      _
    %v92 = vld [vmem:[%s0] sm:$0xff]
    %v93 = vld [vmem:[%s0 + $0x8] sm:$0xff]
    %v94 = vld [vmem:[%s0 + $0x10] sm:$0xff]
    %v95 = vld [vmem:[%s0 + $0x18] sm:$0xff]
    %v96 = vld [vmem:[%s0 + $0x20] sm:$0xff]
    %v97 = vld [vmem:[%s0 + $0x28] sm:$0xff]
    %v98 = vld [vmem:[%s0 + $0x30] sm:$0xff]
    %v99 = vld [vmem:[%s0 + $0x38] sm:$0xff]
    %v100 = vld [vmem:[%s0 + $0x40] sm:$0xff]
    %v101 = vld [vmem:[%s0 + $0x48] sm:$0xff]
    %v102 = vld [vmem:[%s0 + $0x50] sm:$0xff]
    %v103 = vld [vmem:[%s0 + $0x58] sm:$0xff]
    %v104 = vld [vmem:[%s0 + $0x60] sm:$0xff]
    %v105 = vld [vmem:[%s0 + $0x68] sm:$0xff]
    %v106 = vld [vmem:[%s0 + $0x70] sm:$0xff]
    %v107 = vld [vmem:[%s0 + $0x78] sm:$0xff]
    %v108 = vld [vmem:[%s1] sm:$0xff]
    %v109 = vld [vmem:[%s1 + $0x8] sm:$0xff]
    %v110 = vld [vmem:[%s1 + $0x10] sm:$0xff]
    %v111 = vld [vmem:[%s1 + $0x18] sm:$0xff]
    %v112 = vld [vmem:[%s1 + $0x20] sm:$0xff]
    %v113 = vld [vmem:[%s1 + $0x28] sm:$0xff]
    %v114 = vld [vmem:[%s1 + $0x30] sm:$0xff]
    %v115 = vld [vmem:[%s1 + $0x38] sm:$0xff]
    %v116 = vld [vmem:[%s1 + $0x40] sm:$0xff]
    %v117 = vld [vmem:[%s1 + $0x48] sm:$0xff]
    %v118 = vld [vmem:[%s1 + $0x50] sm:$0xff]
    %v119 = vld [vmem:[%s1 + $0x58] sm:$0xff]
    %v120 = vld [vmem:[%s1 + $0x60] sm:$0xff]
    %v121 = vld [vmem:[%s1 + $0x68] sm:$0xff]
    %v122 = vld [vmem:[%s1 + $0x70] sm:$0xff]
    %v123 = vld [vmem:[%s1 + $0x78] sm:$0xff]
    %v124 = vadd.f32 %v92, %v108
    %v125 = vadd.f32 %v93, %v109
    %v126 = vadd.f32 %v94, %v110
    %v127 = vadd.f32 %v95, %v111
    %v128 = vadd.f32 %v96, %v112
    %v129 = vadd.f32 %v97, %v113
    %v130 = vadd.f32 %v98, %v114
    %v131 = vadd.f32 %v99, %v115
    %v132 = vadd.f32 %v100, %v116
    %v133 = vadd.f32 %v101, %v117
    %v134 = vadd.f32 %v102, %v118
    %v135 = vadd.f32 %v103, %v119
    %v136 = vadd.f32 %v104, %v120
    %v137 = vadd.f32 %v105, %v121
    %v138 = vadd.f32 %v106, %v122
    %v139 = vadd.f32 %v107, %v123
    %v140 = vld [vmem:[%s2] sm:$0xff]
    %v141 = vld [vmem:[%s2 + $0x8] sm:$0xff]
    %v142 = vld [vmem:[%s2 + $0x10] sm:$0xff]
    %v143 = vld [vmem:[%s2 + $0x18] sm:$0xff]
    %v144 = vld [vmem:[%s2 + $0x20] sm:$0xff]
    %v145 = vld [vmem:[%s2 + $0x28] sm:$0xff]
    %v146 = vld [vmem:[%s2 + $0x30] sm:$0xff]
    %v147 = vld [vmem:[%s2 + $0x38] sm:$0xff]
    %v148 = vld [vmem:[%s2 + $0x40] sm:$0xff]
    %v149 = vld [vmem:[%s2 + $0x48] sm:$0xff]
    %v150 = vld [vmem:[%s2 + $0x50] sm:$0xff]
    %v151 = vld [vmem:[%s2 + $0x58] sm:$0xff]
    %v152 = vld [vmem:[%s2 + $0x60] sm:$0xff]
    %v153 = vld [vmem:[%s2 + $0x68] sm:$0xff]
    %v154 = vld [vmem:[%s2 + $0x70] sm:$0xff]
    %v155 = vld [vmem:[%s2 + $0x78] sm:$0xff]
    %v156 = vpack.c.bf16 %v125, %v124
    %v157 = vpack.c.bf16 %v127, %v126
    %v158 = vpack.c.bf16 %v129, %v128
    %v159 = vpack.c.bf16 %v131, %v130
    %v160 = vpack.c.bf16 %v133, %v132
    %v161 = vpack.c.bf16 %v135, %v134
    %v162 = vpack.c.bf16 %v137, %v136
    %v163 = vpack.c.bf16 %v139, %v138
    %v164 = vld [vmem:[#allocation2] sm:$0xf]
    %v165 = vld [vmem:[#allocation2 + $0x4] sm:$0xf]
    %v166 = vld [vmem:[#allocation2 + $0x8] sm:$0xf]
    %v167 = vld [vmem:[#allocation2 + $0xc] sm:$0xf]
    %v172 = vunpack.c.l.b16 %v164
    %v173 = vunpack.c.l.b16 %v165
    %v174 = vunpack.c.l.b16 %v166
    %v175 = vunpack.c.l.b16 %v167
    %v176 = vpack.c.b16 %v173, %v172
    %v177 = vpack.c.b16 %v175, %v174
    %vm180 = vcmask 261120
    %v182 = vsel %vm180, %v156, 0
    %v185 = vsel %vm180, %v157, 0
    %v188 = vsel %vm180, %v158, 0
    %v191 = vsel %vm180, %v159, 0
    %v194 = vsel %vm180, %v160, 0
    %v197 = vsel %vm180, %v161, 0
    %v200 = vsel %vm180, %v162, 0
    %v203 = vsel %vm180, %v163, 0
    %205 = vmatprep.subr.bf16.mxu0 0
    %206 = vmatpush1.bf16.msra.mxu0 %v176
    %207 = vmatprep.subr.bf16.mxu0 0
    %208 = vmatpush1.bf16.msra.mxu0 %v177
    %209 = vmatprep.subr.bf16.mxu0 0
    %210 = vmatpush1.bf16.msra.mxu0 0
    %211 = vmatprep.subr.bf16.mxu0 0
    %212 = vmatpush1.bf16.msra.mxu0 0
    %213 = vmatprep.subr.bf16.mxu0 0
    %214 = vmatpush1.bf16.msra.mxu0 0
    %215 = vmatprep.subr.bf16.mxu0 0
    %216 = vmatpush1.bf16.msra.mxu0 0
    %217 = vmatprep.subr.bf16.mxu0 0
    %218 = vmatpush1.bf16.msra.mxu0 0
    %219 = vmatprep.subr.bf16.mxu0 0
    %220 = vmatpush1.bf16.msra.mxu0 0
    %221 = vmatprep.subr.bf16.mxu0 0
    %222 = vmatpush1.bf16.msra.mxu0 0
    %223 = vmatprep.subr.bf16.mxu0 0
    %224 = vmatpush1.bf16.msra.mxu0 0
    %225 = vmatprep.subr.bf16.mxu0 0
    %226 = vmatpush1.bf16.msra.mxu0 0
    %227 = vmatprep.subr.bf16.mxu0 0
    %228 = vmatpush1.bf16.msra.mxu0 0
    %229 = vmatprep.subr.bf16.mxu0 0
    %230 = vmatpush1.bf16.msra.mxu0 0
    %231 = vmatprep.subr.bf16.mxu0 0
    %232 = vmatpush1.bf16.msra.mxu0 0
    %233 = vmatprep.subr.bf16.mxu0 0
    %234 = vmatpush1.bf16.msra.mxu0 0
    %235 = vmatprep.subr.bf16.mxu0 0
    %236 = vmatpush1.bf16.msra.mxu0 0
    %237 = vmatprep.mubr.bf16.mxu0 0
    %238 = vmatmul.mubr.bf16.gmra.mrb[0].mxu0 %v182
    %v239 = vpop.f32.mrb[0].mxu0
    %v240 = vadd.f32 0.0, %v239
    %v241 = vpop.f32.mrb[0].mxu0
    %v242 = vpop.f32.mrb[0].mxu0
    %v243 = vadd.f32 0.0, %v242
    %v244 = vpop.f32.mrb[0].mxu0
    %245 = vmatprep.mubr.bf16.mxu0 0
    %246 = vmatmul.mubr.bf16.gmra.mrb[0].mxu0 %v185
    %v247 = vpop.f32.mrb[0].mxu0
    %v248 = vadd.f32 0.0, %v247
    %v249 = vpop.f32.mrb[0].mxu0
    %v250 = vpop.f32.mrb[0].mxu0
    %v251 = vadd.f32 0.0, %v250
    %v252 = vpop.f32.mrb[0].mxu0
    %253 = vmatprep.mubr.bf16.mxu0 0
    %254 = vmatmul.mubr.bf16.gmra.mrb[0].mxu0 %v188
    %v255 = vpop.f32.mrb[0].mxu0
    %v256 = vadd.f32 0.0, %v255
    %v257 = vpop.f32.mrb[0].mxu0
    %v258 = vpop.f32.mrb[0].mxu0
    %v259 = vadd.f32 0.0, %v258
    %v260 = vpop.f32.mrb[0].mxu0
    %261 = vmatprep.mubr.bf16.mxu0 0
    %262 = vmatmul.mubr.bf16.gmra.mrb[0].mxu0 %v191
    %v263 = vpop.f32.mrb[0].mxu0
    %v264 = vadd.f32 0.0, %v263
    %v265 = vpop.f32.mrb[0].mxu0
    %v266 = vpop.f32.mrb[0].mxu0
    %v267 = vadd.f32 0.0, %v266
    %v268 = vpop.f32.mrb[0].mxu0
    %269 = vmatprep.mubr.bf16.mxu0 0
    %270 = vmatmul.mubr.bf16.gmra.mrb[0].mxu0 %v194
    %v271 = vpop.f32.mrb[0].mxu0
    %v272 = vadd.f32 0.0, %v271
    %v273 = vpop.f32.mrb[0].mxu0
    %v274 = vpop.f32.mrb[0].mxu0
    %v275 = vadd.f32 0.0, %v274
    %v276 = vpop.f32.mrb[0].mxu0
    %277 = vmatprep.mubr.bf16.mxu0 0
    %278 = vmatmul.mubr.bf16.gmra.mrb[0].mxu0 %v197
    %v279 = vpop.f32.mrb[0].mxu0
    %v280 = vadd.f32 0.0, %v279
    %v281 = vpop.f32.mrb[0].mxu0
    %v282 = vpop.f32.mrb[0].mxu0
    %v283 = vadd.f32 0.0, %v282
    %v284 = vpop.f32.mrb[0].mxu0
    %285 = vmatprep.mubr.bf16.mxu0 0
    %286 = vmatmul.mubr.bf16.gmra.mrb[0].mxu0 %v200
    %v287 = vpop.f32.mrb[0].mxu0
    %v288 = vadd.f32 0.0, %v287
    %v289 = vpop.f32.mrb[0].mxu0
    %v290 = vpop.f32.mrb[0].mxu0
    %v291 = vadd.f32 0.0, %v290
    %v292 = vpop.f32.mrb[0].mxu0
    %293 = vmatprep.mubr.bf16.mxu0 0
    %294 = vmatmul.mubr.bf16.gmra.mrb[0].mxu0 %v203
    %v295 = vpop.f32.mrb[0].mxu0
    %v296 = vadd.f32 0.0, %v295
    %v297 = vpop.f32.mrb[0].mxu0
    %v298 = vpop.f32.mrb[0].mxu0
    %v299 = vadd.f32 0.0, %v298
    %v300 = vpop.f32.mrb[0].mxu0
    %301 = vdwg.mxu0
    %v302 = vpack.c.bf16 %v243, %v240
    %v303 = vpack.c.bf16 %v251, %v248
    %v304 = vpack.c.bf16 %v259, %v256
    %v305 = vpack.c.bf16 %v267, %v264
    %v306 = vpack.c.bf16 %v275, %v272
    %v307 = vpack.c.bf16 %v283, %v280
    %v308 = vpack.c.bf16 %v291, %v288
    %v309 = vpack.c.bf16 %v299, %v296
    %v310 = vld [vmem:[#allocation4] sm:$0xf]
    %319 = vrot.lane.b32.xlu0 %v302, 64
    %v320 = vpop.permute.xlu0 %319
    %321 = vrot.lane.b32.xlu0 %v303, 64
    %v322 = vpop.permute.xlu0 %321
    %323 = vrot.lane.b32.xlu0 %v304, 64
    %v324 = vpop.permute.xlu0 %323
    %325 = vrot.lane.b32.xlu0 %v305, 64
    %v326 = vpop.permute.xlu0 %325
    %327 = vrot.lane.b32.xlu0 %v306, 64
    %v328 = vpop.permute.xlu0 %327
    %329 = vrot.lane.b32.xlu0 %v307, 64
    %v330 = vpop.permute.xlu0 %329
    %331 = vrot.lane.b32.xlu0 %v308, 64
    %v332 = vpop.permute.xlu0 %331
    %333 = vrot.lane.b32.xlu0 %v309, 64
    %v334 = vpop.permute.xlu0 %333
    %vm335 = vcmask 64512
    %v337 = vsel %vm335, %v320, 0
    %v340 = vsel %vm335, %v322, 0
    %v343 = vsel %vm335, %v324, 0
    %v346 = vsel %vm335, %v326, 0
    %v349 = vsel %vm335, %v328, 0
    %v352 = vsel %vm335, %v330, 0
    %v355 = vsel %vm335, %v332, 0
    %v358 = vsel %vm335, %v334, 0
    %vm360 = vcmask 1043456
    %v362 = vsel %vm360, %v310, 0
    %364 = vmatprep.subr.bf16.mxu0 0
    %365 = vmatpush1.bf16.msra.mxu0 %v362
    %366 = vmatprep.subr.bf16.mxu0 0
    %367 = vmatpush1.bf16.msra.mxu0 0
    %368 = vmatprep.subr.bf16.mxu0 0
    %369 = vmatpush1.bf16.msra.mxu0 0
    %370 = vmatprep.subr.bf16.mxu0 0
    %371 = vmatpush1.bf16.msra.mxu0 0
    %372 = vmatprep.subr.bf16.mxu0 0
    %373 = vmatpush1.bf16.msra.mxu0 0
    %374 = vmatprep.subr.bf16.mxu0 0
    %375 = vmatpush1.bf16.msra.mxu0 0
    %376 = vmatprep.subr.bf16.mxu0 0
    %377 = vmatpush1.bf16.msra.mxu0 0
    %378 = vmatprep.subr.bf16.mxu0 0
    %379 = vmatpush1.bf16.msra.mxu0 0
    %380 = vmatprep.subr.bf16.mxu0 0
    %381 = vmatpush1.bf16.msra.mxu0 0
    %382 = vmatprep.subr.bf16.mxu0 0
    %383 = vmatpush1.bf16.msra.mxu0 0
    %384 = vmatprep.subr.bf16.mxu0 0
    %385 = vmatpush1.bf16.msra.mxu0 0
    %386 = vmatprep.subr.bf16.mxu0 0
    %387 = vmatpush1.bf16.msra.mxu0 0
    %388 = vmatprep.subr.bf16.mxu0 0
    %389 = vmatpush1.bf16.msra.mxu0 0
    %390 = vmatprep.subr.bf16.mxu0 0
    %391 = vmatpush1.bf16.msra.mxu0 0
    %392 = vmatprep.subr.bf16.mxu0 0
    %393 = vmatpush1.bf16.msra.mxu0 0
    %394 = vmatprep.subr.bf16.mxu0 0
    %395 = vmatpush1.bf16.msra.mxu0 0
    %396 = vmatprep.mubr.bf16.mxu0 0
    %397 = vmatmul.mubr.bf16.gmra.mrb[0].mxu0 %v337
    %v398 = vpop.f32.mrb[0].mxu0
    %v399 = vadd.f32 0.0, %v398
    %v400 = vpop.f32.mrb[0].mxu0
    %v401 = vpop.f32.mrb[0].mxu0
    %v402 = vadd.f32 0.0, %v401
    %v403 = vpop.f32.mrb[0].mxu0
    %404 = vmatprep.mubr.bf16.mxu0 0
    %405 = vmatmul.mubr.bf16.gmra.mrb[0].mxu0 %v340
    %v406 = vpop.f32.mrb[0].mxu0
    %v407 = vadd.f32 0.0, %v406
    %v408 = vpop.f32.mrb[0].mxu0
    %v409 = vpop.f32.mrb[0].mxu0
    %v410 = vadd.f32 0.0, %v409
    %v411 = vpop.f32.mrb[0].mxu0
    %412 = vmatprep.mubr.bf16.mxu0 0
    %413 = vmatmul.mubr.bf16.gmra.mrb[0].mxu0 %v343
    %v414 = vpop.f32.mrb[0].mxu0
    %v415 = vadd.f32 0.0, %v414
    %v416 = vpop.f32.mrb[0].mxu0
    %v417 = vpop.f32.mrb[0].mxu0
    %v418 = vadd.f32 0.0, %v417
    %v419 = vpop.f32.mrb[0].mxu0
    %420 = vmatprep.mubr.bf16.mxu0 0
    %421 = vmatmul.mubr.bf16.gmra.mrb[0].mxu0 %v346
    %v422 = vpop.f32.mrb[0].mxu0
    %v423 = vadd.f32 0.0, %v422
    %v424 = vpop.f32.mrb[0].mxu0
    %v425 = vpop.f32.mrb[0].mxu0
    %v426 = vadd.f32 0.0, %v425
    %v427 = vpop.f32.mrb[0].mxu0
    %428 = vmatprep.mubr.bf16.mxu0 0
    %429 = vmatmul.mubr.bf16.gmra.mrb[0].mxu0 %v349
    %v430 = vpop.f32.mrb[0].mxu0
    %v431 = vadd.f32 0.0, %v430
    %v432 = vpop.f32.mrb[0].mxu0
    %v433 = vpop.f32.mrb[0].mxu0
    %v434 = vadd.f32 0.0, %v433
    %v435 = vpop.f32.mrb[0].mxu0
    %436 = vmatprep.mubr.bf16.mxu0 0
    %437 = vmatmul.mubr.bf16.gmra.mrb[0].mxu0 %v352
    %v438 = vpop.f32.mrb[0].mxu0
    %v439 = vadd.f32 0.0, %v438
    %v440 = vpop.f32.mrb[0].mxu0
    %v441 = vpop.f32.mrb[0].mxu0
    %v442 = vadd.f32 0.0, %v441
    %v443 = vpop.f32.mrb[0].mxu0
    %444 = vmatprep.mubr.bf16.mxu0 0
    %445 = vmatmul.mubr.bf16.gmra.mrb[0].mxu0 %v355
    %v446 = vpop.f32.mrb[0].mxu0
    %v447 = vadd.f32 0.0, %v446
    %v448 = vpop.f32.mrb[0].mxu0
    %v449 = vpop.f32.mrb[0].mxu0
    %v450 = vadd.f32 0.0, %v449
    %v451 = vpop.f32.mrb[0].mxu0
    %452 = vmatprep.mubr.bf16.mxu0 0
    %453 = vmatmul.mubr.bf16.gmra.mrb[0].mxu0 %v358
    %v454 = vpop.f32.mrb[0].mxu0
    %v455 = vadd.f32 0.0, %v454
    %v456 = vpop.f32.mrb[0].mxu0
    %v457 = vpop.f32.mrb[0].mxu0
    %v458 = vadd.f32 0.0, %v457
    %v459 = vpop.f32.mrb[0].mxu0
    %460 = vdwg.mxu0
    %461 = vrot.lane.b32.xlu0 %v302, 96
    %v462 = vpop.permute.xlu0 %461
    %463 = vrot.lane.b32.xlu0 %v303, 96
    %v464 = vpop.permute.xlu0 %463
    %465 = vrot.lane.b32.xlu0 %v304, 96
    %v466 = vpop.permute.xlu0 %465
    %467 = vrot.lane.b32.xlu0 %v305, 96
    %v468 = vpop.permute.xlu0 %467
    %469 = vrot.lane.b32.xlu0 %v306, 96
    %v470 = vpop.permute.xlu0 %469
    %471 = vrot.lane.b32.xlu0 %v307, 96
    %v472 = vpop.permute.xlu0 %471
    %473 = vrot.lane.b32.xlu0 %v308, 96
    %v474 = vpop.permute.xlu0 %473
    %475 = vrot.lane.b32.xlu0 %v309, 96
    %v476 = vpop.permute.xlu0 %475
    %v478 = vsel %vm335, %v302, 0
    %v481 = vsel %vm335, %v303, 0
    %v484 = vsel %vm335, %v304, 0
    %v487 = vsel %vm335, %v305, 0
    %v490 = vsel %vm335, %v306, 0
    %v493 = vsel %vm335, %v307, 0
    %v496 = vsel %vm335, %v308, 0
    %v499 = vsel %vm335, %v309, 0
    %v502 = vsel %vm335, %v462, 0
    %v505 = vsel %vm335, %v464, 0
    %v508 = vsel %vm335, %v466, 0
    %v511 = vsel %vm335, %v468, 0
    %v514 = vsel %vm335, %v470, 0
    %v517 = vsel %vm335, %v472, 0
    %v520 = vsel %vm335, %v474, 0
    %v523 = vsel %vm335, %v476, 0
    %525 = vmatprep.subr.bf16.mxu0 0
    %526 = vmatpush1.bf16.xpose.msra.mxu0 %v502
    %527 = vmatprep.subr.bf16.mxu0 0
    %528 = vmatpush1.bf16.xpose.msra.mxu0 %v505
    %529 = vmatprep.subr.bf16.mxu0 0
    %530 = vmatpush1.bf16.xpose.msra.mxu0 %v508
    %531 = vmatprep.subr.bf16.mxu0 0
    %532 = vmatpush1.bf16.xpose.msra.mxu0 %v511
    %533 = vmatprep.subr.bf16.mxu0 0
    %534 = vmatpush1.bf16.xpose.msra.mxu0 %v514
    %535 = vmatprep.subr.bf16.mxu0 0
    %536 = vmatpush1.bf16.xpose.msra.mxu0 %v517
    %537 = vmatprep.subr.bf16.mxu0 0
    %538 = vmatpush1.bf16.xpose.msra.mxu0 %v520
    %539 = vmatprep.subr.bf16.mxu0 0
    %540 = vmatpush1.bf16.xpose.msra.mxu0 %v523
    %541 = vmatprep.subr.bf16.mxu0 0
    %542 = vmatpush1.bf16.xpose.msra.mxu0 0
    %543 = vmatprep.subr.bf16.mxu0 0
    %544 = vmatpush1.bf16.xpose.msra.mxu0 0
    %545 = vmatprep.subr.bf16.mxu0 0
    %546 = vmatpush1.bf16.xpose.msra.mxu0 0
    %547 = vmatprep.subr.bf16.mxu0 0
    %548 = vmatpush1.bf16.xpose.msra.mxu0 0
    %549 = vmatprep.subr.bf16.mxu0 0
    %550 = vmatpush1.bf16.xpose.msra.mxu0 0
    %551 = vmatprep.subr.bf16.mxu0 0
    %552 = vmatpush1.bf16.xpose.msra.mxu0 0
    %553 = vmatprep.subr.bf16.mxu0 0
    %554 = vmatpush1.bf16.xpose.msra.mxu0 0
    %555 = vmatprep.subr.bf16.mxu0 0
    %556 = vmatpush1.bf16.xpose.msra.mxu0 0
    %557 = vmatprep.mubr.bf16.mxu0 0
    %558 = vmatmul.mubr.bf16.gmra.mrb[0].mxu0 %v478
    %v559 = vpop.f32.mrb[0].mxu0
    %v560 = vadd.f32 0.0, %v559
    %v561 = vpop.f32.mrb[0].mxu0
    %v562 = vpop.f32.mrb[0].mxu0
    %v563 = vadd.f32 0.0, %v562
    %v564 = vpop.f32.mrb[0].mxu0
    %565 = vmatprep.mubr.bf16.mxu0 0
    %566 = vmatmul.mubr.bf16.gmra.mrb[0].mxu0 %v481
    %v567 = vpop.f32.mrb[0].mxu0
    %v568 = vadd.f32 0.0, %v567
    %v569 = vpop.f32.mrb[0].mxu0
    %v570 = vpop.f32.mrb[0].mxu0
    %v571 = vadd.f32 0.0, %v570
    %v572 = vpop.f32.mrb[0].mxu0
    %573 = vmatprep.mubr.bf16.mxu0 0
    %574 = vmatmul.mubr.bf16.gmra.mrb[0].mxu0 %v484
    %v575 = vpop.f32.mrb[0].mxu0
    %v576 = vadd.f32 0.0, %v575
    %v577 = vpop.f32.mrb[0].mxu0
    %v578 = vpop.f32.mrb[0].mxu0
    %v579 = vadd.f32 0.0, %v578
    %v580 = vpop.f32.mrb[0].mxu0
    %581 = vmatprep.mubr.bf16.mxu0 0
    %582 = vmatmul.mubr.bf16.gmra.mrb[0].mxu0 %v487
    %v583 = vpop.f32.mrb[0].mxu0
    %v584 = vadd.f32 0.0, %v583
    %v585 = vpop.f32.mrb[0].mxu0
    %v586 = vpop.f32.mrb[0].mxu0
    %v587 = vadd.f32 0.0, %v586
    %v588 = vpop.f32.mrb[0].mxu0
    %589 = vmatprep.mubr.bf16.mxu0 0
    %590 = vmatmul.mubr.bf16.gmra.mrb[0].mxu0 %v490
    %v591 = vpop.f32.mrb[0].mxu0
    %v592 = vadd.f32 0.0, %v591
    %v593 = vpop.f32.mrb[0].mxu0
    %v594 = vpop.f32.mrb[0].mxu0
    %v595 = vadd.f32 0.0, %v594
    %v596 = vpop.f32.mrb[0].mxu0
    %597 = vmatprep.mubr.bf16.mxu0 0
    %598 = vmatmul.mubr.bf16.gmra.mrb[0].mxu0 %v493
    %v599 = vpop.f32.mrb[0].mxu0
    %v600 = vadd.f32 0.0, %v599
    %v601 = vpop.f32.mrb[0].mxu0
    %v602 = vpop.f32.mrb[0].mxu0
    %v603 = vadd.f32 0.0, %v602
    %v604 = vpop.f32.mrb[0].mxu0
    %605 = vmatprep.mubr.bf16.mxu0 0
    %606 = vmatmul.mubr.bf16.gmra.mrb[0].mxu0 %v496
    %v607 = vpop.f32.mrb[0].mxu0
    %v608 = vadd.f32 0.0, %v607
    %v609 = vpop.f32.mrb[0].mxu0
    %v610 = vpop.f32.mrb[0].mxu0
    %v611 = vadd.f32 0.0, %v610
    %v612 = vpop.f32.mrb[0].mxu0
    %613 = vmatprep.mubr.bf16.mxu0 0
    %614 = vmatmul.mubr.bf16.gmra.mrb[0].mxu0 %v499
    %v615 = vpop.f32.mrb[0].mxu0
    %v616 = vadd.f32 0.0, %v615
    %v617 = vpop.f32.mrb[0].mxu0
    %v618 = vpop.f32.mrb[0].mxu0
    %v619 = vadd.f32 0.0, %v618
    %v620 = vpop.f32.mrb[0].mxu0
    %621 = vdwg.mxu0
    %v622 = vmul.f32 %v560, 0.35355338
    %v623 = vmul.f32 %v563, 0.35355338
    %v624 = vmul.f32 %v568, 0.35355338
    %v625 = vmul.f32 %v571, 0.35355338
    %v626 = vmul.f32 %v576, 0.35355338
    %v627 = vmul.f32 %v579, 0.35355338
    %v628 = vmul.f32 %v584, 0.35355338
    %v629 = vmul.f32 %v587, 0.35355338
    %v630 = vmul.f32 %v592, 0.35355338
    %v631 = vmul.f32 %v595, 0.35355338
    %v632 = vmul.f32 %v600, 0.35355338
    %v633 = vmul.f32 %v603, 0.35355338
    %v634 = vmul.f32 %v608, 0.35355338
    %v635 = vmul.f32 %v611, 0.35355338
    %v636 = vmul.f32 %v616, 0.35355338
    %v637 = vmul.f32 %v619, 0.35355338
    %v638 = vadd.f32 %v622, %v140
    %v639 = vadd.f32 %v623, %v141
    %v640 = vadd.f32 %v624, %v142
    %v641 = vadd.f32 %v625, %v143
    %v642 = vadd.f32 %v626, %v144
    %v643 = vadd.f32 %v627, %v145
    %v644 = vadd.f32 %v628, %v146
    %v645 = vadd.f32 %v629, %v147
    %v646 = vadd.f32 %v630, %v148
    %v647 = vadd.f32 %v631, %v149
    %v648 = vadd.f32 %v632, %v150
    %v649 = vadd.f32 %v633, %v151
    %v650 = vadd.f32 %v634, %v152
    %v651 = vadd.f32 %v635, %v153
    %v652 = vadd.f32 %v636, %v154
    %v653 = vadd.f32 %v637, %v155
    %654 = vmax.xlane.f32.xlu0 %v638
    %v655 = vpop.xlane.xlu0 %654
    %656 = vmax.xlane.f32.xlu0 %v639
    %v657 = vpop.xlane.xlu0 %656
    %658 = vmax.xlane.f32.xlu0 %v640
    %v659 = vpop.xlane.xlu0 %658
    %660 = vmax.xlane.f32.xlu0 %v641
    %v661 = vpop.xlane.xlu0 %660
    %662 = vmax.xlane.f32.xlu0 %v642
    %v663 = vpop.xlane.xlu0 %662
    %664 = vmax.xlane.f32.xlu0 %v643
    %v665 = vpop.xlane.xlu0 %664
    %666 = vmax.xlane.f32.xlu0 %v644
    %v667 = vpop.xlane.xlu0 %666
    %668 = vmax.xlane.f32.xlu0 %v645
    %v669 = vpop.xlane.xlu0 %668
    %670 = vmax.xlane.f32.xlu0 %v646
    %v671 = vpop.xlane.xlu0 %670
    %672 = vmax.xlane.f32.xlu0 %v647
    %v673 = vpop.xlane.xlu0 %672
    %674 = vmax.xlane.f32.xlu0 %v648
    %v675 = vpop.xlane.xlu0 %674
    %676 = vmax.xlane.f32.xlu0 %v649
    %v677 = vpop.xlane.xlu0 %676
    %678 = vmax.xlane.f32.xlu0 %v650
    %v679 = vpop.xlane.xlu0 %678
    %680 = vmax.xlane.f32.xlu0 %v651
    %v681 = vpop.xlane.xlu0 %680
    %682 = vmax.xlane.f32.xlu0 %v652
    %v683 = vpop.xlane.xlu0 %682
    %684 = vmax.xlane.f32.xlu0 %v653
    %v685 = vpop.xlane.xlu0 %684
    %v686 = vsub.f32 %v638, %v655
    %v687 = vsub.f32 %v639, %v657
    %v688 = vsub.f32 %v640, %v659
    %v689 = vsub.f32 %v641, %v661
    %v690 = vsub.f32 %v642, %v663
    %v691 = vsub.f32 %v643, %v665
    %v692 = vsub.f32 %v644, %v667
    %v693 = vsub.f32 %v645, %v669
    %v694 = vsub.f32 %v646, %v671
    %v695 = vsub.f32 %v647, %v673
    %v696 = vsub.f32 %v648, %v675
    %v697 = vsub.f32 %v649, %v677
    %v698 = vsub.f32 %v650, %v679
    %v699 = vsub.f32 %v651, %v681
    %v700 = vsub.f32 %v652, %v683
    %v701 = vsub.f32 %v653, %v685
    %v702 = vmul.f32 %v686, 1.442695
    %v703 = vpow.pop %v702
    %v704 = vmul.f32 %v687, 1.442695
    %v705 = vpow.pop %v704
    %v706 = vmul.f32 %v688, 1.442695
    %v707 = vpow.pop %v706
    %v708 = vmul.f32 %v689, 1.442695
    %v709 = vpow.pop %v708
    %v710 = vmul.f32 %v690, 1.442695
    %v711 = vpow.pop %v710
    %v712 = vmul.f32 %v691, 1.442695
    %v713 = vpow.pop %v712
    %v714 = vmul.f32 %v692, 1.442695
    %v715 = vpow.pop %v714
    %v716 = vmul.f32 %v693, 1.442695
    %v717 = vpow.pop %v716
    %v718 = vmul.f32 %v694, 1.442695
    %v719 = vpow.pop %v718
    %v720 = vmul.f32 %v695, 1.442695
    %v721 = vpow.pop %v720
    %v722 = vmul.f32 %v696, 1.442695
    %v723 = vpow.pop %v722
    %v724 = vmul.f32 %v697, 1.442695
    %v725 = vpow.pop %v724
    %v726 = vmul.f32 %v698, 1.442695
    %v727 = vpow.pop %v726
    %v728 = vmul.f32 %v699, 1.442695
    %v729 = vpow.pop %v728
    %v730 = vmul.f32 %v700, 1.442695
    %v731 = vpow.pop %v730
    %v732 = vmul.f32 %v701, 1.442695
    %v733 = vpow.pop %v732
    %734 = vadd.xlane.f32.xlu0 %v703
    %v735 = vpop.xlane.xlu0 %734
    %736 = vadd.xlane.f32.xlu0 %v705
    %v737 = vpop.xlane.xlu0 %736
    %738 = vadd.xlane.f32.xlu0 %v707
    %v739 = vpop.xlane.xlu0 %738
    %740 = vadd.xlane.f32.xlu0 %v709
    %v741 = vpop.xlane.xlu0 %740
    %742 = vadd.xlane.f32.xlu0 %v711
    %v743 = vpop.xlane.xlu0 %742
    %744 = vadd.xlane.f32.xlu0 %v713
    %v745 = vpop.xlane.xlu0 %744
    %746 = vadd.xlane.f32.xlu0 %v715
    %v747 = vpop.xlane.xlu0 %746
    %748 = vadd.xlane.f32.xlu0 %v717
    %v749 = vpop.xlane.xlu0 %748
    %750 = vadd.xlane.f32.xlu0 %v719
    %v751 = vpop.xlane.xlu0 %750
    %752 = vadd.xlane.f32.xlu0 %v721
    %v753 = vpop.xlane.xlu0 %752
    %754 = vadd.xlane.f32.xlu0 %v723
    %v755 = vpop.xlane.xlu0 %754
    %756 = vadd.xlane.f32.xlu0 %v725
    %v757 = vpop.xlane.xlu0 %756
    %758 = vadd.xlane.f32.xlu0 %v727
    %v759 = vpop.xlane.xlu0 %758
    %760 = vadd.xlane.f32.xlu0 %v729
    %v761 = vpop.xlane.xlu0 %760
    %762 = vadd.xlane.f32.xlu0 %v731
    %v763 = vpop.xlane.xlu0 %762
    %764 = vadd.xlane.f32.xlu0 %v733
    %v765 = vpop.xlane.xlu0 %764
    %v766 = vrcp.pop %v735
    %v767 = vrcp.pop %v737
    %v768 = vrcp.pop %v739
    %v769 = vrcp.pop %v741
    %v770 = vrcp.pop %v743
    %v771 = vrcp.pop %v745
    %v772 = vrcp.pop %v747
    %v773 = vrcp.pop %v749
    %v774 = vrcp.pop %v751
    %v775 = vrcp.pop %v753
    %v776 = vrcp.pop %v755
    %v777 = vrcp.pop %v757
    %v778 = vrcp.pop %v759
    %v779 = vrcp.pop %v761
    %v780 = vrcp.pop %v763
    %v781 = vrcp.pop %v765
    %v782 = vmul.f32 %v703, %v766
    %v783 = vmul.f32 %v705, %v767
    %v784 = vmul.f32 %v707, %v768
    %v785 = vmul.f32 %v709, %v769
    %v786 = vmul.f32 %v711, %v770
    %v787 = vmul.f32 %v713, %v771
    %v788 = vmul.f32 %v715, %v772
    %v789 = vmul.f32 %v717, %v773
    %v790 = vmul.f32 %v719, %v774
    %v791 = vmul.f32 %v721, %v775
    %v792 = vmul.f32 %v723, %v776
    %v793 = vmul.f32 %v725, %v777
    %v794 = vmul.f32 %v727, %v778
    %v795 = vmul.f32 %v729, %v779
    %v796 = vmul.f32 %v731, %v780
    %v797 = vmul.f32 %v733, %v781
    %v798 = vpack.c.bf16 %v783, %v782
    %v799 = vpack.c.bf16 %v785, %v784
    %v800 = vpack.c.bf16 %v787, %v786
    %v801 = vpack.c.bf16 %v789, %v788
    %v802 = vpack.c.bf16 %v791, %v790
    %v803 = vpack.c.bf16 %v793, %v792
    %v804 = vpack.c.bf16 %v795, %v794
    %v805 = vpack.c.bf16 %v797, %v796
    %v806 = vpack.c.bf16 %v402, %v399
    %v807 = vpack.c.bf16 %v410, %v407
    %v808 = vpack.c.bf16 %v418, %v415
    %v809 = vpack.c.bf16 %v426, %v423
    %v810 = vpack.c.bf16 %v434, %v431
    %v811 = vpack.c.bf16 %v442, %v439
    %v812 = vpack.c.bf16 %v450, %v447
    %v813 = vpack.c.bf16 %v458, %v455
    %s814 = scalar_lea.vmem [#allocation4], 4
    %v815 = vld [vmem:[%s814] sm:$0xf]
    %816 = vrot.lane.b32.xlu0 %v302, 56
    %v817 = vpop.permute.xlu0 %816
    %818 = vrot.lane.b32.xlu0 %v303, 56
    %v819 = vpop.permute.xlu0 %818
    %820 = vrot.lane.b32.xlu0 %v304, 56
    %v821 = vpop.permute.xlu0 %820
    %822 = vrot.lane.b32.xlu0 %v305, 56
    %v823 = vpop.permute.xlu0 %822
    %824 = vrot.lane.b32.xlu0 %v306, 56
    %v825 = vpop.permute.xlu0 %824
    %826 = vrot.lane.b32.xlu0 %v307, 56
    %v827 = vpop.permute.xlu0 %826
    %828 = vrot.lane.b32.xlu0 %v308, 56
    %v829 = vpop.permute.xlu0 %828
    %830 = vrot.lane.b32.xlu0 %v309, 56
    %v831 = vpop.permute.xlu0 %830
    %v833 = vsel %vm335, %v817, 0
    %v836 = vsel %vm335, %v819, 0
    %v839 = vsel %vm335, %v821, 0
    %v842 = vsel %vm335, %v823, 0
    %v845 = vsel %vm335, %v825, 0
    %v848 = vsel %vm335, %v827, 0
    %v851 = vsel %vm335, %v829, 0
    %v854 = vsel %vm335, %v831, 0
    %v857 = vsel %vm360, %v815, 0
    %859 = vmatprep.subr.bf16.mxu0 0
    %860 = vmatpush1.bf16.msra.mxu0 %v857
    %861 = vmatprep.subr.bf16.mxu0 0
    %862 = vmatpush1.bf16.msra.mxu0 0
    %863 = vmatprep.subr.bf16.mxu0 0
    %864 = vmatpush1.bf16.msra.mxu0 0
    %865 = vmatprep.subr.bf16.mxu0 0
    %866 = vmatpush1.bf16.msra.mxu0 0
    %867 = vmatprep.subr.bf16.mxu0 0
    %868 = vmatpush1.bf16.msra.mxu0 0
    %869 = vmatprep.subr.bf16.mxu0 0
    %870 = vmatpush1.bf16.msra.mxu0 0
    %871 = vmatprep.subr.bf16.mxu0 0
    %872 = vmatpush1.bf16.msra.mxu0 0
    %873 = vmatprep.subr.bf16.mxu0 0
    %874 = vmatpush1.bf16.msra.mxu0 0
    %875 = vmatprep.subr.bf16.mxu0 0
    %876 = vmatpush1.bf16.msra.mxu0 0
    %877 = vmatprep.subr.bf16.mxu0 0
    %878 = vmatpush1.bf16.msra.mxu0 0
    %879 = vmatprep.subr.bf16.mxu0 0
    %880 = vmatpush1.bf16.msra.mxu0 0
    %881 = vmatprep.subr.bf16.mxu0 0
    %882 = vmatpush1.bf16.msra.mxu0 0
    %883 = vmatprep.subr.bf16.mxu0 0
    %884 = vmatpush1.bf16.msra.mxu0 0
    %885 = vmatprep.subr.bf16.mxu0 0
    %886 = vmatpush1.bf16.msra.mxu0 0
    %887 = vmatprep.subr.bf16.mxu0 0
    %888 = vmatpush1.bf16.msra.mxu0 0
    %889 = vmatprep.subr.bf16.mxu0 0
    %890 = vmatpush1.bf16.msra.mxu0 0
    %891 = vmatprep.mubr.bf16.mxu0 0
    %892 = vmatmul.mubr.bf16.gmra.mrb[0].mxu0 %v833
    %v893 = vpop.f32.mrb[0].mxu0
    %v894 = vadd.f32 0.0, %v893
    %v895 = vpop.f32.mrb[0].mxu0
    %v896 = vpop.f32.mrb[0].mxu0
    %v897 = vadd.f32 0.0, %v896
    %v898 = vpop.f32.mrb[0].mxu0
    %899 = vmatprep.mubr.bf16.mxu0 0
    %900 = vmatmul.mubr.bf16.gmra.mrb[0].mxu0 %v836
    %v901 = vpop.f32.mrb[0].mxu0
    %v902 = vadd.f32 0.0, %v901
    %v903 = vpop.f32.mrb[0].mxu0
    %v904 = vpop.f32.mrb[0].mxu0
    %v905 = vadd.f32 0.0, %v904
    %v906 = vpop.f32.mrb[0].mxu0
    %907 = vmatprep.mubr.bf16.mxu0 0
    %908 = vmatmul.mubr.bf16.gmra.mrb[0].mxu0 %v839
    %v909 = vpop.f32.mrb[0].mxu0
    %v910 = vadd.f32 0.0, %v909
    %v911 = vpop.f32.mrb[0].mxu0
    %v912 = vpop.f32.mrb[0].mxu0
    %v913 = vadd.f32 0.0, %v912
    %v914 = vpop.f32.mrb[0].mxu0
    %915 = vmatprep.mubr.bf16.mxu0 0
    %916 = vmatmul.mubr.bf16.gmra.mrb[0].mxu0 %v842
    %v917 = vpop.f32.mrb[0].mxu0
    %v918 = vadd.f32 0.0, %v917
    %v919 = vpop.f32.mrb[0].mxu0
    %v920 = vpop.f32.mrb[0].mxu0
    %v921 = vadd.f32 0.0, %v920
    %v922 = vpop.f32.mrb[0].mxu0
    %923 = vmatprep.mubr.bf16.mxu0 0
    %924 = vmatmul.mubr.bf16.gmra.mrb[0].mxu0 %v845
    %v925 = vpop.f32.mrb[0].mxu0
    %v926 = vadd.f32 0.0, %v925
    %v927 = vpop.f32.mrb[0].mxu0
    %v928 = vpop.f32.mrb[0].mxu0
    %v929 = vadd.f32 0.0, %v928
    %v930 = vpop.f32.mrb[0].mxu0
    %931 = vmatprep.mubr.bf16.mxu0 0
    %932 = vmatmul.mubr.bf16.gmra.mrb[0].mxu0 %v848
    %v933 = vpop.f32.mrb[0].mxu0
    %v934 = vadd.f32 0.0, %v933
    %v935 = vpop.f32.mrb[0].mxu0
    %v936 = vpop.f32.mrb[0].mxu0
    %v937 = vadd.f32 0.0, %v936
    %v938 = vpop.f32.mrb[0].mxu0
    %939 = vmatprep.mubr.bf16.mxu0 0
    %940 = vmatmul.mubr.bf16.gmra.mrb[0].mxu0 %v851
    %v941 = vpop.f32.mrb[0].mxu0
    %v942 = vadd.f32 0.0, %v941
    %v943 = vpop.f32.mrb[0].mxu0
    %v944 = vpop.f32.mrb[0].mxu0
    %v945 = vadd.f32 0.0, %v944
    %v946 = vpop.f32.mrb[0].mxu0
    %947 = vmatprep.mubr.bf16.mxu0 0
    %948 = vmatmul.mubr.bf16.gmra.mrb[0].mxu0 %v854
    %v949 = vpop.f32.mrb[0].mxu0
    %v950 = vadd.f32 0.0, %v949
    %v951 = vpop.f32.mrb[0].mxu0
    %v952 = vpop.f32.mrb[0].mxu0
    %v953 = vadd.f32 0.0, %v952
    %v954 = vpop.f32.mrb[0].mxu0
    %955 = vdwg.mxu0
    %956 = vrot.lane.b32.xlu0 %v302, 120
    %v957 = vpop.permute.xlu0 %956
    %958 = vrot.lane.b32.xlu0 %v303, 120
    %v959 = vpop.permute.xlu0 %958
    %960 = vrot.lane.b32.xlu0 %v304, 120
    %v961 = vpop.permute.xlu0 %960
    %962 = vrot.lane.b32.xlu0 %v305, 120
    %v963 = vpop.permute.xlu0 %962
    %964 = vrot.lane.b32.xlu0 %v306, 120
    %v965 = vpop.permute.xlu0 %964
    %966 = vrot.lane.b32.xlu0 %v307, 120
    %v967 = vpop.permute.xlu0 %966
    %968 = vrot.lane.b32.xlu0 %v308, 120
    %v969 = vpop.permute.xlu0 %968
    %970 = vrot.lane.b32.xlu0 %v309, 120
    %v971 = vpop.permute.xlu0 %970
    %972 = vrot.lane.b32.xlu0 %v302, 88
    %v973 = vpop.permute.xlu0 %972
    %974 = vrot.lane.b32.xlu0 %v303, 88
    %v975 = vpop.permute.xlu0 %974
    %976 = vrot.lane.b32.xlu0 %v304, 88
    %v977 = vpop.permute.xlu0 %976
    %978 = vrot.lane.b32.xlu0 %v305, 88
    %v979 = vpop.permute.xlu0 %978
    %980 = vrot.lane.b32.xlu0 %v306, 88
    %v981 = vpop.permute.xlu0 %980
    %982 = vrot.lane.b32.xlu0 %v307, 88
    %v983 = vpop.permute.xlu0 %982
    %984 = vrot.lane.b32.xlu0 %v308, 88
    %v985 = vpop.permute.xlu0 %984
    %986 = vrot.lane.b32.xlu0 %v309, 88
    %v987 = vpop.permute.xlu0 %986
    %v989 = vsel %vm335, %v957, 0
    %v992 = vsel %vm335, %v959, 0
    %v995 = vsel %vm335, %v961, 0
    %v998 = vsel %vm335, %v963, 0
    %v1001 = vsel %vm335, %v965, 0
    %v1004 = vsel %vm335, %v967, 0
    %v1007 = vsel %vm335, %v969, 0
    %v1010 = vsel %vm335, %v971, 0
    %v1013 = vsel %vm335, %v973, 0
    %v1016 = vsel %vm335, %v975, 0
    %v1019 = vsel %vm335, %v977, 0
    %v1022 = vsel %vm335, %v979, 0
    %v1025 = vsel %vm335, %v981, 0
    %v1028 = vsel %vm335, %v983, 0
    %v1031 = vsel %vm335, %v985, 0
    %v1034 = vsel %vm335, %v987, 0
    %1036 = vmatprep.subr.bf16.mxu0 0
    %1037 = vmatpush1.bf16.xpose.msra.mxu0 %v1013
    %1038 = vmatprep.subr.bf16.mxu0 0
    %1039 = vmatpush1.bf16.xpose.msra.mxu0 %v1016
    %1040 = vmatprep.subr.bf16.mxu0 0
    %1041 = vmatpush1.bf16.xpose.msra.mxu0 %v1019
    %1042 = vmatprep.subr.bf16.mxu0 0
    %1043 = vmatpush1.bf16.xpose.msra.mxu0 %v1022
    %1044 = vmatprep.subr.bf16.mxu0 0
    %1045 = vmatpush1.bf16.xpose.msra.mxu0 %v1025
    %1046 = vmatprep.subr.bf16.mxu0 0
    %1047 = vmatpush1.bf16.xpose.msra.mxu0 %v1028
    %1048 = vmatprep.subr.bf16.mxu0 0
    %1049 = vmatpush1.bf16.xpose.msra.mxu0 %v1031
    %1050 = vmatprep.subr.bf16.mxu0 0
    %1051 = vmatpush1.bf16.xpose.msra.mxu0 %v1034
    %1052 = vmatprep.subr.bf16.mxu0 0
    %1053 = vmatpush1.bf16.xpose.msra.mxu0 0
    %1054 = vmatprep.subr.bf16.mxu0 0
    %1055 = vmatpush1.bf16.xpose.msra.mxu0 0
    %1056 = vmatprep.subr.bf16.mxu0 0
    %1057 = vmatpush1.bf16.xpose.msra.mxu0 0
    %1058 = vmatprep.subr.bf16.mxu0 0
    %1059 = vmatpush1.bf16.xpose.msra.mxu0 0
    %1060 = vmatprep.subr.bf16.mxu0 0
    %1061 = vmatpush1.bf16.xpose.msra.mxu0 0
    %1062 = vmatprep.subr.bf16.mxu0 0
    %1063 = vmatpush1.bf16.xpose.msra.mxu0 0
    %1064 = vmatprep.subr.bf16.mxu0 0
    %1065 = vmatpush1.bf16.xpose.msra.mxu0 0
    %1066 = vmatprep.subr.bf16.mxu0 0
    %1067 = vmatpush1.bf16.xpose.msra.mxu0 0
    %1068 = vmatprep.mubr.bf16.mxu0 0
    %1069 = vmatmul.mubr.bf16.gmra.mrb[0].mxu0 %v989
    %v1070 = vpop.f32.mrb[0].mxu0
    %v1071 = vadd.f32 0.0, %v1070
    %v1072 = vpop.f32.mrb[0].mxu0
    %v1073 = vpop.f32.mrb[0].mxu0
    %v1074 = vadd.f32 0.0, %v1073
    %v1075 = vpop.f32.mrb[0].mxu0
    %1076 = vmatprep.mubr.bf16.mxu0 0
    %1077 = vmatmul.mubr.bf16.gmra.mrb[0].mxu0 %v992
    %v1078 = vpop.f32.mrb[0].mxu0
    %v1079 = vadd.f32 0.0, %v1078
    %v1080 = vpop.f32.mrb[0].mxu0
    %v1081 = vpop.f32.mrb[0].mxu0
    %v1082 = vadd.f32 0.0, %v1081
    %v1083 = vpop.f32.mrb[0].mxu0
    %1084 = vmatprep.mubr.bf16.mxu0 0
    %1085 = vmatmul.mubr.bf16.gmra.mrb[0].mxu0 %v995
    %v1086 = vpop.f32.mrb[0].mxu0
    %v1087 = vadd.f32 0.0, %v1086
    %v1088 = vpop.f32.mrb[0].mxu0
    %v1089 = vpop.f32.mrb[0].mxu0
    %v1090 = vadd.f32 0.0, %v1089
    %v1091 = vpop.f32.mrb[0].mxu0
    %1092 = vmatprep.mubr.bf16.mxu0 0
    %1093 = vmatmul.mubr.bf16.gmra.mrb[0].mxu0 %v998
    %v1094 = vpop.f32.mrb[0].mxu0
    %v1095 = vadd.f32 0.0, %v1094
    %v1096 = vpop.f32.mrb[0].mxu0
    %v1097 = vpop.f32.mrb[0].mxu0
    %v1098 = vadd.f32 0.0, %v1097
    %v1099 = vpop.f32.mrb[0].mxu0
    %1100 = vmatprep.mubr.bf16.mxu0 0
    %1101 = vmatmul.mubr.bf16.gmra.mrb[0].mxu0 %v1001
    %v1102 = vpop.f32.mrb[0].mxu0
    %v1103 = vadd.f32 0.0, %v1102
    %v1104 = vpop.f32.mrb[0].mxu0
    %v1105 = vpop.f32.mrb[0].mxu0
    %v1106 = vadd.f32 0.0, %v1105
    %v1107 = vpop.f32.mrb[0].mxu0
    %1108 = vmatprep.mubr.bf16.mxu0 0
    %1109 = vmatmul.mubr.bf16.gmra.mrb[0].mxu0 %v1004
    %v1110 = vpop.f32.mrb[0].mxu0
    %v1111 = vadd.f32 0.0, %v1110
    %v1112 = vpop.f32.mrb[0].mxu0
    %v1113 = vpop.f32.mrb[0].mxu0
    %v1114 = vadd.f32 0.0, %v1113
    %v1115 = vpop.f32.mrb[0].mxu0
    %1116 = vmatprep.mubr.bf16.mxu0 0
    %1117 = vmatmul.mubr.bf16.gmra.mrb[0].mxu0 %v1007
    %v1118 = vpop.f32.mrb[0].mxu0
    %v1119 = vadd.f32 0.0, %v1118
    %v1120 = vpop.f32.mrb[0].mxu0
    %v1121 = vpop.f32.mrb[0].mxu0
    %v1122 = vadd.f32 0.0, %v1121
    %v1123 = vpop.f32.mrb[0].mxu0
    %1124 = vmatprep.mubr.bf16.mxu0 0
    %1125 = vmatmul.mubr.bf16.gmra.mrb[0].mxu0 %v1010
    %v1126 = vpop.f32.mrb[0].mxu0
    %v1127 = vadd.f32 0.0, %v1126
    %v1128 = vpop.f32.mrb[0].mxu0
    %v1129 = vpop.f32.mrb[0].mxu0
    %v1130 = vadd.f32 0.0, %v1129
    %v1131 = vpop.f32.mrb[0].mxu0
    %1132 = vdwg.mxu0
    %v1133 = vmul.f32 %v1071, 0.35355338
    %v1134 = vmul.f32 %v1074, 0.35355338
    %v1135 = vmul.f32 %v1079, 0.35355338
    %v1136 = vmul.f32 %v1082, 0.35355338
    %v1137 = vmul.f32 %v1087, 0.35355338
    %v1138 = vmul.f32 %v1090, 0.35355338
    %v1139 = vmul.f32 %v1095, 0.35355338
    %v1140 = vmul.f32 %v1098, 0.35355338
    %v1141 = vmul.f32 %v1103, 0.35355338
    %v1142 = vmul.f32 %v1106, 0.35355338
    %v1143 = vmul.f32 %v1111, 0.35355338
    %v1144 = vmul.f32 %v1114, 0.35355338
    %v1145 = vmul.f32 %v1119, 0.35355338
    %v1146 = vmul.f32 %v1122, 0.35355338
    %v1147 = vmul.f32 %v1127, 0.35355338
    %v1148 = vmul.f32 %v1130, 0.35355338
    %v1149 = vadd.f32 %v1133, %v140
    %v1150 = vadd.f32 %v1134, %v141
    %v1151 = vadd.f32 %v1135, %v142
    %v1152 = vadd.f32 %v1136, %v143
    %v1153 = vadd.f32 %v1137, %v144
    %v1154 = vadd.f32 %v1138, %v145
    %v1155 = vadd.f32 %v1139, %v146
    %v1156 = vadd.f32 %v1140, %v147
    %v1157 = vadd.f32 %v1141, %v148
    %v1158 = vadd.f32 %v1142, %v149
    %v1159 = vadd.f32 %v1143, %v150
    %v1160 = vadd.f32 %v1144, %v151
    %v1161 = vadd.f32 %v1145, %v152
    %v1162 = vadd.f32 %v1146, %v153
    %v1163 = vadd.f32 %v1147, %v154
    %v1164 = vadd.f32 %v1148, %v155
    %1165 = vmax.xlane.f32.xlu0 %v1149
    %v1166 = vpop.xlane.xlu0 %1165
    %1167 = vmax.xlane.f32.xlu0 %v1150
    %v1168 = vpop.xlane.xlu0 %1167
    %1169 = vmax.xlane.f32.xlu0 %v1151
    %v1170 = vpop.xlane.xlu0 %1169
    %1171 = vmax.xlane.f32.xlu0 %v1152
    %v1172 = vpop.xlane.xlu0 %1171
    %1173 = vmax.xlane.f32.xlu0 %v1153
    %v1174 = vpop.xlane.xlu0 %1173
    %1175 = vmax.xlane.f32.xlu0 %v1154
    %v1176 = vpop.xlane.xlu0 %1175
    %1177 = vmax.xlane.f32.xlu0 %v1155
    %v1178 = vpop.xlane.xlu0 %1177
    %1179 = vmax.xlane.f32.xlu0 %v1156
    %v1180 = vpop.xlane.xlu0 %1179
    %1181 = vmax.xlane.f32.xlu0 %v1157
    %v1182 = vpop.xlane.xlu0 %1181
    %1183 = vmax.xlane.f32.xlu0 %v1158
    %v1184 = vpop.xlane.xlu0 %1183
    %1185 = vmax.xlane.f32.xlu0 %v1159
    %v1186 = vpop.xlane.xlu0 %1185
    %1187 = vmax.xlane.f32.xlu0 %v1160
    %v1188 = vpop.xlane.xlu0 %1187
    %1189 = vmax.xlane.f32.xlu0 %v1161
    %v1190 = vpop.xlane.xlu0 %1189
    %1191 = vmax.xlane.f32.xlu0 %v1162
    %v1192 = vpop.xlane.xlu0 %1191
    %1193 = vmax.xlane.f32.xlu0 %v1163
    %v1194 = vpop.xlane.xlu0 %1193
    %1195 = vmax.xlane.f32.xlu0 %v1164
    %v1196 = vpop.xlane.xlu0 %1195
    %v1197 = vsub.f32 %v1149, %v1166
    %v1198 = vsub.f32 %v1150, %v1168
    %v1199 = vsub.f32 %v1151, %v1170
    %v1200 = vsub.f32 %v1152, %v1172
    %v1201 = vsub.f32 %v1153, %v1174
    %v1202 = vsub.f32 %v1154, %v1176
    %v1203 = vsub.f32 %v1155, %v1178
    %v1204 = vsub.f32 %v1156, %v1180
    %v1205 = vsub.f32 %v1157, %v1182
    %v1206 = vsub.f32 %v1158, %v1184
    %v1207 = vsub.f32 %v1159, %v1186
    %v1208 = vsub.f32 %v1160, %v1188
    %v1209 = vsub.f32 %v1161, %v1190
    %v1210 = vsub.f32 %v1162, %v1192
    %v1211 = vsub.f32 %v1163, %v1194
    %v1212 = vsub.f32 %v1164, %v1196
    %v1213 = vmul.f32 %v1197, 1.442695
    %v1214 = vpow.pop %v1213
    %v1215 = vmul.f32 %v1198, 1.442695
    %v1216 = vpow.pop %v1215
    %v1217 = vmul.f32 %v1199, 1.442695
    %v1218 = vpow.pop %v1217
    %v1219 = vmul.f32 %v1200, 1.442695
    %v1220 = vpow.pop %v1219
    %v1221 = vmul.f32 %v1201, 1.442695
    %v1222 = vpow.pop %v1221
    %v1223 = vmul.f32 %v1202, 1.442695
    %v1224 = vpow.pop %v1223
    %v1225 = vmul.f32 %v1203, 1.442695
    %v1226 = vpow.pop %v1225
    %v1227 = vmul.f32 %v1204, 1.442695
    %v1228 = vpow.pop %v1227
    %v1229 = vmul.f32 %v1205, 1.442695
    %v1230 = vpow.pop %v1229
    %v1231 = vmul.f32 %v1206, 1.442695
    %v1232 = vpow.pop %v1231
    %v1233 = vmul.f32 %v1207, 1.442695
    %v1234 = vpow.pop %v1233
    %v1235 = vmul.f32 %v1208, 1.442695
    %v1236 = vpow.pop %v1235
    %v1237 = vmul.f32 %v1209, 1.442695
    %v1238 = vpow.pop %v1237
    %v1239 = vmul.f32 %v1210, 1.442695
    %v1240 = vpow.pop %v1239
    %v1241 = vmul.f32 %v1211, 1.442695
    %v1242 = vpow.pop %v1241
    %v1243 = vmul.f32 %v1212, 1.442695
    %v1244 = vpow.pop %v1243
    %1245 = vadd.xlane.f32.xlu0 %v1214
    %v1246 = vpop.xlane.xlu0 %1245
    %1247 = vadd.xlane.f32.xlu0 %v1216
    %v1248 = vpop.xlane.xlu0 %1247
    %1249 = vadd.xlane.f32.xlu0 %v1218
    %v1250 = vpop.xlane.xlu0 %1249
    %1251 = vadd.xlane.f32.xlu0 %v1220
    %v1252 = vpop.xlane.xlu0 %1251
    %1253 = vadd.xlane.f32.xlu0 %v1222
    %v1254 = vpop.xlane.xlu0 %1253
    %1255 = vadd.xlane.f32.xlu0 %v1224
    %v1256 = vpop.xlane.xlu0 %1255
    %1257 = vadd.xlane.f32.xlu0 %v1226
    %v1258 = vpop.xlane.xlu0 %1257
    %1259 = vadd.xlane.f32.xlu0 %v1228
    %v1260 = vpop.xlane.xlu0 %1259
    %1261 = vadd.xlane.f32.xlu0 %v1230
    %v1262 = vpop.xlane.xlu0 %1261
    %1263 = vadd.xlane.f32.xlu0 %v1232
    %v1264 = vpop.xlane.xlu0 %1263
    %1265 = vadd.xlane.f32.xlu0 %v1234
    %v1266 = vpop.xlane.xlu0 %1265
    %1267 = vadd.xlane.f32.xlu0 %v1236
    %v1268 = vpop.xlane.xlu0 %1267
    %1269 = vadd.xlane.f32.xlu0 %v1238
    %v1270 = vpop.xlane.xlu0 %1269
    %1271 = vadd.xlane.f32.xlu0 %v1240
    %v1272 = vpop.xlane.xlu0 %1271
    %1273 = vadd.xlane.f32.xlu0 %v1242
    %v1274 = vpop.xlane.xlu0 %1273
    %1275 = vadd.xlane.f32.xlu0 %v1244
    %v1276 = vpop.xlane.xlu0 %1275
    %v1277 = vrcp.pop %v1246
    %v1278 = vrcp.pop %v1248
    %v1279 = vrcp.pop %v1250
    %v1280 = vrcp.pop %v1252
    %v1281 = vrcp.pop %v1254
    %v1282 = vrcp.pop %v1256
    %v1283 = vrcp.pop %v1258
    %v1284 = vrcp.pop %v1260
    %v1285 = vrcp.pop %v1262
    %v1286 = vrcp.pop %v1264
    %v1287 = vrcp.pop %v1266
    %v1288 = vrcp.pop %v1268
    %v1289 = vrcp.pop %v1270
    %v1290 = vrcp.pop %v1272
    %v1291 = vrcp.pop %v1274
    %v1292 = vrcp.pop %v1276
    %v1293 = vmul.f32 %v1214, %v1277
    %v1294 = vmul.f32 %v1216, %v1278
    %v1295 = vmul.f32 %v1218, %v1279
    %v1296 = vmul.f32 %v1220, %v1280
    %v1297 = vmul.f32 %v1222, %v1281
    %v1298 = vmul.f32 %v1224, %v1282
    %v1299 = vmul.f32 %v1226, %v1283
    %v1300 = vmul.f32 %v1228, %v1284
    %v1301 = vmul.f32 %v1230, %v1285
    %v1302 = vmul.f32 %v1232, %v1286
    %v1303 = vmul.f32 %v1234, %v1287
    %v1304 = vmul.f32 %v1236, %v1288
    %v1305 = vmul.f32 %v1238, %v1289
    %v1306 = vmul.f32 %v1240, %v1290
    %v1307 = vmul.f32 %v1242, %v1291
    %v1308 = vmul.f32 %v1244, %v1292
    %v1309 = vpack.c.bf16 %v1294, %v1293
    %v1310 = vpack.c.bf16 %v1296, %v1295
    %v1311 = vpack.c.bf16 %v1298, %v1297
    %v1312 = vpack.c.bf16 %v1300, %v1299
    %v1313 = vpack.c.bf16 %v1302, %v1301
    %v1314 = vpack.c.bf16 %v1304, %v1303
    %v1315 = vpack.c.bf16 %v1306, %v1305
    %v1316 = vpack.c.bf16 %v1308, %v1307
    %v1317 = vpack.c.bf16 %v897, %v894
    %v1318 = vpack.c.bf16 %v905, %v902
    %v1319 = vpack.c.bf16 %v913, %v910
    %v1320 = vpack.c.bf16 %v921, %v918
    %v1321 = vpack.c.bf16 %v929, %v926
    %v1322 = vpack.c.bf16 %v937, %v934
    %v1323 = vpack.c.bf16 %v945, %v942
    %v1324 = vpack.c.bf16 %v953, %v950
    %1325 = vmatprep.subr.bf16.mxu0 0
    %1326 = vmatpush1.bf16.msra.mxu0 %v1317
    %1327 = vmatprep.subr.bf16.mxu0 0
    %1328 = vmatpush1.bf16.msra.mxu0 %v1318
    %1329 = vmatprep.subr.bf16.mxu0 0
    %1330 = vmatpush1.bf16.msra.mxu0 %v1319
    %1331 = vmatprep.subr.bf16.mxu0 0
    %1332 = vmatpush1.bf16.msra.mxu0 %v1320
    %1333 = vmatprep.subr.bf16.mxu0 0
    %1334 = vmatpush1.bf16.msra.mxu0 %v1321
    %1335 = vmatprep.subr.bf16.mxu0 0
    %1336 = vmatpush1.bf16.msra.mxu0 %v1322
    %1337 = vmatprep.subr.bf16.mxu0 0
    %1338 = vmatpush1.bf16.msra.mxu0 %v1323
    %1339 = vmatprep.subr.bf16.mxu0 0
    %1340 = vmatpush1.bf16.msra.mxu0 %v1324
    %1341 = vmatprep.subr.bf16.mxu0 0
    %1342 = vmatpush1.bf16.msra.mxu0 0
    %1343 = vmatprep.subr.bf16.mxu0 0
    %1344 = vmatpush1.bf16.msra.mxu0 0
    %1345 = vmatprep.subr.bf16.mxu0 0
    %1346 = vmatpush1.bf16.msra.mxu0 0
    %1347 = vmatprep.subr.bf16.mxu0 0
    %1348 = vmatpush1.bf16.msra.mxu0 0
    %1349 = vmatprep.subr.bf16.mxu0 0
    %1350 = vmatpush1.bf16.msra.mxu0 0
    %1351 = vmatprep.subr.bf16.mxu0 0
    %1352 = vmatpush1.bf16.msra.mxu0 0
    %1353 = vmatprep.subr.bf16.mxu0 0
    %1354 = vmatpush1.bf16.msra.mxu0 0
    %1355 = vmatprep.subr.bf16.mxu0 0
    %1356 = vmatpush1.bf16.msra.mxu0 0
    %1357 = vmatprep.mubr.bf16.mxu0 0
    %1358 = vmatmul.mubr.bf16.gmra.mrb[0].mxu0 %v1309
    %v1359 = vpop.f32.mrb[0].mxu0
    %v1360 = vadd.f32 0.0, %v1359
    %v1361 = vpop.f32.mrb[0].mxu0
    %v1362 = vpop.f32.mrb[0].mxu0
    %v1363 = vadd.f32 0.0, %v1362
    %v1364 = vpop.f32.mrb[0].mxu0
    %1365 = vmatprep.mubr.bf16.mxu0 0
    %1366 = vmatmul.mubr.bf16.gmra.mrb[0].mxu0 %v1310
    %v1367 = vpop.f32.mrb[0].mxu0
    %v1368 = vadd.f32 0.0, %v1367
    %v1369 = vpop.f32.mrb[0].mxu0
    %v1370 = vpop.f32.mrb[0].mxu0
    %v1371 = vadd.f32 0.0, %v1370
    %v1372 = vpop.f32.mrb[0].mxu0
    %1373 = vmatprep.mubr.bf16.mxu0 0
    %1374 = vmatmul.mubr.bf16.gmra.mrb[0].mxu0 %v1311
    %v1375 = vpop.f32.mrb[0].mxu0
    %v1376 = vadd.f32 0.0, %v1375
    %v1377 = vpop.f32.mrb[0].mxu0
    %v1378 = vpop.f32.mrb[0].mxu0
    %v1379 = vadd.f32 0.0, %v1378
    %v1380 = vpop.f32.mrb[0].mxu0
    %1381 = vmatprep.mubr.bf16.mxu0 0
    %1382 = vmatmul.mubr.bf16.gmra.mrb[0].mxu0 %v1312
    %v1383 = vpop.f32.mrb[0].mxu0
    %v1384 = vadd.f32 0.0, %v1383
    %v1385 = vpop.f32.mrb[0].mxu0
    %v1386 = vpop.f32.mrb[0].mxu0
    %v1387 = vadd.f32 0.0, %v1386
    %v1388 = vpop.f32.mrb[0].mxu0
    %1389 = vmatprep.mubr.bf16.mxu0 0
    %1390 = vmatmul.mubr.bf16.gmra.mrb[0].mxu0 %v1313
    %v1391 = vpop.f32.mrb[0].mxu0
    %v1392 = vadd.f32 0.0, %v1391
    %v1393 = vpop.f32.mrb[0].mxu0
    %v1394 = vpop.f32.mrb[0].mxu0
    %v1395 = vadd.f32 0.0, %v1394
    %v1396 = vpop.f32.mrb[0].mxu0
    %1397 = vmatprep.mubr.bf16.mxu0 0
    %1398 = vmatmul.mubr.bf16.gmra.mrb[0].mxu0 %v1314
    %v1399 = vpop.f32.mrb[0].mxu0
    %v1400 = vadd.f32 0.0, %v1399
    %v1401 = vpop.f32.mrb[0].mxu0
    %v1402 = vpop.f32.mrb[0].mxu0
    %v1403 = vadd.f32 0.0, %v1402
    %v1404 = vpop.f32.mrb[0].mxu0
    %1405 = vmatprep.mubr.bf16.mxu0 0
    %1406 = vmatmul.mubr.bf16.gmra.mrb[0].mxu0 %v1315
    %v1407 = vpop.f32.mrb[0].mxu0
    %v1408 = vadd.f32 0.0, %v1407
    %v1409 = vpop.f32.mrb[0].mxu0
    %v1410 = vpop.f32.mrb[0].mxu0
    %v1411 = vadd.f32 0.0, %v1410
    %v1412 = vpop.f32.mrb[0].mxu0
    %1413 = vmatprep.mubr.bf16.mxu0 0
    %1414 = vmatmul.mubr.bf16.gmra.mrb[0].mxu0 %v1316
    %v1415 = vpop.f32.mrb[0].mxu0
    %v1416 = vadd.f32 0.0, %v1415
    %v1417 = vpop.f32.mrb[0].mxu0
    %v1418 = vpop.f32.mrb[0].mxu0
    %v1419 = vadd.f32 0.0, %v1418
    %v1420 = vpop.f32.mrb[0].mxu0
    %1421 = vdwg.mxu0
    %1422 = vmatprep.subr.bf16.mxu0 0
    %1423 = vmatpush1.bf16.msra.mxu0 %v806
    %1424 = vmatprep.subr.bf16.mxu0 0
    %1425 = vmatpush1.bf16.msra.mxu0 %v807
    %1426 = vmatprep.subr.bf16.mxu0 0
    %1427 = vmatpush1.bf16.msra.mxu0 %v808
    %1428 = vmatprep.subr.bf16.mxu0 0
    %1429 = vmatpush1.bf16.msra.mxu0 %v809
    %1430 = vmatprep.subr.bf16.mxu0 0
    %1431 = vmatpush1.bf16.msra.mxu0 %v810
    %1432 = vmatprep.subr.bf16.mxu0 0
    %1433 = vmatpush1.bf16.msra.mxu0 %v811
    %1434 = vmatprep.subr.bf16.mxu0 0
    %1435 = vmatpush1.bf16.msra.mxu0 %v812
    %1436 = vmatprep.subr.bf16.mxu0 0
    %1437 = vmatpush1.bf16.msra.mxu0 %v813
    %1438 = vmatprep.subr.bf16.mxu0 0
    %1439 = vmatpush1.bf16.msra.mxu0 0
    %1440 = vmatprep.subr.bf16.mxu0 0
    %1441 = vmatpush1.bf16.msra.mxu0 0
    %1442 = vmatprep.subr.bf16.mxu0 0
    %1443 = vmatpush1.bf16.msra.mxu0 0
    %1444 = vmatprep.subr.bf16.mxu0 0
    %1445 = vmatpush1.bf16.msra.mxu0 0
    %1446 = vmatprep.subr.bf16.mxu0 0
    %1447 = vmatpush1.bf16.msra.mxu0 0
    %1448 = vmatprep.subr.bf16.mxu0 0
    %1449 = vmatpush1.bf16.msra.mxu0 0
    %1450 = vmatprep.subr.bf16.mxu0 0
    %1451 = vmatpush1.bf16.msra.mxu0 0
    %1452 = vmatprep.subr.bf16.mxu0 0
    %1453 = vmatpush1.bf16.msra.mxu0 0
    %1454 = vmatprep.mubr.bf16.mxu0 0
    %1455 = vmatmul.mubr.bf16.gmra.mrb[0].mxu0 %v798
    %v1456 = vpop.f32.mrb[0].mxu0
    %v1457 = vadd.f32 %v1360, %v1456
    %v1458 = vpop.f32.mrb[0].mxu0
    %v1459 = vpop.f32.mrb[0].mxu0
    %v1460 = vadd.f32 %v1363, %v1459
    %v1461 = vpop.f32.mrb[0].mxu0
    %1462 = vmatprep.mubr.bf16.mxu0 0
    %1463 = vmatmul.mubr.bf16.gmra.mrb[0].mxu0 %v799
    %v1464 = vpop.f32.mrb[0].mxu0
    %v1465 = vadd.f32 %v1368, %v1464
    %v1466 = vpop.f32.mrb[0].mxu0
    %v1467 = vpop.f32.mrb[0].mxu0
    %v1468 = vadd.f32 %v1371, %v1467
    %v1469 = vpop.f32.mrb[0].mxu0
    %1470 = vmatprep.mubr.bf16.mxu0 0
    %1471 = vmatmul.mubr.bf16.gmra.mrb[0].mxu0 %v800
    %v1472 = vpop.f32.mrb[0].mxu0
    %v1473 = vadd.f32 %v1376, %v1472
    %v1474 = vpop.f32.mrb[0].mxu0
    %v1475 = vpop.f32.mrb[0].mxu0
    %v1476 = vadd.f32 %v1379, %v1475
    %v1477 = vpop.f32.mrb[0].mxu0
    %1478 = vmatprep.mubr.bf16.mxu0 0
    %1479 = vmatmul.mubr.bf16.gmra.mrb[0].mxu0 %v801
    %v1480 = vpop.f32.mrb[0].mxu0
    %v1481 = vadd.f32 %v1384, %v1480
    %v1482 = vpop.f32.mrb[0].mxu0
    %v1483 = vpop.f32.mrb[0].mxu0
    %v1484 = vadd.f32 %v1387, %v1483
    %v1485 = vpop.f32.mrb[0].mxu0
    %1486 = vmatprep.mubr.bf16.mxu0 0
    %1487 = vmatmul.mubr.bf16.gmra.mrb[0].mxu0 %v802
    %v1488 = vpop.f32.mrb[0].mxu0
    %v1489 = vadd.f32 %v1392, %v1488
    %v1490 = vpop.f32.mrb[0].mxu0
    %v1491 = vpop.f32.mrb[0].mxu0
    %v1492 = vadd.f32 %v1395, %v1491
    %v1493 = vpop.f32.mrb[0].mxu0
    %1494 = vmatprep.mubr.bf16.mxu0 0
    %1495 = vmatmul.mubr.bf16.gmra.mrb[0].mxu0 %v803
    %v1496 = vpop.f32.mrb[0].mxu0
    %v1497 = vadd.f32 %v1400, %v1496
    %v1498 = vpop.f32.mrb[0].mxu0
    %v1499 = vpop.f32.mrb[0].mxu0
    %v1500 = vadd.f32 %v1403, %v1499
    %v1501 = vpop.f32.mrb[0].mxu0
    %1502 = vmatprep.mubr.bf16.mxu0 0
    %1503 = vmatmul.mubr.bf16.gmra.mrb[0].mxu0 %v804
    %v1504 = vpop.f32.mrb[0].mxu0
    %v1505 = vadd.f32 %v1408, %v1504
    %v1506 = vpop.f32.mrb[0].mxu0
    %v1507 = vpop.f32.mrb[0].mxu0
    %v1508 = vadd.f32 %v1411, %v1507
    %v1509 = vpop.f32.mrb[0].mxu0
    %1510 = vmatprep.mubr.bf16.mxu0 0
    %1511 = vmatmul.mubr.bf16.gmra.mrb[0].mxu0 %v805
    %v1512 = vpop.f32.mrb[0].mxu0
    %v1513 = vadd.f32 %v1416, %v1512
    %v1514 = vpop.f32.mrb[0].mxu0
    %v1515 = vpop.f32.mrb[0].mxu0
    %v1516 = vadd.f32 %v1419, %v1515
    %v1517 = vpop.f32.mrb[0].mxu0
    %1518 = vdwg.mxu0
    %s1519 = scalar_lea.vmem [#allocation4], 8
    %v1520 = vld [vmem:[%s1519] sm:$0xf]
    %1521 = vrot.lane.b32.xlu0 %v302, 48
    %v1522 = vpop.permute.xlu0 %1521
    %1523 = vrot.lane.b32.xlu0 %v303, 48
    %v1524 = vpop.permute.xlu0 %1523
    %1525 = vrot.lane.b32.xlu0 %v304, 48
    %v1526 = vpop.permute.xlu0 %1525
    %1527 = vrot.lane.b32.xlu0 %v305, 48
    %v1528 = vpop.permute.xlu0 %1527
    %1529 = vrot.lane.b32.xlu0 %v306, 48
    %v1530 = vpop.permute.xlu0 %1529
    %1531 = vrot.lane.b32.xlu0 %v307, 48
    %v1532 = vpop.permute.xlu0 %1531
    %1533 = vrot.lane.b32.xlu0 %v308, 48
    %v1534 = vpop.permute.xlu0 %1533
    %1535 = vrot.lane.b32.xlu0 %v309, 48
    %v1536 = vpop.permute.xlu0 %1535
    %v1538 = vsel %vm335, %v1522, 0
    %v1541 = vsel %vm335, %v1524, 0
    %v1544 = vsel %vm335, %v1526, 0
    %v1547 = vsel %vm335, %v1528, 0
    %v1550 = vsel %vm335, %v1530, 0
    %v1553 = vsel %vm335, %v1532, 0
    %v1556 = vsel %vm335, %v1534, 0
    %v1559 = vsel %vm335, %v1536, 0
    %v1562 = vsel %vm360, %v1520, 0
    %1564 = vmatprep.subr.bf16.mxu0 0
    %1565 = vmatpush1.bf16.msra.mxu0 %v1562
    %1566 = vmatprep.subr.bf16.mxu0 0
    %1567 = vmatpush1.bf16.msra.mxu0 0
    %1568 = vmatprep.subr.bf16.mxu0 0
    %1569 = vmatpush1.bf16.msra.mxu0 0
    %1570 = vmatprep.subr.bf16.mxu0 0
    %1571 = vmatpush1.bf16.msra.mxu0 0
    %1572 = vmatprep.subr.bf16.mxu0 0
    %1573 = vmatpush1.bf16.msra.mxu0 0
    %1574 = vmatprep.subr.bf16.mxu0 0
    %1575 = vmatpush1.bf16.msra.mxu0 0
    %1576 = vmatprep.subr.bf16.mxu0 0
    %1577 = vmatpush1.bf16.msra.mxu0 0
    %1578 = vmatprep.subr.bf16.mxu0 0
    %1579 = vmatpush1.bf16.msra.mxu0 0
    %1580 = vmatprep.subr.bf16.mxu0 0
    %1581 = vmatpush1.bf16.msra.mxu0 0
    %1582 = vmatprep.subr.bf16.mxu0 0
    %1583 = vmatpush1.bf16.msra.mxu0 0
    %1584 = vmatprep.subr.bf16.mxu0 0
    %1585 = vmatpush1.bf16.msra.mxu0 0
    %1586 = vmatprep.subr.bf16.mxu0 0
    %1587 = vmatpush1.bf16.msra.mxu0 0
    %1588 = vmatprep.subr.bf16.mxu0 0
    %1589 = vmatpush1.bf16.msra.mxu0 0
    %1590 = vmatprep.subr.bf16.mxu0 0
    %1591 = vmatpush1.bf16.msra.mxu0 0
    %1592 = vmatprep.subr.bf16.mxu0 0
    %1593 = vmatpush1.bf16.msra.mxu0 0
    %1594 = vmatprep.subr.bf16.mxu0 0
    %1595 = vmatpush1.bf16.msra.mxu0 0
    %1596 = vmatprep.mubr.bf16.mxu0 0
    %1597 = vmatmul.mubr.bf16.gmra.mrb[0].mxu0 %v1538
    %v1598 = vpop.f32.mrb[0].mxu0
    %v1599 = vadd.f32 0.0, %v1598
    %v1600 = vpop.f32.mrb[0].mxu0
    %v1601 = vpop.f32.mrb[0].mxu0
    %v1602 = vadd.f32 0.0, %v1601
    %v1603 = vpop.f32.mrb[0].mxu0
    %1604 = vmatprep.mubr.bf16.mxu0 0
    %1605 = vmatmul.mubr.bf16.gmra.mrb[0].mxu0 %v1541
    %v1606 = vpop.f32.mrb[0].mxu0
    %v1607 = vadd.f32 0.0, %v1606
    %v1608 = vpop.f32.mrb[0].mxu0
    %v1609 = vpop.f32.mrb[0].mxu0
    %v1610 = vadd.f32 0.0, %v1609
    %v1611 = vpop.f32.mrb[0].mxu0
    %1612 = vmatprep.mubr.bf16.mxu0 0
    %1613 = vmatmul.mubr.bf16.gmra.mrb[0].mxu0 %v1544
    %v1614 = vpop.f32.mrb[0].mxu0
    %v1615 = vadd.f32 0.0, %v1614
    %v1616 = vpop.f32.mrb[0].mxu0
    %v1617 = vpop.f32.mrb[0].mxu0
    %v1618 = vadd.f32 0.0, %v1617
    %v1619 = vpop.f32.mrb[0].mxu0
    %1620 = vmatprep.mubr.bf16.mxu0 0
    %1621 = vmatmul.mubr.bf16.gmra.mrb[0].mxu0 %v1547
    %v1622 = vpop.f32.mrb[0].mxu0
    %v1623 = vadd.f32 0.0, %v1622
    %v1624 = vpop.f32.mrb[0].mxu0
    %v1625 = vpop.f32.mrb[0].mxu0
    %v1626 = vadd.f32 0.0, %v1625
    %v1627 = vpop.f32.mrb[0].mxu0
    %1628 = vmatprep.mubr.bf16.mxu0 0
    %1629 = vmatmul.mubr.bf16.gmra.mrb[0].mxu0 %v1550
    %v1630 = vpop.f32.mrb[0].mxu0
    %v1631 = vadd.f32 0.0, %v1630
    %v1632 = vpop.f32.mrb[0].mxu0
    %v1633 = vpop.f32.mrb[0].mxu0
    %v1634 = vadd.f32 0.0, %v1633
    %v1635 = vpop.f32.mrb[0].mxu0
    %1636 = vmatprep.mubr.bf16.mxu0 0
    %1637 = vmatmul.mubr.bf16.gmra.mrb[0].mxu0 %v1553
    %v1638 = vpop.f32.mrb[0].mxu0
    %v1639 = vadd.f32 0.0, %v1638
    %v1640 = vpop.f32.mrb[0].mxu0
    %v1641 = vpop.f32.mrb[0].mxu0
    %v1642 = vadd.f32 0.0, %v1641
    %v1643 = vpop.f32.mrb[0].mxu0
    %1644 = vmatprep.mubr.bf16.mxu0 0
    %1645 = vmatmul.mubr.bf16.gmra.mrb[0].mxu0 %v1556
    %v1646 = vpop.f32.mrb[0].mxu0
    %v1647 = vadd.f32 0.0, %v1646
    %v1648 = vpop.f32.mrb[0].mxu0
    %v1649 = vpop.f32.mrb[0].mxu0
    %v1650 = vadd.f32 0.0, %v1649
    %v1651 = vpop.f32.mrb[0].mxu0
    %1652 = vmatprep.mubr.bf16.mxu0 0
    %1653 = vmatmul.mubr.bf16.gmra.mrb[0].mxu0 %v1559
    %v1654 = vpop.f32.mrb[0].mxu0
    %v1655 = vadd.f32 0.0, %v1654
    %v1656 = vpop.f32.mrb[0].mxu0
    %v1657 = vpop.f32.mrb[0].mxu0
    %v1658 = vadd.f32 0.0, %v1657
    %v1659 = vpop.f32.mrb[0].mxu0
    %1660 = vdwg.mxu0
    %1661 = vrot.lane.b32.xlu0 %v302, 112
    %v1662 = vpop.permute.xlu0 %1661
    %1663 = vrot.lane.b32.xlu0 %v303, 112
    %v1664 = vpop.permute.xlu0 %1663
    %1665 = vrot.lane.b32.xlu0 %v304, 112
    %v1666 = vpop.permute.xlu0 %1665
    %1667 = vrot.lane.b32.xlu0 %v305, 112
    %v1668 = vpop.permute.xlu0 %1667
    %1669 = vrot.lane.b32.xlu0 %v306, 112
    %v1670 = vpop.permute.xlu0 %1669
    %1671 = vrot.lane.b32.xlu0 %v307, 112
    %v1672 = vpop.permute.xlu0 %1671
    %1673 = vrot.lane.b32.xlu0 %v308, 112
    %v1674 = vpop.permute.xlu0 %1673
    %1675 = vrot.lane.b32.xlu0 %v309, 112
    %v1676 = vpop.permute.xlu0 %1675
    %1677 = vrot.lane.b32.xlu0 %v302, 80
    %v1678 = vpop.permute.xlu0 %1677
    %1679 = vrot.lane.b32.xlu0 %v303, 80
    %v1680 = vpop.permute.xlu0 %1679
    %1681 = vrot.lane.b32.xlu0 %v304, 80
    %v1682 = vpop.permute.xlu0 %1681
    %1683 = vrot.lane.b32.xlu0 %v305, 80
    %v1684 = vpop.permute.xlu0 %1683
    %1685 = vrot.lane.b32.xlu0 %v306, 80
    %v1686 = vpop.permute.xlu0 %1685
    %1687 = vrot.lane.b32.xlu0 %v307, 80
    %v1688 = vpop.permute.xlu0 %1687
    %1689 = vrot.lane.b32.xlu0 %v308, 80
    %v1690 = vpop.permute.xlu0 %1689
    %1691 = vrot.lane.b32.xlu0 %v309, 80
    %v1692 = vpop.permute.xlu0 %1691
    %v1694 = vsel %vm335, %v1662, 0
    %v1697 = vsel %vm335, %v1664, 0
    %v1700 = vsel %vm335, %v1666, 0
    %v1703 = vsel %vm335, %v1668, 0
    %v1706 = vsel %vm335, %v1670, 0
    %v1709 = vsel %vm335, %v1672, 0
    %v1712 = vsel %vm335, %v1674, 0
    %v1715 = vsel %vm335, %v1676, 0
    %v1718 = vsel %vm335, %v1678, 0
    %v1721 = vsel %vm335, %v1680, 0
    %v1724 = vsel %vm335, %v1682, 0
    %v1727 = vsel %vm335, %v1684, 0
    %v1730 = vsel %vm335, %v1686, 0
    %v1733 = vsel %vm335, %v1688, 0
    %v1736 = vsel %vm335, %v1690, 0
    %v1739 = vsel %vm335, %v1692, 0
    %1741 = vmatprep.subr.bf16.mxu0 0
    %1742 = vmatpush1.bf16.xpose.msra.mxu0 %v1718
    %1743 = vmatprep.subr.bf16.mxu0 0
    %1744 = vmatpush1.bf16.xpose.msra.mxu0 %v1721
    %1745 = vmatprep.subr.bf16.mxu0 0
    %1746 = vmatpush1.bf16.xpose.msra.mxu0 %v1724
    %1747 = vmatprep.subr.bf16.mxu0 0
    %1748 = vmatpush1.bf16.xpose.msra.mxu0 %v1727
    %1749 = vmatprep.subr.bf16.mxu0 0
    %1750 = vmatpush1.bf16.xpose.msra.mxu0 %v1730
    %1751 = vmatprep.subr.bf16.mxu0 0
    %1752 = vmatpush1.bf16.xpose.msra.mxu0 %v1733
    %1753 = vmatprep.subr.bf16.mxu0 0
    %1754 = vmatpush1.bf16.xpose.msra.mxu0 %v1736
    %1755 = vmatprep.subr.bf16.mxu0 0
    %1756 = vmatpush1.bf16.xpose.msra.mxu0 %v1739
    %1757 = vmatprep.subr.bf16.mxu0 0
    %1758 = vmatpush1.bf16.xpose.msra.mxu0 0
    %1759 = vmatprep.subr.bf16.mxu0 0
    %1760 = vmatpush1.bf16.xpose.msra.mxu0 0
    %1761 = vmatprep.subr.bf16.mxu0 0
    %1762 = vmatpush1.bf16.xpose.msra.mxu0 0
    %1763 = vmatprep.subr.bf16.mxu0 0
    %1764 = vmatpush1.bf16.xpose.msra.mxu0 0
    %1765 = vmatprep.subr.bf16.mxu0 0
    %1766 = vmatpush1.bf16.xpose.msra.mxu0 0
    %1767 = vmatprep.subr.bf16.mxu0 0
    %1768 = vmatpush1.bf16.xpose.msra.mxu0 0
    %1769 = vmatprep.subr.bf16.mxu0 0
    %1770 = vmatpush1.bf16.xpose.msra.mxu0 0
    %1771 = vmatprep.subr.bf16.mxu0 0
    %1772 = vmatpush1.bf16.xpose.msra.mxu0 0
    %1773 = vmatprep.mubr.bf16.mxu0 0
    %1774 = vmatmul.mubr.bf16.gmra.mrb[0].mxu0 %v1694
    %v1775 = vpop.f32.mrb[0].mxu0
    %v1776 = vadd.f32 0.0, %v1775
    %v1777 = vpop.f32.mrb[0].mxu0
    %v1778 = vpop.f32.mrb[0].mxu0
    %v1779 = vadd.f32 0.0, %v1778
    %v1780 = vpop.f32.mrb[0].mxu0
    %1781 = vmatprep.mubr.bf16.mxu0 0
    %1782 = vmatmul.mubr.bf16.gmra.mrb[0].mxu0 %v1697
    %v1783 = vpop.f32.mrb[0].mxu0
    %v1784 = vadd.f32 0.0, %v1783
    %v1785 = vpop.f32.mrb[0].mxu0
    %v1786 = vpop.f32.mrb[0].mxu0
    %v1787 = vadd.f32 0.0, %v1786
    %v1788 = vpop.f32.mrb[0].mxu0
    %1789 = vmatprep.mubr.bf16.mxu0 0
    %1790 = vmatmul.mubr.bf16.gmra.mrb[0].mxu0 %v1700
    %v1791 = vpop.f32.mrb[0].mxu0
    %v1792 = vadd.f32 0.0, %v1791
    %v1793 = vpop.f32.mrb[0].mxu0
    %v1794 = vpop.f32.mrb[0].mxu0
    %v1795 = vadd.f32 0.0, %v1794
    %v1796 = vpop.f32.mrb[0].mxu0
    %1797 = vmatprep.mubr.bf16.mxu0 0
    %1798 = vmatmul.mubr.bf16.gmra.mrb[0].mxu0 %v1703
    %v1799 = vpop.f32.mrb[0].mxu0
    %v1800 = vadd.f32 0.0, %v1799
    %v1801 = vpop.f32.mrb[0].mxu0
    %v1802 = vpop.f32.mrb[0].mxu0
    %v1803 = vadd.f32 0.0, %v1802
    %v1804 = vpop.f32.mrb[0].mxu0
    %1805 = vmatprep.mubr.bf16.mxu0 0
    %1806 = vmatmul.mubr.bf16.gmra.mrb[0].mxu0 %v1706
    %v1807 = vpop.f32.mrb[0].mxu0
    %v1808 = vadd.f32 0.0, %v1807
    %v1809 = vpop.f32.mrb[0].mxu0
    %v1810 = vpop.f32.mrb[0].mxu0
    %v1811 = vadd.f32 0.0, %v1810
    %v1812 = vpop.f32.mrb[0].mxu0
    %1813 = vmatprep.mubr.bf16.mxu0 0
    %1814 = vmatmul.mubr.bf16.gmra.mrb[0].mxu0 %v1709
    %v1815 = vpop.f32.mrb[0].mxu0
    %v1816 = vadd.f32 0.0, %v1815
    %v1817 = vpop.f32.mrb[0].mxu0
    %v1818 = vpop.f32.mrb[0].mxu0
    %v1819 = vadd.f32 0.0, %v1818
    %v1820 = vpop.f32.mrb[0].mxu0
    %1821 = vmatprep.mubr.bf16.mxu0 0
    %1822 = vmatmul.mubr.bf16.gmra.mrb[0].mxu0 %v1712
    %v1823 = vpop.f32.mrb[0].mxu0
    %v1824 = vadd.f32 0.0, %v1823
    %v1825 = vpop.f32.mrb[0].mxu0
    %v1826 = vpop.f32.mrb[0].mxu0
    %v1827 = vadd.f32 0.0, %v1826
    %v1828 = vpop.f32.mrb[0].mxu0
    %1829 = vmatprep.mubr.bf16.mxu0 0
    %1830 = vmatmul.mubr.bf16.gmra.mrb[0].mxu0 %v1715
    %v1831 = vpop.f32.mrb[0].mxu0
    %v1832 = vadd.f32 0.0, %v1831
    %v1833 = vpop.f32.mrb[0].mxu0
    %v1834 = vpop.f32.mrb[0].mxu0
    %v1835 = vadd.f32 0.0, %v1834
    %v1836 = vpop.f32.mrb[0].mxu0
    %1837 = vdwg.mxu0
    %v1838 = vmul.f32 %v1776, 0.35355338
    %v1839 = vmul.f32 %v1779, 0.35355338
    %v1840 = vmul.f32 %v1784, 0.35355338
    %v1841 = vmul.f32 %v1787, 0.35355338
    %v1842 = vmul.f32 %v1792, 0.35355338
    %v1843 = vmul.f32 %v1795, 0.35355338
    %v1844 = vmul.f32 %v1800, 0.35355338
    %v1845 = vmul.f32 %v1803, 0.35355338
    %v1846 = vmul.f32 %v1808, 0.35355338
    %v1847 = vmul.f32 %v1811, 0.35355338
    %v1848 = vmul.f32 %v1816, 0.35355338
    %v1849 = vmul.f32 %v1819, 0.35355338
    %v1850 = vmul.f32 %v1824, 0.35355338
    %v1851 = vmul.f32 %v1827, 0.35355338
    %v1852 = vmul.f32 %v1832, 0.35355338
    %v1853 = vmul.f32 %v1835, 0.35355338
    %v1854 = vadd.f32 %v1838, %v140
    %v1855 = vadd.f32 %v1839, %v141
    %v1856 = vadd.f32 %v1840, %v142
    %v1857 = vadd.f32 %v1841, %v143
    %v1858 = vadd.f32 %v1842, %v144
    %v1859 = vadd.f32 %v1843, %v145
    %v1860 = vadd.f32 %v1844, %v146
    %v1861 = vadd.f32 %v1845, %v147
    %v1862 = vadd.f32 %v1846, %v148
    %v1863 = vadd.f32 %v1847, %v149
    %v1864 = vadd.f32 %v1848, %v150
    %v1865 = vadd.f32 %v1849, %v151
    %v1866 = vadd.f32 %v1850, %v152
    %v1867 = vadd.f32 %v1851, %v153
    %v1868 = vadd.f32 %v1852, %v154
    %v1869 = vadd.f32 %v1853, %v155
    %1870 = vmax.xlane.f32.xlu0 %v1854
    %v1871 = vpop.xlane.xlu0 %1870
    %1872 = vmax.xlane.f32.xlu0 %v1855
    %v1873 = vpop.xlane.xlu0 %1872
    %1874 = vmax.xlane.f32.xlu0 %v1856
    %v1875 = vpop.xlane.xlu0 %1874
    %1876 = vmax.xlane.f32.xlu0 %v1857
    %v1877 = vpop.xlane.xlu0 %1876
    %1878 = vmax.xlane.f32.xlu0 %v1858
    %v1879 = vpop.xlane.xlu0 %1878
    %1880 = vmax.xlane.f32.xlu0 %v1859
    %v1881 = vpop.xlane.xlu0 %1880
    %1882 = vmax.xlane.f32.xlu0 %v1860
    %v1883 = vpop.xlane.xlu0 %1882
    %1884 = vmax.xlane.f32.xlu0 %v1861
    %v1885 = vpop.xlane.xlu0 %1884
    %1886 = vmax.xlane.f32.xlu0 %v1862
    %v1887 = vpop.xlane.xlu0 %1886
    %1888 = vmax.xlane.f32.xlu0 %v1863
    %v1889 = vpop.xlane.xlu0 %1888
    %1890 = vmax.xlane.f32.xlu0 %v1864
    %v1891 = vpop.xlane.xlu0 %1890
    %1892 = vmax.xlane.f32.xlu0 %v1865
    %v1893 = vpop.xlane.xlu0 %1892
    %1894 = vmax.xlane.f32.xlu0 %v1866
    %v1895 = vpop.xlane.xlu0 %1894
    %1896 = vmax.xlane.f32.xlu0 %v1867
    %v1897 = vpop.xlane.xlu0 %1896
    %1898 = vmax.xlane.f32.xlu0 %v1868
    %v1899 = vpop.xlane.xlu0 %1898
    %1900 = vmax.xlane.f32.xlu0 %v1869
    %v1901 = vpop.xlane.xlu0 %1900
    %v1902 = vsub.f32 %v1854, %v1871
    %v1903 = vsub.f32 %v1855, %v1873
    %v1904 = vsub.f32 %v1856, %v1875
    %v1905 = vsub.f32 %v1857, %v1877
    %v1906 = vsub.f32 %v1858, %v1879
    %v1907 = vsub.f32 %v1859, %v1881
    %v1908 = vsub.f32 %v1860, %v1883
    %v1909 = vsub.f32 %v1861, %v1885
    %v1910 = vsub.f32 %v1862, %v1887
    %v1911 = vsub.f32 %v1863, %v1889
    %v1912 = vsub.f32 %v1864, %v1891
    %v1913 = vsub.f32 %v1865, %v1893
    %v1914 = vsub.f32 %v1866, %v1895
    %v1915 = vsub.f32 %v1867, %v1897
    %v1916 = vsub.f32 %v1868, %v1899
    %v1917 = vsub.f32 %v1869, %v1901
    %v1918 = vmul.f32 %v1902, 1.442695
    %v1919 = vpow.pop %v1918
    %v1920 = vmul.f32 %v1903, 1.442695
    %v1921 = vpow.pop %v1920
    %v1922 = vmul.f32 %v1904, 1.442695
    %v1923 = vpow.pop %v1922
    %v1924 = vmul.f32 %v1905, 1.442695
    %v1925 = vpow.pop %v1924
    %v1926 = vmul.f32 %v1906, 1.442695
    %v1927 = vpow.pop %v1926
    %v1928 = vmul.f32 %v1907, 1.442695
    %v1929 = vpow.pop %v1928
    %v1930 = vmul.f32 %v1908, 1.442695
    %v1931 = vpow.pop %v1930
    %v1932 = vmul.f32 %v1909, 1.442695
    %v1933 = vpow.pop %v1932
    %v1934 = vmul.f32 %v1910, 1.442695
    %v1935 = vpow.pop %v1934
    %v1936 = vmul.f32 %v1911, 1.442695
    %v1937 = vpow.pop %v1936
    %v1938 = vmul.f32 %v1912, 1.442695
    %v1939 = vpow.pop %v1938
    %v1940 = vmul.f32 %v1913, 1.442695
    %v1941 = vpow.pop %v1940
    %v1942 = vmul.f32 %v1914, 1.442695
    %v1943 = vpow.pop %v1942
    %v1944 = vmul.f32 %v1915, 1.442695
    %v1945 = vpow.pop %v1944
    %v1946 = vmul.f32 %v1916, 1.442695
    %v1947 = vpow.pop %v1946
    %v1948 = vmul.f32 %v1917, 1.442695
    %v1949 = vpow.pop %v1948
    %1950 = vadd.xlane.f32.xlu0 %v1919
    %v1951 = vpop.xlane.xlu0 %1950
    %1952 = vadd.xlane.f32.xlu0 %v1921
    %v1953 = vpop.xlane.xlu0 %1952
    %1954 = vadd.xlane.f32.xlu0 %v1923
    %v1955 = vpop.xlane.xlu0 %1954
    %1956 = vadd.xlane.f32.xlu0 %v1925
    %v1957 = vpop.xlane.xlu0 %1956
    %1958 = vadd.xlane.f32.xlu0 %v1927
    %v1959 = vpop.xlane.xlu0 %1958
    %1960 = vadd.xlane.f32.xlu0 %v1929
    %v1961 = vpop.xlane.xlu0 %1960
    %1962 = vadd.xlane.f32.xlu0 %v1931
    %v1963 = vpop.xlane.xlu0 %1962
    %1964 = vadd.xlane.f32.xlu0 %v1933
    %v1965 = vpop.xlane.xlu0 %1964
    %1966 = vadd.xlane.f32.xlu0 %v1935
    %v1967 = vpop.xlane.xlu0 %1966
    %1968 = vadd.xlane.f32.xlu0 %v1937
    %v1969 = vpop.xlane.xlu0 %1968
    %1970 = vadd.xlane.f32.xlu0 %v1939
    %v1971 = vpop.xlane.xlu0 %1970
    %1972 = vadd.xlane.f32.xlu0 %v1941
    %v1973 = vpop.xlane.xlu0 %1972
    %1974 = vadd.xlane.f32.xlu0 %v1943
    %v1975 = vpop.xlane.xlu0 %1974
    %1976 = vadd.xlane.f32.xlu0 %v1945
    %v1977 = vpop.xlane.xlu0 %1976
    %1978 = vadd.xlane.f32.xlu0 %v1947
    %v1979 = vpop.xlane.xlu0 %1978
    %1980 = vadd.xlane.f32.xlu0 %v1949
    %v1981 = vpop.xlane.xlu0 %1980
    %v1982 = vrcp.pop %v1951
    %v1983 = vrcp.pop %v1953
    %v1984 = vrcp.pop %v1955
    %v1985 = vrcp.pop %v1957
    %v1986 = vrcp.pop %v1959
    %v1987 = vrcp.pop %v1961
    %v1988 = vrcp.pop %v1963
    %v1989 = vrcp.pop %v1965
    %v1990 = vrcp.pop %v1967
    %v1991 = vrcp.pop %v1969
    %v1992 = vrcp.pop %v1971
    %v1993 = vrcp.pop %v1973
    %v1994 = vrcp.pop %v1975
    %v1995 = vrcp.pop %v1977
    %v1996 = vrcp.pop %v1979
    %v1997 = vrcp.pop %v1981
    %v1998 = vmul.f32 %v1919, %v1982
    %v1999 = vmul.f32 %v1921, %v1983
    %v2000 = vmul.f32 %v1923, %v1984
    %v2001 = vmul.f32 %v1925, %v1985
    %v2002 = vmul.f32 %v1927, %v1986
    %v2003 = vmul.f32 %v1929, %v1987
    %v2004 = vmul.f32 %v1931, %v1988
    %v2005 = vmul.f32 %v1933, %v1989
    %v2006 = vmul.f32 %v1935, %v1990
    %v2007 = vmul.f32 %v1937, %v1991
    %v2008 = vmul.f32 %v1939, %v1992
    %v2009 = vmul.f32 %v1941, %v1993
    %v2010 = vmul.f32 %v1943, %v1994
    %v2011 = vmul.f32 %v1945, %v1995
    %v2012 = vmul.f32 %v1947, %v1996
    %v2013 = vmul.f32 %v1949, %v1997
    %v2014 = vpack.c.bf16 %v1999, %v1998
    %v2015 = vpack.c.bf16 %v2001, %v2000
    %v2016 = vpack.c.bf16 %v2003, %v2002
    %v2017 = vpack.c.bf16 %v2005, %v2004
    %v2018 = vpack.c.bf16 %v2007, %v2006
    %v2019 = vpack.c.bf16 %v2009, %v2008
    %v2020 = vpack.c.bf16 %v2011, %v2010
    %v2021 = vpack.c.bf16 %v2013, %v2012
    %v2022 = vpack.c.bf16 %v1602, %v1599
    %v2023 = vpack.c.bf16 %v1610, %v1607
    %v2024 = vpack.c.bf16 %v1618, %v1615
    %v2025 = vpack.c.bf16 %v1626, %v1623
    %v2026 = vpack.c.bf16 %v1634, %v1631
    %v2027 = vpack.c.bf16 %v1642, %v1639
    %v2028 = vpack.c.bf16 %v1650, %v1647
    %v2029 = vpack.c.bf16 %v1658, %v1655
    %2030 = vmatprep.subr.bf16.mxu0 0
    %2031 = vmatpush1.bf16.msra.mxu0 %v2022
    %2032 = vmatprep.subr.bf16.mxu0 0
    %2033 = vmatpush1.bf16.msra.mxu0 %v2023
    %2034 = vmatprep.subr.bf16.mxu0 0
    %2035 = vmatpush1.bf16.msra.mxu0 %v2024
    %2036 = vmatprep.subr.bf16.mxu0 0
    %2037 = vmatpush1.bf16.msra.mxu0 %v2025
    %2038 = vmatprep.subr.bf16.mxu0 0
    %2039 = vmatpush1.bf16.msra.mxu0 %v2026
    %2040 = vmatprep.subr.bf16.mxu0 0
    %2041 = vmatpush1.bf16.msra.mxu0 %v2027
    %2042 = vmatprep.subr.bf16.mxu0 0
    %2043 = vmatpush1.bf16.msra.mxu0 %v2028
    %2044 = vmatprep.subr.bf16.mxu0 0
    %2045 = vmatpush1.bf16.msra.mxu0 %v2029
    %2046 = vmatprep.subr.bf16.mxu0 0
    %2047 = vmatpush1.bf16.msra.mxu0 0
    %2048 = vmatprep.subr.bf16.mxu0 0
    %2049 = vmatpush1.bf16.msra.mxu0 0
    %2050 = vmatprep.subr.bf16.mxu0 0
    %2051 = vmatpush1.bf16.msra.mxu0 0
    %2052 = vmatprep.subr.bf16.mxu0 0
    %2053 = vmatpush1.bf16.msra.mxu0 0
    %2054 = vmatprep.subr.bf16.mxu0 0
    %2055 = vmatpush1.bf16.msra.mxu0 0
    %2056 = vmatprep.subr.bf16.mxu0 0
    %2057 = vmatpush1.bf16.msra.mxu0 0
    %2058 = vmatprep.subr.bf16.mxu0 0
    %2059 = vmatpush1.bf16.msra.mxu0 0
    %2060 = vmatprep.subr.bf16.mxu0 0
    %2061 = vmatpush1.bf16.msra.mxu0 0
    %2062 = vmatprep.mubr.bf16.mxu0 0
    %2063 = vmatmul.mubr.bf16.gmra.mrb[0].mxu0 %v2014
    %v2064 = vpop.f32.mrb[0].mxu0
    %v2065 = vadd.f32 0.0, %v2064
    %v2066 = vpop.f32.mrb[0].mxu0
    %v2067 = vpop.f32.mrb[0].mxu0
    %v2068 = vadd.f32 0.0, %v2067
    %v2069 = vpop.f32.mrb[0].mxu0
    %2070 = vmatprep.mubr.bf16.mxu0 0
    %2071 = vmatmul.mubr.bf16.gmra.mrb[0].mxu0 %v2015
    %v2072 = vpop.f32.mrb[0].mxu0
    %v2073 = vadd.f32 0.0, %v2072
    %v2074 = vpop.f32.mrb[0].mxu0
    %v2075 = vpop.f32.mrb[0].mxu0
    %v2076 = vadd.f32 0.0, %v2075
    %v2077 = vpop.f32.mrb[0].mxu0
    %2078 = vmatprep.mubr.bf16.mxu0 0
    %2079 = vmatmul.mubr.bf16.gmra.mrb[0].mxu0 %v2016
    %v2080 = vpop.f32.mrb[0].mxu0
    %v2081 = vadd.f32 0.0, %v2080
    %v2082 = vpop.f32.mrb[0].mxu0
    %v2083 = vpop.f32.mrb[0].mxu0
    %v2084 = vadd.f32 0.0, %v2083
    %v2085 = vpop.f32.mrb[0].mxu0
    %2086 = vmatprep.mubr.bf16.mxu0 0
    %2087 = vmatmul.mubr.bf16.gmra.mrb[0].mxu0 %v2017
    %v2088 = vpop.f32.mrb[0].mxu0
    %v2089 = vadd.f32 0.0, %v2088
    %v2090 = vpop.f32.mrb[0].mxu0
    %v2091 = vpop.f32.mrb[0].mxu0
    %v2092 = vadd.f32 0.0, %v2091
    %v2093 = vpop.f32.mrb[0].mxu0
    %2094 = vmatprep.mubr.bf16.mxu0 0
    %2095 = vmatmul.mubr.bf16.gmra.mrb[0].mxu0 %v2018
    %v2096 = vpop.f32.mrb[0].mxu0
    %v2097 = vadd.f32 0.0, %v2096
    %v2098 = vpop.f32.mrb[0].mxu0
    %v2099 = vpop.f32.mrb[0].mxu0
    %v2100 = vadd.f32 0.0, %v2099
    %v2101 = vpop.f32.mrb[0].mxu0
    %2102 = vmatprep.mubr.bf16.mxu0 0
    %2103 = vmatmul.mubr.bf16.gmra.mrb[0].mxu0 %v2019
    %v2104 = vpop.f32.mrb[0].mxu0
    %v2105 = vadd.f32 0.0, %v2104
    %v2106 = vpop.f32.mrb[0].mxu0
    %v2107 = vpop.f32.mrb[0].mxu0
    %v2108 = vadd.f32 0.0, %v2107
    %v2109 = vpop.f32.mrb[0].mxu0
    %2110 = vmatprep.mubr.bf16.mxu0 0
    %2111 = vmatmul.mubr.bf16.gmra.mrb[0].mxu0 %v2020
    %v2112 = vpop.f32.mrb[0].mxu0
    %v2113 = vadd.f32 0.0, %v2112
    %v2114 = vpop.f32.mrb[0].mxu0
    %v2115 = vpop.f32.mrb[0].mxu0
    %v2116 = vadd.f32 0.0, %v2115
    %v2117 = vpop.f32.mrb[0].mxu0
    %2118 = vmatprep.mubr.bf16.mxu0 0
    %2119 = vmatmul.mubr.bf16.gmra.mrb[0].mxu0 %v2021
    %v2120 = vpop.f32.mrb[0].mxu0
    %v2121 = vadd.f32 0.0, %v2120
    %v2122 = vpop.f32.mrb[0].mxu0
    %v2123 = vpop.f32.mrb[0].mxu0
    %v2124 = vadd.f32 0.0, %v2123
    %v2125 = vpop.f32.mrb[0].mxu0
    %2126 = vdwg.mxu0
    %v2127 = vadd.f32 %v1457, %v2065
    %v2128 = vadd.f32 %v1460, %v2068
    %v2129 = vadd.f32 %v1465, %v2073
    %v2130 = vadd.f32 %v1468, %v2076
    %v2131 = vadd.f32 %v1473, %v2081
    %v2132 = vadd.f32 %v1476, %v2084
    %v2133 = vadd.f32 %v1481, %v2089
    %v2134 = vadd.f32 %v1484, %v2092
    %v2135 = vadd.f32 %v1489, %v2097
    %v2136 = vadd.f32 %v1492, %v2100
    %v2137 = vadd.f32 %v1497, %v2105
    %v2138 = vadd.f32 %v1500, %v2108
    %v2139 = vadd.f32 %v1505, %v2113
    %v2140 = vadd.f32 %v1508, %v2116
    %v2141 = vadd.f32 %v1513, %v2121
    %v2142 = vadd.f32 %v1516, %v2124
    %s2143 = scalar_lea.vmem [#allocation4], 12
    %v2144 = vld [vmem:[%s2143] sm:$0xf]
    %2145 = vrot.lane.b32.xlu0 %v302, 40
    %v2146 = vpop.permute.xlu0 %2145
    %2147 = vrot.lane.b32.xlu0 %v303, 40
    %v2148 = vpop.permute.xlu0 %2147
    %2149 = vrot.lane.b32.xlu0 %v304, 40
    %v2150 = vpop.permute.xlu0 %2149
    %2151 = vrot.lane.b32.xlu0 %v305, 40
    %v2152 = vpop.permute.xlu0 %2151
    %2153 = vrot.lane.b32.xlu0 %v306, 40
    %v2154 = vpop.permute.xlu0 %2153
    %2155 = vrot.lane.b32.xlu0 %v307, 40
    %v2156 = vpop.permute.xlu0 %2155
    %2157 = vrot.lane.b32.xlu0 %v308, 40
    %v2158 = vpop.permute.xlu0 %2157
    %2159 = vrot.lane.b32.xlu0 %v309, 40
    %v2160 = vpop.permute.xlu0 %2159
    %v2162 = vsel %vm335, %v2146, 0
    %v2165 = vsel %vm335, %v2148, 0
    %v2168 = vsel %vm335, %v2150, 0
    %v2171 = vsel %vm335, %v2152, 0
    %v2174 = vsel %vm335, %v2154, 0
    %v2177 = vsel %vm335, %v2156, 0
    %v2180 = vsel %vm335, %v2158, 0
    %v2183 = vsel %vm335, %v2160, 0
    %v2186 = vsel %vm360, %v2144, 0
    %2188 = vmatprep.subr.bf16.mxu0 0
    %2189 = vmatpush1.bf16.msra.mxu0 %v2186
    %2190 = vmatprep.subr.bf16.mxu0 0
    %2191 = vmatpush1.bf16.msra.mxu0 0
    %2192 = vmatprep.subr.bf16.mxu0 0
    %2193 = vmatpush1.bf16.msra.mxu0 0
    %2194 = vmatprep.subr.bf16.mxu0 0
    %2195 = vmatpush1.bf16.msra.mxu0 0
    %2196 = vmatprep.subr.bf16.mxu0 0
    %2197 = vmatpush1.bf16.msra.mxu0 0
    %2198 = vmatprep.subr.bf16.mxu0 0
    %2199 = vmatpush1.bf16.msra.mxu0 0
    %2200 = vmatprep.subr.bf16.mxu0 0
    %2201 = vmatpush1.bf16.msra.mxu0 0
    %2202 = vmatprep.subr.bf16.mxu0 0
    %2203 = vmatpush1.bf16.msra.mxu0 0
    %2204 = vmatprep.subr.bf16.mxu0 0
    %2205 = vmatpush1.bf16.msra.mxu0 0
    %2206 = vmatprep.subr.bf16.mxu0 0
    %2207 = vmatpush1.bf16.msra.mxu0 0
    %2208 = vmatprep.subr.bf16.mxu0 0
    %2209 = vmatpush1.bf16.msra.mxu0 0
    %2210 = vmatprep.subr.bf16.mxu0 0
    %2211 = vmatpush1.bf16.msra.mxu0 0
    %2212 = vmatprep.subr.bf16.mxu0 0
    %2213 = vmatpush1.bf16.msra.mxu0 0
    %2214 = vmatprep.subr.bf16.mxu0 0
    %2215 = vmatpush1.bf16.msra.mxu0 0
    %2216 = vmatprep.subr.bf16.mxu0 0
    %2217 = vmatpush1.bf16.msra.mxu0 0
    %2218 = vmatprep.subr.bf16.mxu0 0
    %2219 = vmatpush1.bf16.msra.mxu0 0
    %2220 = vmatprep.mubr.bf16.mxu0 0
    %2221 = vmatmul.mubr.bf16.gmra.mrb[0].mxu0 %v2162
    %v2222 = vpop.f32.mrb[0].mxu0
    %v2223 = vadd.f32 0.0, %v2222
    %v2224 = vpop.f32.mrb[0].mxu0
    %v2225 = vpop.f32.mrb[0].mxu0
    %v2226 = vadd.f32 0.0, %v2225
    %v2227 = vpop.f32.mrb[0].mxu0
    %2228 = vmatprep.mubr.bf16.mxu0 0
    %2229 = vmatmul.mubr.bf16.gmra.mrb[0].mxu0 %v2165
    %v2230 = vpop.f32.mrb[0].mxu0
    %v2231 = vadd.f32 0.0, %v2230
    %v2232 = vpop.f32.mrb[0].mxu0
    %v2233 = vpop.f32.mrb[0].mxu0
    %v2234 = vadd.f32 0.0, %v2233
    %v2235 = vpop.f32.mrb[0].mxu0
    %2236 = vmatprep.mubr.bf16.mxu0 0
    %2237 = vmatmul.mubr.bf16.gmra.mrb[0].mxu0 %v2168
    %v2238 = vpop.f32.mrb[0].mxu0
    %v2239 = vadd.f32 0.0, %v2238
    %v2240 = vpop.f32.mrb[0].mxu0
    %v2241 = vpop.f32.mrb[0].mxu0
    %v2242 = vadd.f32 0.0, %v2241
    %v2243 = vpop.f32.mrb[0].mxu0
    %2244 = vmatprep.mubr.bf16.mxu0 0
    %2245 = vmatmul.mubr.bf16.gmra.mrb[0].mxu0 %v2171
    %v2246 = vpop.f32.mrb[0].mxu0
    %v2247 = vadd.f32 0.0, %v2246
    %v2248 = vpop.f32.mrb[0].mxu0
    %v2249 = vpop.f32.mrb[0].mxu0
    %v2250 = vadd.f32 0.0, %v2249
    %v2251 = vpop.f32.mrb[0].mxu0
    %2252 = vmatprep.mubr.bf16.mxu0 0
    %2253 = vmatmul.mubr.bf16.gmra.mrb[0].mxu0 %v2174
    %v2254 = vpop.f32.mrb[0].mxu0
    %v2255 = vadd.f32 0.0, %v2254
    %v2256 = vpop.f32.mrb[0].mxu0
    %v2257 = vpop.f32.mrb[0].mxu0
    %v2258 = vadd.f32 0.0, %v2257
    %v2259 = vpop.f32.mrb[0].mxu0
    %2260 = vmatprep.mubr.bf16.mxu0 0
    %2261 = vmatmul.mubr.bf16.gmra.mrb[0].mxu0 %v2177
    %v2262 = vpop.f32.mrb[0].mxu0
    %v2263 = vadd.f32 0.0, %v2262
    %v2264 = vpop.f32.mrb[0].mxu0
    %v2265 = vpop.f32.mrb[0].mxu0
    %v2266 = vadd.f32 0.0, %v2265
    %v2267 = vpop.f32.mrb[0].mxu0
    %2268 = vmatprep.mubr.bf16.mxu0 0
    %2269 = vmatmul.mubr.bf16.gmra.mrb[0].mxu0 %v2180
    %v2270 = vpop.f32.mrb[0].mxu0
    %v2271 = vadd.f32 0.0, %v2270
    %v2272 = vpop.f32.mrb[0].mxu0
    %v2273 = vpop.f32.mrb[0].mxu0
    %v2274 = vadd.f32 0.0, %v2273
    %v2275 = vpop.f32.mrb[0].mxu0
    %2276 = vmatprep.mubr.bf16.mxu0 0
    %2277 = vmatmul.mubr.bf16.gmra.mrb[0].mxu0 %v2183
    %v2278 = vpop.f32.mrb[0].mxu0
    %v2279 = vadd.f32 0.0, %v2278
    %v2280 = vpop.f32.mrb[0].mxu0
    %v2281 = vpop.f32.mrb[0].mxu0
    %v2282 = vadd.f32 0.0, %v2281
    %v2283 = vpop.f32.mrb[0].mxu0
    %2284 = vdwg.mxu0
    %2285 = vrot.lane.b32.xlu0 %v302, 104
    %v2286 = vpop.permute.xlu0 %2285
    %2287 = vrot.lane.b32.xlu0 %v303, 104
    %v2288 = vpop.permute.xlu0 %2287
    %2289 = vrot.lane.b32.xlu0 %v304, 104
    %v2290 = vpop.permute.xlu0 %2289
    %2291 = vrot.lane.b32.xlu0 %v305, 104
    %v2292 = vpop.permute.xlu0 %2291
    %2293 = vrot.lane.b32.xlu0 %v306, 104
    %v2294 = vpop.permute.xlu0 %2293
    %2295 = vrot.lane.b32.xlu0 %v307, 104
    %v2296 = vpop.permute.xlu0 %2295
    %2297 = vrot.lane.b32.xlu0 %v308, 104
    %v2298 = vpop.permute.xlu0 %2297
    %2299 = vrot.lane.b32.xlu0 %v309, 104
    %v2300 = vpop.permute.xlu0 %2299
    %2301 = vrot.lane.b32.xlu0 %v302, 72
    %v2302 = vpop.permute.xlu0 %2301
    %2303 = vrot.lane.b32.xlu0 %v303, 72
    %v2304 = vpop.permute.xlu0 %2303
    %2305 = vrot.lane.b32.xlu0 %v304, 72
    %v2306 = vpop.permute.xlu0 %2305
    %2307 = vrot.lane.b32.xlu0 %v305, 72
    %v2308 = vpop.permute.xlu0 %2307
    %2309 = vrot.lane.b32.xlu0 %v306, 72
    %v2310 = vpop.permute.xlu0 %2309
    %2311 = vrot.lane.b32.xlu0 %v307, 72
    %v2312 = vpop.permute.xlu0 %2311
    %2313 = vrot.lane.b32.xlu0 %v308, 72
    %v2314 = vpop.permute.xlu0 %2313
    %2315 = vrot.lane.b32.xlu0 %v309, 72
    %v2316 = vpop.permute.xlu0 %2315
    %v2318 = vsel %vm335, %v2286, 0
    %v2321 = vsel %vm335, %v2288, 0
    %v2324 = vsel %vm335, %v2290, 0
    %v2327 = vsel %vm335, %v2292, 0
    %v2330 = vsel %vm335, %v2294, 0
    %v2333 = vsel %vm335, %v2296, 0
    %v2336 = vsel %vm335, %v2298, 0
    %v2339 = vsel %vm335, %v2300, 0
    %v2342 = vsel %vm335, %v2302, 0
    %v2345 = vsel %vm335, %v2304, 0
    %v2348 = vsel %vm335, %v2306, 0
    %v2351 = vsel %vm335, %v2308, 0
    %v2354 = vsel %vm335, %v2310, 0
    %v2357 = vsel %vm335, %v2312, 0
    %v2360 = vsel %vm335, %v2314, 0
    %v2363 = vsel %vm335, %v2316, 0
    %2365 = vmatprep.subr.bf16.mxu0 0
    %2366 = vmatpush1.bf16.xpose.msra.mxu0 %v2342
    %2367 = vmatprep.subr.bf16.mxu0 0
    %2368 = vmatpush1.bf16.xpose.msra.mxu0 %v2345
    %2369 = vmatprep.subr.bf16.mxu0 0
    %2370 = vmatpush1.bf16.xpose.msra.mxu0 %v2348
    %2371 = vmatprep.subr.bf16.mxu0 0
    %2372 = vmatpush1.bf16.xpose.msra.mxu0 %v2351
    %2373 = vmatprep.subr.bf16.mxu0 0
    %2374 = vmatpush1.bf16.xpose.msra.mxu0 %v2354
    %2375 = vmatprep.subr.bf16.mxu0 0
    %2376 = vmatpush1.bf16.xpose.msra.mxu0 %v2357
    %2377 = vmatprep.subr.bf16.mxu0 0
    %2378 = vmatpush1.bf16.xpose.msra.mxu0 %v2360
    %2379 = vmatprep.subr.bf16.mxu0 0
    %2380 = vmatpush1.bf16.xpose.msra.mxu0 %v2363
    %2381 = vmatprep.subr.bf16.mxu0 0
    %2382 = vmatpush1.bf16.xpose.msra.mxu0 0
    %2383 = vmatprep.subr.bf16.mxu0 0
    %2384 = vmatpush1.bf16.xpose.msra.mxu0 0
    %2385 = vmatprep.subr.bf16.mxu0 0
    %2386 = vmatpush1.bf16.xpose.msra.mxu0 0
    %2387 = vmatprep.subr.bf16.mxu0 0
    %2388 = vmatpush1.bf16.xpose.msra.mxu0 0
    %2389 = vmatprep.subr.bf16.mxu0 0
    %2390 = vmatpush1.bf16.xpose.msra.mxu0 0
    %2391 = vmatprep.subr.bf16.mxu0 0
    %2392 = vmatpush1.bf16.xpose.msra.mxu0 0
    %2393 = vmatprep.subr.bf16.mxu0 0
    %2394 = vmatpush1.bf16.xpose.msra.mxu0 0
    %2395 = vmatprep.subr.bf16.mxu0 0
    %2396 = vmatpush1.bf16.xpose.msra.mxu0 0
    %2397 = vmatprep.mubr.bf16.mxu0 0
    %2398 = vmatmul.mubr.bf16.gmra.mrb[0].mxu0 %v2318
    %v2399 = vpop.f32.mrb[0].mxu0
    %v2400 = vadd.f32 0.0, %v2399
    %v2401 = vpop.f32.mrb[0].mxu0
    %v2402 = vpop.f32.mrb[0].mxu0
    %v2403 = vadd.f32 0.0, %v2402
    %v2404 = vpop.f32.mrb[0].mxu0
    %2405 = vmatprep.mubr.bf16.mxu0 0
    %2406 = vmatmul.mubr.bf16.gmra.mrb[0].mxu0 %v2321
    %v2407 = vpop.f32.mrb[0].mxu0
    %v2408 = vadd.f32 0.0, %v2407
    %v2409 = vpop.f32.mrb[0].mxu0
    %v2410 = vpop.f32.mrb[0].mxu0
    %v2411 = vadd.f32 0.0, %v2410
    %v2412 = vpop.f32.mrb[0].mxu0
    %2413 = vmatprep.mubr.bf16.mxu0 0
    %2414 = vmatmul.mubr.bf16.gmra.mrb[0].mxu0 %v2324
    %v2415 = vpop.f32.mrb[0].mxu0
    %v2416 = vadd.f32 0.0, %v2415
    %v2417 = vpop.f32.mrb[0].mxu0
    %v2418 = vpop.f32.mrb[0].mxu0
    %v2419 = vadd.f32 0.0, %v2418
    %v2420 = vpop.f32.mrb[0].mxu0
    %2421 = vmatprep.mubr.bf16.mxu0 0
    %2422 = vmatmul.mubr.bf16.gmra.mrb[0].mxu0 %v2327
    %v2423 = vpop.f32.mrb[0].mxu0
    %v2424 = vadd.f32 0.0, %v2423
    %v2425 = vpop.f32.mrb[0].mxu0
    %v2426 = vpop.f32.mrb[0].mxu0
    %v2427 = vadd.f32 0.0, %v2426
    %v2428 = vpop.f32.mrb[0].mxu0
    %2429 = vmatprep.mubr.bf16.mxu0 0
    %2430 = vmatmul.mubr.bf16.gmra.mrb[0].mxu0 %v2330
    %v2431 = vpop.f32.mrb[0].mxu0
    %v2432 = vadd.f32 0.0, %v2431
    %v2433 = vpop.f32.mrb[0].mxu0
    %v2434 = vpop.f32.mrb[0].mxu0
    %v2435 = vadd.f32 0.0, %v2434
    %v2436 = vpop.f32.mrb[0].mxu0
    %2437 = vmatprep.mubr.bf16.mxu0 0
    %2438 = vmatmul.mubr.bf16.gmra.mrb[0].mxu0 %v2333
    %v2439 = vpop.f32.mrb[0].mxu0
    %v2440 = vadd.f32 0.0, %v2439
    %v2441 = vpop.f32.mrb[0].mxu0
    %v2442 = vpop.f32.mrb[0].mxu0
    %v2443 = vadd.f32 0.0, %v2442
    %v2444 = vpop.f32.mrb[0].mxu0
    %2445 = vmatprep.mubr.bf16.mxu0 0
    %2446 = vmatmul.mubr.bf16.gmra.mrb[0].mxu0 %v2336
    %v2447 = vpop.f32.mrb[0].mxu0
    %v2448 = vadd.f32 0.0, %v2447
    %v2449 = vpop.f32.mrb[0].mxu0
    %v2450 = vpop.f32.mrb[0].mxu0
    %v2451 = vadd.f32 0.0, %v2450
    %v2452 = vpop.f32.mrb[0].mxu0
    %2453 = vmatprep.mubr.bf16.mxu0 0
    %2454 = vmatmul.mubr.bf16.gmra.mrb[0].mxu0 %v2339
    %v2455 = vpop.f32.mrb[0].mxu0
    %v2456 = vadd.f32 0.0, %v2455
    %v2457 = vpop.f32.mrb[0].mxu0
    %v2458 = vpop.f32.mrb[0].mxu0
    %v2459 = vadd.f32 0.0, %v2458
    %v2460 = vpop.f32.mrb[0].mxu0
    %2461 = vdwg.mxu0
    %v2462 = vmul.f32 %v2400, 0.35355338
    %v2463 = vmul.f32 %v2403, 0.35355338
    %v2464 = vmul.f32 %v2408, 0.35355338
    %v2465 = vmul.f32 %v2411, 0.35355338
    %v2466 = vmul.f32 %v2416, 0.35355338
    %v2467 = vmul.f32 %v2419, 0.35355338
    %v2468 = vmul.f32 %v2424, 0.35355338
    %v2469 = vmul.f32 %v2427, 0.35355338
    %v2470 = vmul.f32 %v2432, 0.35355338
    %v2471 = vmul.f32 %v2435, 0.35355338
    %v2472 = vmul.f32 %v2440, 0.35355338
    %v2473 = vmul.f32 %v2443, 0.35355338
    %v2474 = vmul.f32 %v2448, 0.35355338
    %v2475 = vmul.f32 %v2451, 0.35355338
    %v2476 = vmul.f32 %v2456, 0.35355338
    %v2477 = vmul.f32 %v2459, 0.35355338
    %v2478 = vadd.f32 %v2462, %v140
    %v2479 = vadd.f32 %v2463, %v141
    %v2480 = vadd.f32 %v2464, %v142
    %v2481 = vadd.f32 %v2465, %v143
    %v2482 = vadd.f32 %v2466, %v144
    %v2483 = vadd.f32 %v2467, %v145
    %v2484 = vadd.f32 %v2468, %v146
    %v2485 = vadd.f32 %v2469, %v147
    %v2486 = vadd.f32 %v2470, %v148
    %v2487 = vadd.f32 %v2471, %v149
    %v2488 = vadd.f32 %v2472, %v150
    %v2489 = vadd.f32 %v2473, %v151
    %v2490 = vadd.f32 %v2474, %v152
    %v2491 = vadd.f32 %v2475, %v153
    %v2492 = vadd.f32 %v2476, %v154
    %v2493 = vadd.f32 %v2477, %v155
    %2494 = vmax.xlane.f32.xlu0 %v2478
    %v2495 = vpop.xlane.xlu0 %2494
    %2496 = vmax.xlane.f32.xlu0 %v2479
    %v2497 = vpop.xlane.xlu0 %2496
    %2498 = vmax.xlane.f32.xlu0 %v2480
    %v2499 = vpop.xlane.xlu0 %2498
    %2500 = vmax.xlane.f32.xlu0 %v2481
    %v2501 = vpop.xlane.xlu0 %2500
    %2502 = vmax.xlane.f32.xlu0 %v2482
    %v2503 = vpop.xlane.xlu0 %2502
    %2504 = vmax.xlane.f32.xlu0 %v2483
    %v2505 = vpop.xlane.xlu0 %2504
    %2506 = vmax.xlane.f32.xlu0 %v2484
    %v2507 = vpop.xlane.xlu0 %2506
    %2508 = vmax.xlane.f32.xlu0 %v2485
    %v2509 = vpop.xlane.xlu0 %2508
    %2510 = vmax.xlane.f32.xlu0 %v2486
    %v2511 = vpop.xlane.xlu0 %2510
    %2512 = vmax.xlane.f32.xlu0 %v2487
    %v2513 = vpop.xlane.xlu0 %2512
    %2514 = vmax.xlane.f32.xlu0 %v2488
    %v2515 = vpop.xlane.xlu0 %2514
    %2516 = vmax.xlane.f32.xlu0 %v2489
    %v2517 = vpop.xlane.xlu0 %2516
    %2518 = vmax.xlane.f32.xlu0 %v2490
    %v2519 = vpop.xlane.xlu0 %2518
    %2520 = vmax.xlane.f32.xlu0 %v2491
    %v2521 = vpop.xlane.xlu0 %2520
    %2522 = vmax.xlane.f32.xlu0 %v2492
    %v2523 = vpop.xlane.xlu0 %2522
    %2524 = vmax.xlane.f32.xlu0 %v2493
    %v2525 = vpop.xlane.xlu0 %2524
    %v2526 = vsub.f32 %v2478, %v2495
    %v2527 = vsub.f32 %v2479, %v2497
    %v2528 = vsub.f32 %v2480, %v2499
    %v2529 = vsub.f32 %v2481, %v2501
    %v2530 = vsub.f32 %v2482, %v2503
    %v2531 = vsub.f32 %v2483, %v2505
    %v2532 = vsub.f32 %v2484, %v2507
    %v2533 = vsub.f32 %v2485, %v2509
    %v2534 = vsub.f32 %v2486, %v2511
    %v2535 = vsub.f32 %v2487, %v2513
    %v2536 = vsub.f32 %v2488, %v2515
    %v2537 = vsub.f32 %v2489, %v2517
    %v2538 = vsub.f32 %v2490, %v2519
    %v2539 = vsub.f32 %v2491, %v2521
    %v2540 = vsub.f32 %v2492, %v2523
    %v2541 = vsub.f32 %v2493, %v2525
    %v2542 = vmul.f32 %v2526, 1.442695
    %v2543 = vpow.pop %v2542
    %v2544 = vmul.f32 %v2527, 1.442695
    %v2545 = vpow.pop %v2544
    %v2546 = vmul.f32 %v2528, 1.442695
    %v2547 = vpow.pop %v2546
    %v2548 = vmul.f32 %v2529, 1.442695
    %v2549 = vpow.pop %v2548
    %v2550 = vmul.f32 %v2530, 1.442695
    %v2551 = vpow.pop %v2550
    %v2552 = vmul.f32 %v2531, 1.442695
    %v2553 = vpow.pop %v2552
    %v2554 = vmul.f32 %v2532, 1.442695
    %v2555 = vpow.pop %v2554
    %v2556 = vmul.f32 %v2533, 1.442695
    %v2557 = vpow.pop %v2556
    %v2558 = vmul.f32 %v2534, 1.442695
    %v2559 = vpow.pop %v2558
    %v2560 = vmul.f32 %v2535, 1.442695
    %v2561 = vpow.pop %v2560
    %v2562 = vmul.f32 %v2536, 1.442695
    %v2563 = vpow.pop %v2562
    %v2564 = vmul.f32 %v2537, 1.442695
    %v2565 = vpow.pop %v2564
    %v2566 = vmul.f32 %v2538, 1.442695
    %v2567 = vpow.pop %v2566
    %v2568 = vmul.f32 %v2539, 1.442695
    %v2569 = vpow.pop %v2568
    %v2570 = vmul.f32 %v2540, 1.442695
    %v2571 = vpow.pop %v2570
    %v2572 = vmul.f32 %v2541, 1.442695
    %v2573 = vpow.pop %v2572
    %2574 = vadd.xlane.f32.xlu0 %v2543
    %v2575 = vpop.xlane.xlu0 %2574
    %2576 = vadd.xlane.f32.xlu0 %v2545
    %v2577 = vpop.xlane.xlu0 %2576
    %2578 = vadd.xlane.f32.xlu0 %v2547
    %v2579 = vpop.xlane.xlu0 %2578
    %2580 = vadd.xlane.f32.xlu0 %v2549
    %v2581 = vpop.xlane.xlu0 %2580
    %2582 = vadd.xlane.f32.xlu0 %v2551
    %v2583 = vpop.xlane.xlu0 %2582
    %2584 = vadd.xlane.f32.xlu0 %v2553
    %v2585 = vpop.xlane.xlu0 %2584
    %2586 = vadd.xlane.f32.xlu0 %v2555
    %v2587 = vpop.xlane.xlu0 %2586
    %2588 = vadd.xlane.f32.xlu0 %v2557
    %v2589 = vpop.xlane.xlu0 %2588
    %2590 = vadd.xlane.f32.xlu0 %v2559
    %v2591 = vpop.xlane.xlu0 %2590
    %2592 = vadd.xlane.f32.xlu0 %v2561
    %v2593 = vpop.xlane.xlu0 %2592
    %2594 = vadd.xlane.f32.xlu0 %v2563
    %v2595 = vpop.xlane.xlu0 %2594
    %2596 = vadd.xlane.f32.xlu0 %v2565
    %v2597 = vpop.xlane.xlu0 %2596
    %2598 = vadd.xlane.f32.xlu0 %v2567
    %v2599 = vpop.xlane.xlu0 %2598
    %2600 = vadd.xlane.f32.xlu0 %v2569
    %v2601 = vpop.xlane.xlu0 %2600
    %2602 = vadd.xlane.f32.xlu0 %v2571
    %v2603 = vpop.xlane.xlu0 %2602
    %2604 = vadd.xlane.f32.xlu0 %v2573
    %v2605 = vpop.xlane.xlu0 %2604
    %v2606 = vrcp.pop %v2575
    %v2607 = vrcp.pop %v2577
    %v2608 = vrcp.pop %v2579
    %v2609 = vrcp.pop %v2581
    %v2610 = vrcp.pop %v2583
    %v2611 = vrcp.pop %v2585
    %v2612 = vrcp.pop %v2587
    %v2613 = vrcp.pop %v2589
    %v2614 = vrcp.pop %v2591
    %v2615 = vrcp.pop %v2593
    %v2616 = vrcp.pop %v2595
    %v2617 = vrcp.pop %v2597
    %v2618 = vrcp.pop %v2599
    %v2619 = vrcp.pop %v2601
    %v2620 = vrcp.pop %v2603
    %v2621 = vrcp.pop %v2605
    %v2622 = vmul.f32 %v2543, %v2606
    %v2623 = vmul.f32 %v2545, %v2607
    %v2624 = vmul.f32 %v2547, %v2608
    %v2625 = vmul.f32 %v2549, %v2609
    %v2626 = vmul.f32 %v2551, %v2610
    %v2627 = vmul.f32 %v2553, %v2611
    %v2628 = vmul.f32 %v2555, %v2612
    %v2629 = vmul.f32 %v2557, %v2613
    %v2630 = vmul.f32 %v2559, %v2614
    %v2631 = vmul.f32 %v2561, %v2615
    %v2632 = vmul.f32 %v2563, %v2616
    %v2633 = vmul.f32 %v2565, %v2617
    %v2634 = vmul.f32 %v2567, %v2618
    %v2635 = vmul.f32 %v2569, %v2619
    %v2636 = vmul.f32 %v2571, %v2620
    %v2637 = vmul.f32 %v2573, %v2621
    %v2638 = vpack.c.bf16 %v2623, %v2622
    %v2639 = vpack.c.bf16 %v2625, %v2624
    %v2640 = vpack.c.bf16 %v2627, %v2626
    %v2641 = vpack.c.bf16 %v2629, %v2628
    %v2642 = vpack.c.bf16 %v2631, %v2630
    %v2643 = vpack.c.bf16 %v2633, %v2632
    %v2644 = vpack.c.bf16 %v2635, %v2634
    %v2645 = vpack.c.bf16 %v2637, %v2636
    %v2646 = vpack.c.bf16 %v2226, %v2223
    %v2647 = vpack.c.bf16 %v2234, %v2231
    %v2648 = vpack.c.bf16 %v2242, %v2239
    %v2649 = vpack.c.bf16 %v2250, %v2247
    %v2650 = vpack.c.bf16 %v2258, %v2255
    %v2651 = vpack.c.bf16 %v2266, %v2263
    %v2652 = vpack.c.bf16 %v2274, %v2271
    %v2653 = vpack.c.bf16 %v2282, %v2279
    %2654 = vmatprep.subr.bf16.mxu0 0
    %2655 = vmatpush1.bf16.msra.mxu0 %v2646
    %2656 = vmatprep.subr.bf16.mxu0 0
    %2657 = vmatpush1.bf16.msra.mxu0 %v2647
    %2658 = vmatprep.subr.bf16.mxu0 0
    %2659 = vmatpush1.bf16.msra.mxu0 %v2648
    %2660 = vmatprep.subr.bf16.mxu0 0
    %2661 = vmatpush1.bf16.msra.mxu0 %v2649
    %2662 = vmatprep.subr.bf16.mxu0 0
    %2663 = vmatpush1.bf16.msra.mxu0 %v2650
    %2664 = vmatprep.subr.bf16.mxu0 0
    %2665 = vmatpush1.bf16.msra.mxu0 %v2651
    %2666 = vmatprep.subr.bf16.mxu0 0
    %2667 = vmatpush1.bf16.msra.mxu0 %v2652
    %2668 = vmatprep.subr.bf16.mxu0 0
    %2669 = vmatpush1.bf16.msra.mxu0 %v2653
    %2670 = vmatprep.subr.bf16.mxu0 0
    %2671 = vmatpush1.bf16.msra.mxu0 0
    %2672 = vmatprep.subr.bf16.mxu0 0
    %2673 = vmatpush1.bf16.msra.mxu0 0
    %2674 = vmatprep.subr.bf16.mxu0 0
    %2675 = vmatpush1.bf16.msra.mxu0 0
    %2676 = vmatprep.subr.bf16.mxu0 0
    %2677 = vmatpush1.bf16.msra.mxu0 0
    %2678 = vmatprep.subr.bf16.mxu0 0
    %2679 = vmatpush1.bf16.msra.mxu0 0
    %2680 = vmatprep.subr.bf16.mxu0 0
    %2681 = vmatpush1.bf16.msra.mxu0 0
    %2682 = vmatprep.subr.bf16.mxu0 0
    %2683 = vmatpush1.bf16.msra.mxu0 0
    %2684 = vmatprep.subr.bf16.mxu0 0
    %2685 = vmatpush1.bf16.msra.mxu0 0
    %2686 = vmatprep.mubr.bf16.mxu0 0
    %2687 = vmatmul.mubr.bf16.gmra.mrb[0].mxu0 %v2638
    %v2688 = vpop.f32.mrb[0].mxu0
    %v2689 = vadd.f32 0.0, %v2688
    %v2690 = vpop.f32.mrb[0].mxu0
    %v2691 = vpop.f32.mrb[0].mxu0
    %v2692 = vadd.f32 0.0, %v2691
    %v2693 = vpop.f32.mrb[0].mxu0
    %2694 = vmatprep.mubr.bf16.mxu0 0
    %2695 = vmatmul.mubr.bf16.gmra.mrb[0].mxu0 %v2639
    %v2696 = vpop.f32.mrb[0].mxu0
    %v2697 = vadd.f32 0.0, %v2696
    %v2698 = vpop.f32.mrb[0].mxu0
    %v2699 = vpop.f32.mrb[0].mxu0
    %v2700 = vadd.f32 0.0, %v2699
    %v2701 = vpop.f32.mrb[0].mxu0
    %2702 = vmatprep.mubr.bf16.mxu0 0
    %2703 = vmatmul.mubr.bf16.gmra.mrb[0].mxu0 %v2640
    %v2704 = vpop.f32.mrb[0].mxu0
    %v2705 = vadd.f32 0.0, %v2704
    %v2706 = vpop.f32.mrb[0].mxu0
    %v2707 = vpop.f32.mrb[0].mxu0
    %v2708 = vadd.f32 0.0, %v2707
    %v2709 = vpop.f32.mrb[0].mxu0
    %2710 = vmatprep.mubr.bf16.mxu0 0
    %2711 = vmatmul.mubr.bf16.gmra.mrb[0].mxu0 %v2641
    %v2712 = vpop.f32.mrb[0].mxu0
    %v2713 = vadd.f32 0.0, %v2712
    %v2714 = vpop.f32.mrb[0].mxu0
    %v2715 = vpop.f32.mrb[0].mxu0
    %v2716 = vadd.f32 0.0, %v2715
    %v2717 = vpop.f32.mrb[0].mxu0
    %2718 = vmatprep.mubr.bf16.mxu0 0
    %2719 = vmatmul.mubr.bf16.gmra.mrb[0].mxu0 %v2642
    %v2720 = vpop.f32.mrb[0].mxu0
    %v2721 = vadd.f32 0.0, %v2720
    %v2722 = vpop.f32.mrb[0].mxu0
    %v2723 = vpop.f32.mrb[0].mxu0
    %v2724 = vadd.f32 0.0, %v2723
    %v2725 = vpop.f32.mrb[0].mxu0
    %2726 = vmatprep.mubr.bf16.mxu0 0
    %2727 = vmatmul.mubr.bf16.gmra.mrb[0].mxu0 %v2643
    %v2728 = vpop.f32.mrb[0].mxu0
    %v2729 = vadd.f32 0.0, %v2728
    %v2730 = vpop.f32.mrb[0].mxu0
    %v2731 = vpop.f32.mrb[0].mxu0
    %v2732 = vadd.f32 0.0, %v2731
    %v2733 = vpop.f32.mrb[0].mxu0
    %2734 = vmatprep.mubr.bf16.mxu0 0
    %2735 = vmatmul.mubr.bf16.gmra.mrb[0].mxu0 %v2644
    %v2736 = vpop.f32.mrb[0].mxu0
    %v2737 = vadd.f32 0.0, %v2736
    %v2738 = vpop.f32.mrb[0].mxu0
    %v2739 = vpop.f32.mrb[0].mxu0
    %v2740 = vadd.f32 0.0, %v2739
    %v2741 = vpop.f32.mrb[0].mxu0
    %2742 = vmatprep.mubr.bf16.mxu0 0
    %2743 = vmatmul.mubr.bf16.gmra.mrb[0].mxu0 %v2645
    %v2744 = vpop.f32.mrb[0].mxu0
    %v2745 = vadd.f32 0.0, %v2744
    %v2746 = vpop.f32.mrb[0].mxu0
    %v2747 = vpop.f32.mrb[0].mxu0
    %v2748 = vadd.f32 0.0, %v2747
    %v2749 = vpop.f32.mrb[0].mxu0
    %2750 = vdwg.mxu0
    %v2751 = vadd.f32 %v2127, %v2689
    %v2752 = vadd.f32 %v2128, %v2692
    %v2753 = vadd.f32 %v2129, %v2697
    %v2754 = vadd.f32 %v2130, %v2700
    %v2755 = vadd.f32 %v2131, %v2705
    %v2756 = vadd.f32 %v2132, %v2708
    %v2757 = vadd.f32 %v2133, %v2713
    %v2758 = vadd.f32 %v2134, %v2716
    %v2759 = vadd.f32 %v2135, %v2721
    %v2760 = vadd.f32 %v2136, %v2724
    %v2761 = vadd.f32 %v2137, %v2729
    %v2762 = vadd.f32 %v2138, %v2732
    %v2763 = vadd.f32 %v2139, %v2737
    %v2764 = vadd.f32 %v2140, %v2740
    %v2765 = vadd.f32 %v2141, %v2745
    %v2766 = vadd.f32 %v2142, %v2748
    %v2767 = vld [vmem:[%s6] sm:$0x1]
    %v2769 = vlaneseq
    %v2770 = vshrl.u32 %v2769, 7
    %v2771 = vsub.s32 0, %v2770
    %v2772 = vrot.slane %v2767, %v2771
    %v2774 = vadd.f32 %v2751, %v2772
    %v2775 = vadd.f32 %v2752, %v2772
    %v2776 = vadd.f32 %v2753, %v2772
    %v2777 = vadd.f32 %v2754, %v2772
    %v2778 = vadd.f32 %v2755, %v2772
    %v2779 = vadd.f32 %v2756, %v2772
    %v2780 = vadd.f32 %v2757, %v2772
    %v2781 = vadd.f32 %v2758, %v2772
    %v2782 = vadd.f32 %v2759, %v2772
    %v2783 = vadd.f32 %v2760, %v2772
    %v2784 = vadd.f32 %v2761, %v2772
    %v2785 = vadd.f32 %v2762, %v2772
    %v2786 = vadd.f32 %v2763, %v2772
    %v2787 = vadd.f32 %v2764, %v2772
    %v2788 = vadd.f32 %v2765, %v2772
    %v2789 = vadd.f32 %v2766, %v2772
    %v2790 = vadd.f32 %v2774, %v124
    %v2791 = vadd.f32 %v2775, %v125
    %v2792 = vadd.f32 %v2776, %v126
    %v2793 = vadd.f32 %v2777, %v127
    %v2794 = vadd.f32 %v2778, %v128
    %v2795 = vadd.f32 %v2779, %v129
    %v2796 = vadd.f32 %v2780, %v130
    %v2797 = vadd.f32 %v2781, %v131
    %v2798 = vadd.f32 %v2782, %v132
    %v2799 = vadd.f32 %v2783, %v133
    %v2800 = vadd.f32 %v2784, %v134
    %v2801 = vadd.f32 %v2785, %v135
    %v2802 = vadd.f32 %v2786, %v136
    %v2803 = vadd.f32 %v2787, %v137
    %v2804 = vadd.f32 %v2788, %v138
    %v2805 = vadd.f32 %v2789, %v139
    %v2806 = vsel %vm180, %v2790, 0.0
    %2807 = vadd.xlane.f32.xlu0 %v2806
    %v2808 = vpop.xlane.xlu0 %2807
    %v2809 = vsel %vm180, %v2791, 0.0
    %2810 = vadd.xlane.f32.xlu0 %v2809
    %v2811 = vpop.xlane.xlu0 %2810
    %v2812 = vsel %vm180, %v2792, 0.0
    %2813 = vadd.xlane.f32.xlu0 %v2812
    %v2814 = vpop.xlane.xlu0 %2813
    %v2815 = vsel %vm180, %v2793, 0.0
    %2816 = vadd.xlane.f32.xlu0 %v2815
    %v2817 = vpop.xlane.xlu0 %2816
    %v2818 = vsel %vm180, %v2794, 0.0
    %2819 = vadd.xlane.f32.xlu0 %v2818
    %v2820 = vpop.xlane.xlu0 %2819
    %v2821 = vsel %vm180, %v2795, 0.0
    %2822 = vadd.xlane.f32.xlu0 %v2821
    %v2823 = vpop.xlane.xlu0 %2822
    %v2824 = vsel %vm180, %v2796, 0.0
    %2825 = vadd.xlane.f32.xlu0 %v2824
    %v2826 = vpop.xlane.xlu0 %2825
    %v2827 = vsel %vm180, %v2797, 0.0
    %2828 = vadd.xlane.f32.xlu0 %v2827
    %v2829 = vpop.xlane.xlu0 %2828
    %v2830 = vsel %vm180, %v2798, 0.0
    %2831 = vadd.xlane.f32.xlu0 %v2830
    %v2832 = vpop.xlane.xlu0 %2831
    %v2833 = vsel %vm180, %v2799, 0.0
    %2834 = vadd.xlane.f32.xlu0 %v2833
    %v2835 = vpop.xlane.xlu0 %2834
    %v2836 = vsel %vm180, %v2800, 0.0
    %2837 = vadd.xlane.f32.xlu0 %v2836
    %v2838 = vpop.xlane.xlu0 %2837
    %v2839 = vsel %vm180, %v2801, 0.0
    %2840 = vadd.xlane.f32.xlu0 %v2839
    %v2841 = vpop.xlane.xlu0 %2840
    %v2842 = vsel %vm180, %v2802, 0.0
    %2843 = vadd.xlane.f32.xlu0 %v2842
    %v2844 = vpop.xlane.xlu0 %2843
    %v2845 = vsel %vm180, %v2803, 0.0
    %2846 = vadd.xlane.f32.xlu0 %v2845
    %v2847 = vpop.xlane.xlu0 %2846
    %v2848 = vsel %vm180, %v2804, 0.0
    %2849 = vadd.xlane.f32.xlu0 %v2848
    %v2850 = vpop.xlane.xlu0 %2849
    %v2851 = vsel %vm180, %v2805, 0.0
    %2852 = vadd.xlane.f32.xlu0 %v2851
    %v2853 = vpop.xlane.xlu0 %2852
    %v2854 = vrcp.pop 32.0
    %v2855 = vmul.f32 %v2808, %v2854
    %v2856 = vmul.f32 %v2811, %v2854
    %v2857 = vmul.f32 %v2814, %v2854
    %v2858 = vmul.f32 %v2817, %v2854
    %v2859 = vmul.f32 %v2820, %v2854
    %v2860 = vmul.f32 %v2823, %v2854
    %v2861 = vmul.f32 %v2826, %v2854
    %v2862 = vmul.f32 %v2829, %v2854
    %v2863 = vmul.f32 %v2832, %v2854
    %v2864 = vmul.f32 %v2835, %v2854
    %v2865 = vmul.f32 %v2838, %v2854
    %v2866 = vmul.f32 %v2841, %v2854
    %v2867 = vmul.f32 %v2844, %v2854
    %v2868 = vmul.f32 %v2847, %v2854
    %v2869 = vmul.f32 %v2850, %v2854
    %v2870 = vmul.f32 %v2853, %v2854
    %v2871 = vsub.f32 %v2790, %v2855
    %v2872 = vsub.f32 %v2791, %v2856
    %v2873 = vsub.f32 %v2792, %v2857
    %v2874 = vsub.f32 %v2793, %v2858
    %v2875 = vsub.f32 %v2794, %v2859
    %v2876 = vsub.f32 %v2795, %v2860
    %v2877 = vsub.f32 %v2796, %v2861
    %v2878 = vsub.f32 %v2797, %v2862
    %v2879 = vsub.f32 %v2798, %v2863
    %v2880 = vsub.f32 %v2799, %v2864
    %v2881 = vsub.f32 %v2800, %v2865
    %v2882 = vsub.f32 %v2801, %v2866
    %v2883 = vsub.f32 %v2802, %v2867
    %v2884 = vsub.f32 %v2803, %v2868
    %v2885 = vsub.f32 %v2804, %v2869
    %v2886 = vsub.f32 %v2805, %v2870
    %v2887 = vmul.f32 %v2871, %v2871
    %v2888 = vmul.f32 %v2872, %v2872
    %v2889 = vmul.f32 %v2873, %v2873
    %v2890 = vmul.f32 %v2874, %v2874
    %v2891 = vmul.f32 %v2875, %v2875
    %v2892 = vmul.f32 %v2876, %v2876
    %v2893 = vmul.f32 %v2877, %v2877
    %v2894 = vmul.f32 %v2878, %v2878
    %v2895 = vmul.f32 %v2879, %v2879
    %v2896 = vmul.f32 %v2880, %v2880
    %v2897 = vmul.f32 %v2881, %v2881
    %v2898 = vmul.f32 %v2882, %v2882
    %v2899 = vmul.f32 %v2883, %v2883
    %v2900 = vmul.f32 %v2884, %v2884
    %v2901 = vmul.f32 %v2885, %v2885
    %v2902 = vmul.f32 %v2886, %v2886
    %v2903 = vsel %vm180, %v2887, 0.0
    %2904 = vadd.xlane.f32.xlu0 %v2903
    %v2905 = vpop.xlane.xlu0 %2904
    %v2906 = vsel %vm180, %v2888, 0.0
    %2907 = vadd.xlane.f32.xlu0 %v2906
    %v2908 = vpop.xlane.xlu0 %2907
    %v2909 = vsel %vm180, %v2889, 0.0
    %2910 = vadd.xlane.f32.xlu0 %v2909
    %v2911 = vpop.xlane.xlu0 %2910
    %v2912 = vsel %vm180, %v2890, 0.0
    %2913 = vadd.xlane.f32.xlu0 %v2912
    %v2914 = vpop.xlane.xlu0 %2913
    %v2915 = vsel %vm180, %v2891, 0.0
    %2916 = vadd.xlane.f32.xlu0 %v2915
    %v2917 = vpop.xlane.xlu0 %2916
    %v2918 = vsel %vm180, %v2892, 0.0
    %2919 = vadd.xlane.f32.xlu0 %v2918
    %v2920 = vpop.xlane.xlu0 %2919
    %v2921 = vsel %vm180, %v2893, 0.0
    %2922 = vadd.xlane.f32.xlu0 %v2921
    %v2923 = vpop.xlane.xlu0 %2922
    %v2924 = vsel %vm180, %v2894, 0.0
    %2925 = vadd.xlane.f32.xlu0 %v2924
    %v2926 = vpop.xlane.xlu0 %2925
    %v2927 = vsel %vm180, %v2895, 0.0
    %2928 = vadd.xlane.f32.xlu0 %v2927
    %v2929 = vpop.xlane.xlu0 %2928
    %v2930 = vsel %vm180, %v2896, 0.0
    %2931 = vadd.xlane.f32.xlu0 %v2930
    %v2932 = vpop.xlane.xlu0 %2931
    %v2933 = vsel %vm180, %v2897, 0.0
    %2934 = vadd.xlane.f32.xlu0 %v2933
    %v2935 = vpop.xlane.xlu0 %2934
    %v2936 = vsel %vm180, %v2898, 0.0
    %2937 = vadd.xlane.f32.xlu0 %v2936
    %v2938 = vpop.xlane.xlu0 %2937
    %v2939 = vsel %vm180, %v2899, 0.0
    %2940 = vadd.xlane.f32.xlu0 %v2939
    %v2941 = vpop.xlane.xlu0 %2940
    %v2942 = vsel %vm180, %v2900, 0.0
    %2943 = vadd.xlane.f32.xlu0 %v2942
    %v2944 = vpop.xlane.xlu0 %2943
    %v2945 = vsel %vm180, %v2901, 0.0
    %2946 = vadd.xlane.f32.xlu0 %v2945
    %v2947 = vpop.xlane.xlu0 %2946
    %v2948 = vsel %vm180, %v2902, 0.0
    %2949 = vadd.xlane.f32.xlu0 %v2948
    %v2950 = vpop.xlane.xlu0 %2949
    %v2951 = vmul.f32 %v2905, %v2854
    %v2952 = vmul.f32 %v2908, %v2854
    %v2953 = vmul.f32 %v2911, %v2854
    %v2954 = vmul.f32 %v2914, %v2854
    %v2955 = vmul.f32 %v2917, %v2854
    %v2956 = vmul.f32 %v2920, %v2854
    %v2957 = vmul.f32 %v2923, %v2854
    %v2958 = vmul.f32 %v2926, %v2854
    %v2959 = vmul.f32 %v2929, %v2854
    %v2960 = vmul.f32 %v2932, %v2854
    %v2961 = vmul.f32 %v2935, %v2854
    %v2962 = vmul.f32 %v2938, %v2854
    %v2963 = vmul.f32 %v2941, %v2854
    %v2964 = vmul.f32 %v2944, %v2854
    %v2965 = vmul.f32 %v2947, %v2854
    %v2966 = vmul.f32 %v2950, %v2854
    %v2967 = vadd.f32 %v2951, 1e-05
    %v2968 = vadd.f32 %v2952, 1e-05
    %v2969 = vadd.f32 %v2953, 1e-05
    %v2970 = vadd.f32 %v2954, 1e-05
    %v2971 = vadd.f32 %v2955, 1e-05
    %v2972 = vadd.f32 %v2956, 1e-05
    %v2973 = vadd.f32 %v2957, 1e-05
    %v2974 = vadd.f32 %v2958, 1e-05
    %v2975 = vadd.f32 %v2959, 1e-05
    %v2976 = vadd.f32 %v2960, 1e-05
    %v2977 = vadd.f32 %v2961, 1e-05
    %v2978 = vadd.f32 %v2962, 1e-05
    %v2979 = vadd.f32 %v2963, 1e-05
    %v2980 = vadd.f32 %v2964, 1e-05
    %v2981 = vadd.f32 %v2965, 1e-05
    %v2982 = vadd.f32 %v2966, 1e-05
    %v2983 = vrsqrt.pop %v2967
    %v2984 = vrsqrt.pop %v2968
    %v2985 = vrsqrt.pop %v2969
    %v2986 = vrsqrt.pop %v2970
    %v2987 = vrsqrt.pop %v2971
    %v2988 = vrsqrt.pop %v2972
    %v2989 = vrsqrt.pop %v2973
    %v2990 = vrsqrt.pop %v2974
    %v2991 = vrsqrt.pop %v2975
    %v2992 = vrsqrt.pop %v2976
    %v2993 = vrsqrt.pop %v2977
    %v2994 = vrsqrt.pop %v2978
    %v2995 = vrsqrt.pop %v2979
    %v2996 = vrsqrt.pop %v2980
    %v2997 = vrsqrt.pop %v2981
    %v2998 = vrsqrt.pop %v2982
    %v2999 = vmul.f32 %v2871, %v2983
    %v3000 = vmul.f32 %v2872, %v2984
    %v3001 = vmul.f32 %v2873, %v2985
    %v3002 = vmul.f32 %v2874, %v2986
    %v3003 = vmul.f32 %v2875, %v2987
    %v3004 = vmul.f32 %v2876, %v2988
    %v3005 = vmul.f32 %v2877, %v2989
    %v3006 = vmul.f32 %v2878, %v2990
    %v3007 = vmul.f32 %v2879, %v2991
    %v3008 = vmul.f32 %v2880, %v2992
    %v3009 = vmul.f32 %v2881, %v2993
    %v3010 = vmul.f32 %v2882, %v2994
    %v3011 = vmul.f32 %v2883, %v2995
    %v3012 = vmul.f32 %v2884, %v2996
    %v3013 = vmul.f32 %v2885, %v2997
    %v3014 = vmul.f32 %v2886, %v2998
    %v3015 = vld [vmem:[%s7] sm:$0x1]
    %v3017 = vlaneseq
    %v3018 = vshrl.u32 %v3017, 7
    %v3019 = vsub.s32 0, %v3018
    %v3020 = vrot.slane %v3015, %v3019
    %v3022 = vmul.f32 %v2999, %v3020
    %v3023 = vmul.f32 %v3000, %v3020
    %v3024 = vmul.f32 %v3001, %v3020
    %v3025 = vmul.f32 %v3002, %v3020
    %v3026 = vmul.f32 %v3003, %v3020
    %v3027 = vmul.f32 %v3004, %v3020
    %v3028 = vmul.f32 %v3005, %v3020
    %v3029 = vmul.f32 %v3006, %v3020
    %v3030 = vmul.f32 %v3007, %v3020
    %v3031 = vmul.f32 %v3008, %v3020
    %v3032 = vmul.f32 %v3009, %v3020
    %v3033 = vmul.f32 %v3010, %v3020
    %v3034 = vmul.f32 %v3011, %v3020
    %v3035 = vmul.f32 %v3012, %v3020
    %v3036 = vmul.f32 %v3013, %v3020
    %v3037 = vmul.f32 %v3014, %v3020
    %v3038 = vld [vmem:[%s8] sm:$0x1]
    %v3040 = vlaneseq
    %v3041 = vshrl.u32 %v3040, 7
    %v3042 = vsub.s32 0, %v3041
    %v3043 = vrot.slane %v3038, %v3042
    %v3045 = vadd.f32 %v3022, %v3043
    %v3046 = vadd.f32 %v3023, %v3043
    %v3047 = vadd.f32 %v3024, %v3043
    %v3048 = vadd.f32 %v3025, %v3043
    %v3049 = vadd.f32 %v3026, %v3043
    %v3050 = vadd.f32 %v3027, %v3043
    %v3051 = vadd.f32 %v3028, %v3043
    %v3052 = vadd.f32 %v3029, %v3043
    %v3053 = vadd.f32 %v3030, %v3043
    %v3054 = vadd.f32 %v3031, %v3043
    %v3055 = vadd.f32 %v3032, %v3043
    %v3056 = vadd.f32 %v3033, %v3043
    %v3057 = vadd.f32 %v3034, %v3043
    %v3058 = vadd.f32 %v3035, %v3043
    %v3059 = vadd.f32 %v3036, %v3043
    %v3060 = vadd.f32 %v3037, %v3043
    %v3061 = vpack.c.bf16 %v3046, %v3045
    %v3062 = vpack.c.bf16 %v3048, %v3047
    %v3063 = vpack.c.bf16 %v3050, %v3049
    %v3064 = vpack.c.bf16 %v3052, %v3051
    %v3065 = vpack.c.bf16 %v3054, %v3053
    %v3066 = vpack.c.bf16 %v3056, %v3055
    %v3067 = vpack.c.bf16 %v3058, %v3057
    %v3068 = vpack.c.bf16 %v3060, %v3059
    %v3069 = vld [vmem:[#allocation6] sm:$0xf]
    %v3070 = vld [vmem:[#allocation6 + $0x4] sm:$0xf]
    %v3071 = vld [vmem:[#allocation6 + $0x8] sm:$0xf]
    %v3072 = vld [vmem:[#allocation6 + $0xc] sm:$0xf]
    %v3073 = vld [vmem:[%s10] sm:$0x1]
    %v3075 = vlaneseq
    %v3076 = vshrl.u32 %v3075, 7
    %v3077 = vsub.s32 0, %v3076
    %v3078 = vrot.slane %v3073, %v3077
    %v3084 = vunpack.c.l.b16 %v3069
    %v3085 = vunpack.c.l.b16 %v3070
    %v3086 = vunpack.c.l.b16 %v3071
    %v3087 = vunpack.c.l.b16 %v3072
    %v3088 = vpack.c.b16 %v3085, %v3084
    %v3089 = vpack.c.b16 %v3087, %v3086
    %v3093 = vsel %vm180, %v3061, 0
    %v3096 = vsel %vm180, %v3062, 0
    %v3099 = vsel %vm180, %v3063, 0
    %v3102 = vsel %vm180, %v3064, 0
    %v3105 = vsel %vm180, %v3065, 0
    %v3108 = vsel %vm180, %v3066, 0
    %v3111 = vsel %vm180, %v3067, 0
    %v3114 = vsel %vm180, %v3068, 0
    %3116 = vmatprep.subr.bf16.mxu0 0
    %3117 = vmatpush1.bf16.msra.mxu0 %v3088
    %3118 = vmatprep.subr.bf16.mxu0 0
    %3119 = vmatpush1.bf16.msra.mxu0 %v3089
    %3120 = vmatprep.subr.bf16.mxu0 0
    %3121 = vmatpush1.bf16.msra.mxu0 0
    %3122 = vmatprep.subr.bf16.mxu0 0
    %3123 = vmatpush1.bf16.msra.mxu0 0
    %3124 = vmatprep.subr.bf16.mxu0 0
    %3125 = vmatpush1.bf16.msra.mxu0 0
    %3126 = vmatprep.subr.bf16.mxu0 0
    %3127 = vmatpush1.bf16.msra.mxu0 0
    %3128 = vmatprep.subr.bf16.mxu0 0
    %3129 = vmatpush1.bf16.msra.mxu0 0
    %3130 = vmatprep.subr.bf16.mxu0 0
    %3131 = vmatpush1.bf16.msra.mxu0 0
    %3132 = vmatprep.subr.bf16.mxu0 0
    %3133 = vmatpush1.bf16.msra.mxu0 0
    %3134 = vmatprep.subr.bf16.mxu0 0
    %3135 = vmatpush1.bf16.msra.mxu0 0
    %3136 = vmatprep.subr.bf16.mxu0 0
    %3137 = vmatpush1.bf16.msra.mxu0 0
    %3138 = vmatprep.subr.bf16.mxu0 0
    %3139 = vmatpush1.bf16.msra.mxu0 0
    %3140 = vmatprep.subr.bf16.mxu0 0
    %3141 = vmatpush1.bf16.msra.mxu0 0
    %3142 = vmatprep.subr.bf16.mxu0 0
    %3143 = vmatpush1.bf16.msra.mxu0 0
    %3144 = vmatprep.subr.bf16.mxu0 0
    %3145 = vmatpush1.bf16.msra.mxu0 0
    %3146 = vmatprep.subr.bf16.mxu0 0
    %3147 = vmatpush1.bf16.msra.mxu0 0
    %3148 = vmatprep.mubr.bf16.mxu0 0
    %3149 = vmatmul.mubr.bf16.gmra.mrb[0].mxu0 %v3093
    %v3150 = vpop.f32.mrb[0].mxu0
    %v3151 = vadd.f32 %v3078, %v3150
    %v3152 = vpop.f32.mrb[0].mxu0
    %v3153 = vpop.f32.mrb[0].mxu0
    %v3154 = vadd.f32 %v3078, %v3153
    %v3155 = vpop.f32.mrb[0].mxu0
    %3156 = vmatprep.mubr.bf16.mxu0 0
    %3157 = vmatmul.mubr.bf16.gmra.mrb[0].mxu0 %v3096
    %v3158 = vpop.f32.mrb[0].mxu0
    %v3159 = vadd.f32 %v3078, %v3158
    %v3160 = vpop.f32.mrb[0].mxu0
    %v3161 = vpop.f32.mrb[0].mxu0
    %v3162 = vadd.f32 %v3078, %v3161
    %v3163 = vpop.f32.mrb[0].mxu0
    %3164 = vmatprep.mubr.bf16.mxu0 0
    %3165 = vmatmul.mubr.bf16.gmra.mrb[0].mxu0 %v3099
    %v3166 = vpop.f32.mrb[0].mxu0
    %v3167 = vadd.f32 %v3078, %v3166
    %v3168 = vpop.f32.mrb[0].mxu0
    %v3169 = vpop.f32.mrb[0].mxu0
    %v3170 = vadd.f32 %v3078, %v3169
    %v3171 = vpop.f32.mrb[0].mxu0
    %3172 = vmatprep.mubr.bf16.mxu0 0
    %3173 = vmatmul.mubr.bf16.gmra.mrb[0].mxu0 %v3102
    %v3174 = vpop.f32.mrb[0].mxu0
    %v3175 = vadd.f32 %v3078, %v3174
    %v3176 = vpop.f32.mrb[0].mxu0
    %v3177 = vpop.f32.mrb[0].mxu0
    %v3178 = vadd.f32 %v3078, %v3177
    %v3179 = vpop.f32.mrb[0].mxu0
    %3180 = vmatprep.mubr.bf16.mxu0 0
    %3181 = vmatmul.mubr.bf16.gmra.mrb[0].mxu0 %v3105
    %v3182 = vpop.f32.mrb[0].mxu0
    %v3183 = vadd.f32 %v3078, %v3182
    %v3184 = vpop.f32.mrb[0].mxu0
    %v3185 = vpop.f32.mrb[0].mxu0
    %v3186 = vadd.f32 %v3078, %v3185
    %v3187 = vpop.f32.mrb[0].mxu0
    %3188 = vmatprep.mubr.bf16.mxu0 0
    %3189 = vmatmul.mubr.bf16.gmra.mrb[0].mxu0 %v3108
    %v3190 = vpop.f32.mrb[0].mxu0
    %v3191 = vadd.f32 %v3078, %v3190
    %v3192 = vpop.f32.mrb[0].mxu0
    %v3193 = vpop.f32.mrb[0].mxu0
    %v3194 = vadd.f32 %v3078, %v3193
    %v3195 = vpop.f32.mrb[0].mxu0
    %3196 = vmatprep.mubr.bf16.mxu0 0
    %3197 = vmatmul.mubr.bf16.gmra.mrb[0].mxu0 %v3111
    %v3198 = vpop.f32.mrb[0].mxu0
    %v3199 = vadd.f32 %v3078, %v3198
    %v3200 = vpop.f32.mrb[0].mxu0
    %v3201 = vpop.f32.mrb[0].mxu0
    %v3202 = vadd.f32 %v3078, %v3201
    %v3203 = vpop.f32.mrb[0].mxu0
    %3204 = vmatprep.mubr.bf16.mxu0 0
    %3205 = vmatmul.mubr.bf16.gmra.mrb[0].mxu0 %v3114
    %v3206 = vpop.f32.mrb[0].mxu0
    %v3207 = vadd.f32 %v3078, %v3206
    %v3208 = vpop.f32.mrb[0].mxu0
    %v3209 = vpop.f32.mrb[0].mxu0
    %v3210 = vadd.f32 %v3078, %v3209
    %v3211 = vpop.f32.mrb[0].mxu0
    %3212 = vdwg.mxu0
    %v3213 = vmul.f32 %v3151, %v3151
    %v3214 = vmul.f32 %v3154, %v3154
    %v3215 = vmul.f32 %v3159, %v3159
    %v3216 = vmul.f32 %v3162, %v3162
    %v3217 = vmul.f32 %v3167, %v3167
    %v3218 = vmul.f32 %v3170, %v3170
    %v3219 = vmul.f32 %v3175, %v3175
    %v3220 = vmul.f32 %v3178, %v3178
    %v3221 = vmul.f32 %v3183, %v3183
    %v3222 = vmul.f32 %v3186, %v3186
    %v3223 = vmul.f32 %v3191, %v3191
    %v3224 = vmul.f32 %v3194, %v3194
    %v3225 = vmul.f32 %v3199, %v3199
    %v3226 = vmul.f32 %v3202, %v3202
    %v3227 = vmul.f32 %v3207, %v3207
    %v3228 = vmul.f32 %v3210, %v3210
    %v3229 = vmul.f32 %v3151, %v3213
    %v3230 = vmul.f32 %v3154, %v3214
    %v3231 = vmul.f32 %v3159, %v3215
    %v3232 = vmul.f32 %v3162, %v3216
    %v3233 = vmul.f32 %v3167, %v3217
    %v3234 = vmul.f32 %v3170, %v3218
    %v3235 = vmul.f32 %v3175, %v3219
    %v3236 = vmul.f32 %v3178, %v3220
    %v3237 = vmul.f32 %v3183, %v3221
    %v3238 = vmul.f32 %v3186, %v3222
    %v3239 = vmul.f32 %v3191, %v3223
    %v3240 = vmul.f32 %v3194, %v3224
    %v3241 = vmul.f32 %v3199, %v3225
    %v3242 = vmul.f32 %v3202, %v3226
    %v3243 = vmul.f32 %v3207, %v3227
    %v3244 = vmul.f32 %v3210, %v3228
    %v3245 = vmul.f32 %v3229, 0.044715
    %v3246 = vmul.f32 %v3230, 0.044715
    %v3247 = vmul.f32 %v3231, 0.044715
    %v3248 = vmul.f32 %v3232, 0.044715
    %v3249 = vmul.f32 %v3233, 0.044715
    %v3250 = vmul.f32 %v3234, 0.044715
    %v3251 = vmul.f32 %v3235, 0.044715
    %v3252 = vmul.f32 %v3236, 0.044715
    %v3253 = vmul.f32 %v3237, 0.044715
    %v3254 = vmul.f32 %v3238, 0.044715
    %v3255 = vmul.f32 %v3239, 0.044715
    %v3256 = vmul.f32 %v3240, 0.044715
    %v3257 = vmul.f32 %v3241, 0.044715
    %v3258 = vmul.f32 %v3242, 0.044715
    %v3259 = vmul.f32 %v3243, 0.044715
    %v3260 = vmul.f32 %v3244, 0.044715
    %v3261 = vadd.f32 %v3151, %v3245
    %v3262 = vadd.f32 %v3154, %v3246
    %v3263 = vadd.f32 %v3159, %v3247
    %v3264 = vadd.f32 %v3162, %v3248
    %v3265 = vadd.f32 %v3167, %v3249
    %v3266 = vadd.f32 %v3170, %v3250
    %v3267 = vadd.f32 %v3175, %v3251
    %v3268 = vadd.f32 %v3178, %v3252
    %v3269 = vadd.f32 %v3183, %v3253
    %v3270 = vadd.f32 %v3186, %v3254
    %v3271 = vadd.f32 %v3191, %v3255
    %v3272 = vadd.f32 %v3194, %v3256
    %v3273 = vadd.f32 %v3199, %v3257
    %v3274 = vadd.f32 %v3202, %v3258
    %v3275 = vadd.f32 %v3207, %v3259
    %v3276 = vadd.f32 %v3210, %v3260
    %v3277 = vmul.f32 %v3261, 0.7978846
    %v3278 = vmul.f32 %v3262, 0.7978846
    %v3279 = vmul.f32 %v3263, 0.7978846
    %v3280 = vmul.f32 %v3264, 0.7978846
    %v3281 = vmul.f32 %v3265, 0.7978846
    %v3282 = vmul.f32 %v3266, 0.7978846
    %v3283 = vmul.f32 %v3267, 0.7978846
    %v3284 = vmul.f32 %v3268, 0.7978846
    %v3285 = vmul.f32 %v3269, 0.7978846
    %v3286 = vmul.f32 %v3270, 0.7978846
    %v3287 = vmul.f32 %v3271, 0.7978846
    %v3288 = vmul.f32 %v3272, 0.7978846
    %v3289 = vmul.f32 %v3273, 0.7978846
    %v3290 = vmul.f32 %v3274, 0.7978846
    %v3291 = vmul.f32 %v3275, 0.7978846
    %v3292 = vmul.f32 %v3276, 0.7978846
    %v3293 = vtanh.pop %v3277
    %v3294 = vtanh.pop %v3278
    %v3295 = vtanh.pop %v3279
    %v3296 = vtanh.pop %v3280
    %v3297 = vtanh.pop %v3281
    %v3298 = vtanh.pop %v3282
    %v3299 = vtanh.pop %v3283
    %v3300 = vtanh.pop %v3284
    %v3301 = vtanh.pop %v3285
    %v3302 = vtanh.pop %v3286
    %v3303 = vtanh.pop %v3287
    %v3304 = vtanh.pop %v3288
    %v3305 = vtanh.pop %v3289
    %v3306 = vtanh.pop %v3290
    %v3307 = vtanh.pop %v3291
    %v3308 = vtanh.pop %v3292
    %v3309 = vadd.f32 %v3293, 1.0
    %v3310 = vadd.f32 %v3294, 1.0
    %v3311 = vadd.f32 %v3295, 1.0
    %v3312 = vadd.f32 %v3296, 1.0
    %v3313 = vadd.f32 %v3297, 1.0
    %v3314 = vadd.f32 %v3298, 1.0
    %v3315 = vadd.f32 %v3299, 1.0
    %v3316 = vadd.f32 %v3300, 1.0
    %v3317 = vadd.f32 %v3301, 1.0
    %v3318 = vadd.f32 %v3302, 1.0
    %v3319 = vadd.f32 %v3303, 1.0
    %v3320 = vadd.f32 %v3304, 1.0
    %v3321 = vadd.f32 %v3305, 1.0
    %v3322 = vadd.f32 %v3306, 1.0
    %v3323 = vadd.f32 %v3307, 1.0
    %v3324 = vadd.f32 %v3308, 1.0
    %v3325 = vmul.f32 %v3309, 0.5
    %v3326 = vmul.f32 %v3310, 0.5
    %v3327 = vmul.f32 %v3311, 0.5
    %v3328 = vmul.f32 %v3312, 0.5
    %v3329 = vmul.f32 %v3313, 0.5
    %v3330 = vmul.f32 %v3314, 0.5
    %v3331 = vmul.f32 %v3315, 0.5
    %v3332 = vmul.f32 %v3316, 0.5
    %v3333 = vmul.f32 %v3317, 0.5
    %v3334 = vmul.f32 %v3318, 0.5
    %v3335 = vmul.f32 %v3319, 0.5
    %v3336 = vmul.f32 %v3320, 0.5
    %v3337 = vmul.f32 %v3321, 0.5
    %v3338 = vmul.f32 %v3322, 0.5
    %v3339 = vmul.f32 %v3323, 0.5
    %v3340 = vmul.f32 %v3324, 0.5
    %v3341 = vmul.f32 %v3151, %v3325
    %v3342 = vmul.f32 %v3154, %v3326
    %v3343 = vmul.f32 %v3159, %v3327
    %v3344 = vmul.f32 %v3162, %v3328
    %v3345 = vmul.f32 %v3167, %v3329
    %v3346 = vmul.f32 %v3170, %v3330
    %v3347 = vmul.f32 %v3175, %v3331
    %v3348 = vmul.f32 %v3178, %v3332
    %v3349 = vmul.f32 %v3183, %v3333
    %v3350 = vmul.f32 %v3186, %v3334
    %v3351 = vmul.f32 %v3191, %v3335
    %v3352 = vmul.f32 %v3194, %v3336
    %v3353 = vmul.f32 %v3199, %v3337
    %v3354 = vmul.f32 %v3202, %v3338
    %v3355 = vmul.f32 %v3207, %v3339
    %v3356 = vmul.f32 %v3210, %v3340
    %v3357 = vpack.c.bf16 %v3342, %v3341
    %v3358 = vpack.c.bf16 %v3344, %v3343
    %v3359 = vpack.c.bf16 %v3346, %v3345
    %v3360 = vpack.c.bf16 %v3348, %v3347
    %v3361 = vpack.c.bf16 %v3350, %v3349
    %v3362 = vpack.c.bf16 %v3352, %v3351
    %v3363 = vpack.c.bf16 %v3354, %v3353
    %v3364 = vpack.c.bf16 %v3356, %v3355
    %v3365 = vld [vmem:[%s11] sm:$0xf]
    %v3366 = vld [vmem:[%s11 + $0x4] sm:$0xf]
    %v3367 = vld [vmem:[%s11 + $0x8] sm:$0xf]
    %v3368 = vld [vmem:[%s11 + $0xc] sm:$0xf]
    %v3369 = vld [vmem:[%s11 + $0x10] sm:$0xf]
    %v3370 = vld [vmem:[%s11 + $0x14] sm:$0xf]
    %v3371 = vld [vmem:[%s11 + $0x18] sm:$0xf]
    %v3372 = vld [vmem:[%s11 + $0x1c] sm:$0xf]
    %v3373 = vld [vmem:[%s12] sm:$0x1]
    %v3375 = vlaneseq
    %v3376 = vshrl.u32 %v3375, 7
    %v3377 = vsub.s32 0, %v3376
    %v3378 = vrot.slane %v3373, %v3377
    %v3388 = vunpack.c.l.b16 %v3365
    %v3389 = vunpack.c.l.b16 %v3366
    %v3390 = vunpack.c.l.b16 %v3367
    %v3391 = vunpack.c.l.b16 %v3368
    %v3392 = vunpack.c.l.b16 %v3369
    %v3393 = vunpack.c.l.b16 %v3370
    %v3394 = vunpack.c.l.b16 %v3371
    %v3395 = vunpack.c.l.b16 %v3372
    %v3396 = vpack.c.b16 %v3389, %v3388
    %v3397 = vpack.c.b16 %v3391, %v3390
    %v3398 = vpack.c.b16 %v3393, %v3392
    %v3399 = vpack.c.b16 %v3395, %v3394
    %vm3404 = vcmask 523264
    %v3406 = vsel %vm3404, %v3357, 0
    %v3409 = vsel %vm3404, %v3358, 0
    %v3412 = vsel %vm3404, %v3359, 0
    %v3415 = vsel %vm3404, %v3360, 0
    %v3418 = vsel %vm3404, %v3361, 0
    %v3421 = vsel %vm3404, %v3362, 0
    %v3424 = vsel %vm3404, %v3363, 0
    %v3427 = vsel %vm3404, %v3364, 0
    %3429 = vmatprep.subr.bf16.mxu0 0
    %3430 = vmatpush1.bf16.msra.mxu0 %v3396
    %3431 = vmatprep.subr.bf16.mxu0 0
    %3432 = vmatpush1.bf16.msra.mxu0 %v3397
    %3433 = vmatprep.subr.bf16.mxu0 0
    %3434 = vmatpush1.bf16.msra.mxu0 %v3398
    %3435 = vmatprep.subr.bf16.mxu0 0
    %3436 = vmatpush1.bf16.msra.mxu0 %v3399
    %3437 = vmatprep.subr.bf16.mxu0 0
    %3438 = vmatpush1.bf16.msra.mxu0 0
    %3439 = vmatprep.subr.bf16.mxu0 0
    %3440 = vmatpush1.bf16.msra.mxu0 0
    %3441 = vmatprep.subr.bf16.mxu0 0
    %3442 = vmatpush1.bf16.msra.mxu0 0
    %3443 = vmatprep.subr.bf16.mxu0 0
    %3444 = vmatpush1.bf16.msra.mxu0 0
    %3445 = vmatprep.subr.bf16.mxu0 0
    %3446 = vmatpush1.bf16.msra.mxu0 0
    %3447 = vmatprep.subr.bf16.mxu0 0
    %3448 = vmatpush1.bf16.msra.mxu0 0
    %3449 = vmatprep.subr.bf16.mxu0 0
    %3450 = vmatpush1.bf16.msra.mxu0 0
    %3451 = vmatprep.subr.bf16.mxu0 0
    %3452 = vmatpush1.bf16.msra.mxu0 0
    %3453 = vmatprep.subr.bf16.mxu0 0
    %3454 = vmatpush1.bf16.msra.mxu0 0
    %3455 = vmatprep.subr.bf16.mxu0 0
    %3456 = vmatpush1.bf16.msra.mxu0 0
    %3457 = vmatprep.subr.bf16.mxu0 0
    %3458 = vmatpush1.bf16.msra.mxu0 0
    %3459 = vmatprep.subr.bf16.mxu0 0
    %3460 = vmatpush1.bf16.msra.mxu0 0
    %3461 = vmatprep.mubr.bf16.mxu0 0
    %3462 = vmatmul.mubr.bf16.gmra.mrb[0].mxu0 %v3406
    %v3463 = vpop.f32.mrb[0].mxu0
    %v3464 = vadd.f32 %v3378, %v3463
    %v3465 = vpop.f32.mrb[0].mxu0
    %v3466 = vpop.f32.mrb[0].mxu0
    %v3467 = vadd.f32 %v3378, %v3466
    %v3468 = vpop.f32.mrb[0].mxu0
    %3469 = vmatprep.mubr.bf16.mxu0 0
    %3470 = vmatmul.mubr.bf16.gmra.mrb[0].mxu0 %v3409
    %v3471 = vpop.f32.mrb[0].mxu0
    %v3472 = vadd.f32 %v3378, %v3471
    %v3473 = vpop.f32.mrb[0].mxu0
    %v3474 = vpop.f32.mrb[0].mxu0
    %v3475 = vadd.f32 %v3378, %v3474
    %v3476 = vpop.f32.mrb[0].mxu0
    %3477 = vmatprep.mubr.bf16.mxu0 0
    %3478 = vmatmul.mubr.bf16.gmra.mrb[0].mxu0 %v3412
    %v3479 = vpop.f32.mrb[0].mxu0
    %v3480 = vadd.f32 %v3378, %v3479
    %v3481 = vpop.f32.mrb[0].mxu0
    %v3482 = vpop.f32.mrb[0].mxu0
    %v3483 = vadd.f32 %v3378, %v3482
    %v3484 = vpop.f32.mrb[0].mxu0
    %3485 = vmatprep.mubr.bf16.mxu0 0
    %3486 = vmatmul.mubr.bf16.gmra.mrb[0].mxu0 %v3415
    %v3487 = vpop.f32.mrb[0].mxu0
    %v3488 = vadd.f32 %v3378, %v3487
    %v3489 = vpop.f32.mrb[0].mxu0
    %v3490 = vpop.f32.mrb[0].mxu0
    %v3491 = vadd.f32 %v3378, %v3490
    %v3492 = vpop.f32.mrb[0].mxu0
    %3493 = vmatprep.mubr.bf16.mxu0 0
    %3494 = vmatmul.mubr.bf16.gmra.mrb[0].mxu0 %v3418
    %v3495 = vpop.f32.mrb[0].mxu0
    %v3496 = vadd.f32 %v3378, %v3495
    %v3497 = vpop.f32.mrb[0].mxu0
    %v3498 = vpop.f32.mrb[0].mxu0
    %v3499 = vadd.f32 %v3378, %v3498
    %v3500 = vpop.f32.mrb[0].mxu0
    %3501 = vmatprep.mubr.bf16.mxu0 0
    %3502 = vmatmul.mubr.bf16.gmra.mrb[0].mxu0 %v3421
    %v3503 = vpop.f32.mrb[0].mxu0
    %v3504 = vadd.f32 %v3378, %v3503
    %v3505 = vpop.f32.mrb[0].mxu0
    %v3506 = vpop.f32.mrb[0].mxu0
    %v3507 = vadd.f32 %v3378, %v3506
    %v3508 = vpop.f32.mrb[0].mxu0
    %3509 = vmatprep.mubr.bf16.mxu0 0
    %3510 = vmatmul.mubr.bf16.gmra.mrb[0].mxu0 %v3424
    %v3511 = vpop.f32.mrb[0].mxu0
    %v3512 = vadd.f32 %v3378, %v3511
    %v3513 = vpop.f32.mrb[0].mxu0
    %v3514 = vpop.f32.mrb[0].mxu0
    %v3515 = vadd.f32 %v3378, %v3514
    %v3516 = vpop.f32.mrb[0].mxu0
    %3517 = vmatprep.mubr.bf16.mxu0 0
    %3518 = vmatmul.mubr.bf16.gmra.mrb[0].mxu0 %v3427
    %v3519 = vpop.f32.mrb[0].mxu0
    %v3520 = vadd.f32 %v3378, %v3519
    %v3521 = vpop.f32.mrb[0].mxu0
    %v3522 = vpop.f32.mrb[0].mxu0
    %v3523 = vadd.f32 %v3378, %v3522
    %v3524 = vpop.f32.mrb[0].mxu0
    %3525 = vdwg.mxu0
    %v3526 = vadd.f32 %v3464, %v2790
    %v3527 = vadd.f32 %v3467, %v2791
    %v3528 = vadd.f32 %v3472, %v2792
    %v3529 = vadd.f32 %v3475, %v2793
    %v3530 = vadd.f32 %v3480, %v2794
    %v3531 = vadd.f32 %v3483, %v2795
    %v3532 = vadd.f32 %v3488, %v2796
    %v3533 = vadd.f32 %v3491, %v2797
    %v3534 = vadd.f32 %v3496, %v2798
    %v3535 = vadd.f32 %v3499, %v2799
    %v3536 = vadd.f32 %v3504, %v2800
    %v3537 = vadd.f32 %v3507, %v2801
    %v3538 = vadd.f32 %v3512, %v2802
    %v3539 = vadd.f32 %v3515, %v2803
    %v3540 = vadd.f32 %v3520, %v2804
    %v3541 = vadd.f32 %v3523, %v2805
    %v3542 = vld [vmem:[%s13] sm:$0xf]
    %v3543 = vld [vmem:[%s13 + $0x4] sm:$0xf]
    %v3544 = vld [vmem:[%s13 + $0x8] sm:$0xf]
    %v3545 = vld [vmem:[%s13 + $0xc] sm:$0xf]
    %v3546 = vld [vmem:[%s3] sm:$0xf]
    %v3547 = vld [vmem:[%s3 + $0x4] sm:$0xf]
    %v3548 = vld [vmem:[%s3 + $0x8] sm:$0xf]
    %v3549 = vld [vmem:[%s3 + $0xc] sm:$0xf]
    %v3550 = vld [vmem:[%s3 + $0x10] sm:$0xf]
    %v3551 = vld [vmem:[%s3 + $0x14] sm:$0xf]
    %v3552 = vld [vmem:[%s3 + $0x18] sm:$0xf]
    %v3553 = vld [vmem:[%s3 + $0x1c] sm:$0xf]
    %v3554 = vld [vmem:[%s3 + $0x20] sm:$0xf]
    %v3555 = vld [vmem:[%s3 + $0x24] sm:$0xf]
    %v3556 = vld [vmem:[%s3 + $0x28] sm:$0xf]
    %v3557 = vld [vmem:[%s3 + $0x2c] sm:$0xf]
    %v3558 = vld [vmem:[%s3 + $0x30] sm:$0xf]
    %v3559 = vld [vmem:[%s3 + $0x34] sm:$0xf]
    %v3560 = vld [vmem:[%s3 + $0x38] sm:$0xf]
    %v3561 = vld [vmem:[%s3 + $0x3c] sm:$0xf]
    %v3578 = vunpack.c.l.b16 %v3546
    %v3579 = vunpack.c.l.b16 %v3547
    %v3580 = vunpack.c.l.b16 %v3548
    %v3581 = vunpack.c.l.b16 %v3549
    %v3582 = vunpack.c.l.b16 %v3550
    %v3583 = vunpack.c.l.b16 %v3551
    %v3584 = vunpack.c.l.b16 %v3552
    %v3585 = vunpack.c.l.b16 %v3553
    %v3586 = vunpack.c.l.b16 %v3554
    %v3587 = vunpack.c.l.b16 %v3555
    %v3588 = vunpack.c.l.b16 %v3556
    %v3589 = vunpack.c.l.b16 %v3557
    %v3590 = vunpack.c.l.b16 %v3558
    %v3591 = vunpack.c.l.b16 %v3559
    %v3592 = vunpack.c.l.b16 %v3560
    %v3593 = vunpack.c.l.b16 %v3561
    %v3594 = vpack.c.b16 %v3579, %v3578
    %v3595 = vpack.c.b16 %v3581, %v3580
    %v3596 = vpack.c.b16 %v3583, %v3582
    %v3597 = vpack.c.b16 %v3585, %v3584
    %v3598 = vpack.c.b16 %v3587, %v3586
    %v3599 = vpack.c.b16 %v3589, %v3588
    %v3600 = vpack.c.b16 %v3591, %v3590
    %v3601 = vpack.c.b16 %v3593, %v3592
    %3610 = vmatprep.subr.bf16.mxu0 0
    %3611 = vmatpush1.bf16.msra.mxu0 %v156
    %3612 = vmatprep.subr.bf16.mxu0 0
    %3613 = vmatpush1.bf16.msra.mxu0 %v157
    %3614 = vmatprep.subr.bf16.mxu0 0
    %3615 = vmatpush1.bf16.msra.mxu0 %v158
    %3616 = vmatprep.subr.bf16.mxu0 0
    %3617 = vmatpush1.bf16.msra.mxu0 %v159
    %3618 = vmatprep.subr.bf16.mxu0 0
    %3619 = vmatpush1.bf16.msra.mxu0 %v160
    %3620 = vmatprep.subr.bf16.mxu0 0
    %3621 = vmatpush1.bf16.msra.mxu0 %v161
    %3622 = vmatprep.subr.bf16.mxu0 0
    %3623 = vmatpush1.bf16.msra.mxu0 %v162
    %3624 = vmatprep.subr.bf16.mxu0 0
    %3625 = vmatpush1.bf16.msra.mxu0 %v163
    %3626 = vmatprep.subr.bf16.mxu0 0
    %3627 = vmatpush1.bf16.msra.mxu0 0
    %3628 = vmatprep.subr.bf16.mxu0 0
    %3629 = vmatpush1.bf16.msra.mxu0 0
    %3630 = vmatprep.subr.bf16.mxu0 0
    %3631 = vmatpush1.bf16.msra.mxu0 0
    %3632 = vmatprep.subr.bf16.mxu0 0
    %3633 = vmatpush1.bf16.msra.mxu0 0
    %3634 = vmatprep.subr.bf16.mxu0 0
    %3635 = vmatpush1.bf16.msra.mxu0 0
    %3636 = vmatprep.subr.bf16.mxu0 0
    %3637 = vmatpush1.bf16.msra.mxu0 0
    %3638 = vmatprep.subr.bf16.mxu0 0
    %3639 = vmatpush1.bf16.msra.mxu0 0
    %3640 = vmatprep.subr.bf16.mxu0 0
    %3641 = vmatpush1.bf16.msra.mxu0 0
    %3642 = vmatprep.mubr.bf16.mxu0 0
    %3643 = vmatmul.mubr.bf16.gmra.mrb[0].mxu0 %v3594
    %v3644 = vpop.f32.mrb[0].mxu0
    %v3645 = vadd.f32 0.0, %v3644
    %v3646 = vpop.f32.mrb[0].mxu0
    %v3647 = vpop.f32.mrb[0].mxu0
    %v3648 = vadd.f32 0.0, %v3647
    %v3649 = vpop.f32.mrb[0].mxu0
    %3650 = vmatprep.mubr.bf16.mxu0 0
    %3651 = vmatmul.mubr.bf16.gmra.mrb[0].mxu0 %v3595
    %v3652 = vpop.f32.mrb[0].mxu0
    %v3653 = vadd.f32 0.0, %v3652
    %v3654 = vpop.f32.mrb[0].mxu0
    %v3655 = vpop.f32.mrb[0].mxu0
    %v3656 = vadd.f32 0.0, %v3655
    %v3657 = vpop.f32.mrb[0].mxu0
    %3658 = vmatprep.mubr.bf16.mxu0 0
    %3659 = vmatmul.mubr.bf16.gmra.mrb[0].mxu0 %v3596
    %v3660 = vpop.f32.mrb[0].mxu0
    %v3661 = vadd.f32 0.0, %v3660
    %v3662 = vpop.f32.mrb[0].mxu0
    %v3663 = vpop.f32.mrb[0].mxu0
    %v3664 = vadd.f32 0.0, %v3663
    %v3665 = vpop.f32.mrb[0].mxu0
    %3666 = vmatprep.mubr.bf16.mxu0 0
    %3667 = vmatmul.mubr.bf16.gmra.mrb[0].mxu0 %v3597
    %v3668 = vpop.f32.mrb[0].mxu0
    %v3669 = vadd.f32 0.0, %v3668
    %v3670 = vpop.f32.mrb[0].mxu0
    %v3671 = vpop.f32.mrb[0].mxu0
    %v3672 = vadd.f32 0.0, %v3671
    %v3673 = vpop.f32.mrb[0].mxu0
    %3674 = vmatprep.mubr.bf16.mxu0 0
    %3675 = vmatmul.mubr.bf16.gmra.mrb[0].mxu0 %v3598
    %v3676 = vpop.f32.mrb[0].mxu0
    %v3677 = vadd.f32 0.0, %v3676
    %v3678 = vpop.f32.mrb[0].mxu0
    %v3679 = vpop.f32.mrb[0].mxu0
    %v3680 = vadd.f32 0.0, %v3679
    %v3681 = vpop.f32.mrb[0].mxu0
    %3682 = vmatprep.mubr.bf16.mxu0 0
    %3683 = vmatmul.mubr.bf16.gmra.mrb[0].mxu0 %v3599
    %v3684 = vpop.f32.mrb[0].mxu0
    %v3685 = vadd.f32 0.0, %v3684
    %v3686 = vpop.f32.mrb[0].mxu0
    %v3687 = vpop.f32.mrb[0].mxu0
    %v3688 = vadd.f32 0.0, %v3687
    %v3689 = vpop.f32.mrb[0].mxu0
    %3690 = vmatprep.mubr.bf16.mxu0 0
    %3691 = vmatmul.mubr.bf16.gmra.mrb[0].mxu0 %v3600
    %v3692 = vpop.f32.mrb[0].mxu0
    %v3693 = vadd.f32 0.0, %v3692
    %v3694 = vpop.f32.mrb[0].mxu0
    %v3695 = vpop.f32.mrb[0].mxu0
    %v3696 = vadd.f32 0.0, %v3695
    %v3697 = vpop.f32.mrb[0].mxu0
    %3698 = vmatprep.mubr.bf16.mxu0 0
    %3699 = vmatmul.mubr.bf16.gmra.mrb[0].mxu0 %v3601
    %v3700 = vpop.f32.mrb[0].mxu0
    %v3701 = vadd.f32 0.0, %v3700
    %v3702 = vpop.f32.mrb[0].mxu0
    %v3703 = vpop.f32.mrb[0].mxu0
    %v3704 = vadd.f32 0.0, %v3703
    %v3705 = vpop.f32.mrb[0].mxu0
    %3706 = vdwg.mxu0
    %v3707 = vpack.c.bf16 %v3648, %v3645
    %v3708 = vpack.c.bf16 %v3656, %v3653
    %v3709 = vpack.c.bf16 %v3664, %v3661
    %v3710 = vpack.c.bf16 %v3672, %v3669
    %v3711 = vpack.c.bf16 %v3680, %v3677
    %v3712 = vpack.c.bf16 %v3688, %v3685
    %v3713 = vpack.c.bf16 %v3696, %v3693
    %v3714 = vpack.c.bf16 %v3704, %v3701
    %s3715 = scalar_lea.vmem %s13, 16
    %v3716 = vld [vmem:[%s3715] sm:$0xf]
    %v3717 = vld [vmem:[%s3715 + $0x4] sm:$0xf]
    %v3718 = vld [vmem:[%s3715 + $0x8] sm:$0xf]
    %v3719 = vld [vmem:[%s3715 + $0xc] sm:$0xf]
    %v3724 = vunpack.c.l.b16 %v3716
    %v3725 = vunpack.c.l.b16 %v3717
    %v3726 = vunpack.c.l.b16 %v3718
    %v3727 = vunpack.c.l.b16 %v3719
    %v3728 = vpack.c.b16 %v3725, %v3724
    %v3729 = vpack.c.b16 %v3727, %v3726
    %v3733 = vsel %vm180, %v3707, 0
    %v3736 = vsel %vm180, %v3708, 0
    %v3739 = vsel %vm180, %v3709, 0
    %v3742 = vsel %vm180, %v3710, 0
    %v3745 = vsel %vm180, %v3711, 0
    %v3748 = vsel %vm180, %v3712, 0
    %v3751 = vsel %vm180, %v3713, 0
    %v3754 = vsel %vm180, %v3714, 0
    %3756 = vmatprep.subr.bf16.mxu0 0
    %3757 = vmatpush1.bf16.msra.mxu0 %v3728
    %3758 = vmatprep.subr.bf16.mxu0 0
    %3759 = vmatpush1.bf16.msra.mxu0 %v3729
    %3760 = vmatprep.subr.bf16.mxu0 0
    %3761 = vmatpush1.bf16.msra.mxu0 0
    %3762 = vmatprep.subr.bf16.mxu0 0
    %3763 = vmatpush1.bf16.msra.mxu0 0
    %3764 = vmatprep.subr.bf16.mxu0 0
    %3765 = vmatpush1.bf16.msra.mxu0 0
    %3766 = vmatprep.subr.bf16.mxu0 0
    %3767 = vmatpush1.bf16.msra.mxu0 0
    %3768 = vmatprep.subr.bf16.mxu0 0
    %3769 = vmatpush1.bf16.msra.mxu0 0
    %3770 = vmatprep.subr.bf16.mxu0 0
    %3771 = vmatpush1.bf16.msra.mxu0 0
    %3772 = vmatprep.subr.bf16.mxu0 0
    %3773 = vmatpush1.bf16.msra.mxu0 0
    %3774 = vmatprep.subr.bf16.mxu0 0
    %3775 = vmatpush1.bf16.msra.mxu0 0
    %3776 = vmatprep.subr.bf16.mxu0 0
    %3777 = vmatpush1.bf16.msra.mxu0 0
    %3778 = vmatprep.subr.bf16.mxu0 0
    %3779 = vmatpush1.bf16.msra.mxu0 0
    %3780 = vmatprep.subr.bf16.mxu0 0
    %3781 = vmatpush1.bf16.msra.mxu0 0
    %3782 = vmatprep.subr.bf16.mxu0 0
    %3783 = vmatpush1.bf16.msra.mxu0 0
    %3784 = vmatprep.subr.bf16.mxu0 0
    %3785 = vmatpush1.bf16.msra.mxu0 0
    %3786 = vmatprep.subr.bf16.mxu0 0
    %3787 = vmatpush1.bf16.msra.mxu0 0
    %3788 = vmatprep.mubr.bf16.mxu0 0
    %3789 = vmatmul.mubr.bf16.gmra.mrb[0].mxu0 %v3733
    %v3790 = vpop.f32.mrb[0].mxu0
    %v3791 = vadd.f32 0.0, %v3790
    %v3792 = vpop.f32.mrb[0].mxu0
    %v3793 = vpop.f32.mrb[0].mxu0
    %v3794 = vadd.f32 0.0, %v3793
    %v3795 = vpop.f32.mrb[0].mxu0
    %3796 = vmatprep.mubr.bf16.mxu0 0
    %3797 = vmatmul.mubr.bf16.gmra.mrb[0].mxu0 %v3736
    %v3798 = vpop.f32.mrb[0].mxu0
    %v3799 = vadd.f32 0.0, %v3798
    %v3800 = vpop.f32.mrb[0].mxu0
    %v3801 = vpop.f32.mrb[0].mxu0
    %v3802 = vadd.f32 0.0, %v3801
    %v3803 = vpop.f32.mrb[0].mxu0
    %3804 = vmatprep.mubr.bf16.mxu0 0
    %3805 = vmatmul.mubr.bf16.gmra.mrb[0].mxu0 %v3739
    %v3806 = vpop.f32.mrb[0].mxu0
    %v3807 = vadd.f32 0.0, %v3806
    %v3808 = vpop.f32.mrb[0].mxu0
    %v3809 = vpop.f32.mrb[0].mxu0
    %v3810 = vadd.f32 0.0, %v3809
    %v3811 = vpop.f32.mrb[0].mxu0
    %3812 = vmatprep.mubr.bf16.mxu0 0
    %3813 = vmatmul.mubr.bf16.gmra.mrb[0].mxu0 %v3742
    %v3814 = vpop.f32.mrb[0].mxu0
    %v3815 = vadd.f32 0.0, %v3814
    %v3816 = vpop.f32.mrb[0].mxu0
    %v3817 = vpop.f32.mrb[0].mxu0
    %v3818 = vadd.f32 0.0, %v3817
    %v3819 = vpop.f32.mrb[0].mxu0
    %3820 = vmatprep.mubr.bf16.mxu0 0
    %3821 = vmatmul.mubr.bf16.gmra.mrb[0].mxu0 %v3745
    %v3822 = vpop.f32.mrb[0].mxu0
    %v3823 = vadd.f32 0.0, %v3822
    %v3824 = vpop.f32.mrb[0].mxu0
    %v3825 = vpop.f32.mrb[0].mxu0
    %v3826 = vadd.f32 0.0, %v3825
    %v3827 = vpop.f32.mrb[0].mxu0
    %3828 = vmatprep.mubr.bf16.mxu0 0
    %3829 = vmatmul.mubr.bf16.gmra.mrb[0].mxu0 %v3748
    %v3830 = vpop.f32.mrb[0].mxu0
    %v3831 = vadd.f32 0.0, %v3830
    %v3832 = vpop.f32.mrb[0].mxu0
    %v3833 = vpop.f32.mrb[0].mxu0
    %v3834 = vadd.f32 0.0, %v3833
    %v3835 = vpop.f32.mrb[0].mxu0
    %3836 = vmatprep.mubr.bf16.mxu0 0
    %3837 = vmatmul.mubr.bf16.gmra.mrb[0].mxu0 %v3751
    %v3838 = vpop.f32.mrb[0].mxu0
    %v3839 = vadd.f32 0.0, %v3838
    %v3840 = vpop.f32.mrb[0].mxu0
    %v3841 = vpop.f32.mrb[0].mxu0
    %v3842 = vadd.f32 0.0, %v3841
    %v3843 = vpop.f32.mrb[0].mxu0
    %3844 = vmatprep.mubr.bf16.mxu0 0
    %3845 = vmatmul.mubr.bf16.gmra.mrb[0].mxu0 %v3754
    %v3846 = vpop.f32.mrb[0].mxu0
    %v3847 = vadd.f32 0.0, %v3846
    %v3848 = vpop.f32.mrb[0].mxu0
    %v3849 = vpop.f32.mrb[0].mxu0
    %v3850 = vadd.f32 0.0, %v3849
    %v3851 = vpop.f32.mrb[0].mxu0
    %3852 = vdwg.mxu0
    %v3857 = vunpack.c.l.b16 %v3542
    %v3858 = vunpack.c.l.b16 %v3543
    %v3859 = vunpack.c.l.b16 %v3544
    %v3860 = vunpack.c.l.b16 %v3545
    %v3861 = vpack.c.b16 %v3858, %v3857
    %v3862 = vpack.c.b16 %v3860, %v3859
    %3865 = vmatprep.subr.bf16.mxu0 0
    %3866 = vmatpush1.bf16.msra.mxu0 %v3861
    %3867 = vmatprep.subr.bf16.mxu0 0
    %3868 = vmatpush1.bf16.msra.mxu0 %v3862
    %3869 = vmatprep.subr.bf16.mxu0 0
    %3870 = vmatpush1.bf16.msra.mxu0 0
    %3871 = vmatprep.subr.bf16.mxu0 0
    %3872 = vmatpush1.bf16.msra.mxu0 0
    %3873 = vmatprep.subr.bf16.mxu0 0
    %3874 = vmatpush1.bf16.msra.mxu0 0
    %3875 = vmatprep.subr.bf16.mxu0 0
    %3876 = vmatpush1.bf16.msra.mxu0 0
    %3877 = vmatprep.subr.bf16.mxu0 0
    %3878 = vmatpush1.bf16.msra.mxu0 0
    %3879 = vmatprep.subr.bf16.mxu0 0
    %3880 = vmatpush1.bf16.msra.mxu0 0
    %3881 = vmatprep.subr.bf16.mxu0 0
    %3882 = vmatpush1.bf16.msra.mxu0 0
    %3883 = vmatprep.subr.bf16.mxu0 0
    %3884 = vmatpush1.bf16.msra.mxu0 0
    %3885 = vmatprep.subr.bf16.mxu0 0
    %3886 = vmatpush1.bf16.msra.mxu0 0
    %3887 = vmatprep.subr.bf16.mxu0 0
    %3888 = vmatpush1.bf16.msra.mxu0 0
    %3889 = vmatprep.subr.bf16.mxu0 0
    %3890 = vmatpush1.bf16.msra.mxu0 0
    %3891 = vmatprep.subr.bf16.mxu0 0
    %3892 = vmatpush1.bf16.msra.mxu0 0
    %3893 = vmatprep.subr.bf16.mxu0 0
    %3894 = vmatpush1.bf16.msra.mxu0 0
    %3895 = vmatprep.subr.bf16.mxu0 0
    %3896 = vmatpush1.bf16.msra.mxu0 0
    %3897 = vmatprep.mubr.bf16.mxu0 0
    %3898 = vmatmul.mubr.bf16.gmra.mrb[0].mxu0 %v182
    %v3899 = vpop.f32.mrb[0].mxu0
    %v3900 = vadd.f32 %v3791, %v3899
    %v3901 = vpop.f32.mrb[0].mxu0
    %v3902 = vpop.f32.mrb[0].mxu0
    %v3903 = vadd.f32 %v3794, %v3902
    %v3904 = vpop.f32.mrb[0].mxu0
    %3905 = vmatprep.mubr.bf16.mxu0 0
    %3906 = vmatmul.mubr.bf16.gmra.mrb[0].mxu0 %v185
    %v3907 = vpop.f32.mrb[0].mxu0
    %v3908 = vadd.f32 %v3799, %v3907
    %v3909 = vpop.f32.mrb[0].mxu0
    %v3910 = vpop.f32.mrb[0].mxu0
    %v3911 = vadd.f32 %v3802, %v3910
    %v3912 = vpop.f32.mrb[0].mxu0
    %3913 = vmatprep.mubr.bf16.mxu0 0
    %3914 = vmatmul.mubr.bf16.gmra.mrb[0].mxu0 %v188
    %v3915 = vpop.f32.mrb[0].mxu0
    %v3916 = vadd.f32 %v3807, %v3915
    %v3917 = vpop.f32.mrb[0].mxu0
    %v3918 = vpop.f32.mrb[0].mxu0
    %v3919 = vadd.f32 %v3810, %v3918
    %v3920 = vpop.f32.mrb[0].mxu0
    %3921 = vmatprep.mubr.bf16.mxu0 0
    %3922 = vmatmul.mubr.bf16.gmra.mrb[0].mxu0 %v191
    %v3923 = vpop.f32.mrb[0].mxu0
    %v3924 = vadd.f32 %v3815, %v3923
    %v3925 = vpop.f32.mrb[0].mxu0
    %v3926 = vpop.f32.mrb[0].mxu0
    %v3927 = vadd.f32 %v3818, %v3926
    %v3928 = vpop.f32.mrb[0].mxu0
    %3929 = vmatprep.mubr.bf16.mxu0 0
    %3930 = vmatmul.mubr.bf16.gmra.mrb[0].mxu0 %v194
    %v3931 = vpop.f32.mrb[0].mxu0
    %v3932 = vadd.f32 %v3823, %v3931
    %v3933 = vpop.f32.mrb[0].mxu0
    %v3934 = vpop.f32.mrb[0].mxu0
    %v3935 = vadd.f32 %v3826, %v3934
    %v3936 = vpop.f32.mrb[0].mxu0
    %3937 = vmatprep.mubr.bf16.mxu0 0
    %3938 = vmatmul.mubr.bf16.gmra.mrb[0].mxu0 %v197
    %v3939 = vpop.f32.mrb[0].mxu0
    %v3940 = vadd.f32 %v3831, %v3939
    %v3941 = vpop.f32.mrb[0].mxu0
    %v3942 = vpop.f32.mrb[0].mxu0
    %v3943 = vadd.f32 %v3834, %v3942
    %v3944 = vpop.f32.mrb[0].mxu0
    %3945 = vmatprep.mubr.bf16.mxu0 0
    %3946 = vmatmul.mubr.bf16.gmra.mrb[0].mxu0 %v200
    %v3947 = vpop.f32.mrb[0].mxu0
    %v3948 = vadd.f32 %v3839, %v3947
    %v3949 = vpop.f32.mrb[0].mxu0
    %v3950 = vpop.f32.mrb[0].mxu0
    %v3951 = vadd.f32 %v3842, %v3950
    %v3952 = vpop.f32.mrb[0].mxu0
    %3953 = vmatprep.mubr.bf16.mxu0 0
    %3954 = vmatmul.mubr.bf16.gmra.mrb[0].mxu0 %v203
    %v3955 = vpop.f32.mrb[0].mxu0
    %v3956 = vadd.f32 %v3847, %v3955
    %v3957 = vpop.f32.mrb[0].mxu0
    %v3958 = vpop.f32.mrb[0].mxu0
    %v3959 = vadd.f32 %v3850, %v3958
    %v3960 = vpop.f32.mrb[0].mxu0
    %3961 = vdwg.mxu0
    %3962 = vmatprep.subr.bf16.mxu0 0
    %3963 = vmatpush1.bf16.msra.mxu0 %v3707
    %3964 = vmatprep.subr.bf16.mxu0 0
    %3965 = vmatpush1.bf16.msra.mxu0 %v3708
    %3966 = vmatprep.subr.bf16.mxu0 0
    %3967 = vmatpush1.bf16.msra.mxu0 %v3709
    %3968 = vmatprep.subr.bf16.mxu0 0
    %3969 = vmatpush1.bf16.msra.mxu0 %v3710
    %3970 = vmatprep.subr.bf16.mxu0 0
    %3971 = vmatpush1.bf16.msra.mxu0 %v3711
    %3972 = vmatprep.subr.bf16.mxu0 0
    %3973 = vmatpush1.bf16.msra.mxu0 %v3712
    %3974 = vmatprep.subr.bf16.mxu0 0
    %3975 = vmatpush1.bf16.msra.mxu0 %v3713
    %3976 = vmatprep.subr.bf16.mxu0 0
    %3977 = vmatpush1.bf16.msra.mxu0 %v3714
    %3978 = vmatprep.subr.bf16.mxu0 0
    %3979 = vmatpush1.bf16.msra.mxu0 0
    %3980 = vmatprep.subr.bf16.mxu0 0
    %3981 = vmatpush1.bf16.msra.mxu0 0
    %3982 = vmatprep.subr.bf16.mxu0 0
    %3983 = vmatpush1.bf16.msra.mxu0 0
    %3984 = vmatprep.subr.bf16.mxu0 0
    %3985 = vmatpush1.bf16.msra.mxu0 0
    %3986 = vmatprep.subr.bf16.mxu0 0
    %3987 = vmatpush1.bf16.msra.mxu0 0
    %3988 = vmatprep.subr.bf16.mxu0 0
    %3989 = vmatpush1.bf16.msra.mxu0 0
    %3990 = vmatprep.subr.bf16.mxu0 0
    %3991 = vmatpush1.bf16.msra.mxu0 0
    %3992 = vmatprep.subr.bf16.mxu0 0
    %3993 = vmatpush1.bf16.msra.mxu0 0
    %3994 = vmatprep.mubr.bf16.mxu0 0
    %3995 = vmatmul.mubr.bf16.gmra.mrb[0].mxu0 %v3594
    %v3996 = vpop.f32.mrb[0].mxu0
    %v3997 = vadd.f32 0.0, %v3996
    %v3998 = vpop.f32.mrb[0].mxu0
    %v3999 = vpop.f32.mrb[0].mxu0
    %v4000 = vadd.f32 0.0, %v3999
    %v4001 = vpop.f32.mrb[0].mxu0
    %4002 = vmatprep.mubr.bf16.mxu0 0
    %4003 = vmatmul.mubr.bf16.gmra.mrb[0].mxu0 %v3595
    %v4004 = vpop.f32.mrb[0].mxu0
    %v4005 = vadd.f32 0.0, %v4004
    %v4006 = vpop.f32.mrb[0].mxu0
    %v4007 = vpop.f32.mrb[0].mxu0
    %v4008 = vadd.f32 0.0, %v4007
    %v4009 = vpop.f32.mrb[0].mxu0
    %4010 = vmatprep.mubr.bf16.mxu0 0
    %4011 = vmatmul.mubr.bf16.gmra.mrb[0].mxu0 %v3596
    %v4012 = vpop.f32.mrb[0].mxu0
    %v4013 = vadd.f32 0.0, %v4012
    %v4014 = vpop.f32.mrb[0].mxu0
    %v4015 = vpop.f32.mrb[0].mxu0
    %v4016 = vadd.f32 0.0, %v4015
    %v4017 = vpop.f32.mrb[0].mxu0
    %4018 = vmatprep.mubr.bf16.mxu0 0
    %4019 = vmatmul.mubr.bf16.gmra.mrb[0].mxu0 %v3597
    %v4020 = vpop.f32.mrb[0].mxu0
    %v4021 = vadd.f32 0.0, %v4020
    %v4022 = vpop.f32.mrb[0].mxu0
    %v4023 = vpop.f32.mrb[0].mxu0
    %v4024 = vadd.f32 0.0, %v4023
    %v4025 = vpop.f32.mrb[0].mxu0
    %4026 = vmatprep.mubr.bf16.mxu0 0
    %4027 = vmatmul.mubr.bf16.gmra.mrb[0].mxu0 %v3598
    %v4028 = vpop.f32.mrb[0].mxu0
    %v4029 = vadd.f32 0.0, %v4028
    %v4030 = vpop.f32.mrb[0].mxu0
    %v4031 = vpop.f32.mrb[0].mxu0
    %v4032 = vadd.f32 0.0, %v4031
    %v4033 = vpop.f32.mrb[0].mxu0
    %4034 = vmatprep.mubr.bf16.mxu0 0
    %4035 = vmatmul.mubr.bf16.gmra.mrb[0].mxu0 %v3599
    %v4036 = vpop.f32.mrb[0].mxu0
    %v4037 = vadd.f32 0.0, %v4036
    %v4038 = vpop.f32.mrb[0].mxu0
    %v4039 = vpop.f32.mrb[0].mxu0
    %v4040 = vadd.f32 0.0, %v4039
    %v4041 = vpop.f32.mrb[0].mxu0
    %4042 = vmatprep.mubr.bf16.mxu0 0
    %4043 = vmatmul.mubr.bf16.gmra.mrb[0].mxu0 %v3600
    %v4044 = vpop.f32.mrb[0].mxu0
    %v4045 = vadd.f32 0.0, %v4044
    %v4046 = vpop.f32.mrb[0].mxu0
    %v4047 = vpop.f32.mrb[0].mxu0
    %v4048 = vadd.f32 0.0, %v4047
    %v4049 = vpop.f32.mrb[0].mxu0
    %4050 = vmatprep.mubr.bf16.mxu0 0
    %4051 = vmatmul.mubr.bf16.gmra.mrb[0].mxu0 %v3601
    %v4052 = vpop.f32.mrb[0].mxu0
    %v4053 = vadd.f32 0.0, %v4052
    %v4054 = vpop.f32.mrb[0].mxu0
    %v4055 = vpop.f32.mrb[0].mxu0
    %v4056 = vadd.f32 0.0, %v4055
    %v4057 = vpop.f32.mrb[0].mxu0
    %4058 = vdwg.mxu0
    %v4059 = vpack.c.bf16 %v4000, %v3997
    %v4060 = vpack.c.bf16 %v4008, %v4005
    %v4061 = vpack.c.bf16 %v4016, %v4013
    %v4062 = vpack.c.bf16 %v4024, %v4021
    %v4063 = vpack.c.bf16 %v4032, %v4029
    %v4064 = vpack.c.bf16 %v4040, %v4037
    %v4065 = vpack.c.bf16 %v4048, %v4045
    %v4066 = vpack.c.bf16 %v4056, %v4053
    %s4067 = scalar_lea.vmem %s13, 32
    %v4068 = vld [vmem:[%s4067] sm:$0xf]
    %v4069 = vld [vmem:[%s4067 + $0x4] sm:$0xf]
    %v4070 = vld [vmem:[%s4067 + $0x8] sm:$0xf]
    %v4071 = vld [vmem:[%s4067 + $0xc] sm:$0xf]
    %v4076 = vunpack.c.l.b16 %v4068
    %v4077 = vunpack.c.l.b16 %v4069
    %v4078 = vunpack.c.l.b16 %v4070
    %v4079 = vunpack.c.l.b16 %v4071
    %v4080 = vpack.c.b16 %v4077, %v4076
    %v4081 = vpack.c.b16 %v4079, %v4078
    %v4085 = vsel %vm180, %v4059, 0
    %v4088 = vsel %vm180, %v4060, 0
    %v4091 = vsel %vm180, %v4061, 0
    %v4094 = vsel %vm180, %v4062, 0
    %v4097 = vsel %vm180, %v4063, 0
    %v4100 = vsel %vm180, %v4064, 0
    %v4103 = vsel %vm180, %v4065, 0
    %v4106 = vsel %vm180, %v4066, 0
    %4108 = vmatprep.subr.bf16.mxu0 0
    %4109 = vmatpush1.bf16.msra.mxu0 %v4080
    %4110 = vmatprep.subr.bf16.mxu0 0
    %4111 = vmatpush1.bf16.msra.mxu0 %v4081
    %4112 = vmatprep.subr.bf16.mxu0 0
    %4113 = vmatpush1.bf16.msra.mxu0 0
    %4114 = vmatprep.subr.bf16.mxu0 0
    %4115 = vmatpush1.bf16.msra.mxu0 0
    %4116 = vmatprep.subr.bf16.mxu0 0
    %4117 = vmatpush1.bf16.msra.mxu0 0
    %4118 = vmatprep.subr.bf16.mxu0 0
    %4119 = vmatpush1.bf16.msra.mxu0 0
    %4120 = vmatprep.subr.bf16.mxu0 0
    %4121 = vmatpush1.bf16.msra.mxu0 0
    %4122 = vmatprep.subr.bf16.mxu0 0
    %4123 = vmatpush1.bf16.msra.mxu0 0
    %4124 = vmatprep.subr.bf16.mxu0 0
    %4125 = vmatpush1.bf16.msra.mxu0 0
    %4126 = vmatprep.subr.bf16.mxu0 0
    %4127 = vmatpush1.bf16.msra.mxu0 0
    %4128 = vmatprep.subr.bf16.mxu0 0
    %4129 = vmatpush1.bf16.msra.mxu0 0
    %4130 = vmatprep.subr.bf16.mxu0 0
    %4131 = vmatpush1.bf16.msra.mxu0 0
    %4132 = vmatprep.subr.bf16.mxu0 0
    %4133 = vmatpush1.bf16.msra.mxu0 0
    %4134 = vmatprep.subr.bf16.mxu0 0
    %4135 = vmatpush1.bf16.msra.mxu0 0
    %4136 = vmatprep.subr.bf16.mxu0 0
    %4137 = vmatpush1.bf16.msra.mxu0 0
    %4138 = vmatprep.subr.bf16.mxu0 0
    %4139 = vmatpush1.bf16.msra.mxu0 0
    %4140 = vmatprep.mubr.bf16.mxu0 0
    %4141 = vmatmul.mubr.bf16.gmra.mrb[0].mxu0 %v4085
    %v4142 = vpop.f32.mrb[0].mxu0
    %v4143 = vadd.f32 0.0, %v4142
    %v4144 = vpop.f32.mrb[0].mxu0
    %v4145 = vpop.f32.mrb[0].mxu0
    %v4146 = vadd.f32 0.0, %v4145
    %v4147 = vpop.f32.mrb[0].mxu0
    %4148 = vmatprep.mubr.bf16.mxu0 0
    %4149 = vmatmul.mubr.bf16.gmra.mrb[0].mxu0 %v4088
    %v4150 = vpop.f32.mrb[0].mxu0
    %v4151 = vadd.f32 0.0, %v4150
    %v4152 = vpop.f32.mrb[0].mxu0
    %v4153 = vpop.f32.mrb[0].mxu0
    %v4154 = vadd.f32 0.0, %v4153
    %v4155 = vpop.f32.mrb[0].mxu0
    %4156 = vmatprep.mubr.bf16.mxu0 0
    %4157 = vmatmul.mubr.bf16.gmra.mrb[0].mxu0 %v4091
    %v4158 = vpop.f32.mrb[0].mxu0
    %v4159 = vadd.f32 0.0, %v4158
    %v4160 = vpop.f32.mrb[0].mxu0
    %v4161 = vpop.f32.mrb[0].mxu0
    %v4162 = vadd.f32 0.0, %v4161
    %v4163 = vpop.f32.mrb[0].mxu0
    %4164 = vmatprep.mubr.bf16.mxu0 0
    %4165 = vmatmul.mubr.bf16.gmra.mrb[0].mxu0 %v4094
    %v4166 = vpop.f32.mrb[0].mxu0
    %v4167 = vadd.f32 0.0, %v4166
    %v4168 = vpop.f32.mrb[0].mxu0
    %v4169 = vpop.f32.mrb[0].mxu0
    %v4170 = vadd.f32 0.0, %v4169
    %v4171 = vpop.f32.mrb[0].mxu0
    %4172 = vmatprep.mubr.bf16.mxu0 0
    %4173 = vmatmul.mubr.bf16.gmra.mrb[0].mxu0 %v4097
    %v4174 = vpop.f32.mrb[0].mxu0
    %v4175 = vadd.f32 0.0, %v4174
    %v4176 = vpop.f32.mrb[0].mxu0
    %v4177 = vpop.f32.mrb[0].mxu0
    %v4178 = vadd.f32 0.0, %v4177
    %v4179 = vpop.f32.mrb[0].mxu0
    %4180 = vmatprep.mubr.bf16.mxu0 0
    %4181 = vmatmul.mubr.bf16.gmra.mrb[0].mxu0 %v4100
    %v4182 = vpop.f32.mrb[0].mxu0
    %v4183 = vadd.f32 0.0, %v4182
    %v4184 = vpop.f32.mrb[0].mxu0
    %v4185 = vpop.f32.mrb[0].mxu0
    %v4186 = vadd.f32 0.0, %v4185
    %v4187 = vpop.f32.mrb[0].mxu0
    %4188 = vmatprep.mubr.bf16.mxu0 0
    %4189 = vmatmul.mubr.bf16.gmra.mrb[0].mxu0 %v4103
    %v4190 = vpop.f32.mrb[0].mxu0
    %v4191 = vadd.f32 0.0, %v4190
    %v4192 = vpop.f32.mrb[0].mxu0
    %v4193 = vpop.f32.mrb[0].mxu0
    %v4194 = vadd.f32 0.0, %v4193
    %v4195 = vpop.f32.mrb[0].mxu0
    %4196 = vmatprep.mubr.bf16.mxu0 0
    %4197 = vmatmul.mubr.bf16.gmra.mrb[0].mxu0 %v4106
    %v4198 = vpop.f32.mrb[0].mxu0
    %v4199 = vadd.f32 0.0, %v4198
    %v4200 = vpop.f32.mrb[0].mxu0
    %v4201 = vpop.f32.mrb[0].mxu0
    %v4202 = vadd.f32 0.0, %v4201
    %v4203 = vpop.f32.mrb[0].mxu0
    %4204 = vdwg.mxu0
    %v4205 = vadd.f32 %v3900, %v4143
    %v4206 = vadd.f32 %v3903, %v4146
    %v4207 = vadd.f32 %v3908, %v4151
    %v4208 = vadd.f32 %v3911, %v4154
    %v4209 = vadd.f32 %v3916, %v4159
    %v4210 = vadd.f32 %v3919, %v4162
    %v4211 = vadd.f32 %v3924, %v4167
    %v4212 = vadd.f32 %v3927, %v4170
    %v4213 = vadd.f32 %v3932, %v4175
    %v4214 = vadd.f32 %v3935, %v4178
    %v4215 = vadd.f32 %v3940, %v4183
    %v4216 = vadd.f32 %v3943, %v4186
    %v4217 = vadd.f32 %v3948, %v4191
    %v4218 = vadd.f32 %v3951, %v4194
    %v4219 = vadd.f32 %v3956, %v4199
    %v4220 = vadd.f32 %v3959, %v4202
    %s4221 = scalar_lea.vmem %s3, 64
    %v4222 = vld [vmem:[%s4221] sm:$0xf]
    %v4223 = vld [vmem:[%s4221 + $0x4] sm:$0xf]
    %v4224 = vld [vmem:[%s4221 + $0x8] sm:$0xf]
    %v4225 = vld [vmem:[%s4221 + $0xc] sm:$0xf]
    %v4226 = vld [vmem:[%s4221 + $0x10] sm:$0xf]
    %v4227 = vld [vmem:[%s4221 + $0x14] sm:$0xf]
    %v4228 = vld [vmem:[%s4221 + $0x18] sm:$0xf]
    %v4229 = vld [vmem:[%s4221 + $0x1c] sm:$0xf]
    %v4230 = vld [vmem:[%s4221 + $0x20] sm:$0xf]
    %v4231 = vld [vmem:[%s4221 + $0x24] sm:$0xf]
    %v4232 = vld [vmem:[%s4221 + $0x28] sm:$0xf]
    %v4233 = vld [vmem:[%s4221 + $0x2c] sm:$0xf]
    %v4234 = vld [vmem:[%s4221 + $0x30] sm:$0xf]
    %v4235 = vld [vmem:[%s4221 + $0x34] sm:$0xf]
    %v4236 = vld [vmem:[%s4221 + $0x38] sm:$0xf]
    %v4237 = vld [vmem:[%s4221 + $0x3c] sm:$0xf]
    %v4254 = vunpack.c.l.b16 %v4222
    %v4255 = vunpack.c.l.b16 %v4223
    %v4256 = vunpack.c.l.b16 %v4224
    %v4257 = vunpack.c.l.b16 %v4225
    %v4258 = vunpack.c.l.b16 %v4226
    %v4259 = vunpack.c.l.b16 %v4227
    %v4260 = vunpack.c.l.b16 %v4228
    %v4261 = vunpack.c.l.b16 %v4229
    %v4262 = vunpack.c.l.b16 %v4230
    %v4263 = vunpack.c.l.b16 %v4231
    %v4264 = vunpack.c.l.b16 %v4232
    %v4265 = vunpack.c.l.b16 %v4233
    %v4266 = vunpack.c.l.b16 %v4234
    %v4267 = vunpack.c.l.b16 %v4235
    %v4268 = vunpack.c.l.b16 %v4236
    %v4269 = vunpack.c.l.b16 %v4237
    %v4270 = vpack.c.b16 %v4255, %v4254
    %v4271 = vpack.c.b16 %v4257, %v4256
    %v4272 = vpack.c.b16 %v4259, %v4258
    %v4273 = vpack.c.b16 %v4261, %v4260
    %v4274 = vpack.c.b16 %v4263, %v4262
    %v4275 = vpack.c.b16 %v4265, %v4264
    %v4276 = vpack.c.b16 %v4267, %v4266
    %v4277 = vpack.c.b16 %v4269, %v4268
    %4286 = vmatprep.subr.bf16.mxu0 0
    %4287 = vmatpush1.bf16.msra.mxu0 %v156
    %4288 = vmatprep.subr.bf16.mxu0 0
    %4289 = vmatpush1.bf16.msra.mxu0 %v157
    %4290 = vmatprep.subr.bf16.mxu0 0
    %4291 = vmatpush1.bf16.msra.mxu0 %v158
    %4292 = vmatprep.subr.bf16.mxu0 0
    %4293 = vmatpush1.bf16.msra.mxu0 %v159
    %4294 = vmatprep.subr.bf16.mxu0 0
    %4295 = vmatpush1.bf16.msra.mxu0 %v160
    %4296 = vmatprep.subr.bf16.mxu0 0
    %4297 = vmatpush1.bf16.msra.mxu0 %v161
    %4298 = vmatprep.subr.bf16.mxu0 0
    %4299 = vmatpush1.bf16.msra.mxu0 %v162
    %4300 = vmatprep.subr.bf16.mxu0 0
    %4301 = vmatpush1.bf16.msra.mxu0 %v163
    %4302 = vmatprep.subr.bf16.mxu0 0
    %4303 = vmatpush1.bf16.msra.mxu0 0
    %4304 = vmatprep.subr.bf16.mxu0 0
    %4305 = vmatpush1.bf16.msra.mxu0 0
    %4306 = vmatprep.subr.bf16.mxu0 0
    %4307 = vmatpush1.bf16.msra.mxu0 0
    %4308 = vmatprep.subr.bf16.mxu0 0
    %4309 = vmatpush1.bf16.msra.mxu0 0
    %4310 = vmatprep.subr.bf16.mxu0 0
    %4311 = vmatpush1.bf16.msra.mxu0 0
    %4312 = vmatprep.subr.bf16.mxu0 0
    %4313 = vmatpush1.bf16.msra.mxu0 0
    %4314 = vmatprep.subr.bf16.mxu0 0
    %4315 = vmatpush1.bf16.msra.mxu0 0
    %4316 = vmatprep.subr.bf16.mxu0 0
    %4317 = vmatpush1.bf16.msra.mxu0 0
    %4318 = vmatprep.mubr.bf16.mxu0 0
    %4319 = vmatmul.mubr.bf16.gmra.mrb[0].mxu0 %v4270
    %v4320 = vpop.f32.mrb[0].mxu0
    %v4321 = vadd.f32 0.0, %v4320
    %v4322 = vpop.f32.mrb[0].mxu0
    %v4323 = vpop.f32.mrb[0].mxu0
    %v4324 = vadd.f32 0.0, %v4323
    %v4325 = vpop.f32.mrb[0].mxu0
    %4326 = vmatprep.mubr.bf16.mxu0 0
    %4327 = vmatmul.mubr.bf16.gmra.mrb[0].mxu0 %v4271
    %v4328 = vpop.f32.mrb[0].mxu0
    %v4329 = vadd.f32 0.0, %v4328
    %v4330 = vpop.f32.mrb[0].mxu0
    %v4331 = vpop.f32.mrb[0].mxu0
    %v4332 = vadd.f32 0.0, %v4331
    %v4333 = vpop.f32.mrb[0].mxu0
    %4334 = vmatprep.mubr.bf16.mxu0 0
    %4335 = vmatmul.mubr.bf16.gmra.mrb[0].mxu0 %v4272
    %v4336 = vpop.f32.mrb[0].mxu0
    %v4337 = vadd.f32 0.0, %v4336
    %v4338 = vpop.f32.mrb[0].mxu0
    %v4339 = vpop.f32.mrb[0].mxu0
    %v4340 = vadd.f32 0.0, %v4339
    %v4341 = vpop.f32.mrb[0].mxu0
    %4342 = vmatprep.mubr.bf16.mxu0 0
    %4343 = vmatmul.mubr.bf16.gmra.mrb[0].mxu0 %v4273
    %v4344 = vpop.f32.mrb[0].mxu0
    %v4345 = vadd.f32 0.0, %v4344
    %v4346 = vpop.f32.mrb[0].mxu0
    %v4347 = vpop.f32.mrb[0].mxu0
    %v4348 = vadd.f32 0.0, %v4347
    %v4349 = vpop.f32.mrb[0].mxu0
    %4350 = vmatprep.mubr.bf16.mxu0 0
    %4351 = vmatmul.mubr.bf16.gmra.mrb[0].mxu0 %v4274
    %v4352 = vpop.f32.mrb[0].mxu0
    %v4353 = vadd.f32 0.0, %v4352
    %v4354 = vpop.f32.mrb[0].mxu0
    %v4355 = vpop.f32.mrb[0].mxu0
    %v4356 = vadd.f32 0.0, %v4355
    %v4357 = vpop.f32.mrb[0].mxu0
    %4358 = vmatprep.mubr.bf16.mxu0 0
    %4359 = vmatmul.mubr.bf16.gmra.mrb[0].mxu0 %v4275
    %v4360 = vpop.f32.mrb[0].mxu0
    %v4361 = vadd.f32 0.0, %v4360
    %v4362 = vpop.f32.mrb[0].mxu0
    %v4363 = vpop.f32.mrb[0].mxu0
    %v4364 = vadd.f32 0.0, %v4363
    %v4365 = vpop.f32.mrb[0].mxu0
    %4366 = vmatprep.mubr.bf16.mxu0 0
    %4367 = vmatmul.mubr.bf16.gmra.mrb[0].mxu0 %v4276
    %v4368 = vpop.f32.mrb[0].mxu0
    %v4369 = vadd.f32 0.0, %v4368
    %v4370 = vpop.f32.mrb[0].mxu0
    %v4371 = vpop.f32.mrb[0].mxu0
    %v4372 = vadd.f32 0.0, %v4371
    %v4373 = vpop.f32.mrb[0].mxu0
    %4374 = vmatprep.mubr.bf16.mxu0 0
    %4375 = vmatmul.mubr.bf16.gmra.mrb[0].mxu0 %v4277
    %v4376 = vpop.f32.mrb[0].mxu0
    %v4377 = vadd.f32 0.0, %v4376
    %v4378 = vpop.f32.mrb[0].mxu0
    %v4379 = vpop.f32.mrb[0].mxu0
    %v4380 = vadd.f32 0.0, %v4379
    %v4381 = vpop.f32.mrb[0].mxu0
    %4382 = vdwg.mxu0
    %v4383 = vpack.c.bf16 %v4324, %v4321
    %v4384 = vpack.c.bf16 %v4332, %v4329
    %v4385 = vpack.c.bf16 %v4340, %v4337
    %v4386 = vpack.c.bf16 %v4348, %v4345
    %v4387 = vpack.c.bf16 %v4356, %v4353
    %v4388 = vpack.c.bf16 %v4364, %v4361
    %v4389 = vpack.c.bf16 %v4372, %v4369
    %v4390 = vpack.c.bf16 %v4380, %v4377
    %s4391 = scalar_lea.vmem %s13, 48
    %v4392 = vld [vmem:[%s4391] sm:$0xf]
    %v4393 = vld [vmem:[%s4391 + $0x4] sm:$0xf]
    %v4394 = vld [vmem:[%s4391 + $0x8] sm:$0xf]
    %v4395 = vld [vmem:[%s4391 + $0xc] sm:$0xf]
    %v4400 = vunpack.c.l.b16 %v4392
    %v4401 = vunpack.c.l.b16 %v4393
    %v4402 = vunpack.c.l.b16 %v4394
    %v4403 = vunpack.c.l.b16 %v4395
    %v4404 = vpack.c.b16 %v4401, %v4400
    %v4405 = vpack.c.b16 %v4403, %v4402
    %v4409 = vsel %vm180, %v4383, 0
    %v4412 = vsel %vm180, %v4384, 0
    %v4415 = vsel %vm180, %v4385, 0
    %v4418 = vsel %vm180, %v4386, 0
    %v4421 = vsel %vm180, %v4387, 0
    %v4424 = vsel %vm180, %v4388, 0
    %v4427 = vsel %vm180, %v4389, 0
    %v4430 = vsel %vm180, %v4390, 0
    %4432 = vmatprep.subr.bf16.mxu0 0
    %4433 = vmatpush1.bf16.msra.mxu0 %v4404
    %4434 = vmatprep.subr.bf16.mxu0 0
    %4435 = vmatpush1.bf16.msra.mxu0 %v4405
    %4436 = vmatprep.subr.bf16.mxu0 0
    %4437 = vmatpush1.bf16.msra.mxu0 0
    %4438 = vmatprep.subr.bf16.mxu0 0
    %4439 = vmatpush1.bf16.msra.mxu0 0
    %4440 = vmatprep.subr.bf16.mxu0 0
    %4441 = vmatpush1.bf16.msra.mxu0 0
    %4442 = vmatprep.subr.bf16.mxu0 0
    %4443 = vmatpush1.bf16.msra.mxu0 0
    %4444 = vmatprep.subr.bf16.mxu0 0
    %4445 = vmatpush1.bf16.msra.mxu0 0
    %4446 = vmatprep.subr.bf16.mxu0 0
    %4447 = vmatpush1.bf16.msra.mxu0 0
    %4448 = vmatprep.subr.bf16.mxu0 0
    %4449 = vmatpush1.bf16.msra.mxu0 0
    %4450 = vmatprep.subr.bf16.mxu0 0
    %4451 = vmatpush1.bf16.msra.mxu0 0
    %4452 = vmatprep.subr.bf16.mxu0 0
    %4453 = vmatpush1.bf16.msra.mxu0 0
    %4454 = vmatprep.subr.bf16.mxu0 0
    %4455 = vmatpush1.bf16.msra.mxu0 0
    %4456 = vmatprep.subr.bf16.mxu0 0
    %4457 = vmatpush1.bf16.msra.mxu0 0
    %4458 = vmatprep.subr.bf16.mxu0 0
    %4459 = vmatpush1.bf16.msra.mxu0 0
    %4460 = vmatprep.subr.bf16.mxu0 0
    %4461 = vmatpush1.bf16.msra.mxu0 0
    %4462 = vmatprep.subr.bf16.mxu0 0
    %4463 = vmatpush1.bf16.msra.mxu0 0
    %4464 = vmatprep.mubr.bf16.mxu0 0
    %4465 = vmatmul.mubr.bf16.gmra.mrb[0].mxu0 %v4409
    %v4466 = vpop.f32.mrb[0].mxu0
    %v4467 = vadd.f32 0.0, %v4466
    %v4468 = vpop.f32.mrb[0].mxu0
    %v4469 = vpop.f32.mrb[0].mxu0
    %v4470 = vadd.f32 0.0, %v4469
    %v4471 = vpop.f32.mrb[0].mxu0
    %4472 = vmatprep.mubr.bf16.mxu0 0
    %4473 = vmatmul.mubr.bf16.gmra.mrb[0].mxu0 %v4412
    %v4474 = vpop.f32.mrb[0].mxu0
    %v4475 = vadd.f32 0.0, %v4474
    %v4476 = vpop.f32.mrb[0].mxu0
    %v4477 = vpop.f32.mrb[0].mxu0
    %v4478 = vadd.f32 0.0, %v4477
    %v4479 = vpop.f32.mrb[0].mxu0
    %4480 = vmatprep.mubr.bf16.mxu0 0
    %4481 = vmatmul.mubr.bf16.gmra.mrb[0].mxu0 %v4415
    %v4482 = vpop.f32.mrb[0].mxu0
    %v4483 = vadd.f32 0.0, %v4482
    %v4484 = vpop.f32.mrb[0].mxu0
    %v4485 = vpop.f32.mrb[0].mxu0
    %v4486 = vadd.f32 0.0, %v4485
    %v4487 = vpop.f32.mrb[0].mxu0
    %4488 = vmatprep.mubr.bf16.mxu0 0
    %4489 = vmatmul.mubr.bf16.gmra.mrb[0].mxu0 %v4418
    %v4490 = vpop.f32.mrb[0].mxu0
    %v4491 = vadd.f32 0.0, %v4490
    %v4492 = vpop.f32.mrb[0].mxu0
    %v4493 = vpop.f32.mrb[0].mxu0
    %v4494 = vadd.f32 0.0, %v4493
    %v4495 = vpop.f32.mrb[0].mxu0
    %4496 = vmatprep.mubr.bf16.mxu0 0
    %4497 = vmatmul.mubr.bf16.gmra.mrb[0].mxu0 %v4421
    %v4498 = vpop.f32.mrb[0].mxu0
    %v4499 = vadd.f32 0.0, %v4498
    %v4500 = vpop.f32.mrb[0].mxu0
    %v4501 = vpop.f32.mrb[0].mxu0
    %v4502 = vadd.f32 0.0, %v4501
    %v4503 = vpop.f32.mrb[0].mxu0
    %4504 = vmatprep.mubr.bf16.mxu0 0
    %4505 = vmatmul.mubr.bf16.gmra.mrb[0].mxu0 %v4424
    %v4506 = vpop.f32.mrb[0].mxu0
    %v4507 = vadd.f32 0.0, %v4506
    %v4508 = vpop.f32.mrb[0].mxu0
    %v4509 = vpop.f32.mrb[0].mxu0
    %v4510 = vadd.f32 0.0, %v4509
    %v4511 = vpop.f32.mrb[0].mxu0
    %4512 = vmatprep.mubr.bf16.mxu0 0
    %4513 = vmatmul.mubr.bf16.gmra.mrb[0].mxu0 %v4427
    %v4514 = vpop.f32.mrb[0].mxu0
    %v4515 = vadd.f32 0.0, %v4514
    %v4516 = vpop.f32.mrb[0].mxu0
    %v4517 = vpop.f32.mrb[0].mxu0
    %v4518 = vadd.f32 0.0, %v4517
    %v4519 = vpop.f32.mrb[0].mxu0
    %4520 = vmatprep.mubr.bf16.mxu0 0
    %4521 = vmatmul.mubr.bf16.gmra.mrb[0].mxu0 %v4430
    %v4522 = vpop.f32.mrb[0].mxu0
    %v4523 = vadd.f32 0.0, %v4522
    %v4524 = vpop.f32.mrb[0].mxu0
    %v4525 = vpop.f32.mrb[0].mxu0
    %v4526 = vadd.f32 0.0, %v4525
    %v4527 = vpop.f32.mrb[0].mxu0
    %4528 = vdwg.mxu0
    %v4529 = vadd.f32 %v4205, %v4467
    %v4530 = vadd.f32 %v4206, %v4470
    %v4531 = vadd.f32 %v4207, %v4475
    %v4532 = vadd.f32 %v4208, %v4478
    %v4533 = vadd.f32 %v4209, %v4483
    %v4534 = vadd.f32 %v4210, %v4486
    %v4535 = vadd.f32 %v4211, %v4491
    %v4536 = vadd.f32 %v4212, %v4494
    %v4537 = vadd.f32 %v4213, %v4499
    %v4538 = vadd.f32 %v4214, %v4502
    %v4539 = vadd.f32 %v4215, %v4507
    %v4540 = vadd.f32 %v4216, %v4510
    %v4541 = vadd.f32 %v4217, %v4515
    %v4542 = vadd.f32 %v4218, %v4518
    %v4543 = vadd.f32 %v4219, %v4523
    %v4544 = vadd.f32 %v4220, %v4526
    %4545 = vmatprep.subr.bf16.mxu0 0
    %4546 = vmatpush1.bf16.msra.mxu0 %v4383
    %4547 = vmatprep.subr.bf16.mxu0 0
    %4548 = vmatpush1.bf16.msra.mxu0 %v4384
    %4549 = vmatprep.subr.bf16.mxu0 0
    %4550 = vmatpush1.bf16.msra.mxu0 %v4385
    %4551 = vmatprep.subr.bf16.mxu0 0
    %4552 = vmatpush1.bf16.msra.mxu0 %v4386
    %4553 = vmatprep.subr.bf16.mxu0 0
    %4554 = vmatpush1.bf16.msra.mxu0 %v4387
    %4555 = vmatprep.subr.bf16.mxu0 0
    %4556 = vmatpush1.bf16.msra.mxu0 %v4388
    %4557 = vmatprep.subr.bf16.mxu0 0
    %4558 = vmatpush1.bf16.msra.mxu0 %v4389
    %4559 = vmatprep.subr.bf16.mxu0 0
    %4560 = vmatpush1.bf16.msra.mxu0 %v4390
    %4561 = vmatprep.subr.bf16.mxu0 0
    %4562 = vmatpush1.bf16.msra.mxu0 0
    %4563 = vmatprep.subr.bf16.mxu0 0
    %4564 = vmatpush1.bf16.msra.mxu0 0
    %4565 = vmatprep.subr.bf16.mxu0 0
    %4566 = vmatpush1.bf16.msra.mxu0 0
    %4567 = vmatprep.subr.bf16.mxu0 0
    %4568 = vmatpush1.bf16.msra.mxu0 0
    %4569 = vmatprep.subr.bf16.mxu0 0
    %4570 = vmatpush1.bf16.msra.mxu0 0
    %4571 = vmatprep.subr.bf16.mxu0 0
    %4572 = vmatpush1.bf16.msra.mxu0 0
    %4573 = vmatprep.subr.bf16.mxu0 0
    %4574 = vmatpush1.bf16.msra.mxu0 0
    %4575 = vmatprep.subr.bf16.mxu0 0
    %4576 = vmatpush1.bf16.msra.mxu0 0
    %4577 = vmatprep.mubr.bf16.mxu0 0
    %4578 = vmatmul.mubr.bf16.gmra.mrb[0].mxu0 %v4270
    %v4579 = vpop.f32.mrb[0].mxu0
    %v4580 = vadd.f32 0.0, %v4579
    %v4581 = vpop.f32.mrb[0].mxu0
    %v4582 = vpop.f32.mrb[0].mxu0
    %v4583 = vadd.f32 0.0, %v4582
    %v4584 = vpop.f32.mrb[0].mxu0
    %4585 = vmatprep.mubr.bf16.mxu0 0
    %4586 = vmatmul.mubr.bf16.gmra.mrb[0].mxu0 %v4271
    %v4587 = vpop.f32.mrb[0].mxu0
    %v4588 = vadd.f32 0.0, %v4587
    %v4589 = vpop.f32.mrb[0].mxu0
    %v4590 = vpop.f32.mrb[0].mxu0
    %v4591 = vadd.f32 0.0, %v4590
    %v4592 = vpop.f32.mrb[0].mxu0
    %4593 = vmatprep.mubr.bf16.mxu0 0
    %4594 = vmatmul.mubr.bf16.gmra.mrb[0].mxu0 %v4272
    %v4595 = vpop.f32.mrb[0].mxu0
    %v4596 = vadd.f32 0.0, %v4595
    %v4597 = vpop.f32.mrb[0].mxu0
    %v4598 = vpop.f32.mrb[0].mxu0
    %v4599 = vadd.f32 0.0, %v4598
    %v4600 = vpop.f32.mrb[0].mxu0
    %4601 = vmatprep.mubr.bf16.mxu0 0
    %4602 = vmatmul.mubr.bf16.gmra.mrb[0].mxu0 %v4273
    %v4603 = vpop.f32.mrb[0].mxu0
    %v4604 = vadd.f32 0.0, %v4603
    %v4605 = vpop.f32.mrb[0].mxu0
    %v4606 = vpop.f32.mrb[0].mxu0
    %v4607 = vadd.f32 0.0, %v4606
    %v4608 = vpop.f32.mrb[0].mxu0
    %4609 = vmatprep.mubr.bf16.mxu0 0
    %4610 = vmatmul.mubr.bf16.gmra.mrb[0].mxu0 %v4274
    %v4611 = vpop.f32.mrb[0].mxu0
    %v4612 = vadd.f32 0.0, %v4611
    %v4613 = vpop.f32.mrb[0].mxu0
    %v4614 = vpop.f32.mrb[0].mxu0
    %v4615 = vadd.f32 0.0, %v4614
    %v4616 = vpop.f32.mrb[0].mxu0
    %4617 = vmatprep.mubr.bf16.mxu0 0
    %4618 = vmatmul.mubr.bf16.gmra.mrb[0].mxu0 %v4275
    %v4619 = vpop.f32.mrb[0].mxu0
    %v4620 = vadd.f32 0.0, %v4619
    %v4621 = vpop.f32.mrb[0].mxu0
    %v4622 = vpop.f32.mrb[0].mxu0
    %v4623 = vadd.f32 0.0, %v4622
    %v4624 = vpop.f32.mrb[0].mxu0
    %4625 = vmatprep.mubr.bf16.mxu0 0
    %4626 = vmatmul.mubr.bf16.gmra.mrb[0].mxu0 %v4276
    %v4627 = vpop.f32.mrb[0].mxu0
    %v4628 = vadd.f32 0.0, %v4627
    %v4629 = vpop.f32.mrb[0].mxu0
    %v4630 = vpop.f32.mrb[0].mxu0
    %v4631 = vadd.f32 0.0, %v4630
    %v4632 = vpop.f32.mrb[0].mxu0
    %4633 = vmatprep.mubr.bf16.mxu0 0
    %4634 = vmatmul.mubr.bf16.gmra.mrb[0].mxu0 %v4277
    %v4635 = vpop.f32.mrb[0].mxu0
    %v4636 = vadd.f32 0.0, %v4635
    %v4637 = vpop.f32.mrb[0].mxu0
    %v4638 = vpop.f32.mrb[0].mxu0
    %v4639 = vadd.f32 0.0, %v4638
    %v4640 = vpop.f32.mrb[0].mxu0
    %4641 = vdwg.mxu0
    %v4642 = vpack.c.bf16 %v4583, %v4580
    %v4643 = vpack.c.bf16 %v4591, %v4588
    %v4644 = vpack.c.bf16 %v4599, %v4596
    %v4645 = vpack.c.bf16 %v4607, %v4604
    %v4646 = vpack.c.bf16 %v4615, %v4612
    %v4647 = vpack.c.bf16 %v4623, %v4620
    %v4648 = vpack.c.bf16 %v4631, %v4628
    %v4649 = vpack.c.bf16 %v4639, %v4636
    %s4650 = scalar_lea.vmem %s13, 64
    %v4651 = vld [vmem:[%s4650] sm:$0xf]
    %v4652 = vld [vmem:[%s4650 + $0x4] sm:$0xf]
    %v4653 = vld [vmem:[%s4650 + $0x8] sm:$0xf]
    %v4654 = vld [vmem:[%s4650 + $0xc] sm:$0xf]
    %v4659 = vunpack.c.l.b16 %v4651
    %v4660 = vunpack.c.l.b16 %v4652
    %v4661 = vunpack.c.l.b16 %v4653
    %v4662 = vunpack.c.l.b16 %v4654
    %v4663 = vpack.c.b16 %v4660, %v4659
    %v4664 = vpack.c.b16 %v4662, %v4661
    %v4668 = vsel %vm180, %v4642, 0
    %v4671 = vsel %vm180, %v4643, 0
    %v4674 = vsel %vm180, %v4644, 0
    %v4677 = vsel %vm180, %v4645, 0
    %v4680 = vsel %vm180, %v4646, 0
    %v4683 = vsel %vm180, %v4647, 0
    %v4686 = vsel %vm180, %v4648, 0
    %v4689 = vsel %vm180, %v4649, 0
    %4691 = vmatprep.subr.bf16.mxu0 0
    %4692 = vmatpush1.bf16.msra.mxu0 %v4663
    %4693 = vmatprep.subr.bf16.mxu0 0
    %4694 = vmatpush1.bf16.msra.mxu0 %v4664
    %4695 = vmatprep.subr.bf16.mxu0 0
    %4696 = vmatpush1.bf16.msra.mxu0 0
    %4697 = vmatprep.subr.bf16.mxu0 0
    %4698 = vmatpush1.bf16.msra.mxu0 0
    %4699 = vmatprep.subr.bf16.mxu0 0
    %4700 = vmatpush1.bf16.msra.mxu0 0
    %4701 = vmatprep.subr.bf16.mxu0 0
    %4702 = vmatpush1.bf16.msra.mxu0 0
    %4703 = vmatprep.subr.bf16.mxu0 0
    %4704 = vmatpush1.bf16.msra.mxu0 0
    %4705 = vmatprep.subr.bf16.mxu0 0
    %4706 = vmatpush1.bf16.msra.mxu0 0
    %4707 = vmatprep.subr.bf16.mxu0 0
    %4708 = vmatpush1.bf16.msra.mxu0 0
    %4709 = vmatprep.subr.bf16.mxu0 0
    %4710 = vmatpush1.bf16.msra.mxu0 0
    %4711 = vmatprep.subr.bf16.mxu0 0
    %4712 = vmatpush1.bf16.msra.mxu0 0
    %4713 = vmatprep.subr.bf16.mxu0 0
    %4714 = vmatpush1.bf16.msra.mxu0 0
    %4715 = vmatprep.subr.bf16.mxu0 0
    %4716 = vmatpush1.bf16.msra.mxu0 0
    %4717 = vmatprep.subr.bf16.mxu0 0
    %4718 = vmatpush1.bf16.msra.mxu0 0
    %4719 = vmatprep.subr.bf16.mxu0 0
    %4720 = vmatpush1.bf16.msra.mxu0 0
    %4721 = vmatprep.subr.bf16.mxu0 0
    %4722 = vmatpush1.bf16.msra.mxu0 0
    %4723 = vmatprep.mubr.bf16.mxu0 0
    %4724 = vmatmul.mubr.bf16.gmra.mrb[0].mxu0 %v4668
    %v4725 = vpop.f32.mrb[0].mxu0
    %v4726 = vadd.f32 0.0, %v4725
    %v4727 = vpop.f32.mrb[0].mxu0
    %v4728 = vpop.f32.mrb[0].mxu0
    %v4729 = vadd.f32 0.0, %v4728
    %v4730 = vpop.f32.mrb[0].mxu0
    %4731 = vmatprep.mubr.bf16.mxu0 0
    %4732 = vmatmul.mubr.bf16.gmra.mrb[0].mxu0 %v4671
    %v4733 = vpop.f32.mrb[0].mxu0
    %v4734 = vadd.f32 0.0, %v4733
    %v4735 = vpop.f32.mrb[0].mxu0
    %v4736 = vpop.f32.mrb[0].mxu0
    %v4737 = vadd.f32 0.0, %v4736
    %v4738 = vpop.f32.mrb[0].mxu0
    %4739 = vmatprep.mubr.bf16.mxu0 0
    %4740 = vmatmul.mubr.bf16.gmra.mrb[0].mxu0 %v4674
    %v4741 = vpop.f32.mrb[0].mxu0
    %v4742 = vadd.f32 0.0, %v4741
    %v4743 = vpop.f32.mrb[0].mxu0
    %v4744 = vpop.f32.mrb[0].mxu0
    %v4745 = vadd.f32 0.0, %v4744
    %v4746 = vpop.f32.mrb[0].mxu0
    %4747 = vmatprep.mubr.bf16.mxu0 0
    %4748 = vmatmul.mubr.bf16.gmra.mrb[0].mxu0 %v4677
    %v4749 = vpop.f32.mrb[0].mxu0
    %v4750 = vadd.f32 0.0, %v4749
    %v4751 = vpop.f32.mrb[0].mxu0
    %v4752 = vpop.f32.mrb[0].mxu0
    %v4753 = vadd.f32 0.0, %v4752
    %v4754 = vpop.f32.mrb[0].mxu0
    %4755 = vmatprep.mubr.bf16.mxu0 0
    %4756 = vmatmul.mubr.bf16.gmra.mrb[0].mxu0 %v4680
    %v4757 = vpop.f32.mrb[0].mxu0
    %v4758 = vadd.f32 0.0, %v4757
    %v4759 = vpop.f32.mrb[0].mxu0
    %v4760 = vpop.f32.mrb[0].mxu0
    %v4761 = vadd.f32 0.0, %v4760
    %v4762 = vpop.f32.mrb[0].mxu0
    %4763 = vmatprep.mubr.bf16.mxu0 0
    %4764 = vmatmul.mubr.bf16.gmra.mrb[0].mxu0 %v4683
    %v4765 = vpop.f32.mrb[0].mxu0
    %v4766 = vadd.f32 0.0, %v4765
    %v4767 = vpop.f32.mrb[0].mxu0
    %v4768 = vpop.f32.mrb[0].mxu0
    %v4769 = vadd.f32 0.0, %v4768
    %v4770 = vpop.f32.mrb[0].mxu0
    %4771 = vmatprep.mubr.bf16.mxu0 0
    %4772 = vmatmul.mubr.bf16.gmra.mrb[0].mxu0 %v4686
    %v4773 = vpop.f32.mrb[0].mxu0
    %v4774 = vadd.f32 0.0, %v4773
    %v4775 = vpop.f32.mrb[0].mxu0
    %v4776 = vpop.f32.mrb[0].mxu0
    %v4777 = vadd.f32 0.0, %v4776
    %v4778 = vpop.f32.mrb[0].mxu0
    %4779 = vmatprep.mubr.bf16.mxu0 0
    %4780 = vmatmul.mubr.bf16.gmra.mrb[0].mxu0 %v4689
    %v4781 = vpop.f32.mrb[0].mxu0
    %v4782 = vadd.f32 0.0, %v4781
    %v4783 = vpop.f32.mrb[0].mxu0
    %v4784 = vpop.f32.mrb[0].mxu0
    %v4785 = vadd.f32 0.0, %v4784
    %v4786 = vpop.f32.mrb[0].mxu0
    %4787 = vdwg.mxu0
    %v4788 = vadd.f32 %v4529, %v4726
    %v4789 = vadd.f32 %v4530, %v4729
    %v4790 = vadd.f32 %v4531, %v4734
    %v4791 = vadd.f32 %v4532, %v4737
    %v4792 = vadd.f32 %v4533, %v4742
    %v4793 = vadd.f32 %v4534, %v4745
    %v4794 = vadd.f32 %v4535, %v4750
    %v4795 = vadd.f32 %v4536, %v4753
    %v4796 = vadd.f32 %v4537, %v4758
    %v4797 = vadd.f32 %v4538, %v4761
    %v4798 = vadd.f32 %v4539, %v4766
    %v4799 = vadd.f32 %v4540, %v4769
    %v4800 = vadd.f32 %v4541, %v4774
    %v4801 = vadd.f32 %v4542, %v4777
    %v4802 = vadd.f32 %v4543, %v4782
    %v4803 = vadd.f32 %v4544, %v4785
    %v4804 = vld [vmem:[%s14] sm:$0x1]
    %v4806 = vlaneseq
    %v4807 = vshrl.u32 %v4806, 7
    %v4808 = vsub.s32 0, %v4807
    %v4809 = vrot.slane %v4804, %v4808
    %v4811 = vadd.f32 %v4788, %v4809
    %v4812 = vadd.f32 %v4789, %v4809
    %v4813 = vadd.f32 %v4790, %v4809
    %v4814 = vadd.f32 %v4791, %v4809
    %v4815 = vadd.f32 %v4792, %v4809
    %v4816 = vadd.f32 %v4793, %v4809
    %v4817 = vadd.f32 %v4794, %v4809
    %v4818 = vadd.f32 %v4795, %v4809
    %v4819 = vadd.f32 %v4796, %v4809
    %v4820 = vadd.f32 %v4797, %v4809
    %v4821 = vadd.f32 %v4798, %v4809
    %v4822 = vadd.f32 %v4799, %v4809
    %v4823 = vadd.f32 %v4800, %v4809
    %v4824 = vadd.f32 %v4801, %v4809
    %v4825 = vadd.f32 %v4802, %v4809
    %v4826 = vadd.f32 %v4803, %v4809
    %v4827 = vadd.f32 %v4811, %v3526
    %v4828 = vadd.f32 %v4812, %v3527
    %v4829 = vadd.f32 %v4813, %v3528
    %v4830 = vadd.f32 %v4814, %v3529
    %v4831 = vadd.f32 %v4815, %v3530
    %v4832 = vadd.f32 %v4816, %v3531
    %v4833 = vadd.f32 %v4817, %v3532
    %v4834 = vadd.f32 %v4818, %v3533
    %v4835 = vadd.f32 %v4819, %v3534
    %v4836 = vadd.f32 %v4820, %v3535
    %v4837 = vadd.f32 %v4821, %v3536
    %v4838 = vadd.f32 %v4822, %v3537
    %v4839 = vadd.f32 %v4823, %v3538
    %v4840 = vadd.f32 %v4824, %v3539
    %v4841 = vadd.f32 %v4825, %v3540
    %v4842 = vadd.f32 %v4826, %v3541
    %v4843 = vpack.c.bf16 %v4828, %v4827
    %v4844 = vpack.c.bf16 %v4830, %v4829
    %v4845 = vpack.c.bf16 %v4832, %v4831
    %v4846 = vpack.c.bf16 %v4834, %v4833
    %v4847 = vpack.c.bf16 %v4836, %v4835
    %v4848 = vpack.c.bf16 %v4838, %v4837
    %v4849 = vpack.c.bf16 %v4840, %v4839
    %v4850 = vpack.c.bf16 %v4842, %v4841
    %s4851 = scalar_lea.vmem [#allocation2], 16
    %v4852 = vld [vmem:[%s4851] sm:$0xf]
    %v4853 = vld [vmem:[%s4851 + $0x4] sm:$0xf]
    %v4854 = vld [vmem:[%s4851 + $0x8] sm:$0xf]
    %v4855 = vld [vmem:[%s4851 + $0xc] sm:$0xf]
    %v4860 = vunpack.c.l.b16 %v4852
    %v4861 = vunpack.c.l.b16 %v4853
    %v4862 = vunpack.c.l.b16 %v4854
    %v4863 = vunpack.c.l.b16 %v4855
    %v4864 = vpack.c.b16 %v4861, %v4860
    %v4865 = vpack.c.b16 %v4863, %v4862
    %v4869 = vsel %vm180, %v4843, 0
    %v4872 = vsel %vm180, %v4844, 0
    %v4875 = vsel %vm180, %v4845, 0
    %v4878 = vsel %vm180, %v4846, 0
    %v4881 = vsel %vm180, %v4847, 0
    %v4884 = vsel %vm180, %v4848, 0
    %v4887 = vsel %vm180, %v4849, 0
    %v4890 = vsel %vm180, %v4850, 0
    %4892 = vmatprep.subr.bf16.mxu0 0
    %4893 = vmatpush1.bf16.msra.mxu0 %v4864
    %4894 = vmatprep.subr.bf16.mxu0 0
    %4895 = vmatpush1.bf16.msra.mxu0 %v4865
    %4896 = vmatprep.subr.bf16.mxu0 0
    %4897 = vmatpush1.bf16.msra.mxu0 0
    %4898 = vmatprep.subr.bf16.mxu0 0
    %4899 = vmatpush1.bf16.msra.mxu0 0
    %4900 = vmatprep.subr.bf16.mxu0 0
    %4901 = vmatpush1.bf16.msra.mxu0 0
    %4902 = vmatprep.subr.bf16.mxu0 0
    %4903 = vmatpush1.bf16.msra.mxu0 0
    %4904 = vmatprep.subr.bf16.mxu0 0
    %4905 = vmatpush1.bf16.msra.mxu0 0
    %4906 = vmatprep.subr.bf16.mxu0 0
    %4907 = vmatpush1.bf16.msra.mxu0 0
    %4908 = vmatprep.subr.bf16.mxu0 0
    %4909 = vmatpush1.bf16.msra.mxu0 0
    %4910 = vmatprep.subr.bf16.mxu0 0
    %4911 = vmatpush1.bf16.msra.mxu0 0
    %4912 = vmatprep.subr.bf16.mxu0 0
    %4913 = vmatpush1.bf16.msra.mxu0 0
    %4914 = vmatprep.subr.bf16.mxu0 0
    %4915 = vmatpush1.bf16.msra.mxu0 0
    %4916 = vmatprep.subr.bf16.mxu0 0
    %4917 = vmatpush1.bf16.msra.mxu0 0
    %4918 = vmatprep.subr.bf16.mxu0 0
    %4919 = vmatpush1.bf16.msra.mxu0 0
    %4920 = vmatprep.subr.bf16.mxu0 0
    %4921 = vmatpush1.bf16.msra.mxu0 0
    %4922 = vmatprep.subr.bf16.mxu0 0
    %4923 = vmatpush1.bf16.msra.mxu0 0
    %4924 = vmatprep.mubr.bf16.mxu0 0
    %4925 = vmatmul.mubr.bf16.gmra.mrb[0].mxu0 %v4869
    %v4926 = vpop.f32.mrb[0].mxu0
    %v4927 = vadd.f32 0.0, %v4926
    %v4928 = vpop.f32.mrb[0].mxu0
    %v4929 = vpop.f32.mrb[0].mxu0
    %v4930 = vadd.f32 0.0, %v4929
    %v4931 = vpop.f32.mrb[0].mxu0
    %4932 = vmatprep.mubr.bf16.mxu0 0
    %4933 = vmatmul.mubr.bf16.gmra.mrb[0].mxu0 %v4872
    %v4934 = vpop.f32.mrb[0].mxu0
    %v4935 = vadd.f32 0.0, %v4934
    %v4936 = vpop.f32.mrb[0].mxu0
    %v4937 = vpop.f32.mrb[0].mxu0
    %v4938 = vadd.f32 0.0, %v4937
    %v4939 = vpop.f32.mrb[0].mxu0
    %4940 = vmatprep.mubr.bf16.mxu0 0
    %4941 = vmatmul.mubr.bf16.gmra.mrb[0].mxu0 %v4875
    %v4942 = vpop.f32.mrb[0].mxu0
    %v4943 = vadd.f32 0.0, %v4942
    %v4944 = vpop.f32.mrb[0].mxu0
    %v4945 = vpop.f32.mrb[0].mxu0
    %v4946 = vadd.f32 0.0, %v4945
    %v4947 = vpop.f32.mrb[0].mxu0
    %4948 = vmatprep.mubr.bf16.mxu0 0
    %4949 = vmatmul.mubr.bf16.gmra.mrb[0].mxu0 %v4878
    %v4950 = vpop.f32.mrb[0].mxu0
    %v4951 = vadd.f32 0.0, %v4950
    %v4952 = vpop.f32.mrb[0].mxu0
    %v4953 = vpop.f32.mrb[0].mxu0
    %v4954 = vadd.f32 0.0, %v4953
    %v4955 = vpop.f32.mrb[0].mxu0
    %4956 = vmatprep.mubr.bf16.mxu0 0
    %4957 = vmatmul.mubr.bf16.gmra.mrb[0].mxu0 %v4881
    %v4958 = vpop.f32.mrb[0].mxu0
    %v4959 = vadd.f32 0.0, %v4958
    %v4960 = vpop.f32.mrb[0].mxu0
    %v4961 = vpop.f32.mrb[0].mxu0
    %v4962 = vadd.f32 0.0, %v4961
    %v4963 = vpop.f32.mrb[0].mxu0
    %4964 = vmatprep.mubr.bf16.mxu0 0
    %4965 = vmatmul.mubr.bf16.gmra.mrb[0].mxu0 %v4884
    %v4966 = vpop.f32.mrb[0].mxu0
    %v4967 = vadd.f32 0.0, %v4966
    %v4968 = vpop.f32.mrb[0].mxu0
    %v4969 = vpop.f32.mrb[0].mxu0
    %v4970 = vadd.f32 0.0, %v4969
    %v4971 = vpop.f32.mrb[0].mxu0
    %4972 = vmatprep.mubr.bf16.mxu0 0
    %4973 = vmatmul.mubr.bf16.gmra.mrb[0].mxu0 %v4887
    %v4974 = vpop.f32.mrb[0].mxu0
    %v4975 = vadd.f32 0.0, %v4974
    %v4976 = vpop.f32.mrb[0].mxu0
    %v4977 = vpop.f32.mrb[0].mxu0
    %v4978 = vadd.f32 0.0, %v4977
    %v4979 = vpop.f32.mrb[0].mxu0
    %4980 = vmatprep.mubr.bf16.mxu0 0
    %4981 = vmatmul.mubr.bf16.gmra.mrb[0].mxu0 %v4890
    %v4982 = vpop.f32.mrb[0].mxu0
    %v4983 = vadd.f32 0.0, %v4982
    %v4984 = vpop.f32.mrb[0].mxu0
    %v4985 = vpop.f32.mrb[0].mxu0
    %v4986 = vadd.f32 0.0, %v4985
    %v4987 = vpop.f32.mrb[0].mxu0
    %4988 = vdwg.mxu0
    %v4989 = vpack.c.bf16 %v4930, %v4927
    %v4990 = vpack.c.bf16 %v4938, %v4935
    %v4991 = vpack.c.bf16 %v4946, %v4943
    %v4992 = vpack.c.bf16 %v4954, %v4951
    %v4993 = vpack.c.bf16 %v4962, %v4959
    %v4994 = vpack.c.bf16 %v4970, %v4967
    %v4995 = vpack.c.bf16 %v4978, %v4975
    %v4996 = vpack.c.bf16 %v4986, %v4983
    %s4997 = scalar_lea.vmem [#allocation4], 16
    %v4998 = vld [vmem:[%s4997] sm:$0xf]
    %5007 = vrot.lane.b32.xlu0 %v4989, 64
    %v5008 = vpop.permute.xlu0 %5007
    %5009 = vrot.lane.b32.xlu0 %v4990, 64
    %v5010 = vpop.permute.xlu0 %5009
    %5011 = vrot.lane.b32.xlu0 %v4991, 64
    %v5012 = vpop.permute.xlu0 %5011
    %5013 = vrot.lane.b32.xlu0 %v4992, 64
    %v5014 = vpop.permute.xlu0 %5013
    %5015 = vrot.lane.b32.xlu0 %v4993, 64
    %v5016 = vpop.permute.xlu0 %5015
    %5017 = vrot.lane.b32.xlu0 %v4994, 64
    %v5018 = vpop.permute.xlu0 %5017
    %5019 = vrot.lane.b32.xlu0 %v4995, 64
    %v5020 = vpop.permute.xlu0 %5019
    %5021 = vrot.lane.b32.xlu0 %v4996, 64
    %v5022 = vpop.permute.xlu0 %5021
    %v5024 = vsel %vm335, %v5008, 0
    %v5027 = vsel %vm335, %v5010, 0
    %v5030 = vsel %vm335, %v5012, 0
    %v5033 = vsel %vm335, %v5014, 0
    %v5036 = vsel %vm335, %v5016, 0
    %v5039 = vsel %vm335, %v5018, 0
    %v5042 = vsel %vm335, %v5020, 0
    %v5045 = vsel %vm335, %v5022, 0
    %v5048 = vsel %vm360, %v4998, 0
    %5050 = vmatprep.subr.bf16.mxu0 0
    %5051 = vmatpush1.bf16.msra.mxu0 %v5048
    %5052 = vmatprep.subr.bf16.mxu0 0
    %5053 = vmatpush1.bf16.msra.mxu0 0
    %5054 = vmatprep.subr.bf16.mxu0 0
    %5055 = vmatpush1.bf16.msra.mxu0 0
    %5056 = vmatprep.subr.bf16.mxu0 0
    %5057 = vmatpush1.bf16.msra.mxu0 0
    %5058 = vmatprep.subr.bf16.mxu0 0
    %5059 = vmatpush1.bf16.msra.mxu0 0
    %5060 = vmatprep.subr.bf16.mxu0 0
    %5061 = vmatpush1.bf16.msra.mxu0 0
    %5062 = vmatprep.subr.bf16.mxu0 0
    %5063 = vmatpush1.bf16.msra.mxu0 0
    %5064 = vmatprep.subr.bf16.mxu0 0
    %5065 = vmatpush1.bf16.msra.mxu0 0
    %5066 = vmatprep.subr.bf16.mxu0 0
    %5067 = vmatpush1.bf16.msra.mxu0 0
    %5068 = vmatprep.subr.bf16.mxu0 0
    %5069 = vmatpush1.bf16.msra.mxu0 0
    %5070 = vmatprep.subr.bf16.mxu0 0
    %5071 = vmatpush1.bf16.msra.mxu0 0
    %5072 = vmatprep.subr.bf16.mxu0 0
    %5073 = vmatpush1.bf16.msra.mxu0 0
    %5074 = vmatprep.subr.bf16.mxu0 0
    %5075 = vmatpush1.bf16.msra.mxu0 0
    %5076 = vmatprep.subr.bf16.mxu0 0
    %5077 = vmatpush1.bf16.msra.mxu0 0
    %5078 = vmatprep.subr.bf16.mxu0 0
    %5079 = vmatpush1.bf16.msra.mxu0 0
    %5080 = vmatprep.subr.bf16.mxu0 0
    %5081 = vmatpush1.bf16.msra.mxu0 0
    %5082 = vmatprep.mubr.bf16.mxu0 0
    %5083 = vmatmul.mubr.bf16.gmra.mrb[0].mxu0 %v5024
    %v5084 = vpop.f32.mrb[0].mxu0
    %v5085 = vadd.f32 0.0, %v5084
    %v5086 = vpop.f32.mrb[0].mxu0
    %v5087 = vpop.f32.mrb[0].mxu0
    %v5088 = vadd.f32 0.0, %v5087
    %v5089 = vpop.f32.mrb[0].mxu0
    %5090 = vmatprep.mubr.bf16.mxu0 0
    %5091 = vmatmul.mubr.bf16.gmra.mrb[0].mxu0 %v5027
    %v5092 = vpop.f32.mrb[0].mxu0
    %v5093 = vadd.f32 0.0, %v5092
    %v5094 = vpop.f32.mrb[0].mxu0
    %v5095 = vpop.f32.mrb[0].mxu0
    %v5096 = vadd.f32 0.0, %v5095
    %v5097 = vpop.f32.mrb[0].mxu0
    %5098 = vmatprep.mubr.bf16.mxu0 0
    %5099 = vmatmul.mubr.bf16.gmra.mrb[0].mxu0 %v5030
    %v5100 = vpop.f32.mrb[0].mxu0
    %v5101 = vadd.f32 0.0, %v5100
    %v5102 = vpop.f32.mrb[0].mxu0
    %v5103 = vpop.f32.mrb[0].mxu0
    %v5104 = vadd.f32 0.0, %v5103
    %v5105 = vpop.f32.mrb[0].mxu0
    %5106 = vmatprep.mubr.bf16.mxu0 0
    %5107 = vmatmul.mubr.bf16.gmra.mrb[0].mxu0 %v5033
    %v5108 = vpop.f32.mrb[0].mxu0
    %v5109 = vadd.f32 0.0, %v5108
    %v5110 = vpop.f32.mrb[0].mxu0
    %v5111 = vpop.f32.mrb[0].mxu0
    %v5112 = vadd.f32 0.0, %v5111
    %v5113 = vpop.f32.mrb[0].mxu0
    %5114 = vmatprep.mubr.bf16.mxu0 0
    %5115 = vmatmul.mubr.bf16.gmra.mrb[0].mxu0 %v5036
    %v5116 = vpop.f32.mrb[0].mxu0
    %v5117 = vadd.f32 0.0, %v5116
    %v5118 = vpop.f32.mrb[0].mxu0
    %v5119 = vpop.f32.mrb[0].mxu0
    %v5120 = vadd.f32 0.0, %v5119
    %v5121 = vpop.f32.mrb[0].mxu0
    %5122 = vmatprep.mubr.bf16.mxu0 0
    %5123 = vmatmul.mubr.bf16.gmra.mrb[0].mxu0 %v5039
    %v5124 = vpop.f32.mrb[0].mxu0
    %v5125 = vadd.f32 0.0, %v5124
    %v5126 = vpop.f32.mrb[0].mxu0
    %v5127 = vpop.f32.mrb[0].mxu0
    %v5128 = vadd.f32 0.0, %v5127
    %v5129 = vpop.f32.mrb[0].mxu0
    %5130 = vmatprep.mubr.bf16.mxu0 0
    %5131 = vmatmul.mubr.bf16.gmra.mrb[0].mxu0 %v5042
    %v5132 = vpop.f32.mrb[0].mxu0
    %v5133 = vadd.f32 0.0, %v5132
    %v5134 = vpop.f32.mrb[0].mxu0
    %v5135 = vpop.f32.mrb[0].mxu0
    %v5136 = vadd.f32 0.0, %v5135
    %v5137 = vpop.f32.mrb[0].mxu0
    %5138 = vmatprep.mubr.bf16.mxu0 0
    %5139 = vmatmul.mubr.bf16.gmra.mrb[0].mxu0 %v5045
    %v5140 = vpop.f32.mrb[0].mxu0
    %v5141 = vadd.f32 0.0, %v5140
    %v5142 = vpop.f32.mrb[0].mxu0
    %v5143 = vpop.f32.mrb[0].mxu0
    %v5144 = vadd.f32 0.0, %v5143
    %v5145 = vpop.f32.mrb[0].mxu0
    %5146 = vdwg.mxu0
    %5147 = vrot.lane.b32.xlu0 %v4989, 96
    %v5148 = vpop.permute.xlu0 %5147
    %5149 = vrot.lane.b32.xlu0 %v4990, 96
    %v5150 = vpop.permute.xlu0 %5149
    %5151 = vrot.lane.b32.xlu0 %v4991, 96
    %v5152 = vpop.permute.xlu0 %5151
    %5153 = vrot.lane.b32.xlu0 %v4992, 96
    %v5154 = vpop.permute.xlu0 %5153
    %5155 = vrot.lane.b32.xlu0 %v4993, 96
    %v5156 = vpop.permute.xlu0 %5155
    %5157 = vrot.lane.b32.xlu0 %v4994, 96
    %v5158 = vpop.permute.xlu0 %5157
    %5159 = vrot.lane.b32.xlu0 %v4995, 96
    %v5160 = vpop.permute.xlu0 %5159
    %5161 = vrot.lane.b32.xlu0 %v4996, 96
    %v5162 = vpop.permute.xlu0 %5161
    %v5164 = vsel %vm335, %v4989, 0
    %v5167 = vsel %vm335, %v4990, 0
    %v5170 = vsel %vm335, %v4991, 0
    %v5173 = vsel %vm335, %v4992, 0
    %v5176 = vsel %vm335, %v4993, 0
    %v5179 = vsel %vm335, %v4994, 0
    %v5182 = vsel %vm335, %v4995, 0
    %v5185 = vsel %vm335, %v4996, 0
    %v5188 = vsel %vm335, %v5148, 0
    %v5191 = vsel %vm335, %v5150, 0
    %v5194 = vsel %vm335, %v5152, 0
    %v5197 = vsel %vm335, %v5154, 0
    %v5200 = vsel %vm335, %v5156, 0
    %v5203 = vsel %vm335, %v5158, 0
    %v5206 = vsel %vm335, %v5160, 0
    %v5209 = vsel %vm335, %v5162, 0
    %5211 = vmatprep.subr.bf16.mxu0 0
    %5212 = vmatpush1.bf16.xpose.msra.mxu0 %v5188
    %5213 = vmatprep.subr.bf16.mxu0 0
    %5214 = vmatpush1.bf16.xpose.msra.mxu0 %v5191
    %5215 = vmatprep.subr.bf16.mxu0 0
    %5216 = vmatpush1.bf16.xpose.msra.mxu0 %v5194
    %5217 = vmatprep.subr.bf16.mxu0 0
    %5218 = vmatpush1.bf16.xpose.msra.mxu0 %v5197
    %5219 = vmatprep.subr.bf16.mxu0 0
    %5220 = vmatpush1.bf16.xpose.msra.mxu0 %v5200
    %5221 = vmatprep.subr.bf16.mxu0 0
    %5222 = vmatpush1.bf16.xpose.msra.mxu0 %v5203
    %5223 = vmatprep.subr.bf16.mxu0 0
    %5224 = vmatpush1.bf16.xpose.msra.mxu0 %v5206
    %5225 = vmatprep.subr.bf16.mxu0 0
    %5226 = vmatpush1.bf16.xpose.msra.mxu0 %v5209
    %5227 = vmatprep.subr.bf16.mxu0 0
    %5228 = vmatpush1.bf16.xpose.msra.mxu0 0
    %5229 = vmatprep.subr.bf16.mxu0 0
    %5230 = vmatpush1.bf16.xpose.msra.mxu0 0
    %5231 = vmatprep.subr.bf16.mxu0 0
    %5232 = vmatpush1.bf16.xpose.msra.mxu0 0
    %5233 = vmatprep.subr.bf16.mxu0 0
    %5234 = vmatpush1.bf16.xpose.msra.mxu0 0
    %5235 = vmatprep.subr.bf16.mxu0 0
    %5236 = vmatpush1.bf16.xpose.msra.mxu0 0
    %5237 = vmatprep.subr.bf16.mxu0 0
    %5238 = vmatpush1.bf16.xpose.msra.mxu0 0
    %5239 = vmatprep.subr.bf16.mxu0 0
    %5240 = vmatpush1.bf16.xpose.msra.mxu0 0
    %5241 = vmatprep.subr.bf16.mxu0 0
    %5242 = vmatpush1.bf16.xpose.msra.mxu0 0
    %5243 = vmatprep.mubr.bf16.mxu0 0
    %5244 = vmatmul.mubr.bf16.gmra.mrb[0].mxu0 %v5164
    %v5245 = vpop.f32.mrb[0].mxu0
    %v5246 = vadd.f32 0.0, %v5245
    %v5247 = vpop.f32.mrb[0].mxu0
    %v5248 = vpop.f32.mrb[0].mxu0
    %v5249 = vadd.f32 0.0, %v5248
    %v5250 = vpop.f32.mrb[0].mxu0
    %5251 = vmatprep.mubr.bf16.mxu0 0
    %5252 = vmatmul.mubr.bf16.gmra.mrb[0].mxu0 %v5167
    %v5253 = vpop.f32.mrb[0].mxu0
    %v5254 = vadd.f32 0.0, %v5253
    %v5255 = vpop.f32.mrb[0].mxu0
    %v5256 = vpop.f32.mrb[0].mxu0
    %v5257 = vadd.f32 0.0, %v5256
    %v5258 = vpop.f32.mrb[0].mxu0
    %5259 = vmatprep.mubr.bf16.mxu0 0
    %5260 = vmatmul.mubr.bf16.gmra.mrb[0].mxu0 %v5170
    %v5261 = vpop.f32.mrb[0].mxu0
    %v5262 = vadd.f32 0.0, %v5261
    %v5263 = vpop.f32.mrb[0].mxu0
    %v5264 = vpop.f32.mrb[0].mxu0
    %v5265 = vadd.f32 0.0, %v5264
    %v5266 = vpop.f32.mrb[0].mxu0
    %5267 = vmatprep.mubr.bf16.mxu0 0
    %5268 = vmatmul.mubr.bf16.gmra.mrb[0].mxu0 %v5173
    %v5269 = vpop.f32.mrb[0].mxu0
    %v5270 = vadd.f32 0.0, %v5269
    %v5271 = vpop.f32.mrb[0].mxu0
    %v5272 = vpop.f32.mrb[0].mxu0
    %v5273 = vadd.f32 0.0, %v5272
    %v5274 = vpop.f32.mrb[0].mxu0
    %5275 = vmatprep.mubr.bf16.mxu0 0
    %5276 = vmatmul.mubr.bf16.gmra.mrb[0].mxu0 %v5176
    %v5277 = vpop.f32.mrb[0].mxu0
    %v5278 = vadd.f32 0.0, %v5277
    %v5279 = vpop.f32.mrb[0].mxu0
    %v5280 = vpop.f32.mrb[0].mxu0
    %v5281 = vadd.f32 0.0, %v5280
    %v5282 = vpop.f32.mrb[0].mxu0
    %5283 = vmatprep.mubr.bf16.mxu0 0
    %5284 = vmatmul.mubr.bf16.gmra.mrb[0].mxu0 %v5179
    %v5285 = vpop.f32.mrb[0].mxu0
    %v5286 = vadd.f32 0.0, %v5285
    %v5287 = vpop.f32.mrb[0].mxu0
    %v5288 = vpop.f32.mrb[0].mxu0
    %v5289 = vadd.f32 0.0, %v5288
    %v5290 = vpop.f32.mrb[0].mxu0
    %5291 = vmatprep.mubr.bf16.mxu0 0
    %5292 = vmatmul.mubr.bf16.gmra.mrb[0].mxu0 %v5182
    %v5293 = vpop.f32.mrb[0].mxu0
    %v5294 = vadd.f32 0.0, %v5293
    %v5295 = vpop.f32.mrb[0].mxu0
    %v5296 = vpop.f32.mrb[0].mxu0
    %v5297 = vadd.f32 0.0, %v5296
    %v5298 = vpop.f32.mrb[0].mxu0
    %5299 = vmatprep.mubr.bf16.mxu0 0
    %5300 = vmatmul.mubr.bf16.gmra.mrb[0].mxu0 %v5185
    %v5301 = vpop.f32.mrb[0].mxu0
    %v5302 = vadd.f32 0.0, %v5301
    %v5303 = vpop.f32.mrb[0].mxu0
    %v5304 = vpop.f32.mrb[0].mxu0
    %v5305 = vadd.f32 0.0, %v5304
    %v5306 = vpop.f32.mrb[0].mxu0
    %5307 = vdwg.mxu0
    %v5308 = vmul.f32 %v5246, 0.35355338
    %v5309 = vmul.f32 %v5249, 0.35355338
    %v5310 = vmul.f32 %v5254, 0.35355338
    %v5311 = vmul.f32 %v5257, 0.35355338
    %v5312 = vmul.f32 %v5262, 0.35355338
    %v5313 = vmul.f32 %v5265, 0.35355338
    %v5314 = vmul.f32 %v5270, 0.35355338
    %v5315 = vmul.f32 %v5273, 0.35355338
    %v5316 = vmul.f32 %v5278, 0.35355338
    %v5317 = vmul.f32 %v5281, 0.35355338
    %v5318 = vmul.f32 %v5286, 0.35355338
    %v5319 = vmul.f32 %v5289, 0.35355338
    %v5320 = vmul.f32 %v5294, 0.35355338
    %v5321 = vmul.f32 %v5297, 0.35355338
    %v5322 = vmul.f32 %v5302, 0.35355338
    %v5323 = vmul.f32 %v5305, 0.35355338
    %v5324 = vadd.f32 %v5308, %v140
    %v5325 = vadd.f32 %v5309, %v141
    %v5326 = vadd.f32 %v5310, %v142
    %v5327 = vadd.f32 %v5311, %v143
    %v5328 = vadd.f32 %v5312, %v144
    %v5329 = vadd.f32 %v5313, %v145
    %v5330 = vadd.f32 %v5314, %v146
    %v5331 = vadd.f32 %v5315, %v147
    %v5332 = vadd.f32 %v5316, %v148
    %v5333 = vadd.f32 %v5317, %v149
    %v5334 = vadd.f32 %v5318, %v150
    %v5335 = vadd.f32 %v5319, %v151
    %v5336 = vadd.f32 %v5320, %v152
    %v5337 = vadd.f32 %v5321, %v153
    %v5338 = vadd.f32 %v5322, %v154
    %v5339 = vadd.f32 %v5323, %v155
    %5340 = vmax.xlane.f32.xlu0 %v5324
    %v5341 = vpop.xlane.xlu0 %5340
    %5342 = vmax.xlane.f32.xlu0 %v5325
    %v5343 = vpop.xlane.xlu0 %5342
    %5344 = vmax.xlane.f32.xlu0 %v5326
    %v5345 = vpop.xlane.xlu0 %5344
    %5346 = vmax.xlane.f32.xlu0 %v5327
    %v5347 = vpop.xlane.xlu0 %5346
    %5348 = vmax.xlane.f32.xlu0 %v5328
    %v5349 = vpop.xlane.xlu0 %5348
    %5350 = vmax.xlane.f32.xlu0 %v5329
    %v5351 = vpop.xlane.xlu0 %5350
    %5352 = vmax.xlane.f32.xlu0 %v5330
    %v5353 = vpop.xlane.xlu0 %5352
    %5354 = vmax.xlane.f32.xlu0 %v5331
    %v5355 = vpop.xlane.xlu0 %5354
    %5356 = vmax.xlane.f32.xlu0 %v5332
    %v5357 = vpop.xlane.xlu0 %5356
    %5358 = vmax.xlane.f32.xlu0 %v5333
    %v5359 = vpop.xlane.xlu0 %5358
    %5360 = vmax.xlane.f32.xlu0 %v5334
    %v5361 = vpop.xlane.xlu0 %5360
    %5362 = vmax.xlane.f32.xlu0 %v5335
    %v5363 = vpop.xlane.xlu0 %5362
    %5364 = vmax.xlane.f32.xlu0 %v5336
    %v5365 = vpop.xlane.xlu0 %5364
    %5366 = vmax.xlane.f32.xlu0 %v5337
    %v5367 = vpop.xlane.xlu0 %5366
    %5368 = vmax.xlane.f32.xlu0 %v5338
    %v5369 = vpop.xlane.xlu0 %5368
    %5370 = vmax.xlane.f32.xlu0 %v5339
    %v5371 = vpop.xlane.xlu0 %5370
    %v5372 = vsub.f32 %v5324, %v5341
    %v5373 = vsub.f32 %v5325, %v5343
    %v5374 = vsub.f32 %v5326, %v5345
    %v5375 = vsub.f32 %v5327, %v5347
    %v5376 = vsub.f32 %v5328, %v5349
    %v5377 = vsub.f32 %v5329, %v5351
    %v5378 = vsub.f32 %v5330, %v5353
    %v5379 = vsub.f32 %v5331, %v5355
    %v5380 = vsub.f32 %v5332, %v5357
    %v5381 = vsub.f32 %v5333, %v5359
    %v5382 = vsub.f32 %v5334, %v5361
    %v5383 = vsub.f32 %v5335, %v5363
    %v5384 = vsub.f32 %v5336, %v5365
    %v5385 = vsub.f32 %v5337, %v5367
    %v5386 = vsub.f32 %v5338, %v5369
    %v5387 = vsub.f32 %v5339, %v5371
    %v5388 = vmul.f32 %v5372, 1.442695
    %v5389 = vpow.pop %v5388
    %v5390 = vmul.f32 %v5373, 1.442695
    %v5391 = vpow.pop %v5390
    %v5392 = vmul.f32 %v5374, 1.442695
    %v5393 = vpow.pop %v5392
    %v5394 = vmul.f32 %v5375, 1.442695
    %v5395 = vpow.pop %v5394
    %v5396 = vmul.f32 %v5376, 1.442695
    %v5397 = vpow.pop %v5396
    %v5398 = vmul.f32 %v5377, 1.442695
    %v5399 = vpow.pop %v5398
    %v5400 = vmul.f32 %v5378, 1.442695
    %v5401 = vpow.pop %v5400
    %v5402 = vmul.f32 %v5379, 1.442695
    %v5403 = vpow.pop %v5402
    %v5404 = vmul.f32 %v5380, 1.442695
    %v5405 = vpow.pop %v5404
    %v5406 = vmul.f32 %v5381, 1.442695
    %v5407 = vpow.pop %v5406
    %v5408 = vmul.f32 %v5382, 1.442695
    %v5409 = vpow.pop %v5408
    %v5410 = vmul.f32 %v5383, 1.442695
    %v5411 = vpow.pop %v5410
    %v5412 = vmul.f32 %v5384, 1.442695
    %v5413 = vpow.pop %v5412
    %v5414 = vmul.f32 %v5385, 1.442695
    %v5415 = vpow.pop %v5414
    %v5416 = vmul.f32 %v5386, 1.442695
    %v5417 = vpow.pop %v5416
    %v5418 = vmul.f32 %v5387, 1.442695
    %v5419 = vpow.pop %v5418
    %5420 = vadd.xlane.f32.xlu0 %v5389
    %v5421 = vpop.xlane.xlu0 %5420
    %5422 = vadd.xlane.f32.xlu0 %v5391
    %v5423 = vpop.xlane.xlu0 %5422
    %5424 = vadd.xlane.f32.xlu0 %v5393
    %v5425 = vpop.xlane.xlu0 %5424
    %5426 = vadd.xlane.f32.xlu0 %v5395
    %v5427 = vpop.xlane.xlu0 %5426
    %5428 = vadd.xlane.f32.xlu0 %v5397
    %v5429 = vpop.xlane.xlu0 %5428
    %5430 = vadd.xlane.f32.xlu0 %v5399
    %v5431 = vpop.xlane.xlu0 %5430
    %5432 = vadd.xlane.f32.xlu0 %v5401
    %v5433 = vpop.xlane.xlu0 %5432
    %5434 = vadd.xlane.f32.xlu0 %v5403
    %v5435 = vpop.xlane.xlu0 %5434
    %5436 = vadd.xlane.f32.xlu0 %v5405
    %v5437 = vpop.xlane.xlu0 %5436
    %5438 = vadd.xlane.f32.xlu0 %v5407
    %v5439 = vpop.xlane.xlu0 %5438
    %5440 = vadd.xlane.f32.xlu0 %v5409
    %v5441 = vpop.xlane.xlu0 %5440
    %5442 = vadd.xlane.f32.xlu0 %v5411
    %v5443 = vpop.xlane.xlu0 %5442
    %5444 = vadd.xlane.f32.xlu0 %v5413
    %v5445 = vpop.xlane.xlu0 %5444
    %5446 = vadd.xlane.f32.xlu0 %v5415
    %v5447 = vpop.xlane.xlu0 %5446
    %5448 = vadd.xlane.f32.xlu0 %v5417
    %v5449 = vpop.xlane.xlu0 %5448
    %5450 = vadd.xlane.f32.xlu0 %v5419
    %v5451 = vpop.xlane.xlu0 %5450
    %v5452 = vrcp.pop %v5421
    %v5453 = vrcp.pop %v5423
    %v5454 = vrcp.pop %v5425
    %v5455 = vrcp.pop %v5427
    %v5456 = vrcp.pop %v5429
    %v5457 = vrcp.pop %v5431
    %v5458 = vrcp.pop %v5433
    %v5459 = vrcp.pop %v5435
    %v5460 = vrcp.pop %v5437
    %v5461 = vrcp.pop %v5439
    %v5462 = vrcp.pop %v5441
    %v5463 = vrcp.pop %v5443
    %v5464 = vrcp.pop %v5445
    %v5465 = vrcp.pop %v5447
    %v5466 = vrcp.pop %v5449
    %v5467 = vrcp.pop %v5451
    %v5468 = vmul.f32 %v5389, %v5452
    %v5469 = vmul.f32 %v5391, %v5453
    %v5470 = vmul.f32 %v5393, %v5454
    %v5471 = vmul.f32 %v5395, %v5455
    %v5472 = vmul.f32 %v5397, %v5456
    %v5473 = vmul.f32 %v5399, %v5457
    %v5474 = vmul.f32 %v5401, %v5458
    %v5475 = vmul.f32 %v5403, %v5459
    %v5476 = vmul.f32 %v5405, %v5460
    %v5477 = vmul.f32 %v5407, %v5461
    %v5478 = vmul.f32 %v5409, %v5462
    %v5479 = vmul.f32 %v5411, %v5463
    %v5480 = vmul.f32 %v5413, %v5464
    %v5481 = vmul.f32 %v5415, %v5465
    %v5482 = vmul.f32 %v5417, %v5466
    %v5483 = vmul.f32 %v5419, %v5467
    %v5484 = vpack.c.bf16 %v5469, %v5468
    %v5485 = vpack.c.bf16 %v5471, %v5470
    %v5486 = vpack.c.bf16 %v5473, %v5472
    %v5487 = vpack.c.bf16 %v5475, %v5474
    %v5488 = vpack.c.bf16 %v5477, %v5476
    %v5489 = vpack.c.bf16 %v5479, %v5478
    %v5490 = vpack.c.bf16 %v5481, %v5480
    %v5491 = vpack.c.bf16 %v5483, %v5482
    %v5492 = vpack.c.bf16 %v5088, %v5085
    %v5493 = vpack.c.bf16 %v5096, %v5093
    %v5494 = vpack.c.bf16 %v5104, %v5101
    %v5495 = vpack.c.bf16 %v5112, %v5109
    %v5496 = vpack.c.bf16 %v5120, %v5117
    %v5497 = vpack.c.bf16 %v5128, %v5125
    %v5498 = vpack.c.bf16 %v5136, %v5133
    %v5499 = vpack.c.bf16 %v5144, %v5141
    %s5500 = scalar_lea.vmem [#allocation4], 20
    %v5501 = vld [vmem:[%s5500] sm:$0xf]
    %5502 = vrot.lane.b32.xlu0 %v4989, 56
    %v5503 = vpop.permute.xlu0 %5502
    %5504 = vrot.lane.b32.xlu0 %v4990, 56
    %v5505 = vpop.permute.xlu0 %5504
    %5506 = vrot.lane.b32.xlu0 %v4991, 56
    %v5507 = vpop.permute.xlu0 %5506
    %5508 = vrot.lane.b32.xlu0 %v4992, 56
    %v5509 = vpop.permute.xlu0 %5508
    %5510 = vrot.lane.b32.xlu0 %v4993, 56
    %v5511 = vpop.permute.xlu0 %5510
    %5512 = vrot.lane.b32.xlu0 %v4994, 56
    %v5513 = vpop.permute.xlu0 %5512
    %5514 = vrot.lane.b32.xlu0 %v4995, 56
    %v5515 = vpop.permute.xlu0 %5514
    %5516 = vrot.lane.b32.xlu0 %v4996, 56
    %v5517 = vpop.permute.xlu0 %5516
    %v5519 = vsel %vm335, %v5503, 0
    %v5522 = vsel %vm335, %v5505, 0
    %v5525 = vsel %vm335, %v5507, 0
    %v5528 = vsel %vm335, %v5509, 0
    %v5531 = vsel %vm335, %v5511, 0
    %v5534 = vsel %vm335, %v5513, 0
    %v5537 = vsel %vm335, %v5515, 0
    %v5540 = vsel %vm335, %v5517, 0
    %v5543 = vsel %vm360, %v5501, 0
    %5545 = vmatprep.subr.bf16.mxu0 0
    %5546 = vmatpush1.bf16.msra.mxu0 %v5543
    %5547 = vmatprep.subr.bf16.mxu0 0
    %5548 = vmatpush1.bf16.msra.mxu0 0
    %5549 = vmatprep.subr.bf16.mxu0 0
    %5550 = vmatpush1.bf16.msra.mxu0 0
    %5551 = vmatprep.subr.bf16.mxu0 0
    %5552 = vmatpush1.bf16.msra.mxu0 0
    %5553 = vmatprep.subr.bf16.mxu0 0
    %5554 = vmatpush1.bf16.msra.mxu0 0
    %5555 = vmatprep.subr.bf16.mxu0 0
    %5556 = vmatpush1.bf16.msra.mxu0 0
    %5557 = vmatprep.subr.bf16.mxu0 0
    %5558 = vmatpush1.bf16.msra.mxu0 0
    %5559 = vmatprep.subr.bf16.mxu0 0
    %5560 = vmatpush1.bf16.msra.mxu0 0
    %5561 = vmatprep.subr.bf16.mxu0 0
    %5562 = vmatpush1.bf16.msra.mxu0 0
    %5563 = vmatprep.subr.bf16.mxu0 0
    %5564 = vmatpush1.bf16.msra.mxu0 0
    %5565 = vmatprep.subr.bf16.mxu0 0
    %5566 = vmatpush1.bf16.msra.mxu0 0
    %5567 = vmatprep.subr.bf16.mxu0 0
    %5568 = vmatpush1.bf16.msra.mxu0 0
    %5569 = vmatprep.subr.bf16.mxu0 0
    %5570 = vmatpush1.bf16.msra.mxu0 0
    %5571 = vmatprep.subr.bf16.mxu0 0
    %5572 = vmatpush1.bf16.msra.mxu0 0
    %5573 = vmatprep.subr.bf16.mxu0 0
    %5574 = vmatpush1.bf16.msra.mxu0 0
    %5575 = vmatprep.subr.bf16.mxu0 0
    %5576 = vmatpush1.bf16.msra.mxu0 0
    %5577 = vmatprep.mubr.bf16.mxu0 0
    %5578 = vmatmul.mubr.bf16.gmra.mrb[0].mxu0 %v5519
    %v5579 = vpop.f32.mrb[0].mxu0
    %v5580 = vadd.f32 0.0, %v5579
    %v5581 = vpop.f32.mrb[0].mxu0
    %v5582 = vpop.f32.mrb[0].mxu0
    %v5583 = vadd.f32 0.0, %v5582
    %v5584 = vpop.f32.mrb[0].mxu0
    %5585 = vmatprep.mubr.bf16.mxu0 0
    %5586 = vmatmul.mubr.bf16.gmra.mrb[0].mxu0 %v5522
    %v5587 = vpop.f32.mrb[0].mxu0
    %v5588 = vadd.f32 0.0, %v5587
    %v5589 = vpop.f32.mrb[0].mxu0
    %v5590 = vpop.f32.mrb[0].mxu0
    %v5591 = vadd.f32 0.0, %v5590
    %v5592 = vpop.f32.mrb[0].mxu0
    %5593 = vmatprep.mubr.bf16.mxu0 0
    %5594 = vmatmul.mubr.bf16.gmra.mrb[0].mxu0 %v5525
    %v5595 = vpop.f32.mrb[0].mxu0
    %v5596 = vadd.f32 0.0, %v5595
    %v5597 = vpop.f32.mrb[0].mxu0
    %v5598 = vpop.f32.mrb[0].mxu0
    %v5599 = vadd.f32 0.0, %v5598
    %v5600 = vpop.f32.mrb[0].mxu0
    %5601 = vmatprep.mubr.bf16.mxu0 0
    %5602 = vmatmul.mubr.bf16.gmra.mrb[0].mxu0 %v5528
    %v5603 = vpop.f32.mrb[0].mxu0
    %v5604 = vadd.f32 0.0, %v5603
    %v5605 = vpop.f32.mrb[0].mxu0
    %v5606 = vpop.f32.mrb[0].mxu0
    %v5607 = vadd.f32 0.0, %v5606
    %v5608 = vpop.f32.mrb[0].mxu0
    %5609 = vmatprep.mubr.bf16.mxu0 0
    %5610 = vmatmul.mubr.bf16.gmra.mrb[0].mxu0 %v5531
    %v5611 = vpop.f32.mrb[0].mxu0
    %v5612 = vadd.f32 0.0, %v5611
    %v5613 = vpop.f32.mrb[0].mxu0
    %v5614 = vpop.f32.mrb[0].mxu0
    %v5615 = vadd.f32 0.0, %v5614
    %v5616 = vpop.f32.mrb[0].mxu0
    %5617 = vmatprep.mubr.bf16.mxu0 0
    %5618 = vmatmul.mubr.bf16.gmra.mrb[0].mxu0 %v5534
    %v5619 = vpop.f32.mrb[0].mxu0
    %v5620 = vadd.f32 0.0, %v5619
    %v5621 = vpop.f32.mrb[0].mxu0
    %v5622 = vpop.f32.mrb[0].mxu0
    %v5623 = vadd.f32 0.0, %v5622
    %v5624 = vpop.f32.mrb[0].mxu0
    %5625 = vmatprep.mubr.bf16.mxu0 0
    %5626 = vmatmul.mubr.bf16.gmra.mrb[0].mxu0 %v5537
    %v5627 = vpop.f32.mrb[0].mxu0
    %v5628 = vadd.f32 0.0, %v5627
    %v5629 = vpop.f32.mrb[0].mxu0
    %v5630 = vpop.f32.mrb[0].mxu0
    %v5631 = vadd.f32 0.0, %v5630
    %v5632 = vpop.f32.mrb[0].mxu0
    %5633 = vmatprep.mubr.bf16.mxu0 0
    %5634 = vmatmul.mubr.bf16.gmra.mrb[0].mxu0 %v5540
    %v5635 = vpop.f32.mrb[0].mxu0
    %v5636 = vadd.f32 0.0, %v5635
    %v5637 = vpop.f32.mrb[0].mxu0
    %v5638 = vpop.f32.mrb[0].mxu0
    %v5639 = vadd.f32 0.0, %v5638
    %v5640 = vpop.f32.mrb[0].mxu0
    %5641 = vdwg.mxu0
    %5642 = vrot.lane.b32.xlu0 %v4989, 120
    %v5643 = vpop.permute.xlu0 %5642
    %5644 = vrot.lane.b32.xlu0 %v4990, 120
    %v5645 = vpop.permute.xlu0 %5644
    %5646 = vrot.lane.b32.xlu0 %v4991, 120
    %v5647 = vpop.permute.xlu0 %5646
    %5648 = vrot.lane.b32.xlu0 %v4992, 120
    %v5649 = vpop.permute.xlu0 %5648
    %5650 = vrot.lane.b32.xlu0 %v4993, 120
    %v5651 = vpop.permute.xlu0 %5650
    %5652 = vrot.lane.b32.xlu0 %v4994, 120
    %v5653 = vpop.permute.xlu0 %5652
    %5654 = vrot.lane.b32.xlu0 %v4995, 120
    %v5655 = vpop.permute.xlu0 %5654
    %5656 = vrot.lane.b32.xlu0 %v4996, 120
    %v5657 = vpop.permute.xlu0 %5656
    %5658 = vrot.lane.b32.xlu0 %v4989, 88
    %v5659 = vpop.permute.xlu0 %5658
    %5660 = vrot.lane.b32.xlu0 %v4990, 88
    %v5661 = vpop.permute.xlu0 %5660
    %5662 = vrot.lane.b32.xlu0 %v4991, 88
    %v5663 = vpop.permute.xlu0 %5662
    %5664 = vrot.lane.b32.xlu0 %v4992, 88
    %v5665 = vpop.permute.xlu0 %5664
    %5666 = vrot.lane.b32.xlu0 %v4993, 88
    %v5667 = vpop.permute.xlu0 %5666
    %5668 = vrot.lane.b32.xlu0 %v4994, 88
    %v5669 = vpop.permute.xlu0 %5668
    %5670 = vrot.lane.b32.xlu0 %v4995, 88
    %v5671 = vpop.permute.xlu0 %5670
    %5672 = vrot.lane.b32.xlu0 %v4996, 88
    %v5673 = vpop.permute.xlu0 %5672
    %v5675 = vsel %vm335, %v5643, 0
    %v5678 = vsel %vm335, %v5645, 0
    %v5681 = vsel %vm335, %v5647, 0
    %v5684 = vsel %vm335, %v5649, 0
    %v5687 = vsel %vm335, %v5651, 0
    %v5690 = vsel %vm335, %v5653, 0
    %v5693 = vsel %vm335, %v5655, 0
    %v5696 = vsel %vm335, %v5657, 0
    %v5699 = vsel %vm335, %v5659, 0
    %v5702 = vsel %vm335, %v5661, 0
    %v5705 = vsel %vm335, %v5663, 0
    %v5708 = vsel %vm335, %v5665, 0
    %v5711 = vsel %vm335, %v5667, 0
    %v5714 = vsel %vm335, %v5669, 0
    %v5717 = vsel %vm335, %v5671, 0
    %v5720 = vsel %vm335, %v5673, 0
    %5722 = vmatprep.subr.bf16.mxu0 0
    %5723 = vmatpush1.bf16.xpose.msra.mxu0 %v5699
    %5724 = vmatprep.subr.bf16.mxu0 0
    %5725 = vmatpush1.bf16.xpose.msra.mxu0 %v5702
    %5726 = vmatprep.subr.bf16.mxu0 0
    %5727 = vmatpush1.bf16.xpose.msra.mxu0 %v5705
    %5728 = vmatprep.subr.bf16.mxu0 0
    %5729 = vmatpush1.bf16.xpose.msra.mxu0 %v5708
    %5730 = vmatprep.subr.bf16.mxu0 0
    %5731 = vmatpush1.bf16.xpose.msra.mxu0 %v5711
    %5732 = vmatprep.subr.bf16.mxu0 0
    %5733 = vmatpush1.bf16.xpose.msra.mxu0 %v5714
    %5734 = vmatprep.subr.bf16.mxu0 0
    %5735 = vmatpush1.bf16.xpose.msra.mxu0 %v5717
    %5736 = vmatprep.subr.bf16.mxu0 0
    %5737 = vmatpush1.bf16.xpose.msra.mxu0 %v5720
    %5738 = vmatprep.subr.bf16.mxu0 0
    %5739 = vmatpush1.bf16.xpose.msra.mxu0 0
    %5740 = vmatprep.subr.bf16.mxu0 0
    %5741 = vmatpush1.bf16.xpose.msra.mxu0 0
    %5742 = vmatprep.subr.bf16.mxu0 0
    %5743 = vmatpush1.bf16.xpose.msra.mxu0 0
    %5744 = vmatprep.subr.bf16.mxu0 0
    %5745 = vmatpush1.bf16.xpose.msra.mxu0 0
    %5746 = vmatprep.subr.bf16.mxu0 0
    %5747 = vmatpush1.bf16.xpose.msra.mxu0 0
    %5748 = vmatprep.subr.bf16.mxu0 0
    %5749 = vmatpush1.bf16.xpose.msra.mxu0 0
    %5750 = vmatprep.subr.bf16.mxu0 0
    %5751 = vmatpush1.bf16.xpose.msra.mxu0 0
    %5752 = vmatprep.subr.bf16.mxu0 0
    %5753 = vmatpush1.bf16.xpose.msra.mxu0 0
    %5754 = vmatprep.mubr.bf16.mxu0 0
    %5755 = vmatmul.mubr.bf16.gmra.mrb[0].mxu0 %v5675
    %v5756 = vpop.f32.mrb[0].mxu0
    %v5757 = vadd.f32 0.0, %v5756
    %v5758 = vpop.f32.mrb[0].mxu0
    %v5759 = vpop.f32.mrb[0].mxu0
    %v5760 = vadd.f32 0.0, %v5759
    %v5761 = vpop.f32.mrb[0].mxu0
    %5762 = vmatprep.mubr.bf16.mxu0 0
    %5763 = vmatmul.mubr.bf16.gmra.mrb[0].mxu0 %v5678
    %v5764 = vpop.f32.mrb[0].mxu0
    %v5765 = vadd.f32 0.0, %v5764
    %v5766 = vpop.f32.mrb[0].mxu0
    %v5767 = vpop.f32.mrb[0].mxu0
    %v5768 = vadd.f32 0.0, %v5767
    %v5769 = vpop.f32.mrb[0].mxu0
    %5770 = vmatprep.mubr.bf16.mxu0 0
    %5771 = vmatmul.mubr.bf16.gmra.mrb[0].mxu0 %v5681
    %v5772 = vpop.f32.mrb[0].mxu0
    %v5773 = vadd.f32 0.0, %v5772
    %v5774 = vpop.f32.mrb[0].mxu0
    %v5775 = vpop.f32.mrb[0].mxu0
    %v5776 = vadd.f32 0.0, %v5775
    %v5777 = vpop.f32.mrb[0].mxu0
    %5778 = vmatprep.mubr.bf16.mxu0 0
    %5779 = vmatmul.mubr.bf16.gmra.mrb[0].mxu0 %v5684
    %v5780 = vpop.f32.mrb[0].mxu0
    %v5781 = vadd.f32 0.0, %v5780
    %v5782 = vpop.f32.mrb[0].mxu0
    %v5783 = vpop.f32.mrb[0].mxu0
    %v5784 = vadd.f32 0.0, %v5783
    %v5785 = vpop.f32.mrb[0].mxu0
    %5786 = vmatprep.mubr.bf16.mxu0 0
    %5787 = vmatmul.mubr.bf16.gmra.mrb[0].mxu0 %v5687
    %v5788 = vpop.f32.mrb[0].mxu0
    %v5789 = vadd.f32 0.0, %v5788
    %v5790 = vpop.f32.mrb[0].mxu0
    %v5791 = vpop.f32.mrb[0].mxu0
    %v5792 = vadd.f32 0.0, %v5791
    %v5793 = vpop.f32.mrb[0].mxu0
    %5794 = vmatprep.mubr.bf16.mxu0 0
    %5795 = vmatmul.mubr.bf16.gmra.mrb[0].mxu0 %v5690
    %v5796 = vpop.f32.mrb[0].mxu0
    %v5797 = vadd.f32 0.0, %v5796
    %v5798 = vpop.f32.mrb[0].mxu0
    %v5799 = vpop.f32.mrb[0].mxu0
    %v5800 = vadd.f32 0.0, %v5799
    %v5801 = vpop.f32.mrb[0].mxu0
    %5802 = vmatprep.mubr.bf16.mxu0 0
    %5803 = vmatmul.mubr.bf16.gmra.mrb[0].mxu0 %v5693
    %v5804 = vpop.f32.mrb[0].mxu0
    %v5805 = vadd.f32 0.0, %v5804
    %v5806 = vpop.f32.mrb[0].mxu0
    %v5807 = vpop.f32.mrb[0].mxu0
    %v5808 = vadd.f32 0.0, %v5807
    %v5809 = vpop.f32.mrb[0].mxu0
    %5810 = vmatprep.mubr.bf16.mxu0 0
    %5811 = vmatmul.mubr.bf16.gmra.mrb[0].mxu0 %v5696
    %v5812 = vpop.f32.mrb[0].mxu0
    %v5813 = vadd.f32 0.0, %v5812
    %v5814 = vpop.f32.mrb[0].mxu0
    %v5815 = vpop.f32.mrb[0].mxu0
    %v5816 = vadd.f32 0.0, %v5815
    %v5817 = vpop.f32.mrb[0].mxu0
    %5818 = vdwg.mxu0
    %v5819 = vmul.f32 %v5757, 0.35355338
    %v5820 = vmul.f32 %v5760, 0.35355338
    %v5821 = vmul.f32 %v5765, 0.35355338
    %v5822 = vmul.f32 %v5768, 0.35355338
    %v5823 = vmul.f32 %v5773, 0.35355338
    %v5824 = vmul.f32 %v5776, 0.35355338
    %v5825 = vmul.f32 %v5781, 0.35355338
    %v5826 = vmul.f32 %v5784, 0.35355338
    %v5827 = vmul.f32 %v5789, 0.35355338
    %v5828 = vmul.f32 %v5792, 0.35355338
    %v5829 = vmul.f32 %v5797, 0.35355338
    %v5830 = vmul.f32 %v5800, 0.35355338
    %v5831 = vmul.f32 %v5805, 0.35355338
    %v5832 = vmul.f32 %v5808, 0.35355338
    %v5833 = vmul.f32 %v5813, 0.35355338
    %v5834 = vmul.f32 %v5816, 0.35355338
    %v5835 = vadd.f32 %v5819, %v140
    %v5836 = vadd.f32 %v5820, %v141
    %v5837 = vadd.f32 %v5821, %v142
    %v5838 = vadd.f32 %v5822, %v143
    %v5839 = vadd.f32 %v5823, %v144
    %v5840 = vadd.f32 %v5824, %v145
    %v5841 = vadd.f32 %v5825, %v146
    %v5842 = vadd.f32 %v5826, %v147
    %v5843 = vadd.f32 %v5827, %v148
    %v5844 = vadd.f32 %v5828, %v149
    %v5845 = vadd.f32 %v5829, %v150
    %v5846 = vadd.f32 %v5830, %v151
    %v5847 = vadd.f32 %v5831, %v152
    %v5848 = vadd.f32 %v5832, %v153
    %v5849 = vadd.f32 %v5833, %v154
    %v5850 = vadd.f32 %v5834, %v155
    %5851 = vmax.xlane.f32.xlu0 %v5835
    %v5852 = vpop.xlane.xlu0 %5851
    %5853 = vmax.xlane.f32.xlu0 %v5836
    %v5854 = vpop.xlane.xlu0 %5853
    %5855 = vmax.xlane.f32.xlu0 %v5837
    %v5856 = vpop.xlane.xlu0 %5855
    %5857 = vmax.xlane.f32.xlu0 %v5838
    %v5858 = vpop.xlane.xlu0 %5857
    %5859 = vmax.xlane.f32.xlu0 %v5839
    %v5860 = vpop.xlane.xlu0 %5859
    %5861 = vmax.xlane.f32.xlu0 %v5840
    %v5862 = vpop.xlane.xlu0 %5861
    %5863 = vmax.xlane.f32.xlu0 %v5841
    %v5864 = vpop.xlane.xlu0 %5863
    %5865 = vmax.xlane.f32.xlu0 %v5842
    %v5866 = vpop.xlane.xlu0 %5865
    %5867 = vmax.xlane.f32.xlu0 %v5843
    %v5868 = vpop.xlane.xlu0 %5867
    %5869 = vmax.xlane.f32.xlu0 %v5844
    %v5870 = vpop.xlane.xlu0 %5869
    %5871 = vmax.xlane.f32.xlu0 %v5845
    %v5872 = vpop.xlane.xlu0 %5871
    %5873 = vmax.xlane.f32.xlu0 %v5846
    %v5874 = vpop.xlane.xlu0 %5873
    %5875 = vmax.xlane.f32.xlu0 %v5847
    %v5876 = vpop.xlane.xlu0 %5875
    %5877 = vmax.xlane.f32.xlu0 %v5848
    %v5878 = vpop.xlane.xlu0 %5877
    %5879 = vmax.xlane.f32.xlu0 %v5849
    %v5880 = vpop.xlane.xlu0 %5879
    %5881 = vmax.xlane.f32.xlu0 %v5850
    %v5882 = vpop.xlane.xlu0 %5881
    %v5883 = vsub.f32 %v5835, %v5852
    %v5884 = vsub.f32 %v5836, %v5854
    %v5885 = vsub.f32 %v5837, %v5856
    %v5886 = vsub.f32 %v5838, %v5858
    %v5887 = vsub.f32 %v5839, %v5860
    %v5888 = vsub.f32 %v5840, %v5862
    %v5889 = vsub.f32 %v5841, %v5864
    %v5890 = vsub.f32 %v5842, %v5866
    %v5891 = vsub.f32 %v5843, %v5868
    %v5892 = vsub.f32 %v5844, %v5870
    %v5893 = vsub.f32 %v5845, %v5872
    %v5894 = vsub.f32 %v5846, %v5874
    %v5895 = vsub.f32 %v5847, %v5876
    %v5896 = vsub.f32 %v5848, %v5878
    %v5897 = vsub.f32 %v5849, %v5880
    %v5898 = vsub.f32 %v5850, %v5882
    %v5899 = vmul.f32 %v5883, 1.442695
    %v5900 = vpow.pop %v5899
    %v5901 = vmul.f32 %v5884, 1.442695
    %v5902 = vpow.pop %v5901
    %v5903 = vmul.f32 %v5885, 1.442695
    %v5904 = vpow.pop %v5903
    %v5905 = vmul.f32 %v5886, 1.442695
    %v5906 = vpow.pop %v5905
    %v5907 = vmul.f32 %v5887, 1.442695
    %v5908 = vpow.pop %v5907
    %v5909 = vmul.f32 %v5888, 1.442695
    %v5910 = vpow.pop %v5909
    %v5911 = vmul.f32 %v5889, 1.442695
    %v5912 = vpow.pop %v5911
    %v5913 = vmul.f32 %v5890, 1.442695
    %v5914 = vpow.pop %v5913
    %v5915 = vmul.f32 %v5891, 1.442695
    %v5916 = vpow.pop %v5915
    %v5917 = vmul.f32 %v5892, 1.442695
    %v5918 = vpow.pop %v5917
    %v5919 = vmul.f32 %v5893, 1.442695
    %v5920 = vpow.pop %v5919
    %v5921 = vmul.f32 %v5894, 1.442695
    %v5922 = vpow.pop %v5921
    %v5923 = vmul.f32 %v5895, 1.442695
    %v5924 = vpow.pop %v5923
    %v5925 = vmul.f32 %v5896, 1.442695
    %v5926 = vpow.pop %v5925
    %v5927 = vmul.f32 %v5897, 1.442695
    %v5928 = vpow.pop %v5927
    %v5929 = vmul.f32 %v5898, 1.442695
    %v5930 = vpow.pop %v5929
    %5931 = vadd.xlane.f32.xlu0 %v5900
    %v5932 = vpop.xlane.xlu0 %5931
    %5933 = vadd.xlane.f32.xlu0 %v5902
    %v5934 = vpop.xlane.xlu0 %5933
    %5935 = vadd.xlane.f32.xlu0 %v5904
    %v5936 = vpop.xlane.xlu0 %5935
    %5937 = vadd.xlane.f32.xlu0 %v5906
    %v5938 = vpop.xlane.xlu0 %5937
    %5939 = vadd.xlane.f32.xlu0 %v5908
    %v5940 = vpop.xlane.xlu0 %5939
    %5941 = vadd.xlane.f32.xlu0 %v5910
    %v5942 = vpop.xlane.xlu0 %5941
    %5943 = vadd.xlane.f32.xlu0 %v5912
    %v5944 = vpop.xlane.xlu0 %5943
    %5945 = vadd.xlane.f32.xlu0 %v5914
    %v5946 = vpop.xlane.xlu0 %5945
    %5947 = vadd.xlane.f32.xlu0 %v5916
    %v5948 = vpop.xlane.xlu0 %5947
    %5949 = vadd.xlane.f32.xlu0 %v5918
    %v5950 = vpop.xlane.xlu0 %5949
    %5951 = vadd.xlane.f32.xlu0 %v5920
    %v5952 = vpop.xlane.xlu0 %5951
    %5953 = vadd.xlane.f32.xlu0 %v5922
    %v5954 = vpop.xlane.xlu0 %5953
    %5955 = vadd.xlane.f32.xlu0 %v5924
    %v5956 = vpop.xlane.xlu0 %5955
    %5957 = vadd.xlane.f32.xlu0 %v5926
    %v5958 = vpop.xlane.xlu0 %5957
    %5959 = vadd.xlane.f32.xlu0 %v5928
    %v5960 = vpop.xlane.xlu0 %5959
    %5961 = vadd.xlane.f32.xlu0 %v5930
    %v5962 = vpop.xlane.xlu0 %5961
    %v5963 = vrcp.pop %v5932
    %v5964 = vrcp.pop %v5934
    %v5965 = vrcp.pop %v5936
    %v5966 = vrcp.pop %v5938
    %v5967 = vrcp.pop %v5940
    %v5968 = vrcp.pop %v5942
    %v5969 = vrcp.pop %v5944
    %v5970 = vrcp.pop %v5946
    %v5971 = vrcp.pop %v5948
    %v5972 = vrcp.pop %v5950
    %v5973 = vrcp.pop %v5952
    %v5974 = vrcp.pop %v5954
    %v5975 = vrcp.pop %v5956
    %v5976 = vrcp.pop %v5958
    %v5977 = vrcp.pop %v5960
    %v5978 = vrcp.pop %v5962
    %v5979 = vmul.f32 %v5900, %v5963
    %v5980 = vmul.f32 %v5902, %v5964
    %v5981 = vmul.f32 %v5904, %v5965
    %v5982 = vmul.f32 %v5906, %v5966
    %v5983 = vmul.f32 %v5908, %v5967
    %v5984 = vmul.f32 %v5910, %v5968
    %v5985 = vmul.f32 %v5912, %v5969
    %v5986 = vmul.f32 %v5914, %v5970
    %v5987 = vmul.f32 %v5916, %v5971
    %v5988 = vmul.f32 %v5918, %v5972
    %v5989 = vmul.f32 %v5920, %v5973
    %v5990 = vmul.f32 %v5922, %v5974
    %v5991 = vmul.f32 %v5924, %v5975
    %v5992 = vmul.f32 %v5926, %v5976
    %v5993 = vmul.f32 %v5928, %v5977
    %v5994 = vmul.f32 %v5930, %v5978
    %v5995 = vpack.c.bf16 %v5980, %v5979
    %v5996 = vpack.c.bf16 %v5982, %v5981
    %v5997 = vpack.c.bf16 %v5984, %v5983
    %v5998 = vpack.c.bf16 %v5986, %v5985
    %v5999 = vpack.c.bf16 %v5988, %v5987
    %v6000 = vpack.c.bf16 %v5990, %v5989
    %v6001 = vpack.c.bf16 %v5992, %v5991
    %v6002 = vpack.c.bf16 %v5994, %v5993
    %v6003 = vpack.c.bf16 %v5583, %v5580
    %v6004 = vpack.c.bf16 %v5591, %v5588
    %v6005 = vpack.c.bf16 %v5599, %v5596
    %v6006 = vpack.c.bf16 %v5607, %v5604
    %v6007 = vpack.c.bf16 %v5615, %v5612
    %v6008 = vpack.c.bf16 %v5623, %v5620
    %v6009 = vpack.c.bf16 %v5631, %v5628
    %v6010 = vpack.c.bf16 %v5639, %v5636
    %6011 = vmatprep.subr.bf16.mxu0 0
    %6012 = vmatpush1.bf16.msra.mxu0 %v6003
    %6013 = vmatprep.subr.bf16.mxu0 0
    %6014 = vmatpush1.bf16.msra.mxu0 %v6004
    %6015 = vmatprep.subr.bf16.mxu0 0
    %6016 = vmatpush1.bf16.msra.mxu0 %v6005
    %6017 = vmatprep.subr.bf16.mxu0 0
    %6018 = vmatpush1.bf16.msra.mxu0 %v6006
    %6019 = vmatprep.subr.bf16.mxu0 0
    %6020 = vmatpush1.bf16.msra.mxu0 %v6007
    %6021 = vmatprep.subr.bf16.mxu0 0
    %6022 = vmatpush1.bf16.msra.mxu0 %v6008
    %6023 = vmatprep.subr.bf16.mxu0 0
    %6024 = vmatpush1.bf16.msra.mxu0 %v6009
    %6025 = vmatprep.subr.bf16.mxu0 0
    %6026 = vmatpush1.bf16.msra.mxu0 %v6010
    %6027 = vmatprep.subr.bf16.mxu0 0
    %6028 = vmatpush1.bf16.msra.mxu0 0
    %6029 = vmatprep.subr.bf16.mxu0 0
    %6030 = vmatpush1.bf16.msra.mxu0 0
    %6031 = vmatprep.subr.bf16.mxu0 0
    %6032 = vmatpush1.bf16.msra.mxu0 0
    %6033 = vmatprep.subr.bf16.mxu0 0
    %6034 = vmatpush1.bf16.msra.mxu0 0
    %6035 = vmatprep.subr.bf16.mxu0 0
    %6036 = vmatpush1.bf16.msra.mxu0 0
    %6037 = vmatprep.subr.bf16.mxu0 0
    %6038 = vmatpush1.bf16.msra.mxu0 0
    %6039 = vmatprep.subr.bf16.mxu0 0
    %6040 = vmatpush1.bf16.msra.mxu0 0
    %6041 = vmatprep.subr.bf16.mxu0 0
    %6042 = vmatpush1.bf16.msra.mxu0 0
    %6043 = vmatprep.mubr.bf16.mxu0 0
    %6044 = vmatmul.mubr.bf16.gmra.mrb[0].mxu0 %v5995
    %v6045 = vpop.f32.mrb[0].mxu0
    %v6046 = vadd.f32 0.0, %v6045
    %v6047 = vpop.f32.mrb[0].mxu0
    %v6048 = vpop.f32.mrb[0].mxu0
    %v6049 = vadd.f32 0.0, %v6048
    %v6050 = vpop.f32.mrb[0].mxu0
    %6051 = vmatprep.mubr.bf16.mxu0 0
    %6052 = vmatmul.mubr.bf16.gmra.mrb[0].mxu0 %v5996
    %v6053 = vpop.f32.mrb[0].mxu0
    %v6054 = vadd.f32 0.0, %v6053
    %v6055 = vpop.f32.mrb[0].mxu0
    %v6056 = vpop.f32.mrb[0].mxu0
    %v6057 = vadd.f32 0.0, %v6056
    %v6058 = vpop.f32.mrb[0].mxu0
    %6059 = vmatprep.mubr.bf16.mxu0 0
    %6060 = vmatmul.mubr.bf16.gmra.mrb[0].mxu0 %v5997
    %v6061 = vpop.f32.mrb[0].mxu0
    %v6062 = vadd.f32 0.0, %v6061
    %v6063 = vpop.f32.mrb[0].mxu0
    %v6064 = vpop.f32.mrb[0].mxu0
    %v6065 = vadd.f32 0.0, %v6064
    %v6066 = vpop.f32.mrb[0].mxu0
    %6067 = vmatprep.mubr.bf16.mxu0 0
    %6068 = vmatmul.mubr.bf16.gmra.mrb[0].mxu0 %v5998
    %v6069 = vpop.f32.mrb[0].mxu0
    %v6070 = vadd.f32 0.0, %v6069
    %v6071 = vpop.f32.mrb[0].mxu0
    %v6072 = vpop.f32.mrb[0].mxu0
    %v6073 = vadd.f32 0.0, %v6072
    %v6074 = vpop.f32.mrb[0].mxu0
    %6075 = vmatprep.mubr.bf16.mxu0 0
    %6076 = vmatmul.mubr.bf16.gmra.mrb[0].mxu0 %v5999
    %v6077 = vpop.f32.mrb[0].mxu0
    %v6078 = vadd.f32 0.0, %v6077
    %v6079 = vpop.f32.mrb[0].mxu0
    %v6080 = vpop.f32.mrb[0].mxu0
    %v6081 = vadd.f32 0.0, %v6080
    %v6082 = vpop.f32.mrb[0].mxu0
    %6083 = vmatprep.mubr.bf16.mxu0 0
    %6084 = vmatmul.mubr.bf16.gmra.mrb[0].mxu0 %v6000
    %v6085 = vpop.f32.mrb[0].mxu0
    %v6086 = vadd.f32 0.0, %v6085
    %v6087 = vpop.f32.mrb[0].mxu0
    %v6088 = vpop.f32.mrb[0].mxu0
    %v6089 = vadd.f32 0.0, %v6088
    %v6090 = vpop.f32.mrb[0].mxu0
    %6091 = vmatprep.mubr.bf16.mxu0 0
    %6092 = vmatmul.mubr.bf16.gmra.mrb[0].mxu0 %v6001
    %v6093 = vpop.f32.mrb[0].mxu0
    %v6094 = vadd.f32 0.0, %v6093
    %v6095 = vpop.f32.mrb[0].mxu0
    %v6096 = vpop.f32.mrb[0].mxu0
    %v6097 = vadd.f32 0.0, %v6096
    %v6098 = vpop.f32.mrb[0].mxu0
    %6099 = vmatprep.mubr.bf16.mxu0 0
    %6100 = vmatmul.mubr.bf16.gmra.mrb[0].mxu0 %v6002
    %v6101 = vpop.f32.mrb[0].mxu0
    %v6102 = vadd.f32 0.0, %v6101
    %v6103 = vpop.f32.mrb[0].mxu0
    %v6104 = vpop.f32.mrb[0].mxu0
    %v6105 = vadd.f32 0.0, %v6104
    %v6106 = vpop.f32.mrb[0].mxu0
    %6107 = vdwg.mxu0
    %6108 = vmatprep.subr.bf16.mxu0 0
    %6109 = vmatpush1.bf16.msra.mxu0 %v5492
    %6110 = vmatprep.subr.bf16.mxu0 0
    %6111 = vmatpush1.bf16.msra.mxu0 %v5493
    %6112 = vmatprep.subr.bf16.mxu0 0
    %6113 = vmatpush1.bf16.msra.mxu0 %v5494
    %6114 = vmatprep.subr.bf16.mxu0 0
    %6115 = vmatpush1.bf16.msra.mxu0 %v5495
    %6116 = vmatprep.subr.bf16.mxu0 0
    %6117 = vmatpush1.bf16.msra.mxu0 %v5496
    %6118 = vmatprep.subr.bf16.mxu0 0
    %6119 = vmatpush1.bf16.msra.mxu0 %v5497
    %6120 = vmatprep.subr.bf16.mxu0 0
    %6121 = vmatpush1.bf16.msra.mxu0 %v5498
    %6122 = vmatprep.subr.bf16.mxu0 0
    %6123 = vmatpush1.bf16.msra.mxu0 %v5499
    %6124 = vmatprep.subr.bf16.mxu0 0
    %6125 = vmatpush1.bf16.msra.mxu0 0
    %6126 = vmatprep.subr.bf16.mxu0 0
    %6127 = vmatpush1.bf16.msra.mxu0 0
    %6128 = vmatprep.subr.bf16.mxu0 0
    %6129 = vmatpush1.bf16.msra.mxu0 0
    %6130 = vmatprep.subr.bf16.mxu0 0
    %6131 = vmatpush1.bf16.msra.mxu0 0
    %6132 = vmatprep.subr.bf16.mxu0 0
    %6133 = vmatpush1.bf16.msra.mxu0 0
    %6134 = vmatprep.subr.bf16.mxu0 0
    %6135 = vmatpush1.bf16.msra.mxu0 0
    %6136 = vmatprep.subr.bf16.mxu0 0
    %6137 = vmatpush1.bf16.msra.mxu0 0
    %6138 = vmatprep.subr.bf16.mxu0 0
    %6139 = vmatpush1.bf16.msra.mxu0 0
    %6140 = vmatprep.mubr.bf16.mxu0 0
    %6141 = vmatmul.mubr.bf16.gmra.mrb[0].mxu0 %v5484
    %v6142 = vpop.f32.mrb[0].mxu0
    %v6143 = vadd.f32 %v6046, %v6142
    %v6144 = vpop.f32.mrb[0].mxu0
    %v6145 = vpop.f32.mrb[0].mxu0
    %v6146 = vadd.f32 %v6049, %v6145
    %v6147 = vpop.f32.mrb[0].mxu0
    %6148 = vmatprep.mubr.bf16.mxu0 0
    %6149 = vmatmul.mubr.bf16.gmra.mrb[0].mxu0 %v5485
    %v6150 = vpop.f32.mrb[0].mxu0
    %v6151 = vadd.f32 %v6054, %v6150
    %v6152 = vpop.f32.mrb[0].mxu0
    %v6153 = vpop.f32.mrb[0].mxu0
    %v6154 = vadd.f32 %v6057, %v6153
    %v6155 = vpop.f32.mrb[0].mxu0
    %6156 = vmatprep.mubr.bf16.mxu0 0
    %6157 = vmatmul.mubr.bf16.gmra.mrb[0].mxu0 %v5486
    %v6158 = vpop.f32.mrb[0].mxu0
    %v6159 = vadd.f32 %v6062, %v6158
    %v6160 = vpop.f32.mrb[0].mxu0
    %v6161 = vpop.f32.mrb[0].mxu0
    %v6162 = vadd.f32 %v6065, %v6161
    %v6163 = vpop.f32.mrb[0].mxu0
    %6164 = vmatprep.mubr.bf16.mxu0 0
    %6165 = vmatmul.mubr.bf16.gmra.mrb[0].mxu0 %v5487
    %v6166 = vpop.f32.mrb[0].mxu0
    %v6167 = vadd.f32 %v6070, %v6166
    %v6168 = vpop.f32.mrb[0].mxu0
    %v6169 = vpop.f32.mrb[0].mxu0
    %v6170 = vadd.f32 %v6073, %v6169
    %v6171 = vpop.f32.mrb[0].mxu0
    %6172 = vmatprep.mubr.bf16.mxu0 0
    %6173 = vmatmul.mubr.bf16.gmra.mrb[0].mxu0 %v5488
    %v6174 = vpop.f32.mrb[0].mxu0
    %v6175 = vadd.f32 %v6078, %v6174
    %v6176 = vpop.f32.mrb[0].mxu0
    %v6177 = vpop.f32.mrb[0].mxu0
    %v6178 = vadd.f32 %v6081, %v6177
    %v6179 = vpop.f32.mrb[0].mxu0
    %6180 = vmatprep.mubr.bf16.mxu0 0
    %6181 = vmatmul.mubr.bf16.gmra.mrb[0].mxu0 %v5489
    %v6182 = vpop.f32.mrb[0].mxu0
    %v6183 = vadd.f32 %v6086, %v6182
    %v6184 = vpop.f32.mrb[0].mxu0
    %v6185 = vpop.f32.mrb[0].mxu0
    %v6186 = vadd.f32 %v6089, %v6185
    %v6187 = vpop.f32.mrb[0].mxu0
    %6188 = vmatprep.mubr.bf16.mxu0 0
    %6189 = vmatmul.mubr.bf16.gmra.mrb[0].mxu0 %v5490
    %v6190 = vpop.f32.mrb[0].mxu0
    %v6191 = vadd.f32 %v6094, %v6190
    %v6192 = vpop.f32.mrb[0].mxu0
    %v6193 = vpop.f32.mrb[0].mxu0
    %v6194 = vadd.f32 %v6097, %v6193
    %v6195 = vpop.f32.mrb[0].mxu0
    %6196 = vmatprep.mubr.bf16.mxu0 0
    %6197 = vmatmul.mubr.bf16.gmra.mrb[0].mxu0 %v5491
    %v6198 = vpop.f32.mrb[0].mxu0
    %v6199 = vadd.f32 %v6102, %v6198
    %v6200 = vpop.f32.mrb[0].mxu0
    %v6201 = vpop.f32.mrb[0].mxu0
    %v6202 = vadd.f32 %v6105, %v6201
    %v6203 = vpop.f32.mrb[0].mxu0
    %6204 = vdwg.mxu0
    %s6205 = scalar_lea.vmem [#allocation4], 24
    %v6206 = vld [vmem:[%s6205] sm:$0xf]
    %6207 = vrot.lane.b32.xlu0 %v4989, 48
    %v6208 = vpop.permute.xlu0 %6207
    %6209 = vrot.lane.b32.xlu0 %v4990, 48
    %v6210 = vpop.permute.xlu0 %6209
    %6211 = vrot.lane.b32.xlu0 %v4991, 48
    %v6212 = vpop.permute.xlu0 %6211
    %6213 = vrot.lane.b32.xlu0 %v4992, 48
    %v6214 = vpop.permute.xlu0 %6213
    %6215 = vrot.lane.b32.xlu0 %v4993, 48
    %v6216 = vpop.permute.xlu0 %6215
    %6217 = vrot.lane.b32.xlu0 %v4994, 48
    %v6218 = vpop.permute.xlu0 %6217
    %6219 = vrot.lane.b32.xlu0 %v4995, 48
    %v6220 = vpop.permute.xlu0 %6219
    %6221 = vrot.lane.b32.xlu0 %v4996, 48
    %v6222 = vpop.permute.xlu0 %6221
    %v6224 = vsel %vm335, %v6208, 0
    %v6227 = vsel %vm335, %v6210, 0
    %v6230 = vsel %vm335, %v6212, 0
    %v6233 = vsel %vm335, %v6214, 0
    %v6236 = vsel %vm335, %v6216, 0
    %v6239 = vsel %vm335, %v6218, 0
    %v6242 = vsel %vm335, %v6220, 0
    %v6245 = vsel %vm335, %v6222, 0
    %v6248 = vsel %vm360, %v6206, 0
    %6250 = vmatprep.subr.bf16.mxu0 0
    %6251 = vmatpush1.bf16.msra.mxu0 %v6248
    %6252 = vmatprep.subr.bf16.mxu0 0
    %6253 = vmatpush1.bf16.msra.mxu0 0
    %6254 = vmatprep.subr.bf16.mxu0 0
    %6255 = vmatpush1.bf16.msra.mxu0 0
    %6256 = vmatprep.subr.bf16.mxu0 0
    %6257 = vmatpush1.bf16.msra.mxu0 0
    %6258 = vmatprep.subr.bf16.mxu0 0
    %6259 = vmatpush1.bf16.msra.mxu0 0
    %6260 = vmatprep.subr.bf16.mxu0 0
    %6261 = vmatpush1.bf16.msra.mxu0 0
    %6262 = vmatprep.subr.bf16.mxu0 0
    %6263 = vmatpush1.bf16.msra.mxu0 0
    %6264 = vmatprep.subr.bf16.mxu0 0
    %6265 = vmatpush1.bf16.msra.mxu0 0
    %6266 = vmatprep.subr.bf16.mxu0 0
    %6267 = vmatpush1.bf16.msra.mxu0 0
    %6268 = vmatprep.subr.bf16.mxu0 0
    %6269 = vmatpush1.bf16.msra.mxu0 0
    %6270 = vmatprep.subr.bf16.mxu0 0
    %6271 = vmatpush1.bf16.msra.mxu0 0
    %6272 = vmatprep.subr.bf16.mxu0 0
    %6273 = vmatpush1.bf16.msra.mxu0 0
    %6274 = vmatprep.subr.bf16.mxu0 0
    %6275 = vmatpush1.bf16.msra.mxu0 0
    %6276 = vmatprep.subr.bf16.mxu0 0
    %6277 = vmatpush1.bf16.msra.mxu0 0
    %6278 = vmatprep.subr.bf16.mxu0 0
    %6279 = vmatpush1.bf16.msra.mxu0 0
    %6280 = vmatprep.subr.bf16.mxu0 0
    %6281 = vmatpush1.bf16.msra.mxu0 0
    %6282 = vmatprep.mubr.bf16.mxu0 0
    %6283 = vmatmul.mubr.bf16.gmra.mrb[0].mxu0 %v6224
    %v6284 = vpop.f32.mrb[0].mxu0
    %v6285 = vadd.f32 0.0, %v6284
    %v6286 = vpop.f32.mrb[0].mxu0
    %v6287 = vpop.f32.mrb[0].mxu0
    %v6288 = vadd.f32 0.0, %v6287
    %v6289 = vpop.f32.mrb[0].mxu0
    %6290 = vmatprep.mubr.bf16.mxu0 0
    %6291 = vmatmul.mubr.bf16.gmra.mrb[0].mxu0 %v6227
    %v6292 = vpop.f32.mrb[0].mxu0
    %v6293 = vadd.f32 0.0, %v6292
    %v6294 = vpop.f32.mrb[0].mxu0
    %v6295 = vpop.f32.mrb[0].mxu0
    %v6296 = vadd.f32 0.0, %v6295
    %v6297 = vpop.f32.mrb[0].mxu0
    %6298 = vmatprep.mubr.bf16.mxu0 0
    %6299 = vmatmul.mubr.bf16.gmra.mrb[0].mxu0 %v6230
    %v6300 = vpop.f32.mrb[0].mxu0
    %v6301 = vadd.f32 0.0, %v6300
    %v6302 = vpop.f32.mrb[0].mxu0
    %v6303 = vpop.f32.mrb[0].mxu0
    %v6304 = vadd.f32 0.0, %v6303
    %v6305 = vpop.f32.mrb[0].mxu0
    %6306 = vmatprep.mubr.bf16.mxu0 0
    %6307 = vmatmul.mubr.bf16.gmra.mrb[0].mxu0 %v6233
    %v6308 = vpop.f32.mrb[0].mxu0
    %v6309 = vadd.f32 0.0, %v6308
    %v6310 = vpop.f32.mrb[0].mxu0
    %v6311 = vpop.f32.mrb[0].mxu0
    %v6312 = vadd.f32 0.0, %v6311
    %v6313 = vpop.f32.mrb[0].mxu0
    %6314 = vmatprep.mubr.bf16.mxu0 0
    %6315 = vmatmul.mubr.bf16.gmra.mrb[0].mxu0 %v6236
    %v6316 = vpop.f32.mrb[0].mxu0
    %v6317 = vadd.f32 0.0, %v6316
    %v6318 = vpop.f32.mrb[0].mxu0
    %v6319 = vpop.f32.mrb[0].mxu0
    %v6320 = vadd.f32 0.0, %v6319
    %v6321 = vpop.f32.mrb[0].mxu0
    %6322 = vmatprep.mubr.bf16.mxu0 0
    %6323 = vmatmul.mubr.bf16.gmra.mrb[0].mxu0 %v6239
    %v6324 = vpop.f32.mrb[0].mxu0
    %v6325 = vadd.f32 0.0, %v6324
    %v6326 = vpop.f32.mrb[0].mxu0
    %v6327 = vpop.f32.mrb[0].mxu0
    %v6328 = vadd.f32 0.0, %v6327
    %v6329 = vpop.f32.mrb[0].mxu0
    %6330 = vmatprep.mubr.bf16.mxu0 0
    %6331 = vmatmul.mubr.bf16.gmra.mrb[0].mxu0 %v6242
    %v6332 = vpop.f32.mrb[0].mxu0
    %v6333 = vadd.f32 0.0, %v6332
    %v6334 = vpop.f32.mrb[0].mxu0
    %v6335 = vpop.f32.mrb[0].mxu0
    %v6336 = vadd.f32 0.0, %v6335
    %v6337 = vpop.f32.mrb[0].mxu0
    %6338 = vmatprep.mubr.bf16.mxu0 0
    %6339 = vmatmul.mubr.bf16.gmra.mrb[0].mxu0 %v6245
    %v6340 = vpop.f32.mrb[0].mxu0
    %v6341 = vadd.f32 0.0, %v6340
    %v6342 = vpop.f32.mrb[0].mxu0
    %v6343 = vpop.f32.mrb[0].mxu0
    %v6344 = vadd.f32 0.0, %v6343
    %v6345 = vpop.f32.mrb[0].mxu0
    %6346 = vdwg.mxu0
    %6347 = vrot.lane.b32.xlu0 %v4989, 112
    %v6348 = vpop.permute.xlu0 %6347
    %6349 = vrot.lane.b32.xlu0 %v4990, 112
    %v6350 = vpop.permute.xlu0 %6349
    %6351 = vrot.lane.b32.xlu0 %v4991, 112
    %v6352 = vpop.permute.xlu0 %6351
    %6353 = vrot.lane.b32.xlu0 %v4992, 112
    %v6354 = vpop.permute.xlu0 %6353
    %6355 = vrot.lane.b32.xlu0 %v4993, 112
    %v6356 = vpop.permute.xlu0 %6355
    %6357 = vrot.lane.b32.xlu0 %v4994, 112
    %v6358 = vpop.permute.xlu0 %6357
    %6359 = vrot.lane.b32.xlu0 %v4995, 112
    %v6360 = vpop.permute.xlu0 %6359
    %6361 = vrot.lane.b32.xlu0 %v4996, 112
    %v6362 = vpop.permute.xlu0 %6361
    %6363 = vrot.lane.b32.xlu0 %v4989, 80
    %v6364 = vpop.permute.xlu0 %6363
    %6365 = vrot.lane.b32.xlu0 %v4990, 80
    %v6366 = vpop.permute.xlu0 %6365
    %6367 = vrot.lane.b32.xlu0 %v4991, 80
    %v6368 = vpop.permute.xlu0 %6367
    %6369 = vrot.lane.b32.xlu0 %v4992, 80
    %v6370 = vpop.permute.xlu0 %6369
    %6371 = vrot.lane.b32.xlu0 %v4993, 80
    %v6372 = vpop.permute.xlu0 %6371
    %6373 = vrot.lane.b32.xlu0 %v4994, 80
    %v6374 = vpop.permute.xlu0 %6373
    %6375 = vrot.lane.b32.xlu0 %v4995, 80
    %v6376 = vpop.permute.xlu0 %6375
    %6377 = vrot.lane.b32.xlu0 %v4996, 80
    %v6378 = vpop.permute.xlu0 %6377
    %v6380 = vsel %vm335, %v6348, 0
    %v6383 = vsel %vm335, %v6350, 0
    %v6386 = vsel %vm335, %v6352, 0
    %v6389 = vsel %vm335, %v6354, 0
    %v6392 = vsel %vm335, %v6356, 0
    %v6395 = vsel %vm335, %v6358, 0
    %v6398 = vsel %vm335, %v6360, 0
    %v6401 = vsel %vm335, %v6362, 0
    %v6404 = vsel %vm335, %v6364, 0
    %v6407 = vsel %vm335, %v6366, 0
    %v6410 = vsel %vm335, %v6368, 0
    %v6413 = vsel %vm335, %v6370, 0
    %v6416 = vsel %vm335, %v6372, 0
    %v6419 = vsel %vm335, %v6374, 0
    %v6422 = vsel %vm335, %v6376, 0
    %v6425 = vsel %vm335, %v6378, 0
    %6427 = vmatprep.subr.bf16.mxu0 0
    %6428 = vmatpush1.bf16.xpose.msra.mxu0 %v6404
    %6429 = vmatprep.subr.bf16.mxu0 0
    %6430 = vmatpush1.bf16.xpose.msra.mxu0 %v6407
    %6431 = vmatprep.subr.bf16.mxu0 0
    %6432 = vmatpush1.bf16.xpose.msra.mxu0 %v6410
    %6433 = vmatprep.subr.bf16.mxu0 0
    %6434 = vmatpush1.bf16.xpose.msra.mxu0 %v6413
    %6435 = vmatprep.subr.bf16.mxu0 0
    %6436 = vmatpush1.bf16.xpose.msra.mxu0 %v6416
    %6437 = vmatprep.subr.bf16.mxu0 0
    %6438 = vmatpush1.bf16.xpose.msra.mxu0 %v6419
    %6439 = vmatprep.subr.bf16.mxu0 0
    %6440 = vmatpush1.bf16.xpose.msra.mxu0 %v6422
    %6441 = vmatprep.subr.bf16.mxu0 0
    %6442 = vmatpush1.bf16.xpose.msra.mxu0 %v6425
    %6443 = vmatprep.subr.bf16.mxu0 0
    %6444 = vmatpush1.bf16.xpose.msra.mxu0 0
    %6445 = vmatprep.subr.bf16.mxu0 0
    %6446 = vmatpush1.bf16.xpose.msra.mxu0 0
    %6447 = vmatprep.subr.bf16.mxu0 0
    %6448 = vmatpush1.bf16.xpose.msra.mxu0 0
    %6449 = vmatprep.subr.bf16.mxu0 0
    %6450 = vmatpush1.bf16.xpose.msra.mxu0 0
    %6451 = vmatprep.subr.bf16.mxu0 0
    %6452 = vmatpush1.bf16.xpose.msra.mxu0 0
    %6453 = vmatprep.subr.bf16.mxu0 0
    %6454 = vmatpush1.bf16.xpose.msra.mxu0 0
    %6455 = vmatprep.subr.bf16.mxu0 0
    %6456 = vmatpush1.bf16.xpose.msra.mxu0 0
    %6457 = vmatprep.subr.bf16.mxu0 0
    %6458 = vmatpush1.bf16.xpose.msra.mxu0 0
    %6459 = vmatprep.mubr.bf16.mxu0 0
    %6460 = vmatmul.mubr.bf16.gmra.mrb[0].mxu0 %v6380
    %v6461 = vpop.f32.mrb[0].mxu0
    %v6462 = vadd.f32 0.0, %v6461
    %v6463 = vpop.f32.mrb[0].mxu0
    %v6464 = vpop.f32.mrb[0].mxu0
    %v6465 = vadd.f32 0.0, %v6464
    %v6466 = vpop.f32.mrb[0].mxu0
    %6467 = vmatprep.mubr.bf16.mxu0 0
    %6468 = vmatmul.mubr.bf16.gmra.mrb[0].mxu0 %v6383
    %v6469 = vpop.f32.mrb[0].mxu0
    %v6470 = vadd.f32 0.0, %v6469
    %v6471 = vpop.f32.mrb[0].mxu0
    %v6472 = vpop.f32.mrb[0].mxu0
    %v6473 = vadd.f32 0.0, %v6472
    %v6474 = vpop.f32.mrb[0].mxu0
    %6475 = vmatprep.mubr.bf16.mxu0 0
    %6476 = vmatmul.mubr.bf16.gmra.mrb[0].mxu0 %v6386
    %v6477 = vpop.f32.mrb[0].mxu0
    %v6478 = vadd.f32 0.0, %v6477
    %v6479 = vpop.f32.mrb[0].mxu0
    %v6480 = vpop.f32.mrb[0].mxu0
    %v6481 = vadd.f32 0.0, %v6480
    %v6482 = vpop.f32.mrb[0].mxu0
    %6483 = vmatprep.mubr.bf16.mxu0 0
    %6484 = vmatmul.mubr.bf16.gmra.mrb[0].mxu0 %v6389
    %v6485 = vpop.f32.mrb[0].mxu0
    %v6486 = vadd.f32 0.0, %v6485
    %v6487 = vpop.f32.mrb[0].mxu0
    %v6488 = vpop.f32.mrb[0].mxu0
    %v6489 = vadd.f32 0.0, %v6488
    %v6490 = vpop.f32.mrb[0].mxu0
    %6491 = vmatprep.mubr.bf16.mxu0 0
    %6492 = vmatmul.mubr.bf16.gmra.mrb[0].mxu0 %v6392
    %v6493 = vpop.f32.mrb[0].mxu0
    %v6494 = vadd.f32 0.0, %v6493
    %v6495 = vpop.f32.mrb[0].mxu0
    %v6496 = vpop.f32.mrb[0].mxu0
    %v6497 = vadd.f32 0.0, %v6496
    %v6498 = vpop.f32.mrb[0].mxu0
    %6499 = vmatprep.mubr.bf16.mxu0 0
    %6500 = vmatmul.mubr.bf16.gmra.mrb[0].mxu0 %v6395
    %v6501 = vpop.f32.mrb[0].mxu0
    %v6502 = vadd.f32 0.0, %v6501
    %v6503 = vpop.f32.mrb[0].mxu0
    %v6504 = vpop.f32.mrb[0].mxu0
    %v6505 = vadd.f32 0.0, %v6504
    %v6506 = vpop.f32.mrb[0].mxu0
    %6507 = vmatprep.mubr.bf16.mxu0 0
    %6508 = vmatmul.mubr.bf16.gmra.mrb[0].mxu0 %v6398
    %v6509 = vpop.f32.mrb[0].mxu0
    %v6510 = vadd.f32 0.0, %v6509
    %v6511 = vpop.f32.mrb[0].mxu0
    %v6512 = vpop.f32.mrb[0].mxu0
    %v6513 = vadd.f32 0.0, %v6512
    %v6514 = vpop.f32.mrb[0].mxu0
    %6515 = vmatprep.mubr.bf16.mxu0 0
    %6516 = vmatmul.mubr.bf16.gmra.mrb[0].mxu0 %v6401
    %v6517 = vpop.f32.mrb[0].mxu0
    %v6518 = vadd.f32 0.0, %v6517
    %v6519 = vpop.f32.mrb[0].mxu0
    %v6520 = vpop.f32.mrb[0].mxu0
    %v6521 = vadd.f32 0.0, %v6520
    %v6522 = vpop.f32.mrb[0].mxu0
    %6523 = vdwg.mxu0
    %v6524 = vmul.f32 %v6462, 0.35355338
    %v6525 = vmul.f32 %v6465, 0.35355338
    %v6526 = vmul.f32 %v6470, 0.35355338
    %v6527 = vmul.f32 %v6473, 0.35355338
    %v6528 = vmul.f32 %v6478, 0.35355338
    %v6529 = vmul.f32 %v6481, 0.35355338
    %v6530 = vmul.f32 %v6486, 0.35355338
    %v6531 = vmul.f32 %v6489, 0.35355338
    %v6532 = vmul.f32 %v6494, 0.35355338
    %v6533 = vmul.f32 %v6497, 0.35355338
    %v6534 = vmul.f32 %v6502, 0.35355338
    %v6535 = vmul.f32 %v6505, 0.35355338
    %v6536 = vmul.f32 %v6510, 0.35355338
    %v6537 = vmul.f32 %v6513, 0.35355338
    %v6538 = vmul.f32 %v6518, 0.35355338
    %v6539 = vmul.f32 %v6521, 0.35355338
    %v6540 = vadd.f32 %v6524, %v140
    %v6541 = vadd.f32 %v6525, %v141
    %v6542 = vadd.f32 %v6526, %v142
    %v6543 = vadd.f32 %v6527, %v143
    %v6544 = vadd.f32 %v6528, %v144
    %v6545 = vadd.f32 %v6529, %v145
    %v6546 = vadd.f32 %v6530, %v146
    %v6547 = vadd.f32 %v6531, %v147
    %v6548 = vadd.f32 %v6532, %v148
    %v6549 = vadd.f32 %v6533, %v149
    %v6550 = vadd.f32 %v6534, %v150
    %v6551 = vadd.f32 %v6535, %v151
    %v6552 = vadd.f32 %v6536, %v152
    %v6553 = vadd.f32 %v6537, %v153
    %v6554 = vadd.f32 %v6538, %v154
    %v6555 = vadd.f32 %v6539, %v155
    %6556 = vmax.xlane.f32.xlu0 %v6540
    %v6557 = vpop.xlane.xlu0 %6556
    %6558 = vmax.xlane.f32.xlu0 %v6541
    %v6559 = vpop.xlane.xlu0 %6558
    %6560 = vmax.xlane.f32.xlu0 %v6542
    %v6561 = vpop.xlane.xlu0 %6560
    %6562 = vmax.xlane.f32.xlu0 %v6543
    %v6563 = vpop.xlane.xlu0 %6562
    %6564 = vmax.xlane.f32.xlu0 %v6544
    %v6565 = vpop.xlane.xlu0 %6564
    %6566 = vmax.xlane.f32.xlu0 %v6545
    %v6567 = vpop.xlane.xlu0 %6566
    %6568 = vmax.xlane.f32.xlu0 %v6546
    %v6569 = vpop.xlane.xlu0 %6568
    %6570 = vmax.xlane.f32.xlu0 %v6547
    %v6571 = vpop.xlane.xlu0 %6570
    %6572 = vmax.xlane.f32.xlu0 %v6548
    %v6573 = vpop.xlane.xlu0 %6572
    %6574 = vmax.xlane.f32.xlu0 %v6549
    %v6575 = vpop.xlane.xlu0 %6574
    %6576 = vmax.xlane.f32.xlu0 %v6550
    %v6577 = vpop.xlane.xlu0 %6576
    %6578 = vmax.xlane.f32.xlu0 %v6551
    %v6579 = vpop.xlane.xlu0 %6578
    %6580 = vmax.xlane.f32.xlu0 %v6552
    %v6581 = vpop.xlane.xlu0 %6580
    %6582 = vmax.xlane.f32.xlu0 %v6553
    %v6583 = vpop.xlane.xlu0 %6582
    %6584 = vmax.xlane.f32.xlu0 %v6554
    %v6585 = vpop.xlane.xlu0 %6584
    %6586 = vmax.xlane.f32.xlu0 %v6555
    %v6587 = vpop.xlane.xlu0 %6586
    %v6588 = vsub.f32 %v6540, %v6557
    %v6589 = vsub.f32 %v6541, %v6559
    %v6590 = vsub.f32 %v6542, %v6561
    %v6591 = vsub.f32 %v6543, %v6563
    %v6592 = vsub.f32 %v6544, %v6565
    %v6593 = vsub.f32 %v6545, %v6567
    %v6594 = vsub.f32 %v6546, %v6569
    %v6595 = vsub.f32 %v6547, %v6571
    %v6596 = vsub.f32 %v6548, %v6573
    %v6597 = vsub.f32 %v6549, %v6575
    %v6598 = vsub.f32 %v6550, %v6577
    %v6599 = vsub.f32 %v6551, %v6579
    %v6600 = vsub.f32 %v6552, %v6581
    %v6601 = vsub.f32 %v6553, %v6583
    %v6602 = vsub.f32 %v6554, %v6585
    %v6603 = vsub.f32 %v6555, %v6587
    %v6604 = vmul.f32 %v6588, 1.442695
    %v6605 = vpow.pop %v6604
    %v6606 = vmul.f32 %v6589, 1.442695
    %v6607 = vpow.pop %v6606
    %v6608 = vmul.f32 %v6590, 1.442695
    %v6609 = vpow.pop %v6608
    %v6610 = vmul.f32 %v6591, 1.442695
    %v6611 = vpow.pop %v6610
    %v6612 = vmul.f32 %v6592, 1.442695
    %v6613 = vpow.pop %v6612
    %v6614 = vmul.f32 %v6593, 1.442695
    %v6615 = vpow.pop %v6614
    %v6616 = vmul.f32 %v6594, 1.442695
    %v6617 = vpow.pop %v6616
    %v6618 = vmul.f32 %v6595, 1.442695
    %v6619 = vpow.pop %v6618
    %v6620 = vmul.f32 %v6596, 1.442695
    %v6621 = vpow.pop %v6620
    %v6622 = vmul.f32 %v6597, 1.442695
    %v6623 = vpow.pop %v6622
    %v6624 = vmul.f32 %v6598, 1.442695
    %v6625 = vpow.pop %v6624
    %v6626 = vmul.f32 %v6599, 1.442695
    %v6627 = vpow.pop %v6626
    %v6628 = vmul.f32 %v6600, 1.442695
    %v6629 = vpow.pop %v6628
    %v6630 = vmul.f32 %v6601, 1.442695
    %v6631 = vpow.pop %v6630
    %v6632 = vmul.f32 %v6602, 1.442695
    %v6633 = vpow.pop %v6632
    %v6634 = vmul.f32 %v6603, 1.442695
    %v6635 = vpow.pop %v6634
    %6636 = vadd.xlane.f32.xlu0 %v6605
    %v6637 = vpop.xlane.xlu0 %6636
    %6638 = vadd.xlane.f32.xlu0 %v6607
    %v6639 = vpop.xlane.xlu0 %6638
    %6640 = vadd.xlane.f32.xlu0 %v6609
    %v6641 = vpop.xlane.xlu0 %6640
    %6642 = vadd.xlane.f32.xlu0 %v6611
    %v6643 = vpop.xlane.xlu0 %6642
    %6644 = vadd.xlane.f32.xlu0 %v6613
    %v6645 = vpop.xlane.xlu0 %6644
    %6646 = vadd.xlane.f32.xlu0 %v6615
    %v6647 = vpop.xlane.xlu0 %6646
    %6648 = vadd.xlane.f32.xlu0 %v6617
    %v6649 = vpop.xlane.xlu0 %6648
    %6650 = vadd.xlane.f32.xlu0 %v6619
    %v6651 = vpop.xlane.xlu0 %6650
    %6652 = vadd.xlane.f32.xlu0 %v6621
    %v6653 = vpop.xlane.xlu0 %6652
    %6654 = vadd.xlane.f32.xlu0 %v6623
    %v6655 = vpop.xlane.xlu0 %6654
    %6656 = vadd.xlane.f32.xlu0 %v6625
    %v6657 = vpop.xlane.xlu0 %6656
    %6658 = vadd.xlane.f32.xlu0 %v6627
    %v6659 = vpop.xlane.xlu0 %6658
    %6660 = vadd.xlane.f32.xlu0 %v6629
    %v6661 = vpop.xlane.xlu0 %6660
    %6662 = vadd.xlane.f32.xlu0 %v6631
    %v6663 = vpop.xlane.xlu0 %6662
    %6664 = vadd.xlane.f32.xlu0 %v6633
    %v6665 = vpop.xlane.xlu0 %6664
    %6666 = vadd.xlane.f32.xlu0 %v6635
    %v6667 = vpop.xlane.xlu0 %6666
    %v6668 = vrcp.pop %v6637
    %v6669 = vrcp.pop %v6639
    %v6670 = vrcp.pop %v6641
    %v6671 = vrcp.pop %v6643
    %v6672 = vrcp.pop %v6645
    %v6673 = vrcp.pop %v6647
    %v6674 = vrcp.pop %v6649
    %v6675 = vrcp.pop %v6651
    %v6676 = vrcp.pop %v6653
    %v6677 = vrcp.pop %v6655
    %v6678 = vrcp.pop %v6657
    %v6679 = vrcp.pop %v6659
    %v6680 = vrcp.pop %v6661
    %v6681 = vrcp.pop %v6663
    %v6682 = vrcp.pop %v6665
    %v6683 = vrcp.pop %v6667
    %v6684 = vmul.f32 %v6605, %v6668
    %v6685 = vmul.f32 %v6607, %v6669
    %v6686 = vmul.f32 %v6609, %v6670
    %v6687 = vmul.f32 %v6611, %v6671
    %v6688 = vmul.f32 %v6613, %v6672
    %v6689 = vmul.f32 %v6615, %v6673
    %v6690 = vmul.f32 %v6617, %v6674
    %v6691 = vmul.f32 %v6619, %v6675
    %v6692 = vmul.f32 %v6621, %v6676
    %v6693 = vmul.f32 %v6623, %v6677
    %v6694 = vmul.f32 %v6625, %v6678
    %v6695 = vmul.f32 %v6627, %v6679
    %v6696 = vmul.f32 %v6629, %v6680
    %v6697 = vmul.f32 %v6631, %v6681
    %v6698 = vmul.f32 %v6633, %v6682
    %v6699 = vmul.f32 %v6635, %v6683
    %v6700 = vpack.c.bf16 %v6685, %v6684
    %v6701 = vpack.c.bf16 %v6687, %v6686
    %v6702 = vpack.c.bf16 %v6689, %v6688
    %v6703 = vpack.c.bf16 %v6691, %v6690
    %v6704 = vpack.c.bf16 %v6693, %v6692
    %v6705 = vpack.c.bf16 %v6695, %v6694
    %v6706 = vpack.c.bf16 %v6697, %v6696
    %v6707 = vpack.c.bf16 %v6699, %v6698
    %v6708 = vpack.c.bf16 %v6288, %v6285
    %v6709 = vpack.c.bf16 %v6296, %v6293
    %v6710 = vpack.c.bf16 %v6304, %v6301
    %v6711 = vpack.c.bf16 %v6312, %v6309
    %v6712 = vpack.c.bf16 %v6320, %v6317
    %v6713 = vpack.c.bf16 %v6328, %v6325
    %v6714 = vpack.c.bf16 %v6336, %v6333
    %v6715 = vpack.c.bf16 %v6344, %v6341
    %6716 = vmatprep.subr.bf16.mxu0 0
    %6717 = vmatpush1.bf16.msra.mxu0 %v6708
    %6718 = vmatprep.subr.bf16.mxu0 0
    %6719 = vmatpush1.bf16.msra.mxu0 %v6709
    %6720 = vmatprep.subr.bf16.mxu0 0
    %6721 = vmatpush1.bf16.msra.mxu0 %v6710
    %6722 = vmatprep.subr.bf16.mxu0 0
    %6723 = vmatpush1.bf16.msra.mxu0 %v6711
    %6724 = vmatprep.subr.bf16.mxu0 0
    %6725 = vmatpush1.bf16.msra.mxu0 %v6712
    %6726 = vmatprep.subr.bf16.mxu0 0
    %6727 = vmatpush1.bf16.msra.mxu0 %v6713
    %6728 = vmatprep.subr.bf16.mxu0 0
    %6729 = vmatpush1.bf16.msra.mxu0 %v6714
    %6730 = vmatprep.subr.bf16.mxu0 0
    %6731 = vmatpush1.bf16.msra.mxu0 %v6715
    %6732 = vmatprep.subr.bf16.mxu0 0
    %6733 = vmatpush1.bf16.msra.mxu0 0
    %6734 = vmatprep.subr.bf16.mxu0 0
    %6735 = vmatpush1.bf16.msra.mxu0 0
    %6736 = vmatprep.subr.bf16.mxu0 0
    %6737 = vmatpush1.bf16.msra.mxu0 0
    %6738 = vmatprep.subr.bf16.mxu0 0
    %6739 = vmatpush1.bf16.msra.mxu0 0
    %6740 = vmatprep.subr.bf16.mxu0 0
    %6741 = vmatpush1.bf16.msra.mxu0 0
    %6742 = vmatprep.subr.bf16.mxu0 0
    %6743 = vmatpush1.bf16.msra.mxu0 0
    %6744 = vmatprep.subr.bf16.mxu0 0
    %6745 = vmatpush1.bf16.msra.mxu0 0
    %6746 = vmatprep.subr.bf16.mxu0 0
    %6747 = vmatpush1.bf16.msra.mxu0 0
    %6748 = vmatprep.mubr.bf16.mxu0 0
    %6749 = vmatmul.mubr.bf16.gmra.mrb[0].mxu0 %v6700
    %v6750 = vpop.f32.mrb[0].mxu0
    %v6751 = vadd.f32 0.0, %v6750
    %v6752 = vpop.f32.mrb[0].mxu0
    %v6753 = vpop.f32.mrb[0].mxu0
    %v6754 = vadd.f32 0.0, %v6753
    %v6755 = vpop.f32.mrb[0].mxu0
    %6756 = vmatprep.mubr.bf16.mxu0 0
    %6757 = vmatmul.mubr.bf16.gmra.mrb[0].mxu0 %v6701
    %v6758 = vpop.f32.mrb[0].mxu0
    %v6759 = vadd.f32 0.0, %v6758
    %v6760 = vpop.f32.mrb[0].mxu0
    %v6761 = vpop.f32.mrb[0].mxu0
    %v6762 = vadd.f32 0.0, %v6761
    %v6763 = vpop.f32.mrb[0].mxu0
    %6764 = vmatprep.mubr.bf16.mxu0 0
    %6765 = vmatmul.mubr.bf16.gmra.mrb[0].mxu0 %v6702
    %v6766 = vpop.f32.mrb[0].mxu0
    %v6767 = vadd.f32 0.0, %v6766
    %v6768 = vpop.f32.mrb[0].mxu0
    %v6769 = vpop.f32.mrb[0].mxu0
    %v6770 = vadd.f32 0.0, %v6769
    %v6771 = vpop.f32.mrb[0].mxu0
    %6772 = vmatprep.mubr.bf16.mxu0 0
    %6773 = vmatmul.mubr.bf16.gmra.mrb[0].mxu0 %v6703
    %v6774 = vpop.f32.mrb[0].mxu0
    %v6775 = vadd.f32 0.0, %v6774
    %v6776 = vpop.f32.mrb[0].mxu0
    %v6777 = vpop.f32.mrb[0].mxu0
    %v6778 = vadd.f32 0.0, %v6777
    %v6779 = vpop.f32.mrb[0].mxu0
    %6780 = vmatprep.mubr.bf16.mxu0 0
    %6781 = vmatmul.mubr.bf16.gmra.mrb[0].mxu0 %v6704
    %v6782 = vpop.f32.mrb[0].mxu0
    %v6783 = vadd.f32 0.0, %v6782
    %v6784 = vpop.f32.mrb[0].mxu0
    %v6785 = vpop.f32.mrb[0].mxu0
    %v6786 = vadd.f32 0.0, %v6785
    %v6787 = vpop.f32.mrb[0].mxu0
    %6788 = vmatprep.mubr.bf16.mxu0 0
    %6789 = vmatmul.mubr.bf16.gmra.mrb[0].mxu0 %v6705
    %v6790 = vpop.f32.mrb[0].mxu0
    %v6791 = vadd.f32 0.0, %v6790
    %v6792 = vpop.f32.mrb[0].mxu0
    %v6793 = vpop.f32.mrb[0].mxu0
    %v6794 = vadd.f32 0.0, %v6793
    %v6795 = vpop.f32.mrb[0].mxu0
    %6796 = vmatprep.mubr.bf16.mxu0 0
    %6797 = vmatmul.mubr.bf16.gmra.mrb[0].mxu0 %v6706
    %v6798 = vpop.f32.mrb[0].mxu0
    %v6799 = vadd.f32 0.0, %v6798
    %v6800 = vpop.f32.mrb[0].mxu0
    %v6801 = vpop.f32.mrb[0].mxu0
    %v6802 = vadd.f32 0.0, %v6801
    %v6803 = vpop.f32.mrb[0].mxu0
    %6804 = vmatprep.mubr.bf16.mxu0 0
    %6805 = vmatmul.mubr.bf16.gmra.mrb[0].mxu0 %v6707
    %v6806 = vpop.f32.mrb[0].mxu0
    %v6807 = vadd.f32 0.0, %v6806
    %v6808 = vpop.f32.mrb[0].mxu0
    %v6809 = vpop.f32.mrb[0].mxu0
    %v6810 = vadd.f32 0.0, %v6809
    %v6811 = vpop.f32.mrb[0].mxu0
    %6812 = vdwg.mxu0
    %v6813 = vadd.f32 %v6143, %v6751
    %v6814 = vadd.f32 %v6146, %v6754
    %v6815 = vadd.f32 %v6151, %v6759
    %v6816 = vadd.f32 %v6154, %v6762
    %v6817 = vadd.f32 %v6159, %v6767
    %v6818 = vadd.f32 %v6162, %v6770
    %v6819 = vadd.f32 %v6167, %v6775
    %v6820 = vadd.f32 %v6170, %v6778
    %v6821 = vadd.f32 %v6175, %v6783
    %v6822 = vadd.f32 %v6178, %v6786
    %v6823 = vadd.f32 %v6183, %v6791
    %v6824 = vadd.f32 %v6186, %v6794
    %v6825 = vadd.f32 %v6191, %v6799
    %v6826 = vadd.f32 %v6194, %v6802
    %v6827 = vadd.f32 %v6199, %v6807
    %v6828 = vadd.f32 %v6202, %v6810
    %s6829 = scalar_lea.vmem [#allocation4], 28
    %v6830 = vld [vmem:[%s6829] sm:$0xf]
    %6831 = vrot.lane.b32.xlu0 %v4989, 40
    %v6832 = vpop.permute.xlu0 %6831
    %6833 = vrot.lane.b32.xlu0 %v4990, 40
    %v6834 = vpop.permute.xlu0 %6833
    %6835 = vrot.lane.b32.xlu0 %v4991, 40
    %v6836 = vpop.permute.xlu0 %6835
    %6837 = vrot.lane.b32.xlu0 %v4992, 40
    %v6838 = vpop.permute.xlu0 %6837
    %6839 = vrot.lane.b32.xlu0 %v4993, 40
    %v6840 = vpop.permute.xlu0 %6839
    %6841 = vrot.lane.b32.xlu0 %v4994, 40
    %v6842 = vpop.permute.xlu0 %6841
    %6843 = vrot.lane.b32.xlu0 %v4995, 40
    %v6844 = vpop.permute.xlu0 %6843
    %6845 = vrot.lane.b32.xlu0 %v4996, 40
    %v6846 = vpop.permute.xlu0 %6845
    %v6848 = vsel %vm335, %v6832, 0
    %v6851 = vsel %vm335, %v6834, 0
    %v6854 = vsel %vm335, %v6836, 0
    %v6857 = vsel %vm335, %v6838, 0
    %v6860 = vsel %vm335, %v6840, 0
    %v6863 = vsel %vm335, %v6842, 0
    %v6866 = vsel %vm335, %v6844, 0
    %v6869 = vsel %vm335, %v6846, 0
    %v6872 = vsel %vm360, %v6830, 0
    %6874 = vmatprep.subr.bf16.mxu0 0
    %6875 = vmatpush1.bf16.msra.mxu0 %v6872
    %6876 = vmatprep.subr.bf16.mxu0 0
    %6877 = vmatpush1.bf16.msra.mxu0 0
    %6878 = vmatprep.subr.bf16.mxu0 0
    %6879 = vmatpush1.bf16.msra.mxu0 0
    %6880 = vmatprep.subr.bf16.mxu0 0
    %6881 = vmatpush1.bf16.msra.mxu0 0
    %6882 = vmatprep.subr.bf16.mxu0 0
    %6883 = vmatpush1.bf16.msra.mxu0 0
    %6884 = vmatprep.subr.bf16.mxu0 0
    %6885 = vmatpush1.bf16.msra.mxu0 0
    %6886 = vmatprep.subr.bf16.mxu0 0
    %6887 = vmatpush1.bf16.msra.mxu0 0
    %6888 = vmatprep.subr.bf16.mxu0 0
    %6889 = vmatpush1.bf16.msra.mxu0 0
    %6890 = vmatprep.subr.bf16.mxu0 0
    %6891 = vmatpush1.bf16.msra.mxu0 0
    %6892 = vmatprep.subr.bf16.mxu0 0
    %6893 = vmatpush1.bf16.msra.mxu0 0
    %6894 = vmatprep.subr.bf16.mxu0 0
    %6895 = vmatpush1.bf16.msra.mxu0 0
    %6896 = vmatprep.subr.bf16.mxu0 0
    %6897 = vmatpush1.bf16.msra.mxu0 0
    %6898 = vmatprep.subr.bf16.mxu0 0
    %6899 = vmatpush1.bf16.msra.mxu0 0
    %6900 = vmatprep.subr.bf16.mxu0 0
    %6901 = vmatpush1.bf16.msra.mxu0 0
    %6902 = vmatprep.subr.bf16.mxu0 0
    %6903 = vmatpush1.bf16.msra.mxu0 0
    %6904 = vmatprep.subr.bf16.mxu0 0
    %6905 = vmatpush1.bf16.msra.mxu0 0
    %6906 = vmatprep.mubr.bf16.mxu0 0
    %6907 = vmatmul.mubr.bf16.gmra.mrb[0].mxu0 %v6848
    %v6908 = vpop.f32.mrb[0].mxu0
    %v6909 = vadd.f32 0.0, %v6908
    %v6910 = vpop.f32.mrb[0].mxu0
    %v6911 = vpop.f32.mrb[0].mxu0
    %v6912 = vadd.f32 0.0, %v6911
    %v6913 = vpop.f32.mrb[0].mxu0
    %6914 = vmatprep.mubr.bf16.mxu0 0
    %6915 = vmatmul.mubr.bf16.gmra.mrb[0].mxu0 %v6851
    %v6916 = vpop.f32.mrb[0].mxu0
    %v6917 = vadd.f32 0.0, %v6916
    %v6918 = vpop.f32.mrb[0].mxu0
    %v6919 = vpop.f32.mrb[0].mxu0
    %v6920 = vadd.f32 0.0, %v6919
    %v6921 = vpop.f32.mrb[0].mxu0
    %6922 = vmatprep.mubr.bf16.mxu0 0
    %6923 = vmatmul.mubr.bf16.gmra.mrb[0].mxu0 %v6854
    %v6924 = vpop.f32.mrb[0].mxu0
    %v6925 = vadd.f32 0.0, %v6924
    %v6926 = vpop.f32.mrb[0].mxu0
    %v6927 = vpop.f32.mrb[0].mxu0
    %v6928 = vadd.f32 0.0, %v6927
    %v6929 = vpop.f32.mrb[0].mxu0
    %6930 = vmatprep.mubr.bf16.mxu0 0
    %6931 = vmatmul.mubr.bf16.gmra.mrb[0].mxu0 %v6857
    %v6932 = vpop.f32.mrb[0].mxu0
    %v6933 = vadd.f32 0.0, %v6932
    %v6934 = vpop.f32.mrb[0].mxu0
    %v6935 = vpop.f32.mrb[0].mxu0
    %v6936 = vadd.f32 0.0, %v6935
    %v6937 = vpop.f32.mrb[0].mxu0
    %6938 = vmatprep.mubr.bf16.mxu0 0
    %6939 = vmatmul.mubr.bf16.gmra.mrb[0].mxu0 %v6860
    %v6940 = vpop.f32.mrb[0].mxu0
    %v6941 = vadd.f32 0.0, %v6940
    %v6942 = vpop.f32.mrb[0].mxu0
    %v6943 = vpop.f32.mrb[0].mxu0
    %v6944 = vadd.f32 0.0, %v6943
    %v6945 = vpop.f32.mrb[0].mxu0
    %6946 = vmatprep.mubr.bf16.mxu0 0
    %6947 = vmatmul.mubr.bf16.gmra.mrb[0].mxu0 %v6863
    %v6948 = vpop.f32.mrb[0].mxu0
    %v6949 = vadd.f32 0.0, %v6948
    %v6950 = vpop.f32.mrb[0].mxu0
    %v6951 = vpop.f32.mrb[0].mxu0
    %v6952 = vadd.f32 0.0, %v6951
    %v6953 = vpop.f32.mrb[0].mxu0
    %6954 = vmatprep.mubr.bf16.mxu0 0
    %6955 = vmatmul.mubr.bf16.gmra.mrb[0].mxu0 %v6866
    %v6956 = vpop.f32.mrb[0].mxu0
    %v6957 = vadd.f32 0.0, %v6956
    %v6958 = vpop.f32.mrb[0].mxu0
    %v6959 = vpop.f32.mrb[0].mxu0
    %v6960 = vadd.f32 0.0, %v6959
    %v6961 = vpop.f32.mrb[0].mxu0
    %6962 = vmatprep.mubr.bf16.mxu0 0
    %6963 = vmatmul.mubr.bf16.gmra.mrb[0].mxu0 %v6869
    %v6964 = vpop.f32.mrb[0].mxu0
    %v6965 = vadd.f32 0.0, %v6964
    %v6966 = vpop.f32.mrb[0].mxu0
    %v6967 = vpop.f32.mrb[0].mxu0
    %v6968 = vadd.f32 0.0, %v6967
    %v6969 = vpop.f32.mrb[0].mxu0
    %6970 = vdwg.mxu0
    %6971 = vrot.lane.b32.xlu0 %v4989, 104
    %v6972 = vpop.permute.xlu0 %6971
    %6973 = vrot.lane.b32.xlu0 %v4990, 104
    %v6974 = vpop.permute.xlu0 %6973
    %6975 = vrot.lane.b32.xlu0 %v4991, 104
    %v6976 = vpop.permute.xlu0 %6975
    %6977 = vrot.lane.b32.xlu0 %v4992, 104
    %v6978 = vpop.permute.xlu0 %6977
    %6979 = vrot.lane.b32.xlu0 %v4993, 104
    %v6980 = vpop.permute.xlu0 %6979
    %6981 = vrot.lane.b32.xlu0 %v4994, 104
    %v6982 = vpop.permute.xlu0 %6981
    %6983 = vrot.lane.b32.xlu0 %v4995, 104
    %v6984 = vpop.permute.xlu0 %6983
    %6985 = vrot.lane.b32.xlu0 %v4996, 104
    %v6986 = vpop.permute.xlu0 %6985
    %6987 = vrot.lane.b32.xlu0 %v4989, 72
    %v6988 = vpop.permute.xlu0 %6987
    %6989 = vrot.lane.b32.xlu0 %v4990, 72
    %v6990 = vpop.permute.xlu0 %6989
    %6991 = vrot.lane.b32.xlu0 %v4991, 72
    %v6992 = vpop.permute.xlu0 %6991
    %6993 = vrot.lane.b32.xlu0 %v4992, 72
    %v6994 = vpop.permute.xlu0 %6993
    %6995 = vrot.lane.b32.xlu0 %v4993, 72
    %v6996 = vpop.permute.xlu0 %6995
    %6997 = vrot.lane.b32.xlu0 %v4994, 72
    %v6998 = vpop.permute.xlu0 %6997
    %6999 = vrot.lane.b32.xlu0 %v4995, 72
    %v7000 = vpop.permute.xlu0 %6999
    %7001 = vrot.lane.b32.xlu0 %v4996, 72
    %v7002 = vpop.permute.xlu0 %7001
    %v7004 = vsel %vm335, %v6972, 0
    %v7007 = vsel %vm335, %v6974, 0
    %v7010 = vsel %vm335, %v6976, 0
    %v7013 = vsel %vm335, %v6978, 0
    %v7016 = vsel %vm335, %v6980, 0
    %v7019 = vsel %vm335, %v6982, 0
    %v7022 = vsel %vm335, %v6984, 0
    %v7025 = vsel %vm335, %v6986, 0
    %v7028 = vsel %vm335, %v6988, 0
    %v7031 = vsel %vm335, %v6990, 0
    %v7034 = vsel %vm335, %v6992, 0
    %v7037 = vsel %vm335, %v6994, 0
    %v7040 = vsel %vm335, %v6996, 0
    %v7043 = vsel %vm335, %v6998, 0
    %v7046 = vsel %vm335, %v7000, 0
    %v7049 = vsel %vm335, %v7002, 0
    %7051 = vmatprep.subr.bf16.mxu0 0
    %7052 = vmatpush1.bf16.xpose.msra.mxu0 %v7028
    %7053 = vmatprep.subr.bf16.mxu0 0
    %7054 = vmatpush1.bf16.xpose.msra.mxu0 %v7031
    %7055 = vmatprep.subr.bf16.mxu0 0
    %7056 = vmatpush1.bf16.xpose.msra.mxu0 %v7034
    %7057 = vmatprep.subr.bf16.mxu0 0
    %7058 = vmatpush1.bf16.xpose.msra.mxu0 %v7037
    %7059 = vmatprep.subr.bf16.mxu0 0
    %7060 = vmatpush1.bf16.xpose.msra.mxu0 %v7040
    %7061 = vmatprep.subr.bf16.mxu0 0
    %7062 = vmatpush1.bf16.xpose.msra.mxu0 %v7043
    %7063 = vmatprep.subr.bf16.mxu0 0
    %7064 = vmatpush1.bf16.xpose.msra.mxu0 %v7046
    %7065 = vmatprep.subr.bf16.mxu0 0
    %7066 = vmatpush1.bf16.xpose.msra.mxu0 %v7049
    %7067 = vmatprep.subr.bf16.mxu0 0
    %7068 = vmatpush1.bf16.xpose.msra.mxu0 0
    %7069 = vmatprep.subr.bf16.mxu0 0
    %7070 = vmatpush1.bf16.xpose.msra.mxu0 0
    %7071 = vmatprep.subr.bf16.mxu0 0
    %7072 = vmatpush1.bf16.xpose.msra.mxu0 0
    %7073 = vmatprep.subr.bf16.mxu0 0
    %7074 = vmatpush1.bf16.xpose.msra.mxu0 0
    %7075 = vmatprep.subr.bf16.mxu0 0
    %7076 = vmatpush1.bf16.xpose.msra.mxu0 0
    %7077 = vmatprep.subr.bf16.mxu0 0
    %7078 = vmatpush1.bf16.xpose.msra.mxu0 0
    %7079 = vmatprep.subr.bf16.mxu0 0
    %7080 = vmatpush1.bf16.xpose.msra.mxu0 0
    %7081 = vmatprep.subr.bf16.mxu0 0
    %7082 = vmatpush1.bf16.xpose.msra.mxu0 0
    %7083 = vmatprep.mubr.bf16.mxu0 0
    %7084 = vmatmul.mubr.bf16.gmra.mrb[0].mxu0 %v7004
    %v7085 = vpop.f32.mrb[0].mxu0
    %v7086 = vadd.f32 0.0, %v7085
    %v7087 = vpop.f32.mrb[0].mxu0
    %v7088 = vpop.f32.mrb[0].mxu0
    %v7089 = vadd.f32 0.0, %v7088
    %v7090 = vpop.f32.mrb[0].mxu0
    %7091 = vmatprep.mubr.bf16.mxu0 0
    %7092 = vmatmul.mubr.bf16.gmra.mrb[0].mxu0 %v7007
    %v7093 = vpop.f32.mrb[0].mxu0
    %v7094 = vadd.f32 0.0, %v7093
    %v7095 = vpop.f32.mrb[0].mxu0
    %v7096 = vpop.f32.mrb[0].mxu0
    %v7097 = vadd.f32 0.0, %v7096
    %v7098 = vpop.f32.mrb[0].mxu0
    %7099 = vmatprep.mubr.bf16.mxu0 0
    %7100 = vmatmul.mubr.bf16.gmra.mrb[0].mxu0 %v7010
    %v7101 = vpop.f32.mrb[0].mxu0
    %v7102 = vadd.f32 0.0, %v7101
    %v7103 = vpop.f32.mrb[0].mxu0
    %v7104 = vpop.f32.mrb[0].mxu0
    %v7105 = vadd.f32 0.0, %v7104
    %v7106 = vpop.f32.mrb[0].mxu0
    %7107 = vmatprep.mubr.bf16.mxu0 0
    %7108 = vmatmul.mubr.bf16.gmra.mrb[0].mxu0 %v7013
    %v7109 = vpop.f32.mrb[0].mxu0
    %v7110 = vadd.f32 0.0, %v7109
    %v7111 = vpop.f32.mrb[0].mxu0
    %v7112 = vpop.f32.mrb[0].mxu0
    %v7113 = vadd.f32 0.0, %v7112
    %v7114 = vpop.f32.mrb[0].mxu0
    %7115 = vmatprep.mubr.bf16.mxu0 0
    %7116 = vmatmul.mubr.bf16.gmra.mrb[0].mxu0 %v7016
    %v7117 = vpop.f32.mrb[0].mxu0
    %v7118 = vadd.f32 0.0, %v7117
    %v7119 = vpop.f32.mrb[0].mxu0
    %v7120 = vpop.f32.mrb[0].mxu0
    %v7121 = vadd.f32 0.0, %v7120
    %v7122 = vpop.f32.mrb[0].mxu0
    %7123 = vmatprep.mubr.bf16.mxu0 0
    %7124 = vmatmul.mubr.bf16.gmra.mrb[0].mxu0 %v7019
    %v7125 = vpop.f32.mrb[0].mxu0
    %v7126 = vadd.f32 0.0, %v7125
    %v7127 = vpop.f32.mrb[0].mxu0
    %v7128 = vpop.f32.mrb[0].mxu0
    %v7129 = vadd.f32 0.0, %v7128
    %v7130 = vpop.f32.mrb[0].mxu0
    %7131 = vmatprep.mubr.bf16.mxu0 0
    %7132 = vmatmul.mubr.bf16.gmra.mrb[0].mxu0 %v7022
    %v7133 = vpop.f32.mrb[0].mxu0
    %v7134 = vadd.f32 0.0, %v7133
    %v7135 = vpop.f32.mrb[0].mxu0
    %v7136 = vpop.f32.mrb[0].mxu0
    %v7137 = vadd.f32 0.0, %v7136
    %v7138 = vpop.f32.mrb[0].mxu0
    %7139 = vmatprep.mubr.bf16.mxu0 0
    %7140 = vmatmul.mubr.bf16.gmra.mrb[0].mxu0 %v7025
    %v7141 = vpop.f32.mrb[0].mxu0
    %v7142 = vadd.f32 0.0, %v7141
    %v7143 = vpop.f32.mrb[0].mxu0
    %v7144 = vpop.f32.mrb[0].mxu0
    %v7145 = vadd.f32 0.0, %v7144
    %v7146 = vpop.f32.mrb[0].mxu0
    %7147 = vdwg.mxu0
    %v7148 = vmul.f32 %v7086, 0.35355338
    %v7149 = vmul.f32 %v7089, 0.35355338
    %v7150 = vmul.f32 %v7094, 0.35355338
    %v7151 = vmul.f32 %v7097, 0.35355338
    %v7152 = vmul.f32 %v7102, 0.35355338
    %v7153 = vmul.f32 %v7105, 0.35355338
    %v7154 = vmul.f32 %v7110, 0.35355338
    %v7155 = vmul.f32 %v7113, 0.35355338
    %v7156 = vmul.f32 %v7118, 0.35355338
    %v7157 = vmul.f32 %v7121, 0.35355338
    %v7158 = vmul.f32 %v7126, 0.35355338
    %v7159 = vmul.f32 %v7129, 0.35355338
    %v7160 = vmul.f32 %v7134, 0.35355338
    %v7161 = vmul.f32 %v7137, 0.35355338
    %v7162 = vmul.f32 %v7142, 0.35355338
    %v7163 = vmul.f32 %v7145, 0.35355338
    %v7164 = vadd.f32 %v7148, %v140
    %v7165 = vadd.f32 %v7149, %v141
    %v7166 = vadd.f32 %v7150, %v142
    %v7167 = vadd.f32 %v7151, %v143
    %v7168 = vadd.f32 %v7152, %v144
    %v7169 = vadd.f32 %v7153, %v145
    %v7170 = vadd.f32 %v7154, %v146
    %v7171 = vadd.f32 %v7155, %v147
    %v7172 = vadd.f32 %v7156, %v148
    %v7173 = vadd.f32 %v7157, %v149
    %v7174 = vadd.f32 %v7158, %v150
    %v7175 = vadd.f32 %v7159, %v151
    %v7176 = vadd.f32 %v7160, %v152
    %v7177 = vadd.f32 %v7161, %v153
    %v7178 = vadd.f32 %v7162, %v154
    %v7179 = vadd.f32 %v7163, %v155
    %7180 = vmax.xlane.f32.xlu0 %v7164
    %v7181 = vpop.xlane.xlu0 %7180
    %7182 = vmax.xlane.f32.xlu0 %v7165
    %v7183 = vpop.xlane.xlu0 %7182
    %7184 = vmax.xlane.f32.xlu0 %v7166
    %v7185 = vpop.xlane.xlu0 %7184
    %7186 = vmax.xlane.f32.xlu0 %v7167
    %v7187 = vpop.xlane.xlu0 %7186
    %7188 = vmax.xlane.f32.xlu0 %v7168
    %v7189 = vpop.xlane.xlu0 %7188
    %7190 = vmax.xlane.f32.xlu0 %v7169
    %v7191 = vpop.xlane.xlu0 %7190
    %7192 = vmax.xlane.f32.xlu0 %v7170
    %v7193 = vpop.xlane.xlu0 %7192
    %7194 = vmax.xlane.f32.xlu0 %v7171
    %v7195 = vpop.xlane.xlu0 %7194
    %7196 = vmax.xlane.f32.xlu0 %v7172
    %v7197 = vpop.xlane.xlu0 %7196
    %7198 = vmax.xlane.f32.xlu0 %v7173
    %v7199 = vpop.xlane.xlu0 %7198
    %7200 = vmax.xlane.f32.xlu0 %v7174
    %v7201 = vpop.xlane.xlu0 %7200
    %7202 = vmax.xlane.f32.xlu0 %v7175
    %v7203 = vpop.xlane.xlu0 %7202
    %7204 = vmax.xlane.f32.xlu0 %v7176
    %v7205 = vpop.xlane.xlu0 %7204
    %7206 = vmax.xlane.f32.xlu0 %v7177
    %v7207 = vpop.xlane.xlu0 %7206
    %7208 = vmax.xlane.f32.xlu0 %v7178
    %v7209 = vpop.xlane.xlu0 %7208
    %7210 = vmax.xlane.f32.xlu0 %v7179
    %v7211 = vpop.xlane.xlu0 %7210
    %v7212 = vsub.f32 %v7164, %v7181
    %v7213 = vsub.f32 %v7165, %v7183
    %v7214 = vsub.f32 %v7166, %v7185
    %v7215 = vsub.f32 %v7167, %v7187
    %v7216 = vsub.f32 %v7168, %v7189
    %v7217 = vsub.f32 %v7169, %v7191
    %v7218 = vsub.f32 %v7170, %v7193
    %v7219 = vsub.f32 %v7171, %v7195
    %v7220 = vsub.f32 %v7172, %v7197
    %v7221 = vsub.f32 %v7173, %v7199
    %v7222 = vsub.f32 %v7174, %v7201
    %v7223 = vsub.f32 %v7175, %v7203
    %v7224 = vsub.f32 %v7176, %v7205
    %v7225 = vsub.f32 %v7177, %v7207
    %v7226 = vsub.f32 %v7178, %v7209
    %v7227 = vsub.f32 %v7179, %v7211
    %v7228 = vmul.f32 %v7212, 1.442695
    %v7229 = vpow.pop %v7228
    %v7230 = vmul.f32 %v7213, 1.442695
    %v7231 = vpow.pop %v7230
    %v7232 = vmul.f32 %v7214, 1.442695
    %v7233 = vpow.pop %v7232
    %v7234 = vmul.f32 %v7215, 1.442695
    %v7235 = vpow.pop %v7234
    %v7236 = vmul.f32 %v7216, 1.442695
    %v7237 = vpow.pop %v7236
    %v7238 = vmul.f32 %v7217, 1.442695
    %v7239 = vpow.pop %v7238
    %v7240 = vmul.f32 %v7218, 1.442695
    %v7241 = vpow.pop %v7240
    %v7242 = vmul.f32 %v7219, 1.442695
    %v7243 = vpow.pop %v7242
    %v7244 = vmul.f32 %v7220, 1.442695
    %v7245 = vpow.pop %v7244
    %v7246 = vmul.f32 %v7221, 1.442695
    %v7247 = vpow.pop %v7246
    %v7248 = vmul.f32 %v7222, 1.442695
    %v7249 = vpow.pop %v7248
    %v7250 = vmul.f32 %v7223, 1.442695
    %v7251 = vpow.pop %v7250
    %v7252 = vmul.f32 %v7224, 1.442695
    %v7253 = vpow.pop %v7252
    %v7254 = vmul.f32 %v7225, 1.442695
    %v7255 = vpow.pop %v7254
    %v7256 = vmul.f32 %v7226, 1.442695
    %v7257 = vpow.pop %v7256
    %v7258 = vmul.f32 %v7227, 1.442695
    %v7259 = vpow.pop %v7258
    %7260 = vadd.xlane.f32.xlu0 %v7229
    %v7261 = vpop.xlane.xlu0 %7260
    %7262 = vadd.xlane.f32.xlu0 %v7231
    %v7263 = vpop.xlane.xlu0 %7262
    %7264 = vadd.xlane.f32.xlu0 %v7233
    %v7265 = vpop.xlane.xlu0 %7264
    %7266 = vadd.xlane.f32.xlu0 %v7235
    %v7267 = vpop.xlane.xlu0 %7266
    %7268 = vadd.xlane.f32.xlu0 %v7237
    %v7269 = vpop.xlane.xlu0 %7268
    %7270 = vadd.xlane.f32.xlu0 %v7239
    %v7271 = vpop.xlane.xlu0 %7270
    %7272 = vadd.xlane.f32.xlu0 %v7241
    %v7273 = vpop.xlane.xlu0 %7272
    %7274 = vadd.xlane.f32.xlu0 %v7243
    %v7275 = vpop.xlane.xlu0 %7274
    %7276 = vadd.xlane.f32.xlu0 %v7245
    %v7277 = vpop.xlane.xlu0 %7276
    %7278 = vadd.xlane.f32.xlu0 %v7247
    %v7279 = vpop.xlane.xlu0 %7278
    %7280 = vadd.xlane.f32.xlu0 %v7249
    %v7281 = vpop.xlane.xlu0 %7280
    %7282 = vadd.xlane.f32.xlu0 %v7251
    %v7283 = vpop.xlane.xlu0 %7282
    %7284 = vadd.xlane.f32.xlu0 %v7253
    %v7285 = vpop.xlane.xlu0 %7284
    %7286 = vadd.xlane.f32.xlu0 %v7255
    %v7287 = vpop.xlane.xlu0 %7286
    %7288 = vadd.xlane.f32.xlu0 %v7257
    %v7289 = vpop.xlane.xlu0 %7288
    %7290 = vadd.xlane.f32.xlu0 %v7259
    %v7291 = vpop.xlane.xlu0 %7290
    %v7292 = vrcp.pop %v7261
    %v7293 = vrcp.pop %v7263
    %v7294 = vrcp.pop %v7265
    %v7295 = vrcp.pop %v7267
    %v7296 = vrcp.pop %v7269
    %v7297 = vrcp.pop %v7271
    %v7298 = vrcp.pop %v7273
    %v7299 = vrcp.pop %v7275
    %v7300 = vrcp.pop %v7277
    %v7301 = vrcp.pop %v7279
    %v7302 = vrcp.pop %v7281
    %v7303 = vrcp.pop %v7283
    %v7304 = vrcp.pop %v7285
    %v7305 = vrcp.pop %v7287
    %v7306 = vrcp.pop %v7289
    %v7307 = vrcp.pop %v7291
    %v7308 = vmul.f32 %v7229, %v7292
    %v7309 = vmul.f32 %v7231, %v7293
    %v7310 = vmul.f32 %v7233, %v7294
    %v7311 = vmul.f32 %v7235, %v7295
    %v7312 = vmul.f32 %v7237, %v7296
    %v7313 = vmul.f32 %v7239, %v7297
    %v7314 = vmul.f32 %v7241, %v7298
    %v7315 = vmul.f32 %v7243, %v7299
    %v7316 = vmul.f32 %v7245, %v7300
    %v7317 = vmul.f32 %v7247, %v7301
    %v7318 = vmul.f32 %v7249, %v7302
    %v7319 = vmul.f32 %v7251, %v7303
    %v7320 = vmul.f32 %v7253, %v7304
    %v7321 = vmul.f32 %v7255, %v7305
    %v7322 = vmul.f32 %v7257, %v7306
    %v7323 = vmul.f32 %v7259, %v7307
    %v7324 = vpack.c.bf16 %v7309, %v7308
    %v7325 = vpack.c.bf16 %v7311, %v7310
    %v7326 = vpack.c.bf16 %v7313, %v7312
    %v7327 = vpack.c.bf16 %v7315, %v7314
    %v7328 = vpack.c.bf16 %v7317, %v7316
    %v7329 = vpack.c.bf16 %v7319, %v7318
    %v7330 = vpack.c.bf16 %v7321, %v7320
    %v7331 = vpack.c.bf16 %v7323, %v7322
    %v7332 = vpack.c.bf16 %v6912, %v6909
    %v7333 = vpack.c.bf16 %v6920, %v6917
    %v7334 = vpack.c.bf16 %v6928, %v6925
    %v7335 = vpack.c.bf16 %v6936, %v6933
    %v7336 = vpack.c.bf16 %v6944, %v6941
    %v7337 = vpack.c.bf16 %v6952, %v6949
    %v7338 = vpack.c.bf16 %v6960, %v6957
    %v7339 = vpack.c.bf16 %v6968, %v6965
    %7340 = vmatprep.subr.bf16.mxu0 0
    %7341 = vmatpush1.bf16.msra.mxu0 %v7332
    %7342 = vmatprep.subr.bf16.mxu0 0
    %7343 = vmatpush1.bf16.msra.mxu0 %v7333
    %7344 = vmatprep.subr.bf16.mxu0 0
    %7345 = vmatpush1.bf16.msra.mxu0 %v7334
    %7346 = vmatprep.subr.bf16.mxu0 0
    %7347 = vmatpush1.bf16.msra.mxu0 %v7335
    %7348 = vmatprep.subr.bf16.mxu0 0
    %7349 = vmatpush1.bf16.msra.mxu0 %v7336
    %7350 = vmatprep.subr.bf16.mxu0 0
    %7351 = vmatpush1.bf16.msra.mxu0 %v7337
    %7352 = vmatprep.subr.bf16.mxu0 0
    %7353 = vmatpush1.bf16.msra.mxu0 %v7338
    %7354 = vmatprep.subr.bf16.mxu0 0
    %7355 = vmatpush1.bf16.msra.mxu0 %v7339
    %7356 = vmatprep.subr.bf16.mxu0 0
    %7357 = vmatpush1.bf16.msra.mxu0 0
    %7358 = vmatprep.subr.bf16.mxu0 0
    %7359 = vmatpush1.bf16.msra.mxu0 0
    %7360 = vmatprep.subr.bf16.mxu0 0
    %7361 = vmatpush1.bf16.msra.mxu0 0
    %7362 = vmatprep.subr.bf16.mxu0 0
    %7363 = vmatpush1.bf16.msra.mxu0 0
    %7364 = vmatprep.subr.bf16.mxu0 0
    %7365 = vmatpush1.bf16.msra.mxu0 0
    %7366 = vmatprep.subr.bf16.mxu0 0
    %7367 = vmatpush1.bf16.msra.mxu0 0
    %7368 = vmatprep.subr.bf16.mxu0 0
    %7369 = vmatpush1.bf16.msra.mxu0 0
    %7370 = vmatprep.subr.bf16.mxu0 0
    %7371 = vmatpush1.bf16.msra.mxu0 0
    %7372 = vmatprep.mubr.bf16.mxu0 0
    %7373 = vmatmul.mubr.bf16.gmra.mrb[0].mxu0 %v7324
    %v7374 = vpop.f32.mrb[0].mxu0
    %v7375 = vadd.f32 0.0, %v7374
    %v7376 = vpop.f32.mrb[0].mxu0
    %v7377 = vpop.f32.mrb[0].mxu0
    %v7378 = vadd.f32 0.0, %v7377
    %v7379 = vpop.f32.mrb[0].mxu0
    %7380 = vmatprep.mubr.bf16.mxu0 0
    %7381 = vmatmul.mubr.bf16.gmra.mrb[0].mxu0 %v7325
    %v7382 = vpop.f32.mrb[0].mxu0
    %v7383 = vadd.f32 0.0, %v7382
    %v7384 = vpop.f32.mrb[0].mxu0
    %v7385 = vpop.f32.mrb[0].mxu0
    %v7386 = vadd.f32 0.0, %v7385
    %v7387 = vpop.f32.mrb[0].mxu0
    %7388 = vmatprep.mubr.bf16.mxu0 0
    %7389 = vmatmul.mubr.bf16.gmra.mrb[0].mxu0 %v7326
    %v7390 = vpop.f32.mrb[0].mxu0
    %v7391 = vadd.f32 0.0, %v7390
    %v7392 = vpop.f32.mrb[0].mxu0
    %v7393 = vpop.f32.mrb[0].mxu0
    %v7394 = vadd.f32 0.0, %v7393
    %v7395 = vpop.f32.mrb[0].mxu0
    %7396 = vmatprep.mubr.bf16.mxu0 0
    %7397 = vmatmul.mubr.bf16.gmra.mrb[0].mxu0 %v7327
    %v7398 = vpop.f32.mrb[0].mxu0
    %v7399 = vadd.f32 0.0, %v7398
    %v7400 = vpop.f32.mrb[0].mxu0
    %v7401 = vpop.f32.mrb[0].mxu0
    %v7402 = vadd.f32 0.0, %v7401
    %v7403 = vpop.f32.mrb[0].mxu0
    %7404 = vmatprep.mubr.bf16.mxu0 0
    %7405 = vmatmul.mubr.bf16.gmra.mrb[0].mxu0 %v7328
    %v7406 = vpop.f32.mrb[0].mxu0
    %v7407 = vadd.f32 0.0, %v7406
    %v7408 = vpop.f32.mrb[0].mxu0
    %v7409 = vpop.f32.mrb[0].mxu0
    %v7410 = vadd.f32 0.0, %v7409
    %v7411 = vpop.f32.mrb[0].mxu0
    %7412 = vmatprep.mubr.bf16.mxu0 0
    %7413 = vmatmul.mubr.bf16.gmra.mrb[0].mxu0 %v7329
    %v7414 = vpop.f32.mrb[0].mxu0
    %v7415 = vadd.f32 0.0, %v7414
    %v7416 = vpop.f32.mrb[0].mxu0
    %v7417 = vpop.f32.mrb[0].mxu0
    %v7418 = vadd.f32 0.0, %v7417
    %v7419 = vpop.f32.mrb[0].mxu0
    %7420 = vmatprep.mubr.bf16.mxu0 0
    %7421 = vmatmul.mubr.bf16.gmra.mrb[0].mxu0 %v7330
    %v7422 = vpop.f32.mrb[0].mxu0
    %v7423 = vadd.f32 0.0, %v7422
    %v7424 = vpop.f32.mrb[0].mxu0
    %v7425 = vpop.f32.mrb[0].mxu0
    %v7426 = vadd.f32 0.0, %v7425
    %v7427 = vpop.f32.mrb[0].mxu0
    %7428 = vmatprep.mubr.bf16.mxu0 0
    %7429 = vmatmul.mubr.bf16.gmra.mrb[0].mxu0 %v7331
    %v7430 = vpop.f32.mrb[0].mxu0
    %v7431 = vadd.f32 0.0, %v7430
    %v7432 = vpop.f32.mrb[0].mxu0
    %v7433 = vpop.f32.mrb[0].mxu0
    %v7434 = vadd.f32 0.0, %v7433
    %v7435 = vpop.f32.mrb[0].mxu0
    %7436 = vdwg.mxu0
    %v7437 = vadd.f32 %v6813, %v7375
    %v7438 = vadd.f32 %v6814, %v7378
    %v7439 = vadd.f32 %v6815, %v7383
    %v7440 = vadd.f32 %v6816, %v7386
    %v7441 = vadd.f32 %v6817, %v7391
    %v7442 = vadd.f32 %v6818, %v7394
    %v7443 = vadd.f32 %v6819, %v7399
    %v7444 = vadd.f32 %v6820, %v7402
    %v7445 = vadd.f32 %v6821, %v7407
    %v7446 = vadd.f32 %v6822, %v7410
    %v7447 = vadd.f32 %v6823, %v7415
    %v7448 = vadd.f32 %v6824, %v7418
    %v7449 = vadd.f32 %v6825, %v7423
    %v7450 = vadd.f32 %v6826, %v7426
    %v7451 = vadd.f32 %v6827, %v7431
    %v7452 = vadd.f32 %v6828, %v7434
    %s7453 = scalar_lea.vmem %s6, 1
    %v7454 = vld [vmem:[%s7453] sm:$0x1]
    %v7456 = vlaneseq
    %v7457 = vshrl.u32 %v7456, 7
    %v7458 = vsub.s32 0, %v7457
    %v7459 = vrot.slane %v7454, %v7458
    %v7461 = vadd.f32 %v7437, %v7459
    %v7462 = vadd.f32 %v7438, %v7459
    %v7463 = vadd.f32 %v7439, %v7459
    %v7464 = vadd.f32 %v7440, %v7459
    %v7465 = vadd.f32 %v7441, %v7459
    %v7466 = vadd.f32 %v7442, %v7459
    %v7467 = vadd.f32 %v7443, %v7459
    %v7468 = vadd.f32 %v7444, %v7459
    %v7469 = vadd.f32 %v7445, %v7459
    %v7470 = vadd.f32 %v7446, %v7459
    %v7471 = vadd.f32 %v7447, %v7459
    %v7472 = vadd.f32 %v7448, %v7459
    %v7473 = vadd.f32 %v7449, %v7459
    %v7474 = vadd.f32 %v7450, %v7459
    %v7475 = vadd.f32 %v7451, %v7459
    %v7476 = vadd.f32 %v7452, %v7459
    %v7477 = vadd.f32 %v7461, %v4827
    %v7478 = vadd.f32 %v7462, %v4828
    %v7479 = vadd.f32 %v7463, %v4829
    %v7480 = vadd.f32 %v7464, %v4830
    %v7481 = vadd.f32 %v7465, %v4831
    %v7482 = vadd.f32 %v7466, %v4832
    %v7483 = vadd.f32 %v7467, %v4833
    %v7484 = vadd.f32 %v7468, %v4834
    %v7485 = vadd.f32 %v7469, %v4835
    %v7486 = vadd.f32 %v7470, %v4836
    %v7487 = vadd.f32 %v7471, %v4837
    %v7488 = vadd.f32 %v7472, %v4838
    %v7489 = vadd.f32 %v7473, %v4839
    %v7490 = vadd.f32 %v7474, %v4840
    %v7491 = vadd.f32 %v7475, %v4841
    %v7492 = vadd.f32 %v7476, %v4842
    %v7493 = vsel %vm180, %v7477, 0.0
    %7494 = vadd.xlane.f32.xlu0 %v7493
    %v7495 = vpop.xlane.xlu0 %7494
    %v7496 = vsel %vm180, %v7478, 0.0
    %7497 = vadd.xlane.f32.xlu0 %v7496
    %v7498 = vpop.xlane.xlu0 %7497
    %v7499 = vsel %vm180, %v7479, 0.0
    %7500 = vadd.xlane.f32.xlu0 %v7499
    %v7501 = vpop.xlane.xlu0 %7500
    %v7502 = vsel %vm180, %v7480, 0.0
    %7503 = vadd.xlane.f32.xlu0 %v7502
    %v7504 = vpop.xlane.xlu0 %7503
    %v7505 = vsel %vm180, %v7481, 0.0
    %7506 = vadd.xlane.f32.xlu0 %v7505
    %v7507 = vpop.xlane.xlu0 %7506
    %v7508 = vsel %vm180, %v7482, 0.0
    %7509 = vadd.xlane.f32.xlu0 %v7508
    %v7510 = vpop.xlane.xlu0 %7509
    %v7511 = vsel %vm180, %v7483, 0.0
    %7512 = vadd.xlane.f32.xlu0 %v7511
    %v7513 = vpop.xlane.xlu0 %7512
    %v7514 = vsel %vm180, %v7484, 0.0
    %7515 = vadd.xlane.f32.xlu0 %v7514
    %v7516 = vpop.xlane.xlu0 %7515
    %v7517 = vsel %vm180, %v7485, 0.0
    %7518 = vadd.xlane.f32.xlu0 %v7517
    %v7519 = vpop.xlane.xlu0 %7518
    %v7520 = vsel %vm180, %v7486, 0.0
    %7521 = vadd.xlane.f32.xlu0 %v7520
    %v7522 = vpop.xlane.xlu0 %7521
    %v7523 = vsel %vm180, %v7487, 0.0
    %7524 = vadd.xlane.f32.xlu0 %v7523
    %v7525 = vpop.xlane.xlu0 %7524
    %v7526 = vsel %vm180, %v7488, 0.0
    %7527 = vadd.xlane.f32.xlu0 %v7526
    %v7528 = vpop.xlane.xlu0 %7527
    %v7529 = vsel %vm180, %v7489, 0.0
    %7530 = vadd.xlane.f32.xlu0 %v7529
    %v7531 = vpop.xlane.xlu0 %7530
    %v7532 = vsel %vm180, %v7490, 0.0
    %7533 = vadd.xlane.f32.xlu0 %v7532
    %v7534 = vpop.xlane.xlu0 %7533
    %v7535 = vsel %vm180, %v7491, 0.0
    %7536 = vadd.xlane.f32.xlu0 %v7535
    %v7537 = vpop.xlane.xlu0 %7536
    %v7538 = vsel %vm180, %v7492, 0.0
    %7539 = vadd.xlane.f32.xlu0 %v7538
    %v7540 = vpop.xlane.xlu0 %7539
    %v7541 = vmul.f32 %v7495, %v2854
    %v7542 = vmul.f32 %v7498, %v2854
    %v7543 = vmul.f32 %v7501, %v2854
    %v7544 = vmul.f32 %v7504, %v2854
    %v7545 = vmul.f32 %v7507, %v2854
    %v7546 = vmul.f32 %v7510, %v2854
    %v7547 = vmul.f32 %v7513, %v2854
    %v7548 = vmul.f32 %v7516, %v2854
    %v7549 = vmul.f32 %v7519, %v2854
    %v7550 = vmul.f32 %v7522, %v2854
    %v7551 = vmul.f32 %v7525, %v2854
    %v7552 = vmul.f32 %v7528, %v2854
    %v7553 = vmul.f32 %v7531, %v2854
    %v7554 = vmul.f32 %v7534, %v2854
    %v7555 = vmul.f32 %v7537, %v2854
    %v7556 = vmul.f32 %v7540, %v2854
    %v7557 = vsub.f32 %v7477, %v7541
    %v7558 = vsub.f32 %v7478, %v7542
    %v7559 = vsub.f32 %v7479, %v7543
    %v7560 = vsub.f32 %v7480, %v7544
    %v7561 = vsub.f32 %v7481, %v7545
    %v7562 = vsub.f32 %v7482, %v7546
    %v7563 = vsub.f32 %v7483, %v7547
    %v7564 = vsub.f32 %v7484, %v7548
    %v7565 = vsub.f32 %v7485, %v7549
    %v7566 = vsub.f32 %v7486, %v7550
    %v7567 = vsub.f32 %v7487, %v7551
    %v7568 = vsub.f32 %v7488, %v7552
    %v7569 = vsub.f32 %v7489, %v7553
    %v7570 = vsub.f32 %v7490, %v7554
    %v7571 = vsub.f32 %v7491, %v7555
    %v7572 = vsub.f32 %v7492, %v7556
    %v7573 = vmul.f32 %v7557, %v7557
    %v7574 = vmul.f32 %v7558, %v7558
    %v7575 = vmul.f32 %v7559, %v7559
    %v7576 = vmul.f32 %v7560, %v7560
    %v7577 = vmul.f32 %v7561, %v7561
    %v7578 = vmul.f32 %v7562, %v7562
    %v7579 = vmul.f32 %v7563, %v7563
    %v7580 = vmul.f32 %v7564, %v7564
    %v7581 = vmul.f32 %v7565, %v7565
    %v7582 = vmul.f32 %v7566, %v7566
    %v7583 = vmul.f32 %v7567, %v7567
    %v7584 = vmul.f32 %v7568, %v7568
    %v7585 = vmul.f32 %v7569, %v7569
    %v7586 = vmul.f32 %v7570, %v7570
    %v7587 = vmul.f32 %v7571, %v7571
    %v7588 = vmul.f32 %v7572, %v7572
    %v7589 = vsel %vm180, %v7573, 0.0
    %7590 = vadd.xlane.f32.xlu0 %v7589
    %v7591 = vpop.xlane.xlu0 %7590
    %v7592 = vsel %vm180, %v7574, 0.0
    %7593 = vadd.xlane.f32.xlu0 %v7592
    %v7594 = vpop.xlane.xlu0 %7593
    %v7595 = vsel %vm180, %v7575, 0.0
    %7596 = vadd.xlane.f32.xlu0 %v7595
    %v7597 = vpop.xlane.xlu0 %7596
    %v7598 = vsel %vm180, %v7576, 0.0
    %7599 = vadd.xlane.f32.xlu0 %v7598
    %v7600 = vpop.xlane.xlu0 %7599
    %v7601 = vsel %vm180, %v7577, 0.0
    %7602 = vadd.xlane.f32.xlu0 %v7601
    %v7603 = vpop.xlane.xlu0 %7602
    %v7604 = vsel %vm180, %v7578, 0.0
    %7605 = vadd.xlane.f32.xlu0 %v7604
    %v7606 = vpop.xlane.xlu0 %7605
    %v7607 = vsel %vm180, %v7579, 0.0
    %7608 = vadd.xlane.f32.xlu0 %v7607
    %v7609 = vpop.xlane.xlu0 %7608
    %v7610 = vsel %vm180, %v7580, 0.0
    %7611 = vadd.xlane.f32.xlu0 %v7610
    %v7612 = vpop.xlane.xlu0 %7611
    %v7613 = vsel %vm180, %v7581, 0.0
    %7614 = vadd.xlane.f32.xlu0 %v7613
    %v7615 = vpop.xlane.xlu0 %7614
    %v7616 = vsel %vm180, %v7582, 0.0
    %7617 = vadd.xlane.f32.xlu0 %v7616
    %v7618 = vpop.xlane.xlu0 %7617
    %v7619 = vsel %vm180, %v7583, 0.0
    %7620 = vadd.xlane.f32.xlu0 %v7619
    %v7621 = vpop.xlane.xlu0 %7620
    %v7622 = vsel %vm180, %v7584, 0.0
    %7623 = vadd.xlane.f32.xlu0 %v7622
    %v7624 = vpop.xlane.xlu0 %7623
    %v7625 = vsel %vm180, %v7585, 0.0
    %7626 = vadd.xlane.f32.xlu0 %v7625
    %v7627 = vpop.xlane.xlu0 %7626
    %v7628 = vsel %vm180, %v7586, 0.0
    %7629 = vadd.xlane.f32.xlu0 %v7628
    %v7630 = vpop.xlane.xlu0 %7629
    %v7631 = vsel %vm180, %v7587, 0.0
    %7632 = vadd.xlane.f32.xlu0 %v7631
    %v7633 = vpop.xlane.xlu0 %7632
    %v7634 = vsel %vm180, %v7588, 0.0
    %7635 = vadd.xlane.f32.xlu0 %v7634
    %v7636 = vpop.xlane.xlu0 %7635
    %v7637 = vmul.f32 %v7591, %v2854
    %v7638 = vmul.f32 %v7594, %v2854
    %v7639 = vmul.f32 %v7597, %v2854
    %v7640 = vmul.f32 %v7600, %v2854
    %v7641 = vmul.f32 %v7603, %v2854
    %v7642 = vmul.f32 %v7606, %v2854
    %v7643 = vmul.f32 %v7609, %v2854
    %v7644 = vmul.f32 %v7612, %v2854
    %v7645 = vmul.f32 %v7615, %v2854
    %v7646 = vmul.f32 %v7618, %v2854
    %v7647 = vmul.f32 %v7621, %v2854
    %v7648 = vmul.f32 %v7624, %v2854
    %v7649 = vmul.f32 %v7627, %v2854
    %v7650 = vmul.f32 %v7630, %v2854
    %v7651 = vmul.f32 %v7633, %v2854
    %v7652 = vmul.f32 %v7636, %v2854
    %v7653 = vadd.f32 %v7637, 1e-05
    %v7654 = vadd.f32 %v7638, 1e-05
    %v7655 = vadd.f32 %v7639, 1e-05
    %v7656 = vadd.f32 %v7640, 1e-05
    %v7657 = vadd.f32 %v7641, 1e-05
    %v7658 = vadd.f32 %v7642, 1e-05
    %v7659 = vadd.f32 %v7643, 1e-05
    %v7660 = vadd.f32 %v7644, 1e-05
    %v7661 = vadd.f32 %v7645, 1e-05
    %v7662 = vadd.f32 %v7646, 1e-05
    %v7663 = vadd.f32 %v7647, 1e-05
    %v7664 = vadd.f32 %v7648, 1e-05
    %v7665 = vadd.f32 %v7649, 1e-05
    %v7666 = vadd.f32 %v7650, 1e-05
    %v7667 = vadd.f32 %v7651, 1e-05
    %v7668 = vadd.f32 %v7652, 1e-05
    %v7669 = vrsqrt.pop %v7653
    %v7670 = vrsqrt.pop %v7654
    %v7671 = vrsqrt.pop %v7655
    %v7672 = vrsqrt.pop %v7656
    %v7673 = vrsqrt.pop %v7657
    %v7674 = vrsqrt.pop %v7658
    %v7675 = vrsqrt.pop %v7659
    %v7676 = vrsqrt.pop %v7660
    %v7677 = vrsqrt.pop %v7661
    %v7678 = vrsqrt.pop %v7662
    %v7679 = vrsqrt.pop %v7663
    %v7680 = vrsqrt.pop %v7664
    %v7681 = vrsqrt.pop %v7665
    %v7682 = vrsqrt.pop %v7666
    %v7683 = vrsqrt.pop %v7667
    %v7684 = vrsqrt.pop %v7668
    %v7685 = vmul.f32 %v7557, %v7669
    %v7686 = vmul.f32 %v7558, %v7670
    %v7687 = vmul.f32 %v7559, %v7671
    %v7688 = vmul.f32 %v7560, %v7672
    %v7689 = vmul.f32 %v7561, %v7673
    %v7690 = vmul.f32 %v7562, %v7674
    %v7691 = vmul.f32 %v7563, %v7675
    %v7692 = vmul.f32 %v7564, %v7676
    %v7693 = vmul.f32 %v7565, %v7677
    %v7694 = vmul.f32 %v7566, %v7678
    %v7695 = vmul.f32 %v7567, %v7679
    %v7696 = vmul.f32 %v7568, %v7680
    %v7697 = vmul.f32 %v7569, %v7681
    %v7698 = vmul.f32 %v7570, %v7682
    %v7699 = vmul.f32 %v7571, %v7683
    %v7700 = vmul.f32 %v7572, %v7684
    %s7701 = scalar_lea.vmem %s7, 1
    %v7702 = vld [vmem:[%s7701] sm:$0x1]
    %v7704 = vlaneseq
    %v7705 = vshrl.u32 %v7704, 7
    %v7706 = vsub.s32 0, %v7705
    %v7707 = vrot.slane %v7702, %v7706
    %v7709 = vmul.f32 %v7685, %v7707
    %v7710 = vmul.f32 %v7686, %v7707
    %v7711 = vmul.f32 %v7687, %v7707
    %v7712 = vmul.f32 %v7688, %v7707
    %v7713 = vmul.f32 %v7689, %v7707
    %v7714 = vmul.f32 %v7690, %v7707
    %v7715 = vmul.f32 %v7691, %v7707
    %v7716 = vmul.f32 %v7692, %v7707
    %v7717 = vmul.f32 %v7693, %v7707
    %v7718 = vmul.f32 %v7694, %v7707
    %v7719 = vmul.f32 %v7695, %v7707
    %v7720 = vmul.f32 %v7696, %v7707
    %v7721 = vmul.f32 %v7697, %v7707
    %v7722 = vmul.f32 %v7698, %v7707
    %v7723 = vmul.f32 %v7699, %v7707
    %v7724 = vmul.f32 %v7700, %v7707
    %s7725 = scalar_lea.vmem %s8, 1
    %v7726 = vld [vmem:[%s7725] sm:$0x1]
    %v7728 = vlaneseq
    %v7729 = vshrl.u32 %v7728, 7
    %v7730 = vsub.s32 0, %v7729
    %v7731 = vrot.slane %v7726, %v7730
    %v7733 = vadd.f32 %v7709, %v7731
    %v7734 = vadd.f32 %v7710, %v7731
    %v7735 = vadd.f32 %v7711, %v7731
    %v7736 = vadd.f32 %v7712, %v7731
    %v7737 = vadd.f32 %v7713, %v7731
    %v7738 = vadd.f32 %v7714, %v7731
    %v7739 = vadd.f32 %v7715, %v7731
    %v7740 = vadd.f32 %v7716, %v7731
    %v7741 = vadd.f32 %v7717, %v7731
    %v7742 = vadd.f32 %v7718, %v7731
    %v7743 = vadd.f32 %v7719, %v7731
    %v7744 = vadd.f32 %v7720, %v7731
    %v7745 = vadd.f32 %v7721, %v7731
    %v7746 = vadd.f32 %v7722, %v7731
    %v7747 = vadd.f32 %v7723, %v7731
    %v7748 = vadd.f32 %v7724, %v7731
    %v7749 = vpack.c.bf16 %v7734, %v7733
    %v7750 = vpack.c.bf16 %v7736, %v7735
    %v7751 = vpack.c.bf16 %v7738, %v7737
    %v7752 = vpack.c.bf16 %v7740, %v7739
    %v7753 = vpack.c.bf16 %v7742, %v7741
    %v7754 = vpack.c.bf16 %v7744, %v7743
    %v7755 = vpack.c.bf16 %v7746, %v7745
    %v7756 = vpack.c.bf16 %v7748, %v7747
    %s7757 = scalar_lea.vmem [#allocation6], 16
    %v7758 = vld [vmem:[%s7757] sm:$0xf]
    %v7759 = vld [vmem:[%s7757 + $0x4] sm:$0xf]
    %v7760 = vld [vmem:[%s7757 + $0x8] sm:$0xf]
    %v7761 = vld [vmem:[%s7757 + $0xc] sm:$0xf]
    %s7762 = scalar_lea.vmem %s10, 1
    %v7763 = vld [vmem:[%s7762] sm:$0x1]
    %v7765 = vlaneseq
    %v7766 = vshrl.u32 %v7765, 7
    %v7767 = vsub.s32 0, %v7766
    %v7768 = vrot.slane %v7763, %v7767
    %v7774 = vunpack.c.l.b16 %v7758
    %v7775 = vunpack.c.l.b16 %v7759
    %v7776 = vunpack.c.l.b16 %v7760
    %v7777 = vunpack.c.l.b16 %v7761
    %v7778 = vpack.c.b16 %v7775, %v7774
    %v7779 = vpack.c.b16 %v7777, %v7776
    %v7783 = vsel %vm180, %v7749, 0
    %v7786 = vsel %vm180, %v7750, 0
    %v7789 = vsel %vm180, %v7751, 0
    %v7792 = vsel %vm180, %v7752, 0
    %v7795 = vsel %vm180, %v7753, 0
    %v7798 = vsel %vm180, %v7754, 0
    %v7801 = vsel %vm180, %v7755, 0
    %v7804 = vsel %vm180, %v7756, 0
    %7806 = vmatprep.subr.bf16.mxu0 0
    %7807 = vmatpush1.bf16.msra.mxu0 %v7778
    %7808 = vmatprep.subr.bf16.mxu0 0
    %7809 = vmatpush1.bf16.msra.mxu0 %v7779
    %7810 = vmatprep.subr.bf16.mxu0 0
    %7811 = vmatpush1.bf16.msra.mxu0 0
    %7812 = vmatprep.subr.bf16.mxu0 0
    %7813 = vmatpush1.bf16.msra.mxu0 0
    %7814 = vmatprep.subr.bf16.mxu0 0
    %7815 = vmatpush1.bf16.msra.mxu0 0
    %7816 = vmatprep.subr.bf16.mxu0 0
    %7817 = vmatpush1.bf16.msra.mxu0 0
    %7818 = vmatprep.subr.bf16.mxu0 0
    %7819 = vmatpush1.bf16.msra.mxu0 0
    %7820 = vmatprep.subr.bf16.mxu0 0
    %7821 = vmatpush1.bf16.msra.mxu0 0
    %7822 = vmatprep.subr.bf16.mxu0 0
    %7823 = vmatpush1.bf16.msra.mxu0 0
    %7824 = vmatprep.subr.bf16.mxu0 0
    %7825 = vmatpush1.bf16.msra.mxu0 0
    %7826 = vmatprep.subr.bf16.mxu0 0
    %7827 = vmatpush1.bf16.msra.mxu0 0
    %7828 = vmatprep.subr.bf16.mxu0 0
    %7829 = vmatpush1.bf16.msra.mxu0 0
    %7830 = vmatprep.subr.bf16.mxu0 0
    %7831 = vmatpush1.bf16.msra.mxu0 0
    %7832 = vmatprep.subr.bf16.mxu0 0
    %7833 = vmatpush1.bf16.msra.mxu0 0
    %7834 = vmatprep.subr.bf16.mxu0 0
    %7835 = vmatpush1.bf16.msra.mxu0 0
    %7836 = vmatprep.subr.bf16.mxu0 0
    %7837 = vmatpush1.bf16.msra.mxu0 0
    %7838 = vmatprep.mubr.bf16.mxu0 0
    %7839 = vmatmul.mubr.bf16.gmra.mrb[0].mxu0 %v7783
    %v7840 = vpop.f32.mrb[0].mxu0
    %v7841 = vadd.f32 %v7768, %v7840
    %v7842 = vpop.f32.mrb[0].mxu0
    %v7843 = vpop.f32.mrb[0].mxu0
    %v7844 = vadd.f32 %v7768, %v7843
    %v7845 = vpop.f32.mrb[0].mxu0
    %7846 = vmatprep.mubr.bf16.mxu0 0
    %7847 = vmatmul.mubr.bf16.gmra.mrb[0].mxu0 %v7786
    %v7848 = vpop.f32.mrb[0].mxu0
    %v7849 = vadd.f32 %v7768, %v7848
    %v7850 = vpop.f32.mrb[0].mxu0
    %v7851 = vpop.f32.mrb[0].mxu0
    %v7852 = vadd.f32 %v7768, %v7851
    %v7853 = vpop.f32.mrb[0].mxu0
    %7854 = vmatprep.mubr.bf16.mxu0 0
    %7855 = vmatmul.mubr.bf16.gmra.mrb[0].mxu0 %v7789
    %v7856 = vpop.f32.mrb[0].mxu0
    %v7857 = vadd.f32 %v7768, %v7856
    %v7858 = vpop.f32.mrb[0].mxu0
    %v7859 = vpop.f32.mrb[0].mxu0
    %v7860 = vadd.f32 %v7768, %v7859
    %v7861 = vpop.f32.mrb[0].mxu0
    %7862 = vmatprep.mubr.bf16.mxu0 0
    %7863 = vmatmul.mubr.bf16.gmra.mrb[0].mxu0 %v7792
    %v7864 = vpop.f32.mrb[0].mxu0
    %v7865 = vadd.f32 %v7768, %v7864
    %v7866 = vpop.f32.mrb[0].mxu0
    %v7867 = vpop.f32.mrb[0].mxu0
    %v7868 = vadd.f32 %v7768, %v7867
    %v7869 = vpop.f32.mrb[0].mxu0
    %7870 = vmatprep.mubr.bf16.mxu0 0
    %7871 = vmatmul.mubr.bf16.gmra.mrb[0].mxu0 %v7795
    %v7872 = vpop.f32.mrb[0].mxu0
    %v7873 = vadd.f32 %v7768, %v7872
    %v7874 = vpop.f32.mrb[0].mxu0
    %v7875 = vpop.f32.mrb[0].mxu0
    %v7876 = vadd.f32 %v7768, %v7875
    %v7877 = vpop.f32.mrb[0].mxu0
    %7878 = vmatprep.mubr.bf16.mxu0 0
    %7879 = vmatmul.mubr.bf16.gmra.mrb[0].mxu0 %v7798
    %v7880 = vpop.f32.mrb[0].mxu0
    %v7881 = vadd.f32 %v7768, %v7880
    %v7882 = vpop.f32.mrb[0].mxu0
    %v7883 = vpop.f32.mrb[0].mxu0
    %v7884 = vadd.f32 %v7768, %v7883
    %v7885 = vpop.f32.mrb[0].mxu0
    %7886 = vmatprep.mubr.bf16.mxu0 0
    %7887 = vmatmul.mubr.bf16.gmra.mrb[0].mxu0 %v7801
    %v7888 = vpop.f32.mrb[0].mxu0
    %v7889 = vadd.f32 %v7768, %v7888
    %v7890 = vpop.f32.mrb[0].mxu0
    %v7891 = vpop.f32.mrb[0].mxu0
    %v7892 = vadd.f32 %v7768, %v7891
    %v7893 = vpop.f32.mrb[0].mxu0
    %7894 = vmatprep.mubr.bf16.mxu0 0
    %7895 = vmatmul.mubr.bf16.gmra.mrb[0].mxu0 %v7804
    %v7896 = vpop.f32.mrb[0].mxu0
    %v7897 = vadd.f32 %v7768, %v7896
    %v7898 = vpop.f32.mrb[0].mxu0
    %v7899 = vpop.f32.mrb[0].mxu0
    %v7900 = vadd.f32 %v7768, %v7899
    %v7901 = vpop.f32.mrb[0].mxu0
    %7902 = vdwg.mxu0
    %v7903 = vmul.f32 %v7841, %v7841
    %v7904 = vmul.f32 %v7844, %v7844
    %v7905 = vmul.f32 %v7849, %v7849
    %v7906 = vmul.f32 %v7852, %v7852
    %v7907 = vmul.f32 %v7857, %v7857
    %v7908 = vmul.f32 %v7860, %v7860
    %v7909 = vmul.f32 %v7865, %v7865
    %v7910 = vmul.f32 %v7868, %v7868
    %v7911 = vmul.f32 %v7873, %v7873
    %v7912 = vmul.f32 %v7876, %v7876
    %v7913 = vmul.f32 %v7881, %v7881
    %v7914 = vmul.f32 %v7884, %v7884
    %v7915 = vmul.f32 %v7889, %v7889
    %v7916 = vmul.f32 %v7892, %v7892
    %v7917 = vmul.f32 %v7897, %v7897
    %v7918 = vmul.f32 %v7900, %v7900
    %v7919 = vmul.f32 %v7841, %v7903
    %v7920 = vmul.f32 %v7844, %v7904
    %v7921 = vmul.f32 %v7849, %v7905
    %v7922 = vmul.f32 %v7852, %v7906
    %v7923 = vmul.f32 %v7857, %v7907
    %v7924 = vmul.f32 %v7860, %v7908
    %v7925 = vmul.f32 %v7865, %v7909
    %v7926 = vmul.f32 %v7868, %v7910
    %v7927 = vmul.f32 %v7873, %v7911
    %v7928 = vmul.f32 %v7876, %v7912
    %v7929 = vmul.f32 %v7881, %v7913
    %v7930 = vmul.f32 %v7884, %v7914
    %v7931 = vmul.f32 %v7889, %v7915
    %v7932 = vmul.f32 %v7892, %v7916
    %v7933 = vmul.f32 %v7897, %v7917
    %v7934 = vmul.f32 %v7900, %v7918
    %v7935 = vmul.f32 %v7919, 0.044715
    %v7936 = vmul.f32 %v7920, 0.044715
    %v7937 = vmul.f32 %v7921, 0.044715
    %v7938 = vmul.f32 %v7922, 0.044715
    %v7939 = vmul.f32 %v7923, 0.044715
    %v7940 = vmul.f32 %v7924, 0.044715
    %v7941 = vmul.f32 %v7925, 0.044715
    %v7942 = vmul.f32 %v7926, 0.044715
    %v7943 = vmul.f32 %v7927, 0.044715
    %v7944 = vmul.f32 %v7928, 0.044715
    %v7945 = vmul.f32 %v7929, 0.044715
    %v7946 = vmul.f32 %v7930, 0.044715
    %v7947 = vmul.f32 %v7931, 0.044715
    %v7948 = vmul.f32 %v7932, 0.044715
    %v7949 = vmul.f32 %v7933, 0.044715
    %v7950 = vmul.f32 %v7934, 0.044715
    %v7951 = vadd.f32 %v7841, %v7935
    %v7952 = vadd.f32 %v7844, %v7936
    %v7953 = vadd.f32 %v7849, %v7937
    %v7954 = vadd.f32 %v7852, %v7938
    %v7955 = vadd.f32 %v7857, %v7939
    %v7956 = vadd.f32 %v7860, %v7940
    %v7957 = vadd.f32 %v7865, %v7941
    %v7958 = vadd.f32 %v7868, %v7942
    %v7959 = vadd.f32 %v7873, %v7943
    %v7960 = vadd.f32 %v7876, %v7944
    %v7961 = vadd.f32 %v7881, %v7945
    %v7962 = vadd.f32 %v7884, %v7946
    %v7963 = vadd.f32 %v7889, %v7947
    %v7964 = vadd.f32 %v7892, %v7948
    %v7965 = vadd.f32 %v7897, %v7949
    %v7966 = vadd.f32 %v7900, %v7950
    %v7967 = vmul.f32 %v7951, 0.7978846
    %v7968 = vmul.f32 %v7952, 0.7978846
    %v7969 = vmul.f32 %v7953, 0.7978846
    %v7970 = vmul.f32 %v7954, 0.7978846
    %v7971 = vmul.f32 %v7955, 0.7978846
    %v7972 = vmul.f32 %v7956, 0.7978846
    %v7973 = vmul.f32 %v7957, 0.7978846
    %v7974 = vmul.f32 %v7958, 0.7978846
    %v7975 = vmul.f32 %v7959, 0.7978846
    %v7976 = vmul.f32 %v7960, 0.7978846
    %v7977 = vmul.f32 %v7961, 0.7978846
    %v7978 = vmul.f32 %v7962, 0.7978846
    %v7979 = vmul.f32 %v7963, 0.7978846
    %v7980 = vmul.f32 %v7964, 0.7978846
    %v7981 = vmul.f32 %v7965, 0.7978846
    %v7982 = vmul.f32 %v7966, 0.7978846
    %v7983 = vtanh.pop %v7967
    %v7984 = vtanh.pop %v7968
    %v7985 = vtanh.pop %v7969
    %v7986 = vtanh.pop %v7970
    %v7987 = vtanh.pop %v7971
    %v7988 = vtanh.pop %v7972
    %v7989 = vtanh.pop %v7973
    %v7990 = vtanh.pop %v7974
    %v7991 = vtanh.pop %v7975
    %v7992 = vtanh.pop %v7976
    %v7993 = vtanh.pop %v7977
    %v7994 = vtanh.pop %v7978
    %v7995 = vtanh.pop %v7979
    %v7996 = vtanh.pop %v7980
    %v7997 = vtanh.pop %v7981
    %v7998 = vtanh.pop %v7982
    %v7999 = vadd.f32 %v7983, 1.0
    %v8000 = vadd.f32 %v7984, 1.0
    %v8001 = vadd.f32 %v7985, 1.0
    %v8002 = vadd.f32 %v7986, 1.0
    %v8003 = vadd.f32 %v7987, 1.0
    %v8004 = vadd.f32 %v7988, 1.0
    %v8005 = vadd.f32 %v7989, 1.0
    %v8006 = vadd.f32 %v7990, 1.0
    %v8007 = vadd.f32 %v7991, 1.0
    %v8008 = vadd.f32 %v7992, 1.0
    %v8009 = vadd.f32 %v7993, 1.0
    %v8010 = vadd.f32 %v7994, 1.0
    %v8011 = vadd.f32 %v7995, 1.0
    %v8012 = vadd.f32 %v7996, 1.0
    %v8013 = vadd.f32 %v7997, 1.0
    %v8014 = vadd.f32 %v7998, 1.0
    %v8015 = vmul.f32 %v7999, 0.5
    %v8016 = vmul.f32 %v8000, 0.5
    %v8017 = vmul.f32 %v8001, 0.5
    %v8018 = vmul.f32 %v8002, 0.5
    %v8019 = vmul.f32 %v8003, 0.5
    %v8020 = vmul.f32 %v8004, 0.5
    %v8021 = vmul.f32 %v8005, 0.5
    %v8022 = vmul.f32 %v8006, 0.5
    %v8023 = vmul.f32 %v8007, 0.5
    %v8024 = vmul.f32 %v8008, 0.5
    %v8025 = vmul.f32 %v8009, 0.5
    %v8026 = vmul.f32 %v8010, 0.5
    %v8027 = vmul.f32 %v8011, 0.5
    %v8028 = vmul.f32 %v8012, 0.5
    %v8029 = vmul.f32 %v8013, 0.5
    %v8030 = vmul.f32 %v8014, 0.5
    %v8031 = vmul.f32 %v7841, %v8015
    %v8032 = vmul.f32 %v7844, %v8016
    %v8033 = vmul.f32 %v7849, %v8017
    %v8034 = vmul.f32 %v7852, %v8018
    %v8035 = vmul.f32 %v7857, %v8019
    %v8036 = vmul.f32 %v7860, %v8020
    %v8037 = vmul.f32 %v7865, %v8021
    %v8038 = vmul.f32 %v7868, %v8022
    %v8039 = vmul.f32 %v7873, %v8023
    %v8040 = vmul.f32 %v7876, %v8024
    %v8041 = vmul.f32 %v7881, %v8025
    %v8042 = vmul.f32 %v7884, %v8026
    %v8043 = vmul.f32 %v7889, %v8027
    %v8044 = vmul.f32 %v7892, %v8028
    %v8045 = vmul.f32 %v7897, %v8029
    %v8046 = vmul.f32 %v7900, %v8030
    %v8047 = vpack.c.bf16 %v8032, %v8031
    %v8048 = vpack.c.bf16 %v8034, %v8033
    %v8049 = vpack.c.bf16 %v8036, %v8035
    %v8050 = vpack.c.bf16 %v8038, %v8037
    %v8051 = vpack.c.bf16 %v8040, %v8039
    %v8052 = vpack.c.bf16 %v8042, %v8041
    %v8053 = vpack.c.bf16 %v8044, %v8043
    %v8054 = vpack.c.bf16 %v8046, %v8045
    %s8055 = scalar_lea.vmem %s11, 32
    %v8056 = vld [vmem:[%s8055] sm:$0xf]
    %v8057 = vld [vmem:[%s8055 + $0x4] sm:$0xf]
    %v8058 = vld [vmem:[%s8055 + $0x8] sm:$0xf]
    %v8059 = vld [vmem:[%s8055 + $0xc] sm:$0xf]
    %v8060 = vld [vmem:[%s8055 + $0x10] sm:$0xf]
    %v8061 = vld [vmem:[%s8055 + $0x14] sm:$0xf]
    %v8062 = vld [vmem:[%s8055 + $0x18] sm:$0xf]
    %v8063 = vld [vmem:[%s8055 + $0x1c] sm:$0xf]
    %s8064 = scalar_lea.vmem %s12, 1
    %v8065 = vld [vmem:[%s8064] sm:$0x1]
    %v8067 = vlaneseq
    %v8068 = vshrl.u32 %v8067, 7
    %v8069 = vsub.s32 0, %v8068
    %v8070 = vrot.slane %v8065, %v8069
    %v8080 = vunpack.c.l.b16 %v8056
    %v8081 = vunpack.c.l.b16 %v8057
    %v8082 = vunpack.c.l.b16 %v8058
    %v8083 = vunpack.c.l.b16 %v8059
    %v8084 = vunpack.c.l.b16 %v8060
    %v8085 = vunpack.c.l.b16 %v8061
    %v8086 = vunpack.c.l.b16 %v8062
    %v8087 = vunpack.c.l.b16 %v8063
    %v8088 = vpack.c.b16 %v8081, %v8080
    %v8089 = vpack.c.b16 %v8083, %v8082
    %v8090 = vpack.c.b16 %v8085, %v8084
    %v8091 = vpack.c.b16 %v8087, %v8086
    %v8097 = vsel %vm3404, %v8047, 0
    %v8100 = vsel %vm3404, %v8048, 0
    %v8103 = vsel %vm3404, %v8049, 0
    %v8106 = vsel %vm3404, %v8050, 0
    %v8109 = vsel %vm3404, %v8051, 0
    %v8112 = vsel %vm3404, %v8052, 0
    %v8115 = vsel %vm3404, %v8053, 0
    %v8118 = vsel %vm3404, %v8054, 0
    %8120 = vmatprep.subr.bf16.mxu0 0
    %8121 = vmatpush1.bf16.msra.mxu0 %v8088
    %8122 = vmatprep.subr.bf16.mxu0 0
    %8123 = vmatpush1.bf16.msra.mxu0 %v8089
    %8124 = vmatprep.subr.bf16.mxu0 0
    %8125 = vmatpush1.bf16.msra.mxu0 %v8090
    %8126 = vmatprep.subr.bf16.mxu0 0
    %8127 = vmatpush1.bf16.msra.mxu0 %v8091
    %8128 = vmatprep.subr.bf16.mxu0 0
    %8129 = vmatpush1.bf16.msra.mxu0 0
    %8130 = vmatprep.subr.bf16.mxu0 0
    %8131 = vmatpush1.bf16.msra.mxu0 0
    %8132 = vmatprep.subr.bf16.mxu0 0
    %8133 = vmatpush1.bf16.msra.mxu0 0
    %8134 = vmatprep.subr.bf16.mxu0 0
    %8135 = vmatpush1.bf16.msra.mxu0 0
    %8136 = vmatprep.subr.bf16.mxu0 0
    %8137 = vmatpush1.bf16.msra.mxu0 0
    %8138 = vmatprep.subr.bf16.mxu0 0
    %8139 = vmatpush1.bf16.msra.mxu0 0
    %8140 = vmatprep.subr.bf16.mxu0 0
    %8141 = vmatpush1.bf16.msra.mxu0 0
    %8142 = vmatprep.subr.bf16.mxu0 0
    %8143 = vmatpush1.bf16.msra.mxu0 0
    %8144 = vmatprep.subr.bf16.mxu0 0
    %8145 = vmatpush1.bf16.msra.mxu0 0
    %8146 = vmatprep.subr.bf16.mxu0 0
    %8147 = vmatpush1.bf16.msra.mxu0 0
    %8148 = vmatprep.subr.bf16.mxu0 0
    %8149 = vmatpush1.bf16.msra.mxu0 0
    %8150 = vmatprep.subr.bf16.mxu0 0
    %8151 = vmatpush1.bf16.msra.mxu0 0
    %8152 = vmatprep.mubr.bf16.mxu0 0
    %8153 = vmatmul.mubr.bf16.gmra.mrb[0].mxu0 %v8097
    %v8154 = vpop.f32.mrb[0].mxu0
    %v8155 = vadd.f32 %v8070, %v8154
    %v8156 = vpop.f32.mrb[0].mxu0
    %v8157 = vpop.f32.mrb[0].mxu0
    %v8158 = vadd.f32 %v8070, %v8157
    %v8159 = vpop.f32.mrb[0].mxu0
    %8160 = vmatprep.mubr.bf16.mxu0 0
    %8161 = vmatmul.mubr.bf16.gmra.mrb[0].mxu0 %v8100
    %v8162 = vpop.f32.mrb[0].mxu0
    %v8163 = vadd.f32 %v8070, %v8162
    %v8164 = vpop.f32.mrb[0].mxu0
    %v8165 = vpop.f32.mrb[0].mxu0
    %v8166 = vadd.f32 %v8070, %v8165
    %v8167 = vpop.f32.mrb[0].mxu0
    %8168 = vmatprep.mubr.bf16.mxu0 0
    %8169 = vmatmul.mubr.bf16.gmra.mrb[0].mxu0 %v8103
    %v8170 = vpop.f32.mrb[0].mxu0
    %v8171 = vadd.f32 %v8070, %v8170
    %v8172 = vpop.f32.mrb[0].mxu0
    %v8173 = vpop.f32.mrb[0].mxu0
    %v8174 = vadd.f32 %v8070, %v8173
    %v8175 = vpop.f32.mrb[0].mxu0
    %8176 = vmatprep.mubr.bf16.mxu0 0
    %8177 = vmatmul.mubr.bf16.gmra.mrb[0].mxu0 %v8106
    %v8178 = vpop.f32.mrb[0].mxu0
    %v8179 = vadd.f32 %v8070, %v8178
    %v8180 = vpop.f32.mrb[0].mxu0
    %v8181 = vpop.f32.mrb[0].mxu0
    %v8182 = vadd.f32 %v8070, %v8181
    %v8183 = vpop.f32.mrb[0].mxu0
    %8184 = vmatprep.mubr.bf16.mxu0 0
    %8185 = vmatmul.mubr.bf16.gmra.mrb[0].mxu0 %v8109
    %v8186 = vpop.f32.mrb[0].mxu0
    %v8187 = vadd.f32 %v8070, %v8186
    %v8188 = vpop.f32.mrb[0].mxu0
    %v8189 = vpop.f32.mrb[0].mxu0
    %v8190 = vadd.f32 %v8070, %v8189
    %v8191 = vpop.f32.mrb[0].mxu0
    %8192 = vmatprep.mubr.bf16.mxu0 0
    %8193 = vmatmul.mubr.bf16.gmra.mrb[0].mxu0 %v8112
    %v8194 = vpop.f32.mrb[0].mxu0
    %v8195 = vadd.f32 %v8070, %v8194
    %v8196 = vpop.f32.mrb[0].mxu0
    %v8197 = vpop.f32.mrb[0].mxu0
    %v8198 = vadd.f32 %v8070, %v8197
    %v8199 = vpop.f32.mrb[0].mxu0
    %8200 = vmatprep.mubr.bf16.mxu0 0
    %8201 = vmatmul.mubr.bf16.gmra.mrb[0].mxu0 %v8115
    %v8202 = vpop.f32.mrb[0].mxu0
    %v8203 = vadd.f32 %v8070, %v8202
    %v8204 = vpop.f32.mrb[0].mxu0
    %v8205 = vpop.f32.mrb[0].mxu0
    %v8206 = vadd.f32 %v8070, %v8205
    %v8207 = vpop.f32.mrb[0].mxu0
    %8208 = vmatprep.mubr.bf16.mxu0 0
    %8209 = vmatmul.mubr.bf16.gmra.mrb[0].mxu0 %v8118
    %v8210 = vpop.f32.mrb[0].mxu0
    %v8211 = vadd.f32 %v8070, %v8210
    %v8212 = vpop.f32.mrb[0].mxu0
    %v8213 = vpop.f32.mrb[0].mxu0
    %v8214 = vadd.f32 %v8070, %v8213
    %v8215 = vpop.f32.mrb[0].mxu0
    %8216 = vdwg.mxu0
    %v8217 = vadd.f32 %v8155, %v7477
    %v8218 = vadd.f32 %v8158, %v7478
    %v8219 = vadd.f32 %v8163, %v7479
    %v8220 = vadd.f32 %v8166, %v7480
    %v8221 = vadd.f32 %v8171, %v7481
    %v8222 = vadd.f32 %v8174, %v7482
    %v8223 = vadd.f32 %v8179, %v7483
    %v8224 = vadd.f32 %v8182, %v7484
    %v8225 = vadd.f32 %v8187, %v7485
    %v8226 = vadd.f32 %v8190, %v7486
    %v8227 = vadd.f32 %v8195, %v7487
    %v8228 = vadd.f32 %v8198, %v7488
    %v8229 = vadd.f32 %v8203, %v7489
    %v8230 = vadd.f32 %v8206, %v7490
    %v8231 = vadd.f32 %v8211, %v7491
    %v8232 = vadd.f32 %v8214, %v7492
    %s8233 = scalar_lea.vmem %s13, 80
    %v8234 = vld [vmem:[%s8233] sm:$0xf]
    %v8235 = vld [vmem:[%s8233 + $0x4] sm:$0xf]
    %v8236 = vld [vmem:[%s8233 + $0x8] sm:$0xf]
    %v8237 = vld [vmem:[%s8233 + $0xc] sm:$0xf]
    %8238 = vmatprep.subr.bf16.mxu0 0
    %8239 = vmatpush1.bf16.msra.mxu0 %v4843
    %8240 = vmatprep.subr.bf16.mxu0 0
    %8241 = vmatpush1.bf16.msra.mxu0 %v4844
    %8242 = vmatprep.subr.bf16.mxu0 0
    %8243 = vmatpush1.bf16.msra.mxu0 %v4845
    %8244 = vmatprep.subr.bf16.mxu0 0
    %8245 = vmatpush1.bf16.msra.mxu0 %v4846
    %8246 = vmatprep.subr.bf16.mxu0 0
    %8247 = vmatpush1.bf16.msra.mxu0 %v4847
    %8248 = vmatprep.subr.bf16.mxu0 0
    %8249 = vmatpush1.bf16.msra.mxu0 %v4848
    %8250 = vmatprep.subr.bf16.mxu0 0
    %8251 = vmatpush1.bf16.msra.mxu0 %v4849
    %8252 = vmatprep.subr.bf16.mxu0 0
    %8253 = vmatpush1.bf16.msra.mxu0 %v4850
    %8254 = vmatprep.subr.bf16.mxu0 0
    %8255 = vmatpush1.bf16.msra.mxu0 0
    %8256 = vmatprep.subr.bf16.mxu0 0
    %8257 = vmatpush1.bf16.msra.mxu0 0
    %8258 = vmatprep.subr.bf16.mxu0 0
    %8259 = vmatpush1.bf16.msra.mxu0 0
    %8260 = vmatprep.subr.bf16.mxu0 0
    %8261 = vmatpush1.bf16.msra.mxu0 0
    %8262 = vmatprep.subr.bf16.mxu0 0
    %8263 = vmatpush1.bf16.msra.mxu0 0
    %8264 = vmatprep.subr.bf16.mxu0 0
    %8265 = vmatpush1.bf16.msra.mxu0 0
    %8266 = vmatprep.subr.bf16.mxu0 0
    %8267 = vmatpush1.bf16.msra.mxu0 0
    %8268 = vmatprep.subr.bf16.mxu0 0
    %8269 = vmatpush1.bf16.msra.mxu0 0
    %8270 = vmatprep.mubr.bf16.mxu0 0
    %8271 = vmatmul.mubr.bf16.gmra.mrb[0].mxu0 %v3594
    %v8272 = vpop.f32.mrb[0].mxu0
    %v8273 = vadd.f32 0.0, %v8272
    %v8274 = vpop.f32.mrb[0].mxu0
    %v8275 = vpop.f32.mrb[0].mxu0
    %v8276 = vadd.f32 0.0, %v8275
    %v8277 = vpop.f32.mrb[0].mxu0
    %8278 = vmatprep.mubr.bf16.mxu0 0
    %8279 = vmatmul.mubr.bf16.gmra.mrb[0].mxu0 %v3595
    %v8280 = vpop.f32.mrb[0].mxu0
    %v8281 = vadd.f32 0.0, %v8280
    %v8282 = vpop.f32.mrb[0].mxu0
    %v8283 = vpop.f32.mrb[0].mxu0
    %v8284 = vadd.f32 0.0, %v8283
    %v8285 = vpop.f32.mrb[0].mxu0
    %8286 = vmatprep.mubr.bf16.mxu0 0
    %8287 = vmatmul.mubr.bf16.gmra.mrb[0].mxu0 %v3596
    %v8288 = vpop.f32.mrb[0].mxu0
    %v8289 = vadd.f32 0.0, %v8288
    %v8290 = vpop.f32.mrb[0].mxu0
    %v8291 = vpop.f32.mrb[0].mxu0
    %v8292 = vadd.f32 0.0, %v8291
    %v8293 = vpop.f32.mrb[0].mxu0
    %8294 = vmatprep.mubr.bf16.mxu0 0
    %8295 = vmatmul.mubr.bf16.gmra.mrb[0].mxu0 %v3597
    %v8296 = vpop.f32.mrb[0].mxu0
    %v8297 = vadd.f32 0.0, %v8296
    %v8298 = vpop.f32.mrb[0].mxu0
    %v8299 = vpop.f32.mrb[0].mxu0
    %v8300 = vadd.f32 0.0, %v8299
    %v8301 = vpop.f32.mrb[0].mxu0
    %8302 = vmatprep.mubr.bf16.mxu0 0
    %8303 = vmatmul.mubr.bf16.gmra.mrb[0].mxu0 %v3598
    %v8304 = vpop.f32.mrb[0].mxu0
    %v8305 = vadd.f32 0.0, %v8304
    %v8306 = vpop.f32.mrb[0].mxu0
    %v8307 = vpop.f32.mrb[0].mxu0
    %v8308 = vadd.f32 0.0, %v8307
    %v8309 = vpop.f32.mrb[0].mxu0
    %8310 = vmatprep.mubr.bf16.mxu0 0
    %8311 = vmatmul.mubr.bf16.gmra.mrb[0].mxu0 %v3599
    %v8312 = vpop.f32.mrb[0].mxu0
    %v8313 = vadd.f32 0.0, %v8312
    %v8314 = vpop.f32.mrb[0].mxu0
    %v8315 = vpop.f32.mrb[0].mxu0
    %v8316 = vadd.f32 0.0, %v8315
    %v8317 = vpop.f32.mrb[0].mxu0
    %8318 = vmatprep.mubr.bf16.mxu0 0
    %8319 = vmatmul.mubr.bf16.gmra.mrb[0].mxu0 %v3600
    %v8320 = vpop.f32.mrb[0].mxu0
    %v8321 = vadd.f32 0.0, %v8320
    %v8322 = vpop.f32.mrb[0].mxu0
    %v8323 = vpop.f32.mrb[0].mxu0
    %v8324 = vadd.f32 0.0, %v8323
    %v8325 = vpop.f32.mrb[0].mxu0
    %8326 = vmatprep.mubr.bf16.mxu0 0
    %8327 = vmatmul.mubr.bf16.gmra.mrb[0].mxu0 %v3601
    %v8328 = vpop.f32.mrb[0].mxu0
    %v8329 = vadd.f32 0.0, %v8328
    %v8330 = vpop.f32.mrb[0].mxu0
    %v8331 = vpop.f32.mrb[0].mxu0
    %v8332 = vadd.f32 0.0, %v8331
    %v8333 = vpop.f32.mrb[0].mxu0
    %8334 = vdwg.mxu0
    %v8335 = vpack.c.bf16 %v8276, %v8273
    %v8336 = vpack.c.bf16 %v8284, %v8281
    %v8337 = vpack.c.bf16 %v8292, %v8289
    %v8338 = vpack.c.bf16 %v8300, %v8297
    %v8339 = vpack.c.bf16 %v8308, %v8305
    %v8340 = vpack.c.bf16 %v8316, %v8313
    %v8341 = vpack.c.bf16 %v8324, %v8321
    %v8342 = vpack.c.bf16 %v8332, %v8329
    %s8343 = scalar_lea.vmem %s13, 96
    %v8344 = vld [vmem:[%s8343] sm:$0xf]
    %v8345 = vld [vmem:[%s8343 + $0x4] sm:$0xf]
    %v8346 = vld [vmem:[%s8343 + $0x8] sm:$0xf]
    %v8347 = vld [vmem:[%s8343 + $0xc] sm:$0xf]
    %v8352 = vunpack.c.l.b16 %v8344
    %v8353 = vunpack.c.l.b16 %v8345
    %v8354 = vunpack.c.l.b16 %v8346
    %v8355 = vunpack.c.l.b16 %v8347
    %v8356 = vpack.c.b16 %v8353, %v8352
    %v8357 = vpack.c.b16 %v8355, %v8354
    %v8361 = vsel %vm180, %v8335, 0
    %v8364 = vsel %vm180, %v8336, 0
    %v8367 = vsel %vm180, %v8337, 0
    %v8370 = vsel %vm180, %v8338, 0
    %v8373 = vsel %vm180, %v8339, 0
    %v8376 = vsel %vm180, %v8340, 0
    %v8379 = vsel %vm180, %v8341, 0
    %v8382 = vsel %vm180, %v8342, 0
    %8384 = vmatprep.subr.bf16.mxu0 0
    %8385 = vmatpush1.bf16.msra.mxu0 %v8356
    %8386 = vmatprep.subr.bf16.mxu0 0
    %8387 = vmatpush1.bf16.msra.mxu0 %v8357
    %8388 = vmatprep.subr.bf16.mxu0 0
    %8389 = vmatpush1.bf16.msra.mxu0 0
    %8390 = vmatprep.subr.bf16.mxu0 0
    %8391 = vmatpush1.bf16.msra.mxu0 0
    %8392 = vmatprep.subr.bf16.mxu0 0
    %8393 = vmatpush1.bf16.msra.mxu0 0
    %8394 = vmatprep.subr.bf16.mxu0 0
    %8395 = vmatpush1.bf16.msra.mxu0 0
    %8396 = vmatprep.subr.bf16.mxu0 0
    %8397 = vmatpush1.bf16.msra.mxu0 0
    %8398 = vmatprep.subr.bf16.mxu0 0
    %8399 = vmatpush1.bf16.msra.mxu0 0
    %8400 = vmatprep.subr.bf16.mxu0 0
    %8401 = vmatpush1.bf16.msra.mxu0 0
    %8402 = vmatprep.subr.bf16.mxu0 0
    %8403 = vmatpush1.bf16.msra.mxu0 0
    %8404 = vmatprep.subr.bf16.mxu0 0
    %8405 = vmatpush1.bf16.msra.mxu0 0
    %8406 = vmatprep.subr.bf16.mxu0 0
    %8407 = vmatpush1.bf16.msra.mxu0 0
    %8408 = vmatprep.subr.bf16.mxu0 0
    %8409 = vmatpush1.bf16.msra.mxu0 0
    %8410 = vmatprep.subr.bf16.mxu0 0
    %8411 = vmatpush1.bf16.msra.mxu0 0
    %8412 = vmatprep.subr.bf16.mxu0 0
    %8413 = vmatpush1.bf16.msra.mxu0 0
    %8414 = vmatprep.subr.bf16.mxu0 0
    %8415 = vmatpush1.bf16.msra.mxu0 0
    %8416 = vmatprep.mubr.bf16.mxu0 0
    %8417 = vmatmul.mubr.bf16.gmra.mrb[0].mxu0 %v8361
    %v8418 = vpop.f32.mrb[0].mxu0
    %v8419 = vadd.f32 0.0, %v8418
    %v8420 = vpop.f32.mrb[0].mxu0
    %v8421 = vpop.f32.mrb[0].mxu0
    %v8422 = vadd.f32 0.0, %v8421
    %v8423 = vpop.f32.mrb[0].mxu0
    %8424 = vmatprep.mubr.bf16.mxu0 0
    %8425 = vmatmul.mubr.bf16.gmra.mrb[0].mxu0 %v8364
    %v8426 = vpop.f32.mrb[0].mxu0
    %v8427 = vadd.f32 0.0, %v8426
    %v8428 = vpop.f32.mrb[0].mxu0
    %v8429 = vpop.f32.mrb[0].mxu0
    %v8430 = vadd.f32 0.0, %v8429
    %v8431 = vpop.f32.mrb[0].mxu0
    %8432 = vmatprep.mubr.bf16.mxu0 0
    %8433 = vmatmul.mubr.bf16.gmra.mrb[0].mxu0 %v8367
    %v8434 = vpop.f32.mrb[0].mxu0
    %v8435 = vadd.f32 0.0, %v8434
    %v8436 = vpop.f32.mrb[0].mxu0
    %v8437 = vpop.f32.mrb[0].mxu0
    %v8438 = vadd.f32 0.0, %v8437
    %v8439 = vpop.f32.mrb[0].mxu0
    %8440 = vmatprep.mubr.bf16.mxu0 0
    %8441 = vmatmul.mubr.bf16.gmra.mrb[0].mxu0 %v8370
    %v8442 = vpop.f32.mrb[0].mxu0
    %v8443 = vadd.f32 0.0, %v8442
    %v8444 = vpop.f32.mrb[0].mxu0
    %v8445 = vpop.f32.mrb[0].mxu0
    %v8446 = vadd.f32 0.0, %v8445
    %v8447 = vpop.f32.mrb[0].mxu0
    %8448 = vmatprep.mubr.bf16.mxu0 0
    %8449 = vmatmul.mubr.bf16.gmra.mrb[0].mxu0 %v8373
    %v8450 = vpop.f32.mrb[0].mxu0
    %v8451 = vadd.f32 0.0, %v8450
    %v8452 = vpop.f32.mrb[0].mxu0
    %v8453 = vpop.f32.mrb[0].mxu0
    %v8454 = vadd.f32 0.0, %v8453
    %v8455 = vpop.f32.mrb[0].mxu0
    %8456 = vmatprep.mubr.bf16.mxu0 0
    %8457 = vmatmul.mubr.bf16.gmra.mrb[0].mxu0 %v8376
    %v8458 = vpop.f32.mrb[0].mxu0
    %v8459 = vadd.f32 0.0, %v8458
    %v8460 = vpop.f32.mrb[0].mxu0
    %v8461 = vpop.f32.mrb[0].mxu0
    %v8462 = vadd.f32 0.0, %v8461
    %v8463 = vpop.f32.mrb[0].mxu0
    %8464 = vmatprep.mubr.bf16.mxu0 0
    %8465 = vmatmul.mubr.bf16.gmra.mrb[0].mxu0 %v8379
    %v8466 = vpop.f32.mrb[0].mxu0
    %v8467 = vadd.f32 0.0, %v8466
    %v8468 = vpop.f32.mrb[0].mxu0
    %v8469 = vpop.f32.mrb[0].mxu0
    %v8470 = vadd.f32 0.0, %v8469
    %v8471 = vpop.f32.mrb[0].mxu0
    %8472 = vmatprep.mubr.bf16.mxu0 0
    %8473 = vmatmul.mubr.bf16.gmra.mrb[0].mxu0 %v8382
    %v8474 = vpop.f32.mrb[0].mxu0
    %v8475 = vadd.f32 0.0, %v8474
    %v8476 = vpop.f32.mrb[0].mxu0
    %v8477 = vpop.f32.mrb[0].mxu0
    %v8478 = vadd.f32 0.0, %v8477
    %v8479 = vpop.f32.mrb[0].mxu0
    %8480 = vdwg.mxu0
    %v8485 = vunpack.c.l.b16 %v8234
    %v8486 = vunpack.c.l.b16 %v8235
    %v8487 = vunpack.c.l.b16 %v8236
    %v8488 = vunpack.c.l.b16 %v8237
    %v8489 = vpack.c.b16 %v8486, %v8485
    %v8490 = vpack.c.b16 %v8488, %v8487
    %8493 = vmatprep.subr.bf16.mxu0 0
    %8494 = vmatpush1.bf16.msra.mxu0 %v8489
    %8495 = vmatprep.subr.bf16.mxu0 0
    %8496 = vmatpush1.bf16.msra.mxu0 %v8490
    %8497 = vmatprep.subr.bf16.mxu0 0
    %8498 = vmatpush1.bf16.msra.mxu0 0
    %8499 = vmatprep.subr.bf16.mxu0 0
    %8500 = vmatpush1.bf16.msra.mxu0 0
    %8501 = vmatprep.subr.bf16.mxu0 0
    %8502 = vmatpush1.bf16.msra.mxu0 0
    %8503 = vmatprep.subr.bf16.mxu0 0
    %8504 = vmatpush1.bf16.msra.mxu0 0
    %8505 = vmatprep.subr.bf16.mxu0 0
    %8506 = vmatpush1.bf16.msra.mxu0 0
    %8507 = vmatprep.subr.bf16.mxu0 0
    %8508 = vmatpush1.bf16.msra.mxu0 0
    %8509 = vmatprep.subr.bf16.mxu0 0
    %8510 = vmatpush1.bf16.msra.mxu0 0
    %8511 = vmatprep.subr.bf16.mxu0 0
    %8512 = vmatpush1.bf16.msra.mxu0 0
    %8513 = vmatprep.subr.bf16.mxu0 0
    %8514 = vmatpush1.bf16.msra.mxu0 0
    %8515 = vmatprep.subr.bf16.mxu0 0
    %8516 = vmatpush1.bf16.msra.mxu0 0
    %8517 = vmatprep.subr.bf16.mxu0 0
    %8518 = vmatpush1.bf16.msra.mxu0 0
    %8519 = vmatprep.subr.bf16.mxu0 0
    %8520 = vmatpush1.bf16.msra.mxu0 0
    %8521 = vmatprep.subr.bf16.mxu0 0
    %8522 = vmatpush1.bf16.msra.mxu0 0
    %8523 = vmatprep.subr.bf16.mxu0 0
    %8524 = vmatpush1.bf16.msra.mxu0 0
    %8525 = vmatprep.mubr.bf16.mxu0 0
    %8526 = vmatmul.mubr.bf16.gmra.mrb[0].mxu0 %v4869
    %v8527 = vpop.f32.mrb[0].mxu0
    %v8528 = vadd.f32 %v8419, %v8527
    %v8529 = vpop.f32.mrb[0].mxu0
    %v8530 = vpop.f32.mrb[0].mxu0
    %v8531 = vadd.f32 %v8422, %v8530
    %v8532 = vpop.f32.mrb[0].mxu0
    %8533 = vmatprep.mubr.bf16.mxu0 0
    %8534 = vmatmul.mubr.bf16.gmra.mrb[0].mxu0 %v4872
    %v8535 = vpop.f32.mrb[0].mxu0
    %v8536 = vadd.f32 %v8427, %v8535
    %v8537 = vpop.f32.mrb[0].mxu0
    %v8538 = vpop.f32.mrb[0].mxu0
    %v8539 = vadd.f32 %v8430, %v8538
    %v8540 = vpop.f32.mrb[0].mxu0
    %8541 = vmatprep.mubr.bf16.mxu0 0
    %8542 = vmatmul.mubr.bf16.gmra.mrb[0].mxu0 %v4875
    %v8543 = vpop.f32.mrb[0].mxu0
    %v8544 = vadd.f32 %v8435, %v8543
    %v8545 = vpop.f32.mrb[0].mxu0
    %v8546 = vpop.f32.mrb[0].mxu0
    %v8547 = vadd.f32 %v8438, %v8546
    %v8548 = vpop.f32.mrb[0].mxu0
    %8549 = vmatprep.mubr.bf16.mxu0 0
    %8550 = vmatmul.mubr.bf16.gmra.mrb[0].mxu0 %v4878
    %v8551 = vpop.f32.mrb[0].mxu0
    %v8552 = vadd.f32 %v8443, %v8551
    %v8553 = vpop.f32.mrb[0].mxu0
    %v8554 = vpop.f32.mrb[0].mxu0
    %v8555 = vadd.f32 %v8446, %v8554
    %v8556 = vpop.f32.mrb[0].mxu0
    %8557 = vmatprep.mubr.bf16.mxu0 0
    %8558 = vmatmul.mubr.bf16.gmra.mrb[0].mxu0 %v4881
    %v8559 = vpop.f32.mrb[0].mxu0
    %v8560 = vadd.f32 %v8451, %v8559
    %v8561 = vpop.f32.mrb[0].mxu0
    %v8562 = vpop.f32.mrb[0].mxu0
    %v8563 = vadd.f32 %v8454, %v8562
    %v8564 = vpop.f32.mrb[0].mxu0
    %8565 = vmatprep.mubr.bf16.mxu0 0
    %8566 = vmatmul.mubr.bf16.gmra.mrb[0].mxu0 %v4884
    %v8567 = vpop.f32.mrb[0].mxu0
    %v8568 = vadd.f32 %v8459, %v8567
    %v8569 = vpop.f32.mrb[0].mxu0
    %v8570 = vpop.f32.mrb[0].mxu0
    %v8571 = vadd.f32 %v8462, %v8570
    %v8572 = vpop.f32.mrb[0].mxu0
    %8573 = vmatprep.mubr.bf16.mxu0 0
    %8574 = vmatmul.mubr.bf16.gmra.mrb[0].mxu0 %v4887
    %v8575 = vpop.f32.mrb[0].mxu0
    %v8576 = vadd.f32 %v8467, %v8575
    %v8577 = vpop.f32.mrb[0].mxu0
    %v8578 = vpop.f32.mrb[0].mxu0
    %v8579 = vadd.f32 %v8470, %v8578
    %v8580 = vpop.f32.mrb[0].mxu0
    %8581 = vmatprep.mubr.bf16.mxu0 0
    %8582 = vmatmul.mubr.bf16.gmra.mrb[0].mxu0 %v4890
    %v8583 = vpop.f32.mrb[0].mxu0
    %v8584 = vadd.f32 %v8475, %v8583
    %v8585 = vpop.f32.mrb[0].mxu0
    %v8586 = vpop.f32.mrb[0].mxu0
    %v8587 = vadd.f32 %v8478, %v8586
    %v8588 = vpop.f32.mrb[0].mxu0
    %8589 = vdwg.mxu0
    %8590 = vmatprep.subr.bf16.mxu0 0
    %8591 = vmatpush1.bf16.msra.mxu0 %v8335
    %8592 = vmatprep.subr.bf16.mxu0 0
    %8593 = vmatpush1.bf16.msra.mxu0 %v8336
    %8594 = vmatprep.subr.bf16.mxu0 0
    %8595 = vmatpush1.bf16.msra.mxu0 %v8337
    %8596 = vmatprep.subr.bf16.mxu0 0
    %8597 = vmatpush1.bf16.msra.mxu0 %v8338
    %8598 = vmatprep.subr.bf16.mxu0 0
    %8599 = vmatpush1.bf16.msra.mxu0 %v8339
    %8600 = vmatprep.subr.bf16.mxu0 0
    %8601 = vmatpush1.bf16.msra.mxu0 %v8340
    %8602 = vmatprep.subr.bf16.mxu0 0
    %8603 = vmatpush1.bf16.msra.mxu0 %v8341
    %8604 = vmatprep.subr.bf16.mxu0 0
    %8605 = vmatpush1.bf16.msra.mxu0 %v8342
    %8606 = vmatprep.subr.bf16.mxu0 0
    %8607 = vmatpush1.bf16.msra.mxu0 0
    %8608 = vmatprep.subr.bf16.mxu0 0
    %8609 = vmatpush1.bf16.msra.mxu0 0
    %8610 = vmatprep.subr.bf16.mxu0 0
    %8611 = vmatpush1.bf16.msra.mxu0 0
    %8612 = vmatprep.subr.bf16.mxu0 0
    %8613 = vmatpush1.bf16.msra.mxu0 0
    %8614 = vmatprep.subr.bf16.mxu0 0
    %8615 = vmatpush1.bf16.msra.mxu0 0
    %8616 = vmatprep.subr.bf16.mxu0 0
    %8617 = vmatpush1.bf16.msra.mxu0 0
    %8618 = vmatprep.subr.bf16.mxu0 0
    %8619 = vmatpush1.bf16.msra.mxu0 0
    %8620 = vmatprep.subr.bf16.mxu0 0
    %8621 = vmatpush1.bf16.msra.mxu0 0
    %8622 = vmatprep.mubr.bf16.mxu0 0
    %8623 = vmatmul.mubr.bf16.gmra.mrb[0].mxu0 %v3594
    %v8624 = vpop.f32.mrb[0].mxu0
    %v8625 = vadd.f32 0.0, %v8624
    %v8626 = vpop.f32.mrb[0].mxu0
    %v8627 = vpop.f32.mrb[0].mxu0
    %v8628 = vadd.f32 0.0, %v8627
    %v8629 = vpop.f32.mrb[0].mxu0
    %8630 = vmatprep.mubr.bf16.mxu0 0
    %8631 = vmatmul.mubr.bf16.gmra.mrb[0].mxu0 %v3595
    %v8632 = vpop.f32.mrb[0].mxu0
    %v8633 = vadd.f32 0.0, %v8632
    %v8634 = vpop.f32.mrb[0].mxu0
    %v8635 = vpop.f32.mrb[0].mxu0
    %v8636 = vadd.f32 0.0, %v8635
    %v8637 = vpop.f32.mrb[0].mxu0
    %8638 = vmatprep.mubr.bf16.mxu0 0
    %8639 = vmatmul.mubr.bf16.gmra.mrb[0].mxu0 %v3596
    %v8640 = vpop.f32.mrb[0].mxu0
    %v8641 = vadd.f32 0.0, %v8640
    %v8642 = vpop.f32.mrb[0].mxu0
    %v8643 = vpop.f32.mrb[0].mxu0
    %v8644 = vadd.f32 0.0, %v8643
    %v8645 = vpop.f32.mrb[0].mxu0
    %8646 = vmatprep.mubr.bf16.mxu0 0
    %8647 = vmatmul.mubr.bf16.gmra.mrb[0].mxu0 %v3597
    %v8648 = vpop.f32.mrb[0].mxu0
    %v8649 = vadd.f32 0.0, %v8648
    %v8650 = vpop.f32.mrb[0].mxu0
    %v8651 = vpop.f32.mrb[0].mxu0
    %v8652 = vadd.f32 0.0, %v8651
    %v8653 = vpop.f32.mrb[0].mxu0
    %8654 = vmatprep.mubr.bf16.mxu0 0
    %8655 = vmatmul.mubr.bf16.gmra.mrb[0].mxu0 %v3598
    %v8656 = vpop.f32.mrb[0].mxu0
    %v8657 = vadd.f32 0.0, %v8656
    %v8658 = vpop.f32.mrb[0].mxu0
    %v8659 = vpop.f32.mrb[0].mxu0
    %v8660 = vadd.f32 0.0, %v8659
    %v8661 = vpop.f32.mrb[0].mxu0
    %8662 = vmatprep.mubr.bf16.mxu0 0
    %8663 = vmatmul.mubr.bf16.gmra.mrb[0].mxu0 %v3599
    %v8664 = vpop.f32.mrb[0].mxu0
    %v8665 = vadd.f32 0.0, %v8664
    %v8666 = vpop.f32.mrb[0].mxu0
    %v8667 = vpop.f32.mrb[0].mxu0
    %v8668 = vadd.f32 0.0, %v8667
    %v8669 = vpop.f32.mrb[0].mxu0
    %8670 = vmatprep.mubr.bf16.mxu0 0
    %8671 = vmatmul.mubr.bf16.gmra.mrb[0].mxu0 %v3600
    %v8672 = vpop.f32.mrb[0].mxu0
    %v8673 = vadd.f32 0.0, %v8672
    %v8674 = vpop.f32.mrb[0].mxu0
    %v8675 = vpop.f32.mrb[0].mxu0
    %v8676 = vadd.f32 0.0, %v8675
    %v8677 = vpop.f32.mrb[0].mxu0
    %8678 = vmatprep.mubr.bf16.mxu0 0
    %8679 = vmatmul.mubr.bf16.gmra.mrb[0].mxu0 %v3601
    %v8680 = vpop.f32.mrb[0].mxu0
    %v8681 = vadd.f32 0.0, %v8680
    %v8682 = vpop.f32.mrb[0].mxu0
    %v8683 = vpop.f32.mrb[0].mxu0
    %v8684 = vadd.f32 0.0, %v8683
    %v8685 = vpop.f32.mrb[0].mxu0
    %8686 = vdwg.mxu0
    %v8687 = vpack.c.bf16 %v8628, %v8625
    %v8688 = vpack.c.bf16 %v8636, %v8633
    %v8689 = vpack.c.bf16 %v8644, %v8641
    %v8690 = vpack.c.bf16 %v8652, %v8649
    %v8691 = vpack.c.bf16 %v8660, %v8657
    %v8692 = vpack.c.bf16 %v8668, %v8665
    %v8693 = vpack.c.bf16 %v8676, %v8673
    %v8694 = vpack.c.bf16 %v8684, %v8681
    %s8695 = scalar_lea.vmem %s13, 112
    %v8696 = vld [vmem:[%s8695] sm:$0xf]
    %v8697 = vld [vmem:[%s8695 + $0x4] sm:$0xf]
    %v8698 = vld [vmem:[%s8695 + $0x8] sm:$0xf]
    %v8699 = vld [vmem:[%s8695 + $0xc] sm:$0xf]
    %v8704 = vunpack.c.l.b16 %v8696
    %v8705 = vunpack.c.l.b16 %v8697
    %v8706 = vunpack.c.l.b16 %v8698
    %v8707 = vunpack.c.l.b16 %v8699
    %v8708 = vpack.c.b16 %v8705, %v8704
    %v8709 = vpack.c.b16 %v8707, %v8706
    %v8713 = vsel %vm180, %v8687, 0
    %v8716 = vsel %vm180, %v8688, 0
    %v8719 = vsel %vm180, %v8689, 0
    %v8722 = vsel %vm180, %v8690, 0
    %v8725 = vsel %vm180, %v8691, 0
    %v8728 = vsel %vm180, %v8692, 0
    %v8731 = vsel %vm180, %v8693, 0
    %v8734 = vsel %vm180, %v8694, 0
    %8736 = vmatprep.subr.bf16.mxu0 0
    %8737 = vmatpush1.bf16.msra.mxu0 %v8708
    %8738 = vmatprep.subr.bf16.mxu0 0
    %8739 = vmatpush1.bf16.msra.mxu0 %v8709
    %8740 = vmatprep.subr.bf16.mxu0 0
    %8741 = vmatpush1.bf16.msra.mxu0 0
    %8742 = vmatprep.subr.bf16.mxu0 0
    %8743 = vmatpush1.bf16.msra.mxu0 0
    %8744 = vmatprep.subr.bf16.mxu0 0
    %8745 = vmatpush1.bf16.msra.mxu0 0
    %8746 = vmatprep.subr.bf16.mxu0 0
    %8747 = vmatpush1.bf16.msra.mxu0 0
    %8748 = vmatprep.subr.bf16.mxu0 0
    %8749 = vmatpush1.bf16.msra.mxu0 0
    %8750 = vmatprep.subr.bf16.mxu0 0
    %8751 = vmatpush1.bf16.msra.mxu0 0
    %8752 = vmatprep.subr.bf16.mxu0 0
    %8753 = vmatpush1.bf16.msra.mxu0 0
    %8754 = vmatprep.subr.bf16.mxu0 0
    %8755 = vmatpush1.bf16.msra.mxu0 0
    %8756 = vmatprep.subr.bf16.mxu0 0
    %8757 = vmatpush1.bf16.msra.mxu0 0
    %8758 = vmatprep.subr.bf16.mxu0 0
    %8759 = vmatpush1.bf16.msra.mxu0 0
    %8760 = vmatprep.subr.bf16.mxu0 0
    %8761 = vmatpush1.bf16.msra.mxu0 0
    %8762 = vmatprep.subr.bf16.mxu0 0
    %8763 = vmatpush1.bf16.msra.mxu0 0
    %8764 = vmatprep.subr.bf16.mxu0 0
    %8765 = vmatpush1.bf16.msra.mxu0 0
    %8766 = vmatprep.subr.bf16.mxu0 0
    %8767 = vmatpush1.bf16.msra.mxu0 0
    %8768 = vmatprep.mubr.bf16.mxu0 0
    %8769 = vmatmul.mubr.bf16.gmra.mrb[0].mxu0 %v8713
    %v8770 = vpop.f32.mrb[0].mxu0
    %v8771 = vadd.f32 0.0, %v8770
    %v8772 = vpop.f32.mrb[0].mxu0
    %v8773 = vpop.f32.mrb[0].mxu0
    %v8774 = vadd.f32 0.0, %v8773
    %v8775 = vpop.f32.mrb[0].mxu0
    %8776 = vmatprep.mubr.bf16.mxu0 0
    %8777 = vmatmul.mubr.bf16.gmra.mrb[0].mxu0 %v8716
    %v8778 = vpop.f32.mrb[0].mxu0
    %v8779 = vadd.f32 0.0, %v8778
    %v8780 = vpop.f32.mrb[0].mxu0
    %v8781 = vpop.f32.mrb[0].mxu0
    %v8782 = vadd.f32 0.0, %v8781
    %v8783 = vpop.f32.mrb[0].mxu0
    %8784 = vmatprep.mubr.bf16.mxu0 0
    %8785 = vmatmul.mubr.bf16.gmra.mrb[0].mxu0 %v8719
    %v8786 = vpop.f32.mrb[0].mxu0
    %v8787 = vadd.f32 0.0, %v8786
    %v8788 = vpop.f32.mrb[0].mxu0
    %v8789 = vpop.f32.mrb[0].mxu0
    %v8790 = vadd.f32 0.0, %v8789
    %v8791 = vpop.f32.mrb[0].mxu0
    %8792 = vmatprep.mubr.bf16.mxu0 0
    %8793 = vmatmul.mubr.bf16.gmra.mrb[0].mxu0 %v8722
    %v8794 = vpop.f32.mrb[0].mxu0
    %v8795 = vadd.f32 0.0, %v8794
    %v8796 = vpop.f32.mrb[0].mxu0
    %v8797 = vpop.f32.mrb[0].mxu0
    %v8798 = vadd.f32 0.0, %v8797
    %v8799 = vpop.f32.mrb[0].mxu0
    %8800 = vmatprep.mubr.bf16.mxu0 0
    %8801 = vmatmul.mubr.bf16.gmra.mrb[0].mxu0 %v8725
    %v8802 = vpop.f32.mrb[0].mxu0
    %v8803 = vadd.f32 0.0, %v8802
    %v8804 = vpop.f32.mrb[0].mxu0
    %v8805 = vpop.f32.mrb[0].mxu0
    %v8806 = vadd.f32 0.0, %v8805
    %v8807 = vpop.f32.mrb[0].mxu0
    %8808 = vmatprep.mubr.bf16.mxu0 0
    %8809 = vmatmul.mubr.bf16.gmra.mrb[0].mxu0 %v8728
    %v8810 = vpop.f32.mrb[0].mxu0
    %v8811 = vadd.f32 0.0, %v8810
    %v8812 = vpop.f32.mrb[0].mxu0
    %v8813 = vpop.f32.mrb[0].mxu0
    %v8814 = vadd.f32 0.0, %v8813
    %v8815 = vpop.f32.mrb[0].mxu0
    %8816 = vmatprep.mubr.bf16.mxu0 0
    %8817 = vmatmul.mubr.bf16.gmra.mrb[0].mxu0 %v8731
    %v8818 = vpop.f32.mrb[0].mxu0
    %v8819 = vadd.f32 0.0, %v8818
    %v8820 = vpop.f32.mrb[0].mxu0
    %v8821 = vpop.f32.mrb[0].mxu0
    %v8822 = vadd.f32 0.0, %v8821
    %v8823 = vpop.f32.mrb[0].mxu0
    %8824 = vmatprep.mubr.bf16.mxu0 0
    %8825 = vmatmul.mubr.bf16.gmra.mrb[0].mxu0 %v8734
    %v8826 = vpop.f32.mrb[0].mxu0
    %v8827 = vadd.f32 0.0, %v8826
    %v8828 = vpop.f32.mrb[0].mxu0
    %v8829 = vpop.f32.mrb[0].mxu0
    %v8830 = vadd.f32 0.0, %v8829
    %v8831 = vpop.f32.mrb[0].mxu0
    %8832 = vdwg.mxu0
    %v8833 = vadd.f32 %v8528, %v8771
    %v8834 = vadd.f32 %v8531, %v8774
    %v8835 = vadd.f32 %v8536, %v8779
    %v8836 = vadd.f32 %v8539, %v8782
    %v8837 = vadd.f32 %v8544, %v8787
    %v8838 = vadd.f32 %v8547, %v8790
    %v8839 = vadd.f32 %v8552, %v8795
    %v8840 = vadd.f32 %v8555, %v8798
    %v8841 = vadd.f32 %v8560, %v8803
    %v8842 = vadd.f32 %v8563, %v8806
    %v8843 = vadd.f32 %v8568, %v8811
    %v8844 = vadd.f32 %v8571, %v8814
    %v8845 = vadd.f32 %v8576, %v8819
    %v8846 = vadd.f32 %v8579, %v8822
    %v8847 = vadd.f32 %v8584, %v8827
    %v8848 = vadd.f32 %v8587, %v8830
    %8849 = vmatprep.subr.bf16.mxu0 0
    %8850 = vmatpush1.bf16.msra.mxu0 %v4843
    %8851 = vmatprep.subr.bf16.mxu0 0
    %8852 = vmatpush1.bf16.msra.mxu0 %v4844
    %8853 = vmatprep.subr.bf16.mxu0 0
    %8854 = vmatpush1.bf16.msra.mxu0 %v4845
    %8855 = vmatprep.subr.bf16.mxu0 0
    %8856 = vmatpush1.bf16.msra.mxu0 %v4846
    %8857 = vmatprep.subr.bf16.mxu0 0
    %8858 = vmatpush1.bf16.msra.mxu0 %v4847
    %8859 = vmatprep.subr.bf16.mxu0 0
    %8860 = vmatpush1.bf16.msra.mxu0 %v4848
    %8861 = vmatprep.subr.bf16.mxu0 0
    %8862 = vmatpush1.bf16.msra.mxu0 %v4849
    %8863 = vmatprep.subr.bf16.mxu0 0
    %8864 = vmatpush1.bf16.msra.mxu0 %v4850
    %8865 = vmatprep.subr.bf16.mxu0 0
    %8866 = vmatpush1.bf16.msra.mxu0 0
    %8867 = vmatprep.subr.bf16.mxu0 0
    %8868 = vmatpush1.bf16.msra.mxu0 0
    %8869 = vmatprep.subr.bf16.mxu0 0
    %8870 = vmatpush1.bf16.msra.mxu0 0
    %8871 = vmatprep.subr.bf16.mxu0 0
    %8872 = vmatpush1.bf16.msra.mxu0 0
    %8873 = vmatprep.subr.bf16.mxu0 0
    %8874 = vmatpush1.bf16.msra.mxu0 0
    %8875 = vmatprep.subr.bf16.mxu0 0
    %8876 = vmatpush1.bf16.msra.mxu0 0
    %8877 = vmatprep.subr.bf16.mxu0 0
    %8878 = vmatpush1.bf16.msra.mxu0 0
    %8879 = vmatprep.subr.bf16.mxu0 0
    %8880 = vmatpush1.bf16.msra.mxu0 0
    %8881 = vmatprep.mubr.bf16.mxu0 0
    %8882 = vmatmul.mubr.bf16.gmra.mrb[0].mxu0 %v4270
    %v8883 = vpop.f32.mrb[0].mxu0
    %v8884 = vadd.f32 0.0, %v8883
    %v8885 = vpop.f32.mrb[0].mxu0
    %v8886 = vpop.f32.mrb[0].mxu0
    %v8887 = vadd.f32 0.0, %v8886
    %v8888 = vpop.f32.mrb[0].mxu0
    %8889 = vmatprep.mubr.bf16.mxu0 0
    %8890 = vmatmul.mubr.bf16.gmra.mrb[0].mxu0 %v4271
    %v8891 = vpop.f32.mrb[0].mxu0
    %v8892 = vadd.f32 0.0, %v8891
    %v8893 = vpop.f32.mrb[0].mxu0
    %v8894 = vpop.f32.mrb[0].mxu0
    %v8895 = vadd.f32 0.0, %v8894
    %v8896 = vpop.f32.mrb[0].mxu0
    %8897 = vmatprep.mubr.bf16.mxu0 0
    %8898 = vmatmul.mubr.bf16.gmra.mrb[0].mxu0 %v4272
    %v8899 = vpop.f32.mrb[0].mxu0
    %v8900 = vadd.f32 0.0, %v8899
    %v8901 = vpop.f32.mrb[0].mxu0
    %v8902 = vpop.f32.mrb[0].mxu0
    %v8903 = vadd.f32 0.0, %v8902
    %v8904 = vpop.f32.mrb[0].mxu0
    %8905 = vmatprep.mubr.bf16.mxu0 0
    %8906 = vmatmul.mubr.bf16.gmra.mrb[0].mxu0 %v4273
    %v8907 = vpop.f32.mrb[0].mxu0
    %v8908 = vadd.f32 0.0, %v8907
    %v8909 = vpop.f32.mrb[0].mxu0
    %v8910 = vpop.f32.mrb[0].mxu0
    %v8911 = vadd.f32 0.0, %v8910
    %v8912 = vpop.f32.mrb[0].mxu0
    %8913 = vmatprep.mubr.bf16.mxu0 0
    %8914 = vmatmul.mubr.bf16.gmra.mrb[0].mxu0 %v4274
    %v8915 = vpop.f32.mrb[0].mxu0
    %v8916 = vadd.f32 0.0, %v8915
    %v8917 = vpop.f32.mrb[0].mxu0
    %v8918 = vpop.f32.mrb[0].mxu0
    %v8919 = vadd.f32 0.0, %v8918
    %v8920 = vpop.f32.mrb[0].mxu0
    %8921 = vmatprep.mubr.bf16.mxu0 0
    %8922 = vmatmul.mubr.bf16.gmra.mrb[0].mxu0 %v4275
    %v8923 = vpop.f32.mrb[0].mxu0
    %v8924 = vadd.f32 0.0, %v8923
    %v8925 = vpop.f32.mrb[0].mxu0
    %v8926 = vpop.f32.mrb[0].mxu0
    %v8927 = vadd.f32 0.0, %v8926
    %v8928 = vpop.f32.mrb[0].mxu0
    %8929 = vmatprep.mubr.bf16.mxu0 0
    %8930 = vmatmul.mubr.bf16.gmra.mrb[0].mxu0 %v4276
    %v8931 = vpop.f32.mrb[0].mxu0
    %v8932 = vadd.f32 0.0, %v8931
    %v8933 = vpop.f32.mrb[0].mxu0
    %v8934 = vpop.f32.mrb[0].mxu0
    %v8935 = vadd.f32 0.0, %v8934
    %v8936 = vpop.f32.mrb[0].mxu0
    %8937 = vmatprep.mubr.bf16.mxu0 0
    %8938 = vmatmul.mubr.bf16.gmra.mrb[0].mxu0 %v4277
    %v8939 = vpop.f32.mrb[0].mxu0
    %v8940 = vadd.f32 0.0, %v8939
    %v8941 = vpop.f32.mrb[0].mxu0
    %v8942 = vpop.f32.mrb[0].mxu0
    %v8943 = vadd.f32 0.0, %v8942
    %v8944 = vpop.f32.mrb[0].mxu0
    %8945 = vdwg.mxu0
    %v8946 = vpack.c.bf16 %v8887, %v8884
    %v8947 = vpack.c.bf16 %v8895, %v8892
    %v8948 = vpack.c.bf16 %v8903, %v8900
    %v8949 = vpack.c.bf16 %v8911, %v8908
    %v8950 = vpack.c.bf16 %v8919, %v8916
    %v8951 = vpack.c.bf16 %v8927, %v8924
    %v8952 = vpack.c.bf16 %v8935, %v8932
    %v8953 = vpack.c.bf16 %v8943, %v8940
    %s8954 = scalar_lea.vmem %s13, 128
    %v8955 = vld [vmem:[%s8954] sm:$0xf]
    %v8956 = vld [vmem:[%s8954 + $0x4] sm:$0xf]
    %v8957 = vld [vmem:[%s8954 + $0x8] sm:$0xf]
    %v8958 = vld [vmem:[%s8954 + $0xc] sm:$0xf]
    %v8963 = vunpack.c.l.b16 %v8955
    %v8964 = vunpack.c.l.b16 %v8956
    %v8965 = vunpack.c.l.b16 %v8957
    %v8966 = vunpack.c.l.b16 %v8958
    %v8967 = vpack.c.b16 %v8964, %v8963
    %v8968 = vpack.c.b16 %v8966, %v8965
    %v8972 = vsel %vm180, %v8946, 0
    %v8975 = vsel %vm180, %v8947, 0
    %v8978 = vsel %vm180, %v8948, 0
    %v8981 = vsel %vm180, %v8949, 0
    %v8984 = vsel %vm180, %v8950, 0
    %v8987 = vsel %vm180, %v8951, 0
    %v8990 = vsel %vm180, %v8952, 0
    %v8993 = vsel %vm180, %v8953, 0
    %8995 = vmatprep.subr.bf16.mxu0 0
    %8996 = vmatpush1.bf16.msra.mxu0 %v8967
    %8997 = vmatprep.subr.bf16.mxu0 0
    %8998 = vmatpush1.bf16.msra.mxu0 %v8968
    %8999 = vmatprep.subr.bf16.mxu0 0
    %9000 = vmatpush1.bf16.msra.mxu0 0
    %9001 = vmatprep.subr.bf16.mxu0 0
    %9002 = vmatpush1.bf16.msra.mxu0 0
    %9003 = vmatprep.subr.bf16.mxu0 0
    %9004 = vmatpush1.bf16.msra.mxu0 0
    %9005 = vmatprep.subr.bf16.mxu0 0
    %9006 = vmatpush1.bf16.msra.mxu0 0
    %9007 = vmatprep.subr.bf16.mxu0 0
    %9008 = vmatpush1.bf16.msra.mxu0 0
    %9009 = vmatprep.subr.bf16.mxu0 0
    %9010 = vmatpush1.bf16.msra.mxu0 0
    %9011 = vmatprep.subr.bf16.mxu0 0
    %9012 = vmatpush1.bf16.msra.mxu0 0
    %9013 = vmatprep.subr.bf16.mxu0 0
    %9014 = vmatpush1.bf16.msra.mxu0 0
    %9015 = vmatprep.subr.bf16.mxu0 0
    %9016 = vmatpush1.bf16.msra.mxu0 0
    %9017 = vmatprep.subr.bf16.mxu0 0
    %9018 = vmatpush1.bf16.msra.mxu0 0
    %9019 = vmatprep.subr.bf16.mxu0 0
    %9020 = vmatpush1.bf16.msra.mxu0 0
    %9021 = vmatprep.subr.bf16.mxu0 0
    %9022 = vmatpush1.bf16.msra.mxu0 0
    %9023 = vmatprep.subr.bf16.mxu0 0
    %9024 = vmatpush1.bf16.msra.mxu0 0
    %9025 = vmatprep.subr.bf16.mxu0 0
    %9026 = vmatpush1.bf16.msra.mxu0 0
    %9027 = vmatprep.mubr.bf16.mxu0 0
    %9028 = vmatmul.mubr.bf16.gmra.mrb[0].mxu0 %v8972
    %v9029 = vpop.f32.mrb[0].mxu0
    %v9030 = vadd.f32 0.0, %v9029
    %v9031 = vpop.f32.mrb[0].mxu0
    %v9032 = vpop.f32.mrb[0].mxu0
    %v9033 = vadd.f32 0.0, %v9032
    %v9034 = vpop.f32.mrb[0].mxu0
    %9035 = vmatprep.mubr.bf16.mxu0 0
    %9036 = vmatmul.mubr.bf16.gmra.mrb[0].mxu0 %v8975
    %v9037 = vpop.f32.mrb[0].mxu0
    %v9038 = vadd.f32 0.0, %v9037
    %v9039 = vpop.f32.mrb[0].mxu0
    %v9040 = vpop.f32.mrb[0].mxu0
    %v9041 = vadd.f32 0.0, %v9040
    %v9042 = vpop.f32.mrb[0].mxu0
    %9043 = vmatprep.mubr.bf16.mxu0 0
    %9044 = vmatmul.mubr.bf16.gmra.mrb[0].mxu0 %v8978
    %v9045 = vpop.f32.mrb[0].mxu0
    %v9046 = vadd.f32 0.0, %v9045
    %v9047 = vpop.f32.mrb[0].mxu0
    %v9048 = vpop.f32.mrb[0].mxu0
    %v9049 = vadd.f32 0.0, %v9048
    %v9050 = vpop.f32.mrb[0].mxu0
    %9051 = vmatprep.mubr.bf16.mxu0 0
    %9052 = vmatmul.mubr.bf16.gmra.mrb[0].mxu0 %v8981
    %v9053 = vpop.f32.mrb[0].mxu0
    %v9054 = vadd.f32 0.0, %v9053
    %v9055 = vpop.f32.mrb[0].mxu0
    %v9056 = vpop.f32.mrb[0].mxu0
    %v9057 = vadd.f32 0.0, %v9056
    %v9058 = vpop.f32.mrb[0].mxu0
    %9059 = vmatprep.mubr.bf16.mxu0 0
    %9060 = vmatmul.mubr.bf16.gmra.mrb[0].mxu0 %v8984
    %v9061 = vpop.f32.mrb[0].mxu0
    %v9062 = vadd.f32 0.0, %v9061
    %v9063 = vpop.f32.mrb[0].mxu0
    %v9064 = vpop.f32.mrb[0].mxu0
    %v9065 = vadd.f32 0.0, %v9064
    %v9066 = vpop.f32.mrb[0].mxu0
    %9067 = vmatprep.mubr.bf16.mxu0 0
    %9068 = vmatmul.mubr.bf16.gmra.mrb[0].mxu0 %v8987
    %v9069 = vpop.f32.mrb[0].mxu0
    %v9070 = vadd.f32 0.0, %v9069
    %v9071 = vpop.f32.mrb[0].mxu0
    %v9072 = vpop.f32.mrb[0].mxu0
    %v9073 = vadd.f32 0.0, %v9072
    %v9074 = vpop.f32.mrb[0].mxu0
    %9075 = vmatprep.mubr.bf16.mxu0 0
    %9076 = vmatmul.mubr.bf16.gmra.mrb[0].mxu0 %v8990
    %v9077 = vpop.f32.mrb[0].mxu0
    %v9078 = vadd.f32 0.0, %v9077
    %v9079 = vpop.f32.mrb[0].mxu0
    %v9080 = vpop.f32.mrb[0].mxu0
    %v9081 = vadd.f32 0.0, %v9080
    %v9082 = vpop.f32.mrb[0].mxu0
    %9083 = vmatprep.mubr.bf16.mxu0 0
    %9084 = vmatmul.mubr.bf16.gmra.mrb[0].mxu0 %v8993
    %v9085 = vpop.f32.mrb[0].mxu0
    %v9086 = vadd.f32 0.0, %v9085
    %v9087 = vpop.f32.mrb[0].mxu0
    %v9088 = vpop.f32.mrb[0].mxu0
    %v9089 = vadd.f32 0.0, %v9088
    %v9090 = vpop.f32.mrb[0].mxu0
    %9091 = vdwg.mxu0
    %v9092 = vadd.f32 %v8833, %v9030
    %v9093 = vadd.f32 %v8834, %v9033
    %v9094 = vadd.f32 %v8835, %v9038
    %v9095 = vadd.f32 %v8836, %v9041
    %v9096 = vadd.f32 %v8837, %v9046
    %v9097 = vadd.f32 %v8838, %v9049
    %v9098 = vadd.f32 %v8839, %v9054
    %v9099 = vadd.f32 %v8840, %v9057
    %v9100 = vadd.f32 %v8841, %v9062
    %v9101 = vadd.f32 %v8842, %v9065
    %v9102 = vadd.f32 %v8843, %v9070
    %v9103 = vadd.f32 %v8844, %v9073
    %v9104 = vadd.f32 %v8845, %v9078
    %v9105 = vadd.f32 %v8846, %v9081
    %v9106 = vadd.f32 %v8847, %v9086
    %v9107 = vadd.f32 %v8848, %v9089
    %9108 = vmatprep.subr.bf16.mxu0 0
    %9109 = vmatpush1.bf16.msra.mxu0 %v8946
    %9110 = vmatprep.subr.bf16.mxu0 0
    %9111 = vmatpush1.bf16.msra.mxu0 %v8947
    %9112 = vmatprep.subr.bf16.mxu0 0
    %9113 = vmatpush1.bf16.msra.mxu0 %v8948
    %9114 = vmatprep.subr.bf16.mxu0 0
    %9115 = vmatpush1.bf16.msra.mxu0 %v8949
    %9116 = vmatprep.subr.bf16.mxu0 0
    %9117 = vmatpush1.bf16.msra.mxu0 %v8950
    %9118 = vmatprep.subr.bf16.mxu0 0
    %9119 = vmatpush1.bf16.msra.mxu0 %v8951
    %9120 = vmatprep.subr.bf16.mxu0 0
    %9121 = vmatpush1.bf16.msra.mxu0 %v8952
    %9122 = vmatprep.subr.bf16.mxu0 0
    %9123 = vmatpush1.bf16.msra.mxu0 %v8953
    %9124 = vmatprep.subr.bf16.mxu0 0
    %9125 = vmatpush1.bf16.msra.mxu0 0
    %9126 = vmatprep.subr.bf16.mxu0 0
    %9127 = vmatpush1.bf16.msra.mxu0 0
    %9128 = vmatprep.subr.bf16.mxu0 0
    %9129 = vmatpush1.bf16.msra.mxu0 0
    %9130 = vmatprep.subr.bf16.mxu0 0
    %9131 = vmatpush1.bf16.msra.mxu0 0
    %9132 = vmatprep.subr.bf16.mxu0 0
    %9133 = vmatpush1.bf16.msra.mxu0 0
    %9134 = vmatprep.subr.bf16.mxu0 0
    %9135 = vmatpush1.bf16.msra.mxu0 0
    %9136 = vmatprep.subr.bf16.mxu0 0
    %9137 = vmatpush1.bf16.msra.mxu0 0
    %9138 = vmatprep.subr.bf16.mxu0 0
    %9139 = vmatpush1.bf16.msra.mxu0 0
    %9140 = vmatprep.mubr.bf16.mxu0 0
    %9141 = vmatmul.mubr.bf16.gmra.mrb[0].mxu0 %v4270
    %v9142 = vpop.f32.mrb[0].mxu0
    %v9143 = vadd.f32 0.0, %v9142
    %v9144 = vpop.f32.mrb[0].mxu0
    %v9145 = vpop.f32.mrb[0].mxu0
    %v9146 = vadd.f32 0.0, %v9145
    %v9147 = vpop.f32.mrb[0].mxu0
    %9148 = vmatprep.mubr.bf16.mxu0 0
    %9149 = vmatmul.mubr.bf16.gmra.mrb[0].mxu0 %v4271
    %v9150 = vpop.f32.mrb[0].mxu0
    %v9151 = vadd.f32 0.0, %v9150
    %v9152 = vpop.f32.mrb[0].mxu0
    %v9153 = vpop.f32.mrb[0].mxu0
    %v9154 = vadd.f32 0.0, %v9153
    %v9155 = vpop.f32.mrb[0].mxu0
    %9156 = vmatprep.mubr.bf16.mxu0 0
    %9157 = vmatmul.mubr.bf16.gmra.mrb[0].mxu0 %v4272
    %v9158 = vpop.f32.mrb[0].mxu0
    %v9159 = vadd.f32 0.0, %v9158
    %v9160 = vpop.f32.mrb[0].mxu0
    %v9161 = vpop.f32.mrb[0].mxu0
    %v9162 = vadd.f32 0.0, %v9161
    %v9163 = vpop.f32.mrb[0].mxu0
    %9164 = vmatprep.mubr.bf16.mxu0 0
    %9165 = vmatmul.mubr.bf16.gmra.mrb[0].mxu0 %v4273
    %v9166 = vpop.f32.mrb[0].mxu0
    %v9167 = vadd.f32 0.0, %v9166
    %v9168 = vpop.f32.mrb[0].mxu0
    %v9169 = vpop.f32.mrb[0].mxu0
    %v9170 = vadd.f32 0.0, %v9169
    %v9171 = vpop.f32.mrb[0].mxu0
    %9172 = vmatprep.mubr.bf16.mxu0 0
    %9173 = vmatmul.mubr.bf16.gmra.mrb[0].mxu0 %v4274
    %v9174 = vpop.f32.mrb[0].mxu0
    %v9175 = vadd.f32 0.0, %v9174
    %v9176 = vpop.f32.mrb[0].mxu0
    %v9177 = vpop.f32.mrb[0].mxu0
    %v9178 = vadd.f32 0.0, %v9177
    %v9179 = vpop.f32.mrb[0].mxu0
    %9180 = vmatprep.mubr.bf16.mxu0 0
    %9181 = vmatmul.mubr.bf16.gmra.mrb[0].mxu0 %v4275
    %v9182 = vpop.f32.mrb[0].mxu0
    %v9183 = vadd.f32 0.0, %v9182
    %v9184 = vpop.f32.mrb[0].mxu0
    %v9185 = vpop.f32.mrb[0].mxu0
    %v9186 = vadd.f32 0.0, %v9185
    %v9187 = vpop.f32.mrb[0].mxu0
    %9188 = vmatprep.mubr.bf16.mxu0 0
    %9189 = vmatmul.mubr.bf16.gmra.mrb[0].mxu0 %v4276
    %v9190 = vpop.f32.mrb[0].mxu0
    %v9191 = vadd.f32 0.0, %v9190
    %v9192 = vpop.f32.mrb[0].mxu0
    %v9193 = vpop.f32.mrb[0].mxu0
    %v9194 = vadd.f32 0.0, %v9193
    %v9195 = vpop.f32.mrb[0].mxu0
    %9196 = vmatprep.mubr.bf16.mxu0 0
    %9197 = vmatmul.mubr.bf16.gmra.mrb[0].mxu0 %v4277
    %v9198 = vpop.f32.mrb[0].mxu0
    %v9199 = vadd.f32 0.0, %v9198
    %v9200 = vpop.f32.mrb[0].mxu0
    %v9201 = vpop.f32.mrb[0].mxu0
    %v9202 = vadd.f32 0.0, %v9201
    %v9203 = vpop.f32.mrb[0].mxu0
    %9204 = vdwg.mxu0
    %v9205 = vpack.c.bf16 %v9146, %v9143
    %v9206 = vpack.c.bf16 %v9154, %v9151
    %v9207 = vpack.c.bf16 %v9162, %v9159
    %v9208 = vpack.c.bf16 %v9170, %v9167
    %v9209 = vpack.c.bf16 %v9178, %v9175
    %v9210 = vpack.c.bf16 %v9186, %v9183
    %v9211 = vpack.c.bf16 %v9194, %v9191
    %v9212 = vpack.c.bf16 %v9202, %v9199
    %s9213 = scalar_lea.vmem %s13, 144
    %v9214 = vld [vmem:[%s9213] sm:$0xf]
    %v9215 = vld [vmem:[%s9213 + $0x4] sm:$0xf]
    %v9216 = vld [vmem:[%s9213 + $0x8] sm:$0xf]
    %v9217 = vld [vmem:[%s9213 + $0xc] sm:$0xf]
    %v9222 = vunpack.c.l.b16 %v9214
    %v9223 = vunpack.c.l.b16 %v9215
    %v9224 = vunpack.c.l.b16 %v9216
    %v9225 = vunpack.c.l.b16 %v9217
    %v9226 = vpack.c.b16 %v9223, %v9222
    %v9227 = vpack.c.b16 %v9225, %v9224
    %v9231 = vsel %vm180, %v9205, 0
    %v9234 = vsel %vm180, %v9206, 0
    %v9237 = vsel %vm180, %v9207, 0
    %v9240 = vsel %vm180, %v9208, 0
    %v9243 = vsel %vm180, %v9209, 0
    %v9246 = vsel %vm180, %v9210, 0
    %v9249 = vsel %vm180, %v9211, 0
    %v9252 = vsel %vm180, %v9212, 0
    %9254 = vmatprep.subr.bf16.mxu0 0
    %9255 = vmatpush1.bf16.msra.mxu0 %v9226
    %9256 = vmatprep.subr.bf16.mxu0 0
    %9257 = vmatpush1.bf16.msra.mxu0 %v9227
    %9258 = vmatprep.subr.bf16.mxu0 0
    %9259 = vmatpush1.bf16.msra.mxu0 0
    %9260 = vmatprep.subr.bf16.mxu0 0
    %9261 = vmatpush1.bf16.msra.mxu0 0
    %9262 = vmatprep.subr.bf16.mxu0 0
    %9263 = vmatpush1.bf16.msra.mxu0 0
    %9264 = vmatprep.subr.bf16.mxu0 0
    %9265 = vmatpush1.bf16.msra.mxu0 0
    %9266 = vmatprep.subr.bf16.mxu0 0
    %9267 = vmatpush1.bf16.msra.mxu0 0
    %9268 = vmatprep.subr.bf16.mxu0 0
    %9269 = vmatpush1.bf16.msra.mxu0 0
    %9270 = vmatprep.subr.bf16.mxu0 0
    %9271 = vmatpush1.bf16.msra.mxu0 0
    %9272 = vmatprep.subr.bf16.mxu0 0
    %9273 = vmatpush1.bf16.msra.mxu0 0
    %9274 = vmatprep.subr.bf16.mxu0 0
    %9275 = vmatpush1.bf16.msra.mxu0 0
    %9276 = vmatprep.subr.bf16.mxu0 0
    %9277 = vmatpush1.bf16.msra.mxu0 0
    %9278 = vmatprep.subr.bf16.mxu0 0
    %9279 = vmatpush1.bf16.msra.mxu0 0
    %9280 = vmatprep.subr.bf16.mxu0 0
    %9281 = vmatpush1.bf16.msra.mxu0 0
    %9282 = vmatprep.subr.bf16.mxu0 0
    %9283 = vmatpush1.bf16.msra.mxu0 0
    %9284 = vmatprep.subr.bf16.mxu0 0
    %9285 = vmatpush1.bf16.msra.mxu0 0
    %9286 = vmatprep.mubr.bf16.mxu0 0
    %9287 = vmatmul.mubr.bf16.gmra.mrb[0].mxu0 %v9231
    %v9288 = vpop.f32.mrb[0].mxu0
    %v9289 = vadd.f32 0.0, %v9288
    %v9290 = vpop.f32.mrb[0].mxu0
    %v9291 = vpop.f32.mrb[0].mxu0
    %v9292 = vadd.f32 0.0, %v9291
    %v9293 = vpop.f32.mrb[0].mxu0
    %9294 = vmatprep.mubr.bf16.mxu0 0
    %9295 = vmatmul.mubr.bf16.gmra.mrb[0].mxu0 %v9234
    %v9296 = vpop.f32.mrb[0].mxu0
    %v9297 = vadd.f32 0.0, %v9296
    %v9298 = vpop.f32.mrb[0].mxu0
    %v9299 = vpop.f32.mrb[0].mxu0
    %v9300 = vadd.f32 0.0, %v9299
    %v9301 = vpop.f32.mrb[0].mxu0
    %9302 = vmatprep.mubr.bf16.mxu0 0
    %9303 = vmatmul.mubr.bf16.gmra.mrb[0].mxu0 %v9237
    %v9304 = vpop.f32.mrb[0].mxu0
    %v9305 = vadd.f32 0.0, %v9304
    %v9306 = vpop.f32.mrb[0].mxu0
    %v9307 = vpop.f32.mrb[0].mxu0
    %v9308 = vadd.f32 0.0, %v9307
    %v9309 = vpop.f32.mrb[0].mxu0
    %9310 = vmatprep.mubr.bf16.mxu0 0
    %9311 = vmatmul.mubr.bf16.gmra.mrb[0].mxu0 %v9240
    %v9312 = vpop.f32.mrb[0].mxu0
    %v9313 = vadd.f32 0.0, %v9312
    %v9314 = vpop.f32.mrb[0].mxu0
    %v9315 = vpop.f32.mrb[0].mxu0
    %v9316 = vadd.f32 0.0, %v9315
    %v9317 = vpop.f32.mrb[0].mxu0
    %9318 = vmatprep.mubr.bf16.mxu0 0
    %9319 = vmatmul.mubr.bf16.gmra.mrb[0].mxu0 %v9243
    %v9320 = vpop.f32.mrb[0].mxu0
    %v9321 = vadd.f32 0.0, %v9320
    %v9322 = vpop.f32.mrb[0].mxu0
    %v9323 = vpop.f32.mrb[0].mxu0
    %v9324 = vadd.f32 0.0, %v9323
    %v9325 = vpop.f32.mrb[0].mxu0
    %9326 = vmatprep.mubr.bf16.mxu0 0
    %9327 = vmatmul.mubr.bf16.gmra.mrb[0].mxu0 %v9246
    %v9328 = vpop.f32.mrb[0].mxu0
    %v9329 = vadd.f32 0.0, %v9328
    %v9330 = vpop.f32.mrb[0].mxu0
    %v9331 = vpop.f32.mrb[0].mxu0
    %v9332 = vadd.f32 0.0, %v9331
    %v9333 = vpop.f32.mrb[0].mxu0
    %9334 = vmatprep.mubr.bf16.mxu0 0
    %9335 = vmatmul.mubr.bf16.gmra.mrb[0].mxu0 %v9249
    %v9336 = vpop.f32.mrb[0].mxu0
    %v9337 = vadd.f32 0.0, %v9336
    %v9338 = vpop.f32.mrb[0].mxu0
    %v9339 = vpop.f32.mrb[0].mxu0
    %v9340 = vadd.f32 0.0, %v9339
    %v9341 = vpop.f32.mrb[0].mxu0
    %9342 = vmatprep.mubr.bf16.mxu0 0
    %9343 = vmatmul.mubr.bf16.gmra.mrb[0].mxu0 %v9252
    %v9344 = vpop.f32.mrb[0].mxu0
    %v9345 = vadd.f32 0.0, %v9344
    %v9346 = vpop.f32.mrb[0].mxu0
    %v9347 = vpop.f32.mrb[0].mxu0
    %v9348 = vadd.f32 0.0, %v9347
    %v9349 = vpop.f32.mrb[0].mxu0
    %9350 = vdwg.mxu0
    %v9351 = vadd.f32 %v9092, %v9289
    %v9352 = vadd.f32 %v9093, %v9292
    %v9353 = vadd.f32 %v9094, %v9297
    %v9354 = vadd.f32 %v9095, %v9300
    %v9355 = vadd.f32 %v9096, %v9305
    %v9356 = vadd.f32 %v9097, %v9308
    %v9357 = vadd.f32 %v9098, %v9313
    %v9358 = vadd.f32 %v9099, %v9316
    %v9359 = vadd.f32 %v9100, %v9321
    %v9360 = vadd.f32 %v9101, %v9324
    %v9361 = vadd.f32 %v9102, %v9329
    %v9362 = vadd.f32 %v9103, %v9332
    %v9363 = vadd.f32 %v9104, %v9337
    %v9364 = vadd.f32 %v9105, %v9340
    %v9365 = vadd.f32 %v9106, %v9345
    %v9366 = vadd.f32 %v9107, %v9348
    %s9367 = scalar_lea.vmem %s14, 1
    %v9368 = vld [vmem:[%s9367] sm:$0x1]
    %v9370 = vlaneseq
    %v9371 = vshrl.u32 %v9370, 7
    %v9372 = vsub.s32 0, %v9371
    %v9373 = vrot.slane %v9368, %v9372
    %v9375 = vadd.f32 %v9351, %v9373
    %v9376 = vadd.f32 %v9352, %v9373
    %v9377 = vadd.f32 %v9353, %v9373
    %v9378 = vadd.f32 %v9354, %v9373
    %v9379 = vadd.f32 %v9355, %v9373
    %v9380 = vadd.f32 %v9356, %v9373
    %v9381 = vadd.f32 %v9357, %v9373
    %v9382 = vadd.f32 %v9358, %v9373
    %v9383 = vadd.f32 %v9359, %v9373
    %v9384 = vadd.f32 %v9360, %v9373
    %v9385 = vadd.f32 %v9361, %v9373
    %v9386 = vadd.f32 %v9362, %v9373
    %v9387 = vadd.f32 %v9363, %v9373
    %v9388 = vadd.f32 %v9364, %v9373
    %v9389 = vadd.f32 %v9365, %v9373
    %v9390 = vadd.f32 %v9366, %v9373
    %v9391 = vadd.f32 %v9375, %v8217
    %v9392 = vadd.f32 %v9376, %v8218
    %v9393 = vadd.f32 %v9377, %v8219
    %v9394 = vadd.f32 %v9378, %v8220
    %v9395 = vadd.f32 %v9379, %v8221
    %v9396 = vadd.f32 %v9380, %v8222
    %v9397 = vadd.f32 %v9381, %v8223
    %v9398 = vadd.f32 %v9382, %v8224
    %v9399 = vadd.f32 %v9383, %v8225
    %v9400 = vadd.f32 %v9384, %v8226
    %v9401 = vadd.f32 %v9385, %v8227
    %v9402 = vadd.f32 %v9386, %v8228
    %v9403 = vadd.f32 %v9387, %v8229
    %v9404 = vadd.f32 %v9388, %v8230
    %v9405 = vadd.f32 %v9389, %v8231
    %v9406 = vadd.f32 %v9390, %v8232
    %9407 = vst.msk [vmem:[%s15] sm:$0xff] %vm180, %v9391
    %9408 = vst.msk [vmem:[%s15 + $0x8] sm:$0xff] %vm180, %v9392
    %9409 = vst.msk [vmem:[%s15 + $0x10] sm:$0xff] %vm180, %v9393
    %9410 = vst.msk [vmem:[%s15 + $0x18] sm:$0xff] %vm180, %v9394
    %9411 = vst.msk [vmem:[%s15 + $0x20] sm:$0xff] %vm180, %v9395
    %9412 = vst.msk [vmem:[%s15 + $0x28] sm:$0xff] %vm180, %v9396
    %9413 = vst.msk [vmem:[%s15 + $0x30] sm:$0xff] %vm180, %v9397
    %9414 = vst.msk [vmem:[%s15 + $0x38] sm:$0xff] %vm180, %v9398
    %9415 = vst.msk [vmem:[%s15 + $0x40] sm:$0xff] %vm180, %v9399
    %9416 = vst.msk [vmem:[%s15 + $0x48] sm:$0xff] %vm180, %v9400
    %9417 = vst.msk [vmem:[%s15 + $0x50] sm:$0xff] %vm180, %v9401
    %9418 = vst.msk [vmem:[%s15 + $0x58] sm:$0xff] %vm180, %v9402
    %9419 = vst.msk [vmem:[%s15 + $0x60] sm:$0xff] %vm180, %v9403
    %9420 = vst.msk [vmem:[%s15 + $0x68] sm:$0xff] %vm180, %v9404
    %9421 = vst.msk [vmem:[%s15 + $0x70] sm:$0xff] %vm180, %v9405
    %9422 = vst.msk [vmem:[%s15 + $0x78] sm:$0xff] %vm180, %v9406
    // Predicated region
    $region74: #{tpu_custom_call.1} parent=1 // pred_check
      _
    $region75: #{tpu_custom_call.1} parent=1 // pred_check_branch
      %9424 = sbr.rel (0) target = $region77
    $region76: #{tpu_custom_call.1} parent=1 // pred_region
      _
    $region77: #{tpu_custom_call.1} parent=1 // pred_fallthru
      _
    // Predicated region
    $region78: #{tpu_custom_call.1} parent=1 // pred_check
      _
    $region79: #{tpu_custom_call.1} parent=1 // pred_check_branch
      %9426 = sbr.rel (0) target = $region81
    $region80: #{tpu_custom_call.1} parent=1 // pred_region
      _
    $region81: #{tpu_custom_call.1} parent=1 // pred_fallthru
      _
    %9427 = vsyncpa [#allocation3], 1
    %9428 = vsyncpa [#allocation5], 1

</llo_original>
